<compile_context>
chip_gen: v7x
topology: tpu7x:2x2x1
jax: 0.10.0
libtpu: 0.0.40
codegen_flags: <defaults>
</compile_context>

<pallas_src>
import functools

import numpy as np
import jax
import jax.numpy as jnp
from jax.experimental import pallas as pl
from jax.experimental.pallas import tpu as pltpu

LRELU_SLOPE = 0.2
BN_EPS = 1e-5


def _round_up(x, m):
    return ((x + m - 1) // m) * m


# ----------------------------- Pallas kernel --------------------------------
def _fused_gemm_kernel(*refs, n_pairs, act):
    """refs = (w0, p0[, w1, p1], shift, out).

    acc[co, m] = sum_i (w_i @ p_i)[co, m]     (bf16 x bf16 -> f32 on the MXU)
    out        = act(acc + shift[co])         stored bf16, lane-dense tiles.
    """
    o_ref = refs[-1]
    sh_ref = refs[-2]
    acc = None
    for i in range(n_pairs):
        d = jnp.dot(refs[2 * i][...], refs[2 * i + 1][...],
                    preferred_element_type=jnp.float32)
        acc = d if acc is None else acc + d
    acc = acc + sh_ref[...]              # conv bias / BN shift pre-folded
    if act == "lrelu":
        acc = jnp.where(acc > 0, acc, LRELU_SLOPE * acc)
    elif act == "relu":
        acc = jnp.maximum(acc, 0.0)
    elif act == "tanh":
        acc = jnp.tanh(acc)
    o_ref[...] = acc.astype(o_ref.dtype)


def _pick_tm(m_pad128):
    # Aim for >=8 grid steps on big layers (>=4 per v7x TensorCore) while
    # keeping 256..1024-lane tiles (~85% of HBM roofline at 512 per measured
    # tiling data); tiny layers fall back to a single 128-lane tile.
    tm = (m_pad128 // 8) // 128 * 128
    tm = max(256, min(1024, tm))
    return min(tm, m_pad128)


def _fused_gemm(pairs, shift, act):
    """act( sum_i w_i @ p_i + shift ), fused in one Pallas kernel.

    pairs: list of (w (R, K_i) bf16, p (K_i, M) bf16)   -- scale pre-folded
    shift: (R, 1) f32                                    -- bias pre-folded
    returns (R, M) bf16.
    """
    R = pairs[0][0].shape[0]
    M = pairs[0][1].shape[1]
    tm = _pick_tm(_round_up(M, 128))
    m_pad = _round_up(M, tm)

    ins, in_specs = [], []
    for w, p in pairs:
        K = w.shape[1]
        if m_pad != M:
            p = jnp.pad(p, ((0, 0), (0, m_pad - M)))
        ins += [w, p]
        in_specs += [
            pl.BlockSpec((R, K), lambda i: (0, 0)),    # weight (resident)
            pl.BlockSpec((K, tm), lambda i: (0, i)),   # patch tile (streamed)
        ]
    ins.append(shift)
    in_specs.append(pl.BlockSpec((R, 1), lambda i: (0, 0)))

    out = pl.pallas_call(
        functools.partial(_fused_gemm_kernel, n_pairs=len(pairs), act=act),
        out_shape=jax.ShapeDtypeStruct((R, m_pad), jnp.bfloat16),
        grid_spec=pltpu.PrefetchScalarGridSpec(
            num_scalar_prefetch=0,
            grid=(m_pad // tm,),
            in_specs=in_specs,
            out_specs=pl.BlockSpec((R, tm), lambda i: (0, i)),
        ),
        compiler_params=pltpu.CompilerParams(
            dimension_semantics=("parallel",)),
    )(*ins)
    return out[:, :M]


# ------------------------------- JAX glue ------------------------------------
def _im2col_cm(x_cm, k, stride, pad):
    """Channel-major im2col: (C, N, H, W) -> (k*k*C, N*Ho*Wo), rows (ki,kj,c)."""
    C, N, H, W = x_cm.shape
    xp = jnp.pad(x_cm, ((0, 0), (0, 0), (pad, pad), (pad, pad)))
    Ho = (H + 2 * pad - k) // stride + 1
    Wo = (W + 2 * pad - k) // stride + 1
    cols = []
    for ki in range(k):
        for kj in range(k):
            cols.append(
                xp[:, :, ki:ki + stride * (Ho - 1) + 1:stride,
                         kj:kj + stride * (Wo - 1) + 1:stride])
    p = jnp.stack(cols, axis=0)              # (k*k, C, N, Ho, Wo)
    return p.reshape(k * k * C, N * Ho * Wo), (Ho, Wo)


def conv2d_down(x_cm, layer, act):
    """Conv2d(k=4, s=2, p=1) + bias + BN(eval) + activation, channel-major."""
    N = x_cm.shape[1]
    patches, (Ho, Wo) = _im2col_cm(x_cm, 4, 2, 1)
    y = _fused_gemm([(layer["w"], patches)], layer["sh"], act)
    return y[:layer["cout"]].reshape(layer["cout"], N, Ho, Wo)


def conv_t_up(xs, layer, act):
    """ConvTranspose2d(k=4, s=2, p=1) + bias + BN(eval) + activation.

    xs: one or two channel-major inputs (the two halves of the torch concat);
    each contributes its own GEMM accumulated in the same kernel."""
    N, H, W = xs[0].shape[1:]
    pairs = []
    for x, w in zip(xs, layer["ws"]):
        patches, _ = _im2col_cm(x, 3, 1, 1)   # 3x3 stride-1 window over pad(x,1)
        pairs.append((w, patches))
    cout = layer["cout"]
    y = _fused_gemm(pairs, layer["sh"], act)          # (c4_pad, N*H*W)
    y = y[:4 * cout].reshape(2, 2, cout, N, H, W)     # rows ordered (r, c, co)
    y = jnp.transpose(y, (2, 3, 4, 0, 5, 1))          # (co, N, H, r, W, c)
    return y.reshape(cout, N, 2 * H, 2 * W)


# ----------------------------- parameters ------------------------------------
def make_params(key, input_nc, output_nc, ngf):
    chans_enc = [input_nc, ngf, ngf * 2, ngf * 4, ngf * 8,
                 ngf * 8, ngf * 8, ngf * 8, ngf * 8]
    dec_cin = [ngf * 8, ngf * 16, ngf * 16, ngf * 16,
               ngf * 16, ngf * 8, ngf * 4, ngf * 2]
    dec_cout = [ngf * 8, ngf * 8, ngf * 8, ngf * 8,
                ngf * 4, ngf * 2, ngf, output_nc]
    keys = jax.random.split(key, 32)
    ki = 0
    params = {}
    for i in range(8):   # encoder Conv2d weights: (Cout, Cin, 4, 4)
        cin, cout = chans_enc[i], chans_enc[i + 1]
        params[f"en{i+1}_w"] = 0.05 * jax.random.normal(
            keys[ki], (cout, cin, 4, 4), jnp.float32); ki += 1
        params[f"en{i+1}_b"] = 0.01 * jax.random.normal(
            keys[ki], (cout,), jnp.float32); ki += 1
    for i in range(8):   # decoder ConvTranspose2d weights: (Cin, Cout, 4, 4)
        params[f"de{i+1}_w"] = 0.05 * jax.random.normal(
            keys[ki], (dec_cin[i], dec_cout[i], 4, 4), jnp.float32); ki += 1
        params[f"de{i+1}_b"] = 0.01 * jax.random.normal(
            keys[ki], (dec_cout[i],), jnp.float32); ki += 1
    return params


def _subpixel_weight_np(w_iohw):
    """ConvTranspose2d(4,2,1) weight half (Cin_h, Cout, 4, 4) -> sub-pixel
    combined weight (4*Cout, 9*Cin_h):
      rows (r, c, cout)  -- the 2x2 output phase
      cols (wi, wj, cin) -- the 3x3 stride-1 window over pad(x, 1)
    out[2i+r, 2j+c, co] = sum x_pad[i+wi, j+wj, ci] * w[ci, co, kh, kw]
    with kh = 3 + r - 2*wi, kw = 3 + c - 2*wj (dropped where out of range)."""
    cin, cout = w_iohw.shape[:2]
    wc = np.zeros((2, 2, cout, 3, 3, cin), np.float32)
    for r in range(2):
        for c in range(2):
            for wi in range(3):
                for wj in range(3):
                    kh = 3 + r - 2 * wi
                    kw = 3 + c - 2 * wj
                    if 0 <= kh < 4 and 0 <= kw < 4:
                        wc[r, c, :, wi, wj, :] = w_iohw[:, :, kh, kw].T
    return wc.reshape(4 * cout, 9 * cin)


def prepare_params(params, input_nc, output_nc, ngf):
    """Host-side (numpy) weight prep, done ONCE outside the jitted forward:
    reorder / sub-pixel-combine / fold BN scale into weights / fold bias into
    shift / pad rows / cast to bf16."""
    bn_gain = float(1.0 / np.sqrt(1.0 + BN_EPS))   # eval-mode BN, fresh stats
    enc_has_bn = [False] + [True] * 6 + [False]
    dec_has_bn = [True] * 7 + [False]
    dec_cout = [ngf * 8, ngf * 8, ngf * 8, ngf * 8, ngf * 4, ngf * 2, ngf,
                output_nc]

    enc = []
    for i in range(8):
        w = np.asarray(params[f"en{i+1}_w"], np.float32)   # (cout, cin, 4, 4)
        b = np.asarray(params[f"en{i+1}_b"], np.float32)
        cout = w.shape[0]
        s = bn_gain if enc_has_bn[i] else 1.0
        w2 = w.transpose(0, 2, 3, 1).reshape(cout, -1) * s  # cols (kh, kw, cin)
        sh = b * s
        cp = _round_up(cout, 16)
        w2 = np.pad(w2, ((0, cp - cout), (0, 0)))
        sh = np.pad(sh, (0, cp - cout)).reshape(cp, 1)
        enc.append(dict(w=jnp.asarray(w2, jnp.bfloat16),
                        sh=jnp.asarray(sh, jnp.float32), cout=cout))

    dec = []
    for i in range(8):
        w = np.asarray(params[f"de{i+1}_w"], np.float32)   # (cin_total, cout, 4, 4)
        b = np.asarray(params[f"de{i+1}_b"], np.float32)
        cout = w.shape[1]
        s = bn_gain if dec_has_bn[i] else 1.0
        if i == 0:
            halves = [w]                                    # de1: no skip concat
        else:
            c1 = dec_cout[i - 1]                            # torch concat: [d, skip]
            halves = [w[:c1], w[c1:]]
        c4 = 4 * cout
        cp = _round_up(c4, 16)
        ws = []
        for wh in halves:
            wt = _subpixel_weight_np(wh) * s
            wt = np.pad(wt, ((0, cp - c4), (0, 0)))
            ws.append(jnp.asarray(wt, jnp.bfloat16))
        sh = np.pad(np.tile(b * s, 4), (0, cp - c4)).reshape(cp, 1)
        dec.append(dict(ws=ws, sh=jnp.asarray(sh, jnp.float32), cout=cout))

    return dict(enc=enc, dec=dec)


# ------------------------------ forward --------------------------------------
def make_forward(prep):
    enc_acts = ["lrelu"] * 7 + ["relu"]

    def forward(x_nchw):
        # NCHW -> channel-major (C, N, H, W), bf16 end-to-end.
        h = jnp.transpose(x_nchw, (1, 0, 2, 3)).astype(jnp.bfloat16)

        enc_outs = []
        for i in range(8):
            h = conv2d_down(h, prep["enc"][i], enc_acts[i])
            enc_outs.append(h)

        # Decoder: ConvT + BN + [Dropout eval] + ReLU; the torch concat
        # cat(d, skip) is consumed as two accumulated GEMMs (never built).
        d = enc_outs[7]
        for i in range(7):
            xs = [d] if i == 0 else [d, enc_outs[7 - i]]   # skips en7 .. en2
            d = conv_t_up(xs, prep["dec"][i], "relu")

        # The reference computes de8 and discards it (returns out_de7); traced
        # for structural fidelity, dead-code-eliminated by XLA under jit.
        _ = conv_t_up([d, enc_outs[0]], prep["dec"][7], "tanh")

        out = jnp.concatenate([d, enc_outs[0]], axis=0)    # out_de7 = cat(de7, en1)
        return jnp.transpose(out, (1, 0, 2, 3)).astype(jnp.float32)  # NCHW f32

    return forward


# -------------------------------- main ----------------------------------------
if __name__ == "__main__":
    key = jax.random.PRNGKey(0)
    kx, kp = jax.random.split(key)

    # 8 stride-2 stages require spatial >= 256; keep channels tiny instead.
    N, input_nc, output_nc, ngf = 1, 3, 3, 4
    H = W = 256

    x = jax.random.normal(kx, (N, input_nc, H, W), jnp.float32)
    params = make_params(kp, input_nc, output_nc, ngf)
    prep = prepare_params(params, input_nc, output_nc, ngf)   # hoisted weight prep

    fwd = jax.jit(make_forward(prep))
    out = fwd(x)
    jax.block_until_ready(out)

    assert out.shape == (N, ngf * 2, H // 2, W // 2), out.shape
    assert out.dtype == jnp.float32
    print("KERNEL_OK")
</pallas_src>

<mosaic_0001>
module attributes {stable_mosaic.version = 11 : i64} {
  func.func @_fused_gemm_kernel(%arg0: i32, %arg1: memref<16x48xbf16, #tpu.memory_space<vmem>>, %arg2: memref<48x1024xbf16, #tpu.memory_space<vmem>>, %arg3: memref<16x1xf32, #tpu.memory_space<vmem>>, %arg4: memref<16x1024xbf16, #tpu.memory_space<vmem>>) attributes {dimension_semantics = [#tpu.dimension_semantics<parallel>], iteration_bounds = array<i64: 16>, scalar_prefetch = 0 : i64, scratch_operands = 0 : i64, tpu.core_type = #tpu.core_type<tc>, window_params = [{pipeline_mode = #tpu.pipeline_mode<synchronous>, transform_indices = @transform_0, window_bounds = array<i64: 16, 48>}, {transform_indices = @transform_1, window_bounds = array<i64: 48, 1024>}, {pipeline_mode = #tpu.pipeline_mode<synchronous>, transform_indices = @transform_2, window_bounds = array<i64: 16, 1>}, {transform_indices = @transform_3, window_bounds = array<i64: 16, 1024>}]} {
    %c0 = arith.constant 0 : index
    %c0_0 = arith.constant 0 : index
    %0 = vector.load %arg1[%c0, %c0_0] : memref<16x48xbf16, #tpu.memory_space<vmem>>, vector<16x48xbf16>
    %c0_1 = arith.constant 0 : index
    %c0_2 = arith.constant 0 : index
    %1 = vector.load %arg2[%c0_1, %c0_2] : memref<48x1024xbf16, #tpu.memory_space<vmem>>, vector<48x1024xbf16>
    %cst = arith.constant dense<0.000000e+00> : vector<16x1024xf32>
    %2 = tpu.matmul %0, %1, %cst {dimension_numbers = #tpu.dot_dimension_numbers<[1], [0], [0], [1], [0, 0, 1, 1], [], []>} : vector<16x48xbf16>, vector<48x1024xbf16>, vector<16x1024xf32> -> vector<16x1024xf32>
    %c0_3 = arith.constant 0 : index
    %c0_4 = arith.constant 0 : index
    %3 = vector.load %arg3[%c0_3, %c0_4] : memref<16x1xf32, #tpu.memory_space<vmem>>, vector<16x1xf32>
    %4 = vector.broadcast %3 : vector<16x1xf32> to vector<16x1024xf32>
    %5 = arith.addf %2, %4 : vector<16x1024xf32>
    %cst_5 = arith.constant 0.000000e+00 : f32
    %6 = vector.broadcast %cst_5 : f32 to vector<16x1024xf32>
    %7 = arith.cmpf ogt, %5, %6 : vector<16x1024xf32>
    %cst_6 = arith.constant 2.000000e-01 : f32
    %8 = vector.broadcast %cst_6 : f32 to vector<16x1024xf32>
    %9 = arith.mulf %8, %5 : vector<16x1024xf32>
    %10 = arith.select %7, %5, %9 : vector<16x1024xi1>, vector<16x1024xf32>
    %11 = arith.truncf %10 : vector<16x1024xf32> to vector<16x1024xbf16>
    %c0_7 = arith.constant 0 : index
    %c0_8 = arith.constant 0 : index
    %12 = vector.load %arg4[%c0_7, %c0_8] : memref<16x1024xbf16, #tpu.memory_space<vmem>>, vector<16x1024xbf16>
    tpu.vector_store %arg4[%c0_7, %c0_8], %11 {strides = array<i32>} : memref<16x1024xbf16, #tpu.memory_space<vmem>>, vector<16x1024xbf16>,
    return
  }
  func.func @transform_0(%arg0: i32) -> (i32, i32) {
    %c0_i32 = arith.constant 0 : i32
    %c0_i32_0 = arith.constant 0 : i32
    %c0_i32_1 = arith.constant 0 : i32
    return %c0_i32, %c0_i32_0 : i32, i32
  }
  func.func @transform_1(%arg0: i32) -> (i32, i32) {
    %c0_i32 = arith.constant 0 : i32
    %c0_i32_0 = arith.constant 0 : i32
    return %c0_i32, %arg0 : i32, i32
  }
  func.func @transform_2(%arg0: i32) -> (i32, i32) {
    %c0_i32 = arith.constant 0 : i32
    %c0_i32_0 = arith.constant 0 : i32
    %c0_i32_1 = arith.constant 0 : i32
    return %c0_i32, %c0_i32_0 : i32, i32
  }
  func.func @transform_3(%arg0: i32) -> (i32, i32) {
    %c0_i32 = arith.constant 0 : i32
    %c0_i32_0 = arith.constant 0 : i32
    return %c0_i32, %arg0 : i32, i32
  }
}

module attributes {stable_mosaic.version = 11 : i64} {
  func.func @_fused_gemm_kernel(%arg0: i32, %arg1: memref<16x64xbf16, #tpu.memory_space<vmem>>, %arg2: memref<64x512xbf16, #tpu.memory_space<vmem>>, %arg3: memref<16x1xf32, #tpu.memory_space<vmem>>, %arg4: memref<16x512xbf16, #tpu.memory_space<vmem>>) attributes {dimension_semantics = [#tpu.dimension_semantics<parallel>], iteration_bounds = array<i64: 8>, scalar_prefetch = 0 : i64, scratch_operands = 0 : i64, tpu.core_type = #tpu.core_type<tc>, window_params = [{pipeline_mode = #tpu.pipeline_mode<synchronous>, transform_indices = @transform_0, window_bounds = array<i64: 16, 64>}, {transform_indices = @transform_1, window_bounds = array<i64: 64, 512>}, {pipeline_mode = #tpu.pipeline_mode<synchronous>, transform_indices = @transform_2, window_bounds = array<i64: 16, 1>}, {transform_indices = @transform_3, window_bounds = array<i64: 16, 512>}]} {
    %c0 = arith.constant 0 : index
    %c0_0 = arith.constant 0 : index
    %0 = vector.load %arg1[%c0, %c0_0] : memref<16x64xbf16, #tpu.memory_space<vmem>>, vector<16x64xbf16>
    %c0_1 = arith.constant 0 : index
    %c0_2 = arith.constant 0 : index
    %1 = vector.load %arg2[%c0_1, %c0_2] : memref<64x512xbf16, #tpu.memory_space<vmem>>, vector<64x512xbf16>
    %cst = arith.constant dense<0.000000e+00> : vector<16x512xf32>
    %2 = tpu.matmul %0, %1, %cst {dimension_numbers = #tpu.dot_dimension_numbers<[1], [0], [0], [1], [0, 0, 1, 1], [], []>} : vector<16x64xbf16>, vector<64x512xbf16>, vector<16x512xf32> -> vector<16x512xf32>
    %c0_3 = arith.constant 0 : index
    %c0_4 = arith.constant 0 : index
    %3 = vector.load %arg3[%c0_3, %c0_4] : memref<16x1xf32, #tpu.memory_space<vmem>>, vector<16x1xf32>
    %4 = vector.broadcast %3 : vector<16x1xf32> to vector<16x512xf32>
    %5 = arith.addf %2, %4 : vector<16x512xf32>
    %cst_5 = arith.constant 0.000000e+00 : f32
    %6 = vector.broadcast %cst_5 : f32 to vector<16x512xf32>
    %7 = arith.cmpf ogt, %5, %6 : vector<16x512xf32>
    %cst_6 = arith.constant 2.000000e-01 : f32
    %8 = vector.broadcast %cst_6 : f32 to vector<16x512xf32>
    %9 = arith.mulf %8, %5 : vector<16x512xf32>
    %10 = arith.select %7, %5, %9 : vector<16x512xi1>, vector<16x512xf32>
    %11 = arith.truncf %10 : vector<16x512xf32> to vector<16x512xbf16>
    %c0_7 = arith.constant 0 : index
    %c0_8 = arith.constant 0 : index
    %12 = vector.load %arg4[%c0_7, %c0_8] : memref<16x512xbf16, #tpu.memory_space<vmem>>, vector<16x512xbf16>
    tpu.vector_store %arg4[%c0_7, %c0_8], %11 {strides = array<i32>} : memref<16x512xbf16, #tpu.memory_space<vmem>>, vector<16x512xbf16>,
    return
  }
  func.func @transform_0(%arg0: i32) -> (i32, i32) {
    %c0_i32 = arith.constant 0 : i32
    %c0_i32_0 = arith.constant 0 : i32
    %c0_i32_1 = arith.constant 0 : i32
    return %c0_i32, %c0_i32_0 : i32, i32
  }
  func.func @transform_1(%arg0: i32) -> (i32, i32) {
    %c0_i32 = arith.constant 0 : i32
    %c0_i32_0 = arith.constant 0 : i32
    return %c0_i32, %arg0 : i32, i32
  }
  func.func @transform_2(%arg0: i32) -> (i32, i32) {
    %c0_i32 = arith.constant 0 : i32
    %c0_i32_0 = arith.constant 0 : i32
    %c0_i32_1 = arith.constant 0 : i32
    return %c0_i32, %c0_i32_0 : i32, i32
  }
  func.func @transform_3(%arg0: i32) -> (i32, i32) {
    %c0_i32 = arith.constant 0 : i32
    %c0_i32_0 = arith.constant 0 : i32
    return %c0_i32, %arg0 : i32, i32
  }
}

module attributes {stable_mosaic.version = 11 : i64} {
  func.func @_fused_gemm_kernel(%arg0: i32, %arg1: memref<16x128xbf16, #tpu.memory_space<vmem>>, %arg2: memref<128x256xbf16, #tpu.memory_space<vmem>>, %arg3: memref<16x1xf32, #tpu.memory_space<vmem>>, %arg4: memref<16x256xbf16, #tpu.memory_space<vmem>>) attributes {dimension_semantics = [#tpu.dimension_semantics<parallel>], iteration_bounds = array<i64: 4>, scalar_prefetch = 0 : i64, scratch_operands = 0 : i64, tpu.core_type = #tpu.core_type<tc>, window_params = [{pipeline_mode = #tpu.pipeline_mode<synchronous>, transform_indices = @transform_0, window_bounds = array<i64: 16, 128>}, {transform_indices = @transform_1, window_bounds = array<i64: 128, 256>}, {pipeline_mode = #tpu.pipeline_mode<synchronous>, transform_indices = @transform_2, window_bounds = array<i64: 16, 1>}, {transform_indices = @transform_3, window_bounds = array<i64: 16, 256>}]} {
    %c0 = arith.constant 0 : index
    %c0_0 = arith.constant 0 : index
    %0 = vector.load %arg1[%c0, %c0_0] : memref<16x128xbf16, #tpu.memory_space<vmem>>, vector<16x128xbf16>
    %c0_1 = arith.constant 0 : index
    %c0_2 = arith.constant 0 : index
    %1 = vector.load %arg2[%c0_1, %c0_2] : memref<128x256xbf16, #tpu.memory_space<vmem>>, vector<128x256xbf16>
    %cst = arith.constant dense<0.000000e+00> : vector<16x256xf32>
    %2 = tpu.matmul %0, %1, %cst {dimension_numbers = #tpu.dot_dimension_numbers<[1], [0], [0], [1], [0, 0, 1, 1], [], []>} : vector<16x128xbf16>, vector<128x256xbf16>, vector<16x256xf32> -> vector<16x256xf32>
    %c0_3 = arith.constant 0 : index
    %c0_4 = arith.constant 0 : index
    %3 = vector.load %arg3[%c0_3, %c0_4] : memref<16x1xf32, #tpu.memory_space<vmem>>, vector<16x1xf32>
    %4 = vector.broadcast %3 : vector<16x1xf32> to vector<16x256xf32>
    %5 = arith.addf %2, %4 : vector<16x256xf32>
    %cst_5 = arith.constant 0.000000e+00 : f32
    %6 = vector.broadcast %cst_5 : f32 to vector<16x256xf32>
    %7 = arith.cmpf ogt, %5, %6 : vector<16x256xf32>
    %cst_6 = arith.constant 2.000000e-01 : f32
    %8 = vector.broadcast %cst_6 : f32 to vector<16x256xf32>
    %9 = arith.mulf %8, %5 : vector<16x256xf32>
    %10 = arith.select %7, %5, %9 : vector<16x256xi1>, vector<16x256xf32>
    %11 = arith.truncf %10 : vector<16x256xf32> to vector<16x256xbf16>
    %c0_7 = arith.constant 0 : index
    %c0_8 = arith.constant 0 : index
    %12 = vector.load %arg4[%c0_7, %c0_8] : memref<16x256xbf16, #tpu.memory_space<vmem>>, vector<16x256xbf16>
    tpu.vector_store %arg4[%c0_7, %c0_8], %11 {strides = array<i32>} : memref<16x256xbf16, #tpu.memory_space<vmem>>, vector<16x256xbf16>,
    return
  }
  func.func @transform_0(%arg0: i32) -> (i32, i32) {
    %c0_i32 = arith.constant 0 : i32
    %c0_i32_0 = arith.constant 0 : i32
    %c0_i32_1 = arith.constant 0 : i32
    return %c0_i32, %c0_i32_0 : i32, i32
  }
  func.func @transform_1(%arg0: i32) -> (i32, i32) {
    %c0_i32 = arith.constant 0 : i32
    %c0_i32_0 = arith.constant 0 : i32
    return %c0_i32, %arg0 : i32, i32
  }
  func.func @transform_2(%arg0: i32) -> (i32, i32) {
    %c0_i32 = arith.constant 0 : i32
    %c0_i32_0 = arith.constant 0 : i32
    %c0_i32_1 = arith.constant 0 : i32
    return %c0_i32, %c0_i32_0 : i32, i32
  }
  func.func @transform_3(%arg0: i32) -> (i32, i32) {
    %c0_i32 = arith.constant 0 : i32
    %c0_i32_0 = arith.constant 0 : i32
    return %c0_i32, %arg0 : i32, i32
  }
}

module attributes {stable_mosaic.version = 11 : i64} {
  func.func @_fused_gemm_kernel(%arg0: i32, %arg1: memref<32x256xbf16, #tpu.memory_space<vmem>>, %arg2: memref<256x256xbf16, #tpu.memory_space<vmem>>, %arg3: memref<32x1xf32, #tpu.memory_space<vmem>>, %arg4: memref<32x256xbf16, #tpu.memory_space<vmem>>) attributes {dimension_semantics = [#tpu.dimension_semantics<parallel>], iteration_bounds = array<i64: 1>, scalar_prefetch = 0 : i64, scratch_operands = 0 : i64, tpu.core_type = #tpu.core_type<tc>, window_params = [{pipeline_mode = #tpu.pipeline_mode<synchronous>, transform_indices = @transform_0, window_bounds = array<i64: 32, 256>}, {transform_indices = @transform_1, window_bounds = array<i64: 256, 256>}, {pipeline_mode = #tpu.pipeline_mode<synchronous>, transform_indices = @transform_2, window_bounds = array<i64: 32, 1>}, {transform_indices = @transform_3, window_bounds = array<i64: 32, 256>}]} {
    %c0 = arith.constant 0 : index
    %c0_0 = arith.constant 0 : index
    %0 = vector.load %arg1[%c0, %c0_0] : memref<32x256xbf16, #tpu.memory_space<vmem>>, vector<32x256xbf16>
    %c0_1 = arith.constant 0 : index
    %c0_2 = arith.constant 0 : index
    %1 = vector.load %arg2[%c0_1, %c0_2] : memref<256x256xbf16, #tpu.memory_space<vmem>>, vector<256x256xbf16>
    %cst = arith.constant dense<0.000000e+00> : vector<32x256xf32>
    %2 = tpu.matmul %0, %1, %cst {dimension_numbers = #tpu.dot_dimension_numbers<[1], [0], [0], [1], [0, 0, 1, 1], [], []>} : vector<32x256xbf16>, vector<256x256xbf16>, vector<32x256xf32> -> vector<32x256xf32>
    %c0_3 = arith.constant 0 : index
    %c0_4 = arith.constant 0 : index
    %3 = vector.load %arg3[%c0_3, %c0_4] : memref<32x1xf32, #tpu.memory_space<vmem>>, vector<32x1xf32>
    %4 = vector.broadcast %3 : vector<32x1xf32> to vector<32x256xf32>
    %5 = arith.addf %2, %4 : vector<32x256xf32>
    %cst_5 = arith.constant 0.000000e+00 : f32
    %6 = vector.broadcast %cst_5 : f32 to vector<32x256xf32>
    %7 = arith.cmpf ogt, %5, %6 : vector<32x256xf32>
    %cst_6 = arith.constant 2.000000e-01 : f32
    %8 = vector.broadcast %cst_6 : f32 to vector<32x256xf32>
    %9 = arith.mulf %8, %5 : vector<32x256xf32>
    %10 = arith.select %7, %5, %9 : vector<32x256xi1>, vector<32x256xf32>
    %11 = arith.truncf %10 : vector<32x256xf32> to vector<32x256xbf16>
    %c0_7 = arith.constant 0 : index
    %c0_8 = arith.constant 0 : index
    %12 = vector.load %arg4[%c0_7, %c0_8] : memref<32x256xbf16, #tpu.memory_space<vmem>>, vector<32x256xbf16>
    tpu.vector_store %arg4[%c0_7, %c0_8], %11 {strides = array<i32>} : memref<32x256xbf16, #tpu.memory_space<vmem>>, vector<32x256xbf16>,
    return
  }
  func.func @transform_0(%arg0: i32) -> (i32, i32) {
    %c0_i32 = arith.constant 0 : i32
    %c0_i32_0 = arith.constant 0 : i32
    %c0_i32_1 = arith.constant 0 : i32
    return %c0_i32, %c0_i32_0 : i32, i32
  }
  func.func @transform_1(%arg0: i32) -> (i32, i32) {
    %c0_i32 = arith.constant 0 : i32
    %c0_i32_0 = arith.constant 0 : i32
    return %c0_i32, %arg0 : i32, i32
  }
  func.func @transform_2(%arg0: i32) -> (i32, i32) {
    %c0_i32 = arith.constant 0 : i32
    %c0_i32_0 = arith.constant 0 : i32
    %c0_i32_1 = arith.constant 0 : i32
    return %c0_i32, %c0_i32_0 : i32, i32
  }
  func.func @transform_3(%arg0: i32) -> (i32, i32) {
    %c0_i32 = arith.constant 0 : i32
    %c0_i32_0 = arith.constant 0 : i32
    return %c0_i32, %arg0 : i32, i32
  }
}

module attributes {stable_mosaic.version = 11 : i64} {
  func.func @_fused_gemm_kernel(%arg0: i32, %arg1: memref<32x512xbf16, #tpu.memory_space<vmem>>, %arg2: memref<512x128xbf16, #tpu.memory_space<vmem>>, %arg3: memref<32x1xf32, #tpu.memory_space<vmem>>, %arg4: memref<32x128xbf16, #tpu.memory_space<vmem>>) attributes {dimension_semantics = [#tpu.dimension_semantics<parallel>], iteration_bounds = array<i64: 1>, scalar_prefetch = 0 : i64, scratch_operands = 0 : i64, tpu.core_type = #tpu.core_type<tc>, window_params = [{pipeline_mode = #tpu.pipeline_mode<synchronous>, transform_indices = @transform_0, window_bounds = array<i64: 32, 512>}, {transform_indices = @transform_1, window_bounds = array<i64: 512, 128>}, {pipeline_mode = #tpu.pipeline_mode<synchronous>, transform_indices = @transform_2, window_bounds = array<i64: 32, 1>}, {transform_indices = @transform_3, window_bounds = array<i64: 32, 128>}]} {
    %c0 = arith.constant 0 : index
    %c0_0 = arith.constant 0 : index
    %0 = vector.load %arg1[%c0, %c0_0] : memref<32x512xbf16, #tpu.memory_space<vmem>>, vector<32x512xbf16>
    %c0_1 = arith.constant 0 : index
    %c0_2 = arith.constant 0 : index
    %1 = vector.load %arg2[%c0_1, %c0_2] : memref<512x128xbf16, #tpu.memory_space<vmem>>, vector<512x128xbf16>
    %cst = arith.constant dense<0.000000e+00> : vector<32x128xf32>
    %2 = tpu.matmul %0, %1, %cst {dimension_numbers = #tpu.dot_dimension_numbers<[1], [0], [0], [1], [0, 0, 1, 1], [], []>} : vector<32x512xbf16>, vector<512x128xbf16>, vector<32x128xf32> -> vector<32x128xf32>
    %c0_3 = arith.constant 0 : index
    %c0_4 = arith.constant 0 : index
    %3 = vector.load %arg3[%c0_3, %c0_4] : memref<32x1xf32, #tpu.memory_space<vmem>>, vector<32x1xf32>
    %4 = vector.broadcast %3 : vector<32x1xf32> to vector<32x128xf32>
    %5 = arith.addf %2, %4 : vector<32x128xf32>
    %cst_5 = arith.constant 0.000000e+00 : f32
    %6 = vector.broadcast %cst_5 : f32 to vector<32x128xf32>
    %7 = arith.cmpf ogt, %5, %6 : vector<32x128xf32>
    %cst_6 = arith.constant 2.000000e-01 : f32
    %8 = vector.broadcast %cst_6 : f32 to vector<32x128xf32>
    %9 = arith.mulf %8, %5 : vector<32x128xf32>
    %10 = arith.select %7, %5, %9 : vector<32x128xi1>, vector<32x128xf32>
    %11 = arith.truncf %10 : vector<32x128xf32> to vector<32x128xbf16>
    %c0_7 = arith.constant 0 : index
    %c0_8 = arith.constant 0 : index
    %12 = vector.load %arg4[%c0_7, %c0_8] : memref<32x128xbf16, #tpu.memory_space<vmem>>, vector<32x128xbf16>
    tpu.vector_store %arg4[%c0_7, %c0_8], %11 {strides = array<i32>} : memref<32x128xbf16, #tpu.memory_space<vmem>>, vector<32x128xbf16>,
    return
  }
  func.func @transform_0(%arg0: i32) -> (i32, i32) {
    %c0_i32 = arith.constant 0 : i32
    %c0_i32_0 = arith.constant 0 : i32
    %c0_i32_1 = arith.constant 0 : i32
    return %c0_i32, %c0_i32_0 : i32, i32
  }
  func.func @transform_1(%arg0: i32) -> (i32, i32) {
    %c0_i32 = arith.constant 0 : i32
    %c0_i32_0 = arith.constant 0 : i32
    return %c0_i32, %arg0 : i32, i32
  }
  func.func @transform_2(%arg0: i32) -> (i32, i32) {
    %c0_i32 = arith.constant 0 : i32
    %c0_i32_0 = arith.constant 0 : i32
    %c0_i32_1 = arith.constant 0 : i32
    return %c0_i32, %c0_i32_0 : i32, i32
  }
  func.func @transform_3(%arg0: i32) -> (i32, i32) {
    %c0_i32 = arith.constant 0 : i32
    %c0_i32_0 = arith.constant 0 : i32
    return %c0_i32, %arg0 : i32, i32
  }
}

module attributes {stable_mosaic.version = 11 : i64} {
  func.func @_fused_gemm_kernel(%arg0: i32, %arg1: memref<32x512xbf16, #tpu.memory_space<vmem>>, %arg2: memref<512x128xbf16, #tpu.memory_space<vmem>>, %arg3: memref<32x1xf32, #tpu.memory_space<vmem>>, %arg4: memref<32x128xbf16, #tpu.memory_space<vmem>>) attributes {dimension_semantics = [#tpu.dimension_semantics<parallel>], iteration_bounds = array<i64: 1>, scalar_prefetch = 0 : i64, scratch_operands = 0 : i64, tpu.core_type = #tpu.core_type<tc>, window_params = [{pipeline_mode = #tpu.pipeline_mode<synchronous>, transform_indices = @transform_0, window_bounds = array<i64: 32, 512>}, {transform_indices = @transform_1, window_bounds = array<i64: 512, 128>}, {pipeline_mode = #tpu.pipeline_mode<synchronous>, transform_indices = @transform_2, window_bounds = array<i64: 32, 1>}, {transform_indices = @transform_3, window_bounds = array<i64: 32, 128>}]} {
    %c0 = arith.constant 0 : index
    %c0_0 = arith.constant 0 : index
    %0 = vector.load %arg1[%c0, %c0_0] : memref<32x512xbf16, #tpu.memory_space<vmem>>, vector<32x512xbf16>
    %c0_1 = arith.constant 0 : index
    %c0_2 = arith.constant 0 : index
    %1 = vector.load %arg2[%c0_1, %c0_2] : memref<512x128xbf16, #tpu.memory_space<vmem>>, vector<512x128xbf16>
    %cst = arith.constant dense<0.000000e+00> : vector<32x128xf32>
    %2 = tpu.matmul %0, %1, %cst {dimension_numbers = #tpu.dot_dimension_numbers<[1], [0], [0], [1], [0, 0, 1, 1], [], []>} : vector<32x512xbf16>, vector<512x128xbf16>, vector<32x128xf32> -> vector<32x128xf32>
    %c0_3 = arith.constant 0 : index
    %c0_4 = arith.constant 0 : index
    %3 = vector.load %arg3[%c0_3, %c0_4] : memref<32x1xf32, #tpu.memory_space<vmem>>, vector<32x1xf32>
    %4 = vector.broadcast %3 : vector<32x1xf32> to vector<32x128xf32>
    %5 = arith.addf %2, %4 : vector<32x128xf32>
    %cst_5 = arith.constant 0.000000e+00 : f32
    %6 = vector.broadcast %cst_5 : f32 to vector<32x128xf32>
    %7 = arith.maximumf %5, %6 : vector<32x128xf32>
    %8 = arith.truncf %7 : vector<32x128xf32> to vector<32x128xbf16>
    %c0_6 = arith.constant 0 : index
    %c0_7 = arith.constant 0 : index
    %9 = vector.load %arg4[%c0_6, %c0_7] : memref<32x128xbf16, #tpu.memory_space<vmem>>, vector<32x128xbf16>
    tpu.vector_store %arg4[%c0_6, %c0_7], %8 {strides = array<i32>} : memref<32x128xbf16, #tpu.memory_space<vmem>>, vector<32x128xbf16>,
    return
  }
  func.func @transform_0(%arg0: i32) -> (i32, i32) {
    %c0_i32 = arith.constant 0 : i32
    %c0_i32_0 = arith.constant 0 : i32
    %c0_i32_1 = arith.constant 0 : i32
    return %c0_i32, %c0_i32_0 : i32, i32
  }
  func.func @transform_1(%arg0: i32) -> (i32, i32) {
    %c0_i32 = arith.constant 0 : i32
    %c0_i32_0 = arith.constant 0 : i32
    return %c0_i32, %arg0 : i32, i32
  }
  func.func @transform_2(%arg0: i32) -> (i32, i32) {
    %c0_i32 = arith.constant 0 : i32
    %c0_i32_0 = arith.constant 0 : i32
    %c0_i32_1 = arith.constant 0 : i32
    return %c0_i32, %c0_i32_0 : i32, i32
  }
  func.func @transform_3(%arg0: i32) -> (i32, i32) {
    %c0_i32 = arith.constant 0 : i32
    %c0_i32_0 = arith.constant 0 : i32
    return %c0_i32, %arg0 : i32, i32
  }
}

module attributes {stable_mosaic.version = 11 : i64} {
  func.func @_fused_gemm_kernel(%arg0: i32, %arg1: memref<128x288xbf16, #tpu.memory_space<vmem>>, %arg2: memref<288x128xbf16, #tpu.memory_space<vmem>>, %arg3: memref<128x1xf32, #tpu.memory_space<vmem>>, %arg4: memref<128x128xbf16, #tpu.memory_space<vmem>>) attributes {dimension_semantics = [#tpu.dimension_semantics<parallel>], iteration_bounds = array<i64: 1>, scalar_prefetch = 0 : i64, scratch_operands = 0 : i64, tpu.core_type = #tpu.core_type<tc>, window_params = [{pipeline_mode = #tpu.pipeline_mode<synchronous>, transform_indices = @transform_0, window_bounds = array<i64: 128, 288>}, {transform_indices = @transform_1, window_bounds = array<i64: 288, 128>}, {pipeline_mode = #tpu.pipeline_mode<synchronous>, transform_indices = @transform_2, window_bounds = array<i64: 128, 1>}, {transform_indices = @transform_3, window_bounds = array<i64: 128, 128>}]} {
    %c0 = arith.constant 0 : index
    %c0_0 = arith.constant 0 : index
    %0 = vector.load %arg1[%c0, %c0_0] : memref<128x288xbf16, #tpu.memory_space<vmem>>, vector<128x288xbf16>
    %c0_1 = arith.constant 0 : index
    %c0_2 = arith.constant 0 : index
    %1 = vector.load %arg2[%c0_1, %c0_2] : memref<288x128xbf16, #tpu.memory_space<vmem>>, vector<288x128xbf16>
    %cst = arith.constant dense<0.000000e+00> : vector<128x128xf32>
    %2 = tpu.matmul %0, %1, %cst {dimension_numbers = #tpu.dot_dimension_numbers<[1], [0], [0], [1], [0, 0, 1, 1], [], []>} : vector<128x288xbf16>, vector<288x128xbf16>, vector<128x128xf32> -> vector<128x128xf32>
    %c0_3 = arith.constant 0 : index
    %c0_4 = arith.constant 0 : index
    %3 = vector.load %arg3[%c0_3, %c0_4] : memref<128x1xf32, #tpu.memory_space<vmem>>, vector<128x1xf32>
    %4 = vector.broadcast %3 : vector<128x1xf32> to vector<128x128xf32>
    %5 = arith.addf %2, %4 : vector<128x128xf32>
    %cst_5 = arith.constant 0.000000e+00 : f32
    %6 = vector.broadcast %cst_5 : f32 to vector<128x128xf32>
    %7 = arith.maximumf %5, %6 : vector<128x128xf32>
    %8 = arith.truncf %7 : vector<128x128xf32> to vector<128x128xbf16>
    %c0_6 = arith.constant 0 : index
    %c0_7 = arith.constant 0 : index
    %9 = vector.load %arg4[%c0_6, %c0_7] : memref<128x128xbf16, #tpu.memory_space<vmem>>, vector<128x128xbf16>
    tpu.vector_store %arg4[%c0_6, %c0_7], %8 {strides = array<i32>} : memref<128x128xbf16, #tpu.memory_space<vmem>>, vector<128x128xbf16>,
    return
  }
  func.func @transform_0(%arg0: i32) -> (i32, i32) {
    %c0_i32 = arith.constant 0 : i32
    %c0_i32_0 = arith.constant 0 : i32
    %c0_i32_1 = arith.constant 0 : i32
    return %c0_i32, %c0_i32_0 : i32, i32
  }
  func.func @transform_1(%arg0: i32) -> (i32, i32) {
    %c0_i32 = arith.constant 0 : i32
    %c0_i32_0 = arith.constant 0 : i32
    return %c0_i32, %arg0 : i32, i32
  }
  func.func @transform_2(%arg0: i32) -> (i32, i32) {
    %c0_i32 = arith.constant 0 : i32
    %c0_i32_0 = arith.constant 0 : i32
    %c0_i32_1 = arith.constant 0 : i32
    return %c0_i32, %c0_i32_0 : i32, i32
  }
  func.func @transform_3(%arg0: i32) -> (i32, i32) {
    %c0_i32 = arith.constant 0 : i32
    %c0_i32_0 = arith.constant 0 : i32
    return %c0_i32, %arg0 : i32, i32
  }
}

module attributes {stable_mosaic.version = 11 : i64} {
  func.func @_fused_gemm_kernel(%arg0: i32, %arg1: memref<128x288xbf16, #tpu.memory_space<vmem>>, %arg2: memref<288x128xbf16, #tpu.memory_space<vmem>>, %arg3: memref<128x288xbf16, #tpu.memory_space<vmem>>, %arg4: memref<288x128xbf16, #tpu.memory_space<vmem>>, %arg5: memref<128x1xf32, #tpu.memory_space<vmem>>, %arg6: memref<128x128xbf16, #tpu.memory_space<vmem>>) attributes {dimension_semantics = [#tpu.dimension_semantics<parallel>], iteration_bounds = array<i64: 1>, scalar_prefetch = 0 : i64, scratch_operands = 0 : i64, tpu.core_type = #tpu.core_type<tc>, window_params = [{pipeline_mode = #tpu.pipeline_mode<synchronous>, transform_indices = @transform_0, window_bounds = array<i64: 128, 288>}, {transform_indices = @transform_1, window_bounds = array<i64: 288, 128>}, {pipeline_mode = #tpu.pipeline_mode<synchronous>, transform_indices = @transform_2, window_bounds = array<i64: 128, 288>}, {transform_indices = @transform_3, window_bounds = array<i64: 288, 128>}, {pipeline_mode = #tpu.pipeline_mode<synchronous>, transform_indices = @transform_4, window_bounds = array<i64: 128, 1>}, {transform_indices = @transform_5, window_bounds = array<i64: 128, 128>}]} {
    %c0 = arith.constant 0 : index
    %c0_0 = arith.constant 0 : index
    %0 = vector.load %arg1[%c0, %c0_0] : memref<128x288xbf16, #tpu.memory_space<vmem>>, vector<128x288xbf16>
    %c0_1 = arith.constant 0 : index
    %c0_2 = arith.constant 0 : index
    %1 = vector.load %arg2[%c0_1, %c0_2] : memref<288x128xbf16, #tpu.memory_space<vmem>>, vector<288x128xbf16>
    %cst = arith.constant dense<0.000000e+00> : vector<128x128xf32>
    %2 = tpu.matmul %0, %1, %cst {dimension_numbers = #tpu.dot_dimension_numbers<[1], [0], [0], [1], [0, 0, 1, 1], [], []>} : vector<128x288xbf16>, vector<288x128xbf16>, vector<128x128xf32> -> vector<128x128xf32>
    %c0_3 = arith.constant 0 : index
    %c0_4 = arith.constant 0 : index
    %3 = vector.load %arg3[%c0_3, %c0_4] : memref<128x288xbf16, #tpu.memory_space<vmem>>, vector<128x288xbf16>
    %c0_5 = arith.constant 0 : index
    %c0_6 = arith.constant 0 : index
    %4 = vector.load %arg4[%c0_5, %c0_6] : memref<288x128xbf16, #tpu.memory_space<vmem>>, vector<288x128xbf16>
    %cst_7 = arith.constant dense<0.000000e+00> : vector<128x128xf32>
    %5 = tpu.matmul %3, %4, %cst_7 {dimension_numbers = #tpu.dot_dimension_numbers<[1], [0], [0], [1], [0, 0, 1, 1], [], []>} : vector<128x288xbf16>, vector<288x128xbf16>, vector<128x128xf32> -> vector<128x128xf32>
    %6 = arith.addf %2, %5 : vector<128x128xf32>
    %c0_8 = arith.constant 0 : index
    %c0_9 = arith.constant 0 : index
    %7 = vector.load %arg5[%c0_8, %c0_9] : memref<128x1xf32, #tpu.memory_space<vmem>>, vector<128x1xf32>
    %8 = vector.broadcast %7 : vector<128x1xf32> to vector<128x128xf32>
    %9 = arith.addf %6, %8 : vector<128x128xf32>
    %cst_10 = arith.constant 0.000000e+00 : f32
    %10 = vector.broadcast %cst_10 : f32 to vector<128x128xf32>
    %11 = arith.maximumf %9, %10 : vector<128x128xf32>
    %12 = arith.truncf %11 : vector<128x128xf32> to vector<128x128xbf16>
    %c0_11 = arith.constant 0 : index
    %c0_12 = arith.constant 0 : index
    %13 = vector.load %arg6[%c0_11, %c0_12] : memref<128x128xbf16, #tpu.memory_space<vmem>>, vector<128x128xbf16>
    tpu.vector_store %arg6[%c0_11, %c0_12], %12 {strides = array<i32>} : memref<128x128xbf16, #tpu.memory_space<vmem>>, vector<128x128xbf16>,
    return
  }
  func.func @transform_0(%arg0: i32) -> (i32, i32) {
    %c0_i32 = arith.constant 0 : i32
    %c0_i32_0 = arith.constant 0 : i32
    %c0_i32_1 = arith.constant 0 : i32
    return %c0_i32, %c0_i32_0 : i32, i32
  }
  func.func @transform_1(%arg0: i32) -> (i32, i32) {
    %c0_i32 = arith.constant 0 : i32
    %c0_i32_0 = arith.constant 0 : i32
    return %c0_i32, %arg0 : i32, i32
  }
  func.func @transform_2(%arg0: i32) -> (i32, i32) {
    %c0_i32 = arith.constant 0 : i32
    %c0_i32_0 = arith.constant 0 : i32
    %c0_i32_1 = arith.constant 0 : i32
    return %c0_i32, %c0_i32_0 : i32, i32
  }
  func.func @transform_3(%arg0: i32) -> (i32, i32) {
    %c0_i32 = arith.constant 0 : i32
    %c0_i32_0 = arith.constant 0 : i32
    return %c0_i32, %arg0 : i32, i32
  }
  func.func @transform_4(%arg0: i32) -> (i32, i32) {
    %c0_i32 = arith.constant 0 : i32
    %c0_i32_0 = arith.constant 0 : i32
    %c0_i32_1 = arith.constant 0 : i32
    return %c0_i32, %c0_i32_0 : i32, i32
  }
  func.func @transform_5(%arg0: i32) -> (i32, i32) {
    %c0_i32 = arith.constant 0 : i32
    %c0_i32_0 = arith.constant 0 : i32
    return %c0_i32, %arg0 : i32, i32
  }
}

module attributes {stable_mosaic.version = 11 : i64} {
  func.func @_fused_gemm_kernel(%arg0: i32, %arg1: memref<64x288xbf16, #tpu.memory_space<vmem>>, %arg2: memref<288x256xbf16, #tpu.memory_space<vmem>>, %arg3: memref<64x288xbf16, #tpu.memory_space<vmem>>, %arg4: memref<288x256xbf16, #tpu.memory_space<vmem>>, %arg5: memref<64x1xf32, #tpu.memory_space<vmem>>, %arg6: memref<64x256xbf16, #tpu.memory_space<vmem>>) attributes {dimension_semantics = [#tpu.dimension_semantics<parallel>], iteration_bounds = array<i64: 1>, scalar_prefetch = 0 : i64, scratch_operands = 0 : i64, tpu.core_type = #tpu.core_type<tc>, window_params = [{pipeline_mode = #tpu.pipeline_mode<synchronous>, transform_indices = @transform_0, window_bounds = array<i64: 64, 288>}, {transform_indices = @transform_1, window_bounds = array<i64: 288, 256>}, {pipeline_mode = #tpu.pipeline_mode<synchronous>, transform_indices = @transform_2, window_bounds = array<i64: 64, 288>}, {transform_indices = @transform_3, window_bounds = array<i64: 288, 256>}, {pipeline_mode = #tpu.pipeline_mode<synchronous>, transform_indices = @transform_4, window_bounds = array<i64: 64, 1>}, {transform_indices = @transform_5, window_bounds = array<i64: 64, 256>}]} {
    %c0 = arith.constant 0 : index
    %c0_0 = arith.constant 0 : index
    %0 = vector.load %arg1[%c0, %c0_0] : memref<64x288xbf16, #tpu.memory_space<vmem>>, vector<64x288xbf16>
    %c0_1 = arith.constant 0 : index
    %c0_2 = arith.constant 0 : index
    %1 = vector.load %arg2[%c0_1, %c0_2] : memref<288x256xbf16, #tpu.memory_space<vmem>>, vector<288x256xbf16>
    %cst = arith.constant dense<0.000000e+00> : vector<64x256xf32>
    %2 = tpu.matmul %0, %1, %cst {dimension_numbers = #tpu.dot_dimension_numbers<[1], [0], [0], [1], [0, 0, 1, 1], [], []>} : vector<64x288xbf16>, vector<288x256xbf16>, vector<64x256xf32> -> vector<64x256xf32>
    %c0_3 = arith.constant 0 : index
    %c0_4 = arith.constant 0 : index
    %3 = vector.load %arg3[%c0_3, %c0_4] : memref<64x288xbf16, #tpu.memory_space<vmem>>, vector<64x288xbf16>
    %c0_5 = arith.constant 0 : index
    %c0_6 = arith.constant 0 : index
    %4 = vector.load %arg4[%c0_5, %c0_6] : memref<288x256xbf16, #tpu.memory_space<vmem>>, vector<288x256xbf16>
    %cst_7 = arith.constant dense<0.000000e+00> : vector<64x256xf32>
    %5 = tpu.matmul %3, %4, %cst_7 {dimension_numbers = #tpu.dot_dimension_numbers<[1], [0], [0], [1], [0, 0, 1, 1], [], []>} : vector<64x288xbf16>, vector<288x256xbf16>, vector<64x256xf32> -> vector<64x256xf32>
    %6 = arith.addf %2, %5 : vector<64x256xf32>
    %c0_8 = arith.constant 0 : index
    %c0_9 = arith.constant 0 : index
    %7 = vector.load %arg5[%c0_8, %c0_9] : memref<64x1xf32, #tpu.memory_space<vmem>>, vector<64x1xf32>
    %8 = vector.broadcast %7 : vector<64x1xf32> to vector<64x256xf32>
    %9 = arith.addf %6, %8 : vector<64x256xf32>
    %cst_10 = arith.constant 0.000000e+00 : f32
    %10 = vector.broadcast %cst_10 : f32 to vector<64x256xf32>
    %11 = arith.maximumf %9, %10 : vector<64x256xf32>
    %12 = arith.truncf %11 : vector<64x256xf32> to vector<64x256xbf16>
    %c0_11 = arith.constant 0 : index
    %c0_12 = arith.constant 0 : index
    %13 = vector.load %arg6[%c0_11, %c0_12] : memref<64x256xbf16, #tpu.memory_space<vmem>>, vector<64x256xbf16>
    tpu.vector_store %arg6[%c0_11, %c0_12], %12 {strides = array<i32>} : memref<64x256xbf16, #tpu.memory_space<vmem>>, vector<64x256xbf16>,
    return
  }
  func.func @transform_0(%arg0: i32) -> (i32, i32) {
    %c0_i32 = arith.constant 0 : i32
    %c0_i32_0 = arith.constant 0 : i32
    %c0_i32_1 = arith.constant 0 : i32
    return %c0_i32, %c0_i32_0 : i32, i32
  }
  func.func @transform_1(%arg0: i32) -> (i32, i32) {
    %c0_i32 = arith.constant 0 : i32
    %c0_i32_0 = arith.constant 0 : i32
    return %c0_i32, %arg0 : i32, i32
  }
  func.func @transform_2(%arg0: i32) -> (i32, i32) {
    %c0_i32 = arith.constant 0 : i32
    %c0_i32_0 = arith.constant 0 : i32
    %c0_i32_1 = arith.constant 0 : i32
    return %c0_i32, %c0_i32_0 : i32, i32
  }
  func.func @transform_3(%arg0: i32) -> (i32, i32) {
    %c0_i32 = arith.constant 0 : i32
    %c0_i32_0 = arith.constant 0 : i32
    return %c0_i32, %arg0 : i32, i32
  }
  func.func @transform_4(%arg0: i32) -> (i32, i32) {
    %c0_i32 = arith.constant 0 : i32
    %c0_i32_0 = arith.constant 0 : i32
    %c0_i32_1 = arith.constant 0 : i32
    return %c0_i32, %c0_i32_0 : i32, i32
  }
  func.func @transform_5(%arg0: i32) -> (i32, i32) {
    %c0_i32 = arith.constant 0 : i32
    %c0_i32_0 = arith.constant 0 : i32
    return %c0_i32, %arg0 : i32, i32
  }
}

module attributes {stable_mosaic.version = 11 : i64} {
  func.func @_fused_gemm_kernel(%arg0: i32, %arg1: memref<32x144xbf16, #tpu.memory_space<vmem>>, %arg2: memref<144x256xbf16, #tpu.memory_space<vmem>>, %arg3: memref<32x144xbf16, #tpu.memory_space<vmem>>, %arg4: memref<144x256xbf16, #tpu.memory_space<vmem>>, %arg5: memref<32x1xf32, #tpu.memory_space<vmem>>, %arg6: memref<32x256xbf16, #tpu.memory_space<vmem>>) attributes {dimension_semantics = [#tpu.dimension_semantics<parallel>], iteration_bounds = array<i64: 4>, scalar_prefetch = 0 : i64, scratch_operands = 0 : i64, tpu.core_type = #tpu.core_type<tc>, window_params = [{pipeline_mode = #tpu.pipeline_mode<synchronous>, transform_indices = @transform_0, window_bounds = array<i64: 32, 144>}, {transform_indices = @transform_1, window_bounds = array<i64: 144, 256>}, {pipeline_mode = #tpu.pipeline_mode<synchronous>, transform_indices = @transform_2, window_bounds = array<i64: 32, 144>}, {transform_indices = @transform_3, window_bounds = array<i64: 144, 256>}, {pipeline_mode = #tpu.pipeline_mode<synchronous>, transform_indices = @transform_4, window_bounds = array<i64: 32, 1>}, {transform_indices = @transform_5, window_bounds = array<i64: 32, 256>}]} {
    %c0 = arith.constant 0 : index
    %c0_0 = arith.constant 0 : index
    %0 = vector.load %arg1[%c0, %c0_0] : memref<32x144xbf16, #tpu.memory_space<vmem>>, vector<32x144xbf16>
    %c0_1 = arith.constant 0 : index
    %c0_2 = arith.constant 0 : index
    %1 = vector.load %arg2[%c0_1, %c0_2] : memref<144x256xbf16, #tpu.memory_space<vmem>>, vector<144x256xbf16>
    %cst = arith.constant dense<0.000000e+00> : vector<32x256xf32>
    %2 = tpu.matmul %0, %1, %cst {dimension_numbers = #tpu.dot_dimension_numbers<[1], [0], [0], [1], [0, 0, 1, 1], [], []>} : vector<32x144xbf16>, vector<144x256xbf16>, vector<32x256xf32> -> vector<32x256xf32>
    %c0_3 = arith.constant 0 : index
    %c0_4 = arith.constant 0 : index
    %3 = vector.load %arg3[%c0_3, %c0_4] : memref<32x144xbf16, #tpu.memory_space<vmem>>, vector<32x144xbf16>
    %c0_5 = arith.constant 0 : index
    %c0_6 = arith.constant 0 : index
    %4 = vector.load %arg4[%c0_5, %c0_6] : memref<144x256xbf16, #tpu.memory_space<vmem>>, vector<144x256xbf16>
    %cst_7 = arith.constant dense<0.000000e+00> : vector<32x256xf32>
    %5 = tpu.matmul %3, %4, %cst_7 {dimension_numbers = #tpu.dot_dimension_numbers<[1], [0], [0], [1], [0, 0, 1, 1], [], []>} : vector<32x144xbf16>, vector<144x256xbf16>, vector<32x256xf32> -> vector<32x256xf32>
    %6 = arith.addf %2, %5 : vector<32x256xf32>
    %c0_8 = arith.constant 0 : index
    %c0_9 = arith.constant 0 : index
    %7 = vector.load %arg5[%c0_8, %c0_9] : memref<32x1xf32, #tpu.memory_space<vmem>>, vector<32x1xf32>
    %8 = vector.broadcast %7 : vector<32x1xf32> to vector<32x256xf32>
    %9 = arith.addf %6, %8 : vector<32x256xf32>
    %cst_10 = arith.constant 0.000000e+00 : f32
    %10 = vector.broadcast %cst_10 : f32 to vector<32x256xf32>
    %11 = arith.maximumf %9, %10 : vector<32x256xf32>
    %12 = arith.truncf %11 : vector<32x256xf32> to vector<32x256xbf16>
    %c0_11 = arith.constant 0 : index
    %c0_12 = arith.constant 0 : index
    %13 = vector.load %arg6[%c0_11, %c0_12] : memref<32x256xbf16, #tpu.memory_space<vmem>>, vector<32x256xbf16>
    tpu.vector_store %arg6[%c0_11, %c0_12], %12 {strides = array<i32>} : memref<32x256xbf16, #tpu.memory_space<vmem>>, vector<32x256xbf16>,
    return
  }
  func.func @transform_0(%arg0: i32) -> (i32, i32) {
    %c0_i32 = arith.constant 0 : i32
    %c0_i32_0 = arith.constant 0 : i32
    %c0_i32_1 = arith.constant 0 : i32
    return %c0_i32, %c0_i32_0 : i32, i32
  }
  func.func @transform_1(%arg0: i32) -> (i32, i32) {
    %c0_i32 = arith.constant 0 : i32
    %c0_i32_0 = arith.constant 0 : i32
    return %c0_i32, %arg0 : i32, i32
  }
  func.func @transform_2(%arg0: i32) -> (i32, i32) {
    %c0_i32 = arith.constant 0 : i32
    %c0_i32_0 = arith.constant 0 : i32
    %c0_i32_1 = arith.constant 0 : i32
    return %c0_i32, %c0_i32_0 : i32, i32
  }
  func.func @transform_3(%arg0: i32) -> (i32, i32) {
    %c0_i32 = arith.constant 0 : i32
    %c0_i32_0 = arith.constant 0 : i32
    return %c0_i32, %arg0 : i32, i32
  }
  func.func @transform_4(%arg0: i32) -> (i32, i32) {
    %c0_i32 = arith.constant 0 : i32
    %c0_i32_0 = arith.constant 0 : i32
    %c0_i32_1 = arith.constant 0 : i32
    return %c0_i32, %c0_i32_0 : i32, i32
  }
  func.func @transform_5(%arg0: i32) -> (i32, i32) {
    %c0_i32 = arith.constant 0 : i32
    %c0_i32_0 = arith.constant 0 : i32
    return %c0_i32, %arg0 : i32, i32
  }
}

module attributes {stable_mosaic.version = 11 : i64} {
  func.func @_fused_gemm_kernel(%arg0: i32, %arg1: memref<16x72xbf16, #tpu.memory_space<vmem>>, %arg2: memref<72x512xbf16, #tpu.memory_space<vmem>>, %arg3: memref<16x72xbf16, #tpu.memory_space<vmem>>, %arg4: memref<72x512xbf16, #tpu.memory_space<vmem>>, %arg5: memref<16x1xf32, #tpu.memory_space<vmem>>, %arg6: memref<16x512xbf16, #tpu.memory_space<vmem>>) attributes {dimension_semantics = [#tpu.dimension_semantics<parallel>], iteration_bounds = array<i64: 8>, scalar_prefetch = 0 : i64, scratch_operands = 0 : i64, tpu.core_type = #tpu.core_type<tc>, window_params = [{pipeline_mode = #tpu.pipeline_mode<synchronous>, transform_indices = @transform_0, window_bounds = array<i64: 16, 72>}, {transform_indices = @transform_1, window_bounds = array<i64: 72, 512>}, {pipeline_mode = #tpu.pipeline_mode<synchronous>, transform_indices = @transform_2, window_bounds = array<i64: 16, 72>}, {transform_indices = @transform_3, window_bounds = array<i64: 72, 512>}, {pipeline_mode = #tpu.pipeline_mode<synchronous>, transform_indices = @transform_4, window_bounds = array<i64: 16, 1>}, {transform_indices = @transform_5, window_bounds = array<i64: 16, 512>}]} {
    %c0 = arith.constant 0 : index
    %c0_0 = arith.constant 0 : index
    %0 = vector.load %arg1[%c0, %c0_0] : memref<16x72xbf16, #tpu.memory_space<vmem>>, vector<16x72xbf16>
    %c0_1 = arith.constant 0 : index
    %c0_2 = arith.constant 0 : index
    %1 = vector.load %arg2[%c0_1, %c0_2] : memref<72x512xbf16, #tpu.memory_space<vmem>>, vector<72x512xbf16>
    %cst = arith.constant dense<0.000000e+00> : vector<16x512xf32>
    %2 = tpu.matmul %0, %1, %cst {dimension_numbers = #tpu.dot_dimension_numbers<[1], [0], [0], [1], [0, 0, 1, 1], [], []>} : vector<16x72xbf16>, vector<72x512xbf16>, vector<16x512xf32> -> vector<16x512xf32>
    %c0_3 = arith.constant 0 : index
    %c0_4 = arith.constant 0 : index
    %3 = vector.load %arg3[%c0_3, %c0_4] : memref<16x72xbf16, #tpu.memory_space<vmem>>, vector<16x72xbf16>
    %c0_5 = arith.constant 0 : index
    %c0_6 = arith.constant 0 : index
    %4 = vector.load %arg4[%c0_5, %c0_6] : memref<72x512xbf16, #tpu.memory_space<vmem>>, vector<72x512xbf16>
    %cst_7 = arith.constant dense<0.000000e+00> : vector<16x512xf32>
    %5 = tpu.matmul %3, %4, %cst_7 {dimension_numbers = #tpu.dot_dimension_numbers<[1], [0], [0], [1], [0, 0, 1, 1], [], []>} : vector<16x72xbf16>, vector<72x512xbf16>, vector<16x512xf32> -> vector<16x512xf32>
    %6 = arith.addf %2, %5 : vector<16x512xf32>
    %c0_8 = arith.constant 0 : index
    %c0_9 = arith.constant 0 : index
    %7 = vector.load %arg5[%c0_8, %c0_9] : memref<16x1xf32, #tpu.memory_space<vmem>>, vector<16x1xf32>
    %8 = vector.broadcast %7 : vector<16x1xf32> to vector<16x512xf32>
    %9 = arith.addf %6, %8 : vector<16x512xf32>
    %cst_10 = arith.constant 0.000000e+00 : f32
    %10 = vector.broadcast %cst_10 : f32 to vector<16x512xf32>
    %11 = arith.maximumf %9, %10 : vector<16x512xf32>
    %12 = arith.truncf %11 : vector<16x512xf32> to vector<16x512xbf16>
    %c0_11 = arith.constant 0 : index
    %c0_12 = arith.constant 0 : index
    %13 = vector.load %arg6[%c0_11, %c0_12] : memref<16x512xbf16, #tpu.memory_space<vmem>>, vector<16x512xbf16>
    tpu.vector_store %arg6[%c0_11, %c0_12], %12 {strides = array<i32>} : memref<16x512xbf16, #tpu.memory_space<vmem>>, vector<16x512xbf16>,
    return
  }
  func.func @transform_0(%arg0: i32) -> (i32, i32) {
    %c0_i32 = arith.constant 0 : i32
    %c0_i32_0 = arith.constant 0 : i32
    %c0_i32_1 = arith.constant 0 : i32
    return %c0_i32, %c0_i32_0 : i32, i32
  }
  func.func @transform_1(%arg0: i32) -> (i32, i32) {
    %c0_i32 = arith.constant 0 : i32
    %c0_i32_0 = arith.constant 0 : i32
    return %c0_i32, %arg0 : i32, i32
  }
  func.func @transform_2(%arg0: i32) -> (i32, i32) {
    %c0_i32 = arith.constant 0 : i32
    %c0_i32_0 = arith.constant 0 : i32
    %c0_i32_1 = arith.constant 0 : i32
    return %c0_i32, %c0_i32_0 : i32, i32
  }
  func.func @transform_3(%arg0: i32) -> (i32, i32) {
    %c0_i32 = arith.constant 0 : i32
    %c0_i32_0 = arith.constant 0 : i32
    return %c0_i32, %arg0 : i32, i32
  }
  func.func @transform_4(%arg0: i32) -> (i32, i32) {
    %c0_i32 = arith.constant 0 : i32
    %c0_i32_0 = arith.constant 0 : i32
    %c0_i32_1 = arith.constant 0 : i32
    return %c0_i32, %c0_i32_0 : i32, i32
  }
  func.func @transform_5(%arg0: i32) -> (i32, i32) {
    %c0_i32 = arith.constant 0 : i32
    %c0_i32_0 = arith.constant 0 : i32
    return %c0_i32, %arg0 : i32, i32
  }
}

</mosaic_0001>

<llo_original>
// kernel: forward.15
$region0: #{forward.15}
  #allocation0 [shape = 'u32[]', space=smem, size = 0x4, offset = 0x4, fixed_abs, tag = 'smem constant byte address 0x4 - core index']
  #allocation1 [shape = 'u32[144,128]{1,0:T(1,128)}', space=vmem, size = 0x12000, scoped, tag = 'internal scratch']
  %s0 = inlined_call_operand.vmem [shape: bf16[16,48], index: 0, kind: input, shape index: {}]
  %s1 = inlined_call_operand.vmem [shape: bf16[48,16384], index: 1, kind: input, shape index: {}]
  %s2 = inlined_call_operand.vmem [shape: f32[16,1], index: 2, kind: input, shape index: {}]
  %s3 = inlined_call_operand.vmem [shape: bf16[16,16384], index: 3, kind: output, shape index: {}]
  %s4 = sld [smem:[#allocation0]]
  $region87: #{forward.15} parent=0
    _
  %s6 = ssub.s32 1, %s4
  %s7 = scalar_select 0, %s6, %s4
  $region1: #{forward.15} parent=0
    #allocation2 [shape = 'u8[196608]{0}', space=vmem, size = 0x30000, scoped, tag = 'input window, operand 1']
    #allocation3 [shape = 'u8[65536]{0}', space=vmem, size = 0x10000, scoped, tag = 'output window, operand 0']
    loop: start=0, step=1, limit=18
    $region2: #{forward.15} parent=1 // loop_pre_header
      _
    $region3: #{forward.15} parent=1 // loop_header
      %s9 = sphi 0, %s13
      %p10 = scmp.ge.s32.totalorder %s9, 18
      %s17 = sphi 0, %s17
      %s19 = sphi 0, %s17
      %s20 = sphi 0, %s19
      %s34 = sphi 0, %s20
      %s40 = sphi 0, %s42
      %s43 = sphi 0, %s40
      %s44 = sphi 0, %s43
      %s60 = sphi 0, %s44
      %s64 = sphi 0, %s64
      %s66 = sphi 0, %s64
      %s67 = sphi 0, %s66
      %s81 = sphi 0, %s67
      %s87 = sphi 0, %s89
      %s90 = sphi 0, %s87
      %s91 = sphi 0, %s90
      %s107 = sphi 0, %s91
    $region4: #{forward.15} parent=1 // loop_header_branch
      %12 = sbr.rel (%p10) target = $region8
    $region5: #{forward.15} parent=1 // loop_body
      %s14 = ssub.s32 %s9, 1
      %s15 = ssub.s32 %s9, 2
      %s16 = sadd.s32 %s9, 1
      %s18 = sadd.s32 %s17, 1
      %p21 = scmp.eq.s32.totalorder %s9, 15
      %p22 = scmp.ne.s32.totalorder %s17, %s19
      %p23 = scmp.eq.s32.totalorder %s9, 0
      %p24 = por %p22, %p23
      %p25 = scmp.ne.s32.totalorder %s17, %s19
      %p26 = scmp.eq.s32.totalorder %s14, 15
      %p27 = por %p25, %p26
      %p28 = scmp.ne.s32.totalorder %s19, %s20
      %p29 = scmp.eq.s32.totalorder %s14, 0
      %p30 = por %p28, %p29
      %p31 = scmp.ne.s32.totalorder %s19, %s20
      %p32 = scmp.eq.s32.totalorder %s15, 15
      %p33 = por %p31, %p32
      %p35 = scmp.ne.s32.totalorder %s20, %s34
      %p36 = scmp.eq.s32.totalorder %s15, 0
      %p37 = por %p35, %p36
      %s38 = ssub.s32 %s9, %s16
      %p39 = scmp.eq.s32.totalorder %s38, 0
      %s41 = sadd.s32 %s40, 1
      %s42 = scalar_select %p39, %s40, %s41
      %p45 = pneg %p39
      %p46 = scmp.eq.s32.totalorder %s9, 15
      %p47 = por %p45, %p46
      %p48 = scmp.ne.s32.totalorder %s40, %s43
      %p49 = scmp.eq.s32.totalorder %s9, 0
      %p50 = por %p48, %p49
      %p51 = scmp.ne.s32.totalorder %s40, %s43
      %p52 = scmp.eq.s32.totalorder %s14, 15
      %p53 = por %p51, %p52
      %p54 = scmp.ne.s32.totalorder %s43, %s44
      %p55 = scmp.eq.s32.totalorder %s14, 0
      %p56 = por %p54, %p55
      %p57 = scmp.ne.s32.totalorder %s43, %s44
      %p58 = scmp.eq.s32.totalorder %s15, 15
      %p59 = por %p57, %p58
      %p61 = scmp.ne.s32.totalorder %s44, %s60
      %p62 = scmp.eq.s32.totalorder %s15, 0
      %p63 = por %p61, %p62
      %s65 = sadd.s32 %s64, 1
      %p68 = scmp.eq.s32.totalorder %s9, 15
      %p69 = scmp.ne.s32.totalorder %s64, %s66
      %p70 = scmp.eq.s32.totalorder %s9, 0
      %p71 = por %p69, %p70
      %p72 = scmp.ne.s32.totalorder %s64, %s66
      %p73 = scmp.eq.s32.totalorder %s14, 15
      %p74 = por %p72, %p73
      %p75 = scmp.ne.s32.totalorder %s66, %s67
      %p76 = scmp.eq.s32.totalorder %s14, 0
      %p77 = por %p75, %p76
      %p78 = scmp.ne.s32.totalorder %s66, %s67
      %p79 = scmp.eq.s32.totalorder %s15, 15
      %p80 = por %p78, %p79
      %p82 = scmp.ne.s32.totalorder %s67, %s81
      %p83 = scmp.eq.s32.totalorder %s15, 0
      %p84 = por %p82, %p83
      %s85 = ssub.s32 %s9, %s16
      %p86 = scmp.eq.s32.totalorder %s85, 0
      %s88 = sadd.s32 %s87, 1
      %s89 = scalar_select %p86, %s87, %s88
      %p92 = pneg %p86
      %p93 = scmp.eq.s32.totalorder %s9, 15
      %p94 = por %p92, %p93
      %p95 = scmp.ne.s32.totalorder %s87, %s90
      %p96 = scmp.eq.s32.totalorder %s9, 0
      %p97 = por %p95, %p96
      %p98 = scmp.ne.s32.totalorder %s87, %s90
      %p99 = scmp.eq.s32.totalorder %s14, 15
      %p100 = por %p98, %p99
      %p101 = scmp.ne.s32.totalorder %s90, %s91
      %p102 = scmp.eq.s32.totalorder %s14, 0
      %p103 = por %p101, %p102
      %p104 = scmp.ne.s32.totalorder %s90, %s91
      %p105 = scmp.eq.s32.totalorder %s15, 15
      %p106 = por %p104, %p105
      %p108 = scmp.ne.s32.totalorder %s91, %s107
      %p109 = scmp.eq.s32.totalorder %s15, 0
      %p110 = por %p108, %p109
      %p111 = scmp.le.s32.totalorder 1, %s9
      %p112 = scmp.lt.s32.totalorder %s9, 17
      %p113 = pnand %p111, %p112
      %p114 = pneg %p113
      // Predicated region
      $region9: #{forward.15} parent=5 // pred_check
        _
      $region10: #{forward.15} parent=5 // pred_check_branch
        %116 = sbr.rel (%p113) target = $region12
      $region11: #{forward.15} parent=5 // pred_region
        %s117 = ssub.s32 %s9, 1
        // Predicated region
        $region13: #{forward.15} parent=11 // pred_check
          %p118 = pneg %p30
        $region14: #{forward.15} parent=11 // pred_check_branch
          %120 = sbr.rel (%p118) target = $region16
        $region15: #{forward.15} parent=11 // pred_region
          _
        $region16: #{forward.15} parent=11 // pred_fallthru
          _
        // Predicated region
        $region17: #{forward.15} parent=11 // pred_check
          %p121 = pneg %p77
        $region18: #{forward.15} parent=11 // pred_check_branch
          %123 = sbr.rel (%p121) target = $region20
        $region19: #{forward.15} parent=11 // pred_region
          _
        $region20: #{forward.15} parent=11 // pred_fallthru
          _
      $region12: #{forward.15} parent=5 // pred_fallthru
        _
      %p124 = scmp.lt.s32.totalorder %s9, 16
      // Predicated region
      $region21: #{forward.15} parent=5 // pred_check
        %p125 = pneg %p124
      $region22: #{forward.15} parent=5 // pred_check_branch
        %127 = sbr.rel (%p125) target = $region24
      $region23: #{forward.15} parent=5 // pred_region
        // Predicated region
        $region25: #{forward.15} parent=23 // pred_check
          %p128 = pneg %p50
        $region26: #{forward.15} parent=23 // pred_check_branch
          %130 = sbr.rel (%p128) target = $region28
        $region27: #{forward.15} parent=23 // pred_region
          %s131 = sand.u32 %s40, 1
          %s132 = sand.u32 %s40, 1
          %s133 = smul.addr %s132, 192
          %s134 = scalar_lea.vmem [#allocation2], %s133
          %s135 = smul.u32 8, %s9
          %s136 = smul.addr %s135, 4
          %s137 = scalar_lea.vmem %s1, %s136
          // Predicated region
          $region29: #{forward.15} parent=27 // pred_check
            _
          $region30: #{forward.15} parent=27 // pred_check_branch
            %139 = sbr.rel (0) target = $region32
          $region31: #{forward.15} parent=27 // pred_region
            // Predicated region
            $region33: #{forward.15} parent=31 // pred_check
              _
            $region34: #{forward.15} parent=31 // pred_check_branch
              %141 = sbr.rel (0) target = $region36
            $region35: #{forward.15} parent=31 // pred_region
              loop: start=0, step=1, limit=1
              $region37: #{forward.15} parent=35 // loop_pre_header
                _
              $region38: #{forward.15} parent=35 // loop_header
                %s143 = sphi 0, %s147
                %p144 = scmp.ge.s32.totalorder %s143, 1
                %s148 = sphi %s137, %s137
                %s149 = sphi %s134, %s134
              $region39: #{forward.15} parent=35 // loop_header_branch
                %146 = sbr.rel (%p144) target = $region43
              $region40: #{forward.15} parent=35 // loop_body
                %v150 = vld [vmem:[%s148] sm:$0xff]
                %151 = vst [vmem:[%s149] sm:$0xff] %v150
                %v152 = vld [vmem:[%s148 + $0x8] sm:$0xff]
                %153 = vst [vmem:[%s149 + $0x8] sm:$0xff] %v152
                %v154 = vld [vmem:[%s148 + $0x10] sm:$0xff]
                %155 = vst [vmem:[%s149 + $0x10] sm:$0xff] %v154
                %v156 = vld [vmem:[%s148 + $0x18] sm:$0xff]
                %157 = vst [vmem:[%s149 + $0x18] sm:$0xff] %v156
                %v158 = vld [vmem:[%s148 + $0x200] sm:$0xff]
                %159 = vst [vmem:[%s149 + $0x20] sm:$0xff] %v158
                %v160 = vld [vmem:[%s148 + $0x208] sm:$0xff]
                %161 = vst [vmem:[%s149 + $0x28] sm:$0xff] %v160
                %v162 = vld [vmem:[%s148 + $0x210] sm:$0xff]
                %163 = vst [vmem:[%s149 + $0x30] sm:$0xff] %v162
                %v164 = vld [vmem:[%s148 + $0x218] sm:$0xff]
                %165 = vst [vmem:[%s149 + $0x38] sm:$0xff] %v164
                %v166 = vld [vmem:[%s148 + $0x400] sm:$0xff]
                %167 = vst [vmem:[%s149 + $0x40] sm:$0xff] %v166
                %v168 = vld [vmem:[%s148 + $0x408] sm:$0xff]
                %169 = vst [vmem:[%s149 + $0x48] sm:$0xff] %v168
                %v170 = vld [vmem:[%s148 + $0x410] sm:$0xff]
                %171 = vst [vmem:[%s149 + $0x50] sm:$0xff] %v170
                %v172 = vld [vmem:[%s148 + $0x418] sm:$0xff]
                %173 = vst [vmem:[%s149 + $0x58] sm:$0xff] %v172
                %v174 = vld [vmem:[%s148 + $0x600] sm:$0xff]
                %175 = vst [vmem:[%s149 + $0x60] sm:$0xff] %v174
                %v176 = vld [vmem:[%s148 + $0x608] sm:$0xff]
                %177 = vst [vmem:[%s149 + $0x68] sm:$0xff] %v176
                %v178 = vld [vmem:[%s148 + $0x610] sm:$0xff]
                %179 = vst [vmem:[%s149 + $0x70] sm:$0xff] %v178
                %v180 = vld [vmem:[%s148 + $0x618] sm:$0xff]
                %181 = vst [vmem:[%s149 + $0x78] sm:$0xff] %v180
                %v182 = vld [vmem:[%s148 + $0x800] sm:$0xff]
                %183 = vst [vmem:[%s149 + $0x80] sm:$0xff] %v182
                %v184 = vld [vmem:[%s148 + $0x808] sm:$0xff]
                %185 = vst [vmem:[%s149 + $0x88] sm:$0xff] %v184
                %v186 = vld [vmem:[%s148 + $0x810] sm:$0xff]
                %187 = vst [vmem:[%s149 + $0x90] sm:$0xff] %v186
                %v188 = vld [vmem:[%s148 + $0x818] sm:$0xff]
                %189 = vst [vmem:[%s149 + $0x98] sm:$0xff] %v188
                %v190 = vld [vmem:[%s148 + $0xa00] sm:$0xff]
                %191 = vst [vmem:[%s149 + $0xa0] sm:$0xff] %v190
                %v192 = vld [vmem:[%s148 + $0xa08] sm:$0xff]
                %193 = vst [vmem:[%s149 + $0xa8] sm:$0xff] %v192
                %v194 = vld [vmem:[%s148 + $0xa10] sm:$0xff]
                %195 = vst [vmem:[%s149 + $0xb0] sm:$0xff] %v194
                %v196 = vld [vmem:[%s148 + $0xa18] sm:$0xff]
                %197 = vst [vmem:[%s149 + $0xb8] sm:$0xff] %v196
              $region41: #{forward.15} parent=35 // loop_footer
                %s147 = sadd.s32 1, %s143
              $region42: #{forward.15} parent=35 // loop_footer_branch
                %142 = sbr.rel target = $region38
              $region43: #{forward.15} parent=35 // loop_exit
                _
            $region36: #{forward.15} parent=31 // pred_fallthru
              _
            // Predicated region
            $region44: #{forward.15} parent=31 // pred_check
              _
            $region45: #{forward.15} parent=31 // pred_check_branch
              %199 = sbr.rel target = $region47
            $region46: #{forward.15} parent=31 // pred_region
              _
            $region47: #{forward.15} parent=31 // pred_fallthru
              _
          $region32: #{forward.15} parent=27 // pred_fallthru
            _
          %200 = vnop
        $region28: #{forward.15} parent=23 // pred_fallthru
          _
      $region24: #{forward.15} parent=5 // pred_fallthru
        _
      %p201 = scmp.le.s32.totalorder 1, %s9
      %p202 = scmp.lt.s32.totalorder %s9, 17
      %p203 = pnand %p201, %p202
      %p204 = pneg %p203
      // Predicated region
      $region48: #{forward.15} parent=5 // pred_check
        _
      $region49: #{forward.15} parent=5 // pred_check_branch
        %206 = sbr.rel (%p203) target = $region51
      $region50: #{forward.15} parent=5 // pred_region
        %s207 = ssub.s32 %s9, 1
        %s208 = sand.u32 %s43, 1
        %s209 = sand.u32 %s43, 1
        %s210 = smul.addr %s209, 192
        %s211 = scalar_lea.vmem [#allocation2], %s210
        // Predicated region
        $region52: #{forward.15} parent=50 // pred_check
          %p212 = pneg %p56
        $region53: #{forward.15} parent=50 // pred_check_branch
          %214 = sbr.rel (%p212) target = $region55
        $region54: #{forward.15} parent=50 // pred_region
          _
        $region55: #{forward.15} parent=50 // pred_fallthru
          _
        %p215 = pneg %p30
        %p216 = pneg %p27
        %s217 = sand.u32 %s43, 1
        %s218 = sand.u32 %s43, 1
        %s219 = smul.addr %s218, 192
        %s220 = scalar_lea.vmem [#allocation2], %s219
        %p221 = pneg %p56
        %p222 = pneg %p53
        %p223 = pneg %p77
        %p224 = pneg %p74
        %p225 = pneg %p103
        %p226 = pneg %p100
        %s227 = sand.u32 %s90, 1
        %s228 = sand.u32 %s90, 1
        %s229 = smul.addr %s228, 64
        %s230 = scalar_lea.vmem [#allocation3], %s229
        %s231 = smul.u32 8, %s14
        %s232 = smul.u32 8, %s14
        %v234 = vld [vmem:[%s0] sm:$0xf]
        %v235 = vld [vmem:[%s0 + $0x4] sm:$0xf]
        %v236 = vld [vmem:[%s211] sm:$0xff]
        %v237 = vld [vmem:[%s211 + $0x8] sm:$0xff]
        %v238 = vld [vmem:[%s211 + $0x10] sm:$0xff]
        %v239 = vld [vmem:[%s211 + $0x18] sm:$0xff]
        %v240 = vld [vmem:[%s211 + $0x20] sm:$0xff]
        %v241 = vld [vmem:[%s211 + $0x28] sm:$0xff]
        %v242 = vld [vmem:[%s211 + $0x30] sm:$0xff]
        %v243 = vld [vmem:[%s211 + $0x38] sm:$0xff]
        %v244 = vld [vmem:[%s211 + $0x40] sm:$0xff]
        %v245 = vld [vmem:[%s211 + $0x48] sm:$0xff]
        %v246 = vld [vmem:[%s211 + $0x50] sm:$0xff]
        %v247 = vld [vmem:[%s211 + $0x58] sm:$0xff]
        %v248 = vld [vmem:[%s211 + $0x60] sm:$0xff]
        %v249 = vld [vmem:[%s211 + $0x68] sm:$0xff]
        %v250 = vld [vmem:[%s211 + $0x70] sm:$0xff]
        %v251 = vld [vmem:[%s211 + $0x78] sm:$0xff]
        %v252 = vld [vmem:[%s211 + $0x80] sm:$0xff]
        %v253 = vld [vmem:[%s211 + $0x88] sm:$0xff]
        %v254 = vld [vmem:[%s211 + $0x90] sm:$0xff]
        %v255 = vld [vmem:[%s211 + $0x98] sm:$0xff]
        %v256 = vld [vmem:[%s211 + $0xa0] sm:$0xff]
        %v257 = vld [vmem:[%s211 + $0xa8] sm:$0xff]
        %v258 = vld [vmem:[%s211 + $0xb0] sm:$0xff]
        %v259 = vld [vmem:[%s211 + $0xb8] sm:$0xff]
        %v260 = vld [vmem:[%s2] sm:$0xff]
        %v261 = vld [vmem:[%s2 + $0x8] sm:$0xff]
        %263 = vset.pattern.permute.xlu0 0
        %264 = vperm.xlu0 %263, %v260
        %v265 = vpop.permute.xlu0 %264
        %268 = vset.pattern.permute.xlu0 0
        %269 = vperm.xlu0 %268, %v261
        %v270 = vpop.permute.xlu0 %269
        %v274 = vunpack.c.l.b16 %v234
        %v275 = vunpack.c.l.b16 %v235
        %v276 = vpack.c.b16 %v275, %v274
        %v301 = vunpack.c.l.b16 %v236
        %v302 = vunpack.c.h.b16 %v236
        %v303 = vunpack.c.l.b16 %v237
        %v304 = vunpack.c.h.b16 %v237
        %v305 = vunpack.c.l.b16 %v238
        %v306 = vunpack.c.h.b16 %v238
        %v307 = vunpack.c.l.b16 %v239
        %v308 = vunpack.c.h.b16 %v239
        %v309 = vunpack.c.l.b16 %v240
        %v310 = vunpack.c.h.b16 %v240
        %v311 = vunpack.c.l.b16 %v241
        %v312 = vunpack.c.h.b16 %v241
        %v313 = vunpack.c.l.b16 %v242
        %v314 = vunpack.c.h.b16 %v242
        %v315 = vunpack.c.l.b16 %v243
        %v316 = vunpack.c.h.b16 %v243
        %v317 = vunpack.c.l.b16 %v244
        %v318 = vunpack.c.h.b16 %v244
        %v319 = vunpack.c.l.b16 %v245
        %v320 = vunpack.c.h.b16 %v245
        %v321 = vunpack.c.l.b16 %v246
        %v322 = vunpack.c.h.b16 %v246
        %v323 = vunpack.c.l.b16 %v247
        %v324 = vunpack.c.h.b16 %v247
        %v325 = vunpack.c.l.b16 %v248
        %v326 = vunpack.c.h.b16 %v248
        %v327 = vunpack.c.l.b16 %v249
        %v328 = vunpack.c.h.b16 %v249
        %v329 = vunpack.c.l.b16 %v250
        %v330 = vunpack.c.h.b16 %v250
        %v331 = vunpack.c.l.b16 %v251
        %v332 = vunpack.c.h.b16 %v251
        %v333 = vunpack.c.l.b16 %v252
        %v334 = vunpack.c.h.b16 %v252
        %v335 = vunpack.c.l.b16 %v253
        %v336 = vunpack.c.h.b16 %v253
        %v337 = vunpack.c.l.b16 %v254
        %v338 = vunpack.c.h.b16 %v254
        %v339 = vunpack.c.l.b16 %v255
        %v340 = vunpack.c.h.b16 %v255
        %v341 = vunpack.c.l.b16 %v256
        %v342 = vunpack.c.h.b16 %v256
        %v343 = vunpack.c.l.b16 %v257
        %v344 = vunpack.c.h.b16 %v257
        %v345 = vunpack.c.l.b16 %v258
        %v346 = vunpack.c.h.b16 %v258
        %v347 = vunpack.c.l.b16 %v259
        %v348 = vunpack.c.h.b16 %v259
        %v349 = vpack.c.b16 %v309, %v301
        %v350 = vpack.c.b16 %v310, %v302
        %v351 = vpack.c.b16 %v311, %v303
        %v352 = vpack.c.b16 %v312, %v304
        %v353 = vpack.c.b16 %v313, %v305
        %v354 = vpack.c.b16 %v314, %v306
        %v355 = vpack.c.b16 %v315, %v307
        %v356 = vpack.c.b16 %v316, %v308
        %v357 = vpack.c.b16 %v325, %v317
        %v358 = vpack.c.b16 %v326, %v318
        %v359 = vpack.c.b16 %v327, %v319
        %v360 = vpack.c.b16 %v328, %v320
        %v361 = vpack.c.b16 %v329, %v321
        %v362 = vpack.c.b16 %v330, %v322
        %v363 = vpack.c.b16 %v331, %v323
        %v364 = vpack.c.b16 %v332, %v324
        %v365 = vpack.c.b16 %v341, %v333
        %v366 = vpack.c.b16 %v342, %v334
        %v367 = vpack.c.b16 %v343, %v335
        %v368 = vpack.c.b16 %v344, %v336
        %v369 = vpack.c.b16 %v345, %v337
        %v370 = vpack.c.b16 %v346, %v338
        %v371 = vpack.c.b16 %v347, %v339
        %v372 = vpack.c.b16 %v348, %v340
        %vm397 = vcmask 392192
        %v399 = vsel %vm397, %v276, 0
        %401 = vmatprep.subr.bf16.mxu0 %v350
        %402 = vmatpush1.bf16.msra.mxu0 %v349
        %403 = vmatprep.subr.bf16.mxu0 %v358
        %404 = vmatpush1.bf16.msra.mxu0 %v357
        %405 = vmatprep.subr.bf16.mxu0 %v366
        %406 = vmatpush1.bf16.msra.mxu0 %v365
        %407 = vmatprep.subr.bf16.mxu0 0
        %408 = vmatpush1.bf16.msra.mxu0 0
        %409 = vmatprep.subr.bf16.mxu0 0
        %410 = vmatpush1.bf16.msra.mxu0 0
        %411 = vmatprep.subr.bf16.mxu0 0
        %412 = vmatpush1.bf16.msra.mxu0 0
        %413 = vmatprep.subr.bf16.mxu0 0
        %414 = vmatpush1.bf16.msra.mxu0 0
        %415 = vmatprep.subr.bf16.mxu0 0
        %416 = vmatpush1.bf16.msra.mxu0 0
        %417 = vmatprep.subr.bf16.mxu0 0
        %418 = vmatpush1.bf16.msra.mxu0 0
        %419 = vmatprep.subr.bf16.mxu0 0
        %420 = vmatpush1.bf16.msra.mxu0 0
        %421 = vmatprep.subr.bf16.mxu0 0
        %422 = vmatpush1.bf16.msra.mxu0 0
        %423 = vmatprep.subr.bf16.mxu0 0
        %424 = vmatpush1.bf16.msra.mxu0 0
        %425 = vmatprep.subr.bf16.mxu0 0
        %426 = vmatpush1.bf16.msra.mxu0 0
        %427 = vmatprep.subr.bf16.mxu0 0
        %428 = vmatpush1.bf16.msra.mxu0 0
        %429 = vmatprep.subr.bf16.mxu0 0
        %430 = vmatpush1.bf16.msra.mxu0 0
        %431 = vmatprep.subr.bf16.mxu0 0
        %432 = vmatpush1.bf16.msra.mxu0 0
        %433 = vmatprep.mubr.bf16.mxu0 0
        %434 = vmatmul.mubr.bf16.gmra.mrb[0].mxu0 %v399
        %v435 = vpop.f32.mrb[0].mxu0
        %v436 = vadd.f32 %v265, %v435
        %v437 = vpop.f32.mrb[0].mxu0
        %v438 = vadd.f32 %v265, %v437
        %v439 = vpop.f32.mrb[0].mxu0
        %v440 = vadd.f32 %v270, %v439
        %v441 = vpop.f32.mrb[0].mxu0
        %v442 = vadd.f32 %v270, %v441
        %443 = vdwg.mxu0
        %444 = vmatprep.subr.bf16.mxu0 %v352
        %445 = vmatpush1.bf16.msra.mxu0 %v351
        %446 = vmatprep.subr.bf16.mxu0 %v360
        %447 = vmatpush1.bf16.msra.mxu0 %v359
        %448 = vmatprep.subr.bf16.mxu0 %v368
        %449 = vmatpush1.bf16.msra.mxu0 %v367
        %450 = vmatprep.subr.bf16.mxu0 0
        %451 = vmatpush1.bf16.msra.mxu0 0
        %452 = vmatprep.subr.bf16.mxu0 0
        %453 = vmatpush1.bf16.msra.mxu0 0
        %454 = vmatprep.subr.bf16.mxu0 0
        %455 = vmatpush1.bf16.msra.mxu0 0
        %456 = vmatprep.subr.bf16.mxu0 0
        %457 = vmatpush1.bf16.msra.mxu0 0
        %458 = vmatprep.subr.bf16.mxu0 0
        %459 = vmatpush1.bf16.msra.mxu0 0
        %460 = vmatprep.subr.bf16.mxu0 0
        %461 = vmatpush1.bf16.msra.mxu0 0
        %462 = vmatprep.subr.bf16.mxu0 0
        %463 = vmatpush1.bf16.msra.mxu0 0
        %464 = vmatprep.subr.bf16.mxu0 0
        %465 = vmatpush1.bf16.msra.mxu0 0
        %466 = vmatprep.subr.bf16.mxu0 0
        %467 = vmatpush1.bf16.msra.mxu0 0
        %468 = vmatprep.subr.bf16.mxu0 0
        %469 = vmatpush1.bf16.msra.mxu0 0
        %470 = vmatprep.subr.bf16.mxu0 0
        %471 = vmatpush1.bf16.msra.mxu0 0
        %472 = vmatprep.subr.bf16.mxu0 0
        %473 = vmatpush1.bf16.msra.mxu0 0
        %474 = vmatprep.subr.bf16.mxu0 0
        %475 = vmatpush1.bf16.msra.mxu0 0
        %476 = vmatprep.mubr.bf16.mxu0 0
        %477 = vmatmul.mubr.bf16.gmra.mrb[0].mxu0 %v399
        %v478 = vpop.f32.mrb[0].mxu0
        %v479 = vadd.f32 %v265, %v478
        %v480 = vpop.f32.mrb[0].mxu0
        %v481 = vadd.f32 %v265, %v480
        %v482 = vpop.f32.mrb[0].mxu0
        %v483 = vadd.f32 %v270, %v482
        %v484 = vpop.f32.mrb[0].mxu0
        %v485 = vadd.f32 %v270, %v484
        %486 = vdwg.mxu0
        %487 = vmatprep.subr.bf16.mxu0 %v354
        %488 = vmatpush1.bf16.msra.mxu0 %v353
        %489 = vmatprep.subr.bf16.mxu0 %v362
        %490 = vmatpush1.bf16.msra.mxu0 %v361
        %491 = vmatprep.subr.bf16.mxu0 %v370
        %492 = vmatpush1.bf16.msra.mxu0 %v369
        %493 = vmatprep.subr.bf16.mxu0 0
        %494 = vmatpush1.bf16.msra.mxu0 0
        %495 = vmatprep.subr.bf16.mxu0 0
        %496 = vmatpush1.bf16.msra.mxu0 0
        %497 = vmatprep.subr.bf16.mxu0 0
        %498 = vmatpush1.bf16.msra.mxu0 0
        %499 = vmatprep.subr.bf16.mxu0 0
        %500 = vmatpush1.bf16.msra.mxu0 0
        %501 = vmatprep.subr.bf16.mxu0 0
        %502 = vmatpush1.bf16.msra.mxu0 0
        %503 = vmatprep.subr.bf16.mxu0 0
        %504 = vmatpush1.bf16.msra.mxu0 0
        %505 = vmatprep.subr.bf16.mxu0 0
        %506 = vmatpush1.bf16.msra.mxu0 0
        %507 = vmatprep.subr.bf16.mxu0 0
        %508 = vmatpush1.bf16.msra.mxu0 0
        %509 = vmatprep.subr.bf16.mxu0 0
        %510 = vmatpush1.bf16.msra.mxu0 0
        %511 = vmatprep.subr.bf16.mxu0 0
        %512 = vmatpush1.bf16.msra.mxu0 0
        %513 = vmatprep.subr.bf16.mxu0 0
        %514 = vmatpush1.bf16.msra.mxu0 0
        %515 = vmatprep.subr.bf16.mxu0 0
        %516 = vmatpush1.bf16.msra.mxu0 0
        %517 = vmatprep.subr.bf16.mxu0 0
        %518 = vmatpush1.bf16.msra.mxu0 0
        %519 = vmatprep.mubr.bf16.mxu0 0
        %520 = vmatmul.mubr.bf16.gmra.mrb[0].mxu0 %v399
        %v521 = vpop.f32.mrb[0].mxu0
        %v522 = vadd.f32 %v265, %v521
        %v523 = vpop.f32.mrb[0].mxu0
        %v524 = vadd.f32 %v265, %v523
        %v525 = vpop.f32.mrb[0].mxu0
        %v526 = vadd.f32 %v270, %v525
        %v527 = vpop.f32.mrb[0].mxu0
        %v528 = vadd.f32 %v270, %v527
        %529 = vdwg.mxu0
        %530 = vmatprep.subr.bf16.mxu0 %v356
        %531 = vmatpush1.bf16.msra.mxu0 %v355
        %532 = vmatprep.subr.bf16.mxu0 %v364
        %533 = vmatpush1.bf16.msra.mxu0 %v363
        %534 = vmatprep.subr.bf16.mxu0 %v372
        %535 = vmatpush1.bf16.msra.mxu0 %v371
        %536 = vmatprep.subr.bf16.mxu0 0
        %537 = vmatpush1.bf16.msra.mxu0 0
        %538 = vmatprep.subr.bf16.mxu0 0
        %539 = vmatpush1.bf16.msra.mxu0 0
        %540 = vmatprep.subr.bf16.mxu0 0
        %541 = vmatpush1.bf16.msra.mxu0 0
        %542 = vmatprep.subr.bf16.mxu0 0
        %543 = vmatpush1.bf16.msra.mxu0 0
        %544 = vmatprep.subr.bf16.mxu0 0
        %545 = vmatpush1.bf16.msra.mxu0 0
        %546 = vmatprep.subr.bf16.mxu0 0
        %547 = vmatpush1.bf16.msra.mxu0 0
        %548 = vmatprep.subr.bf16.mxu0 0
        %549 = vmatpush1.bf16.msra.mxu0 0
        %550 = vmatprep.subr.bf16.mxu0 0
        %551 = vmatpush1.bf16.msra.mxu0 0
        %552 = vmatprep.subr.bf16.mxu0 0
        %553 = vmatpush1.bf16.msra.mxu0 0
        %554 = vmatprep.subr.bf16.mxu0 0
        %555 = vmatpush1.bf16.msra.mxu0 0
        %556 = vmatprep.subr.bf16.mxu0 0
        %557 = vmatpush1.bf16.msra.mxu0 0
        %558 = vmatprep.subr.bf16.mxu0 0
        %559 = vmatpush1.bf16.msra.mxu0 0
        %560 = vmatprep.subr.bf16.mxu0 0
        %561 = vmatpush1.bf16.msra.mxu0 0
        %562 = vmatprep.mubr.bf16.mxu0 0
        %563 = vmatmul.mubr.bf16.gmra.mrb[0].mxu0 %v399
        %v564 = vpop.f32.mrb[0].mxu0
        %v565 = vadd.f32 %v265, %v564
        %v566 = vpop.f32.mrb[0].mxu0
        %v567 = vadd.f32 %v265, %v566
        %v568 = vpop.f32.mrb[0].mxu0
        %v569 = vadd.f32 %v270, %v568
        %v570 = vpop.f32.mrb[0].mxu0
        %v571 = vadd.f32 %v270, %v570
        %572 = vdwg.mxu0
        %vm573 = vcmp.gt.f32.partialorder %v436, 0.0
        %vm574 = vcmp.gt.f32.partialorder %v438, 0.0
        %vm575 = vcmp.gt.f32.partialorder %v479, 0.0
        %vm576 = vcmp.gt.f32.partialorder %v481, 0.0
        %vm577 = vcmp.gt.f32.partialorder %v522, 0.0
        %vm578 = vcmp.gt.f32.partialorder %v524, 0.0
        %vm579 = vcmp.gt.f32.partialorder %v565, 0.0
        %vm580 = vcmp.gt.f32.partialorder %v567, 0.0
        %vm581 = vcmp.gt.f32.partialorder %v440, 0.0
        %vm582 = vcmp.gt.f32.partialorder %v442, 0.0
        %vm583 = vcmp.gt.f32.partialorder %v483, 0.0
        %vm584 = vcmp.gt.f32.partialorder %v485, 0.0
        %vm585 = vcmp.gt.f32.partialorder %v526, 0.0
        %vm586 = vcmp.gt.f32.partialorder %v528, 0.0
        %vm587 = vcmp.gt.f32.partialorder %v569, 0.0
        %vm588 = vcmp.gt.f32.partialorder %v571, 0.0
        %v589 = vmul.f32 %v436, 0.2
        %v590 = vmul.f32 %v438, 0.2
        %v591 = vmul.f32 %v479, 0.2
        %v592 = vmul.f32 %v481, 0.2
        %v593 = vmul.f32 %v522, 0.2
        %v594 = vmul.f32 %v524, 0.2
        %v595 = vmul.f32 %v565, 0.2
        %v596 = vmul.f32 %v567, 0.2
        %v597 = vmul.f32 %v440, 0.2
        %v598 = vmul.f32 %v442, 0.2
        %v599 = vmul.f32 %v483, 0.2
        %v600 = vmul.f32 %v485, 0.2
        %v601 = vmul.f32 %v526, 0.2
        %v602 = vmul.f32 %v528, 0.2
        %v603 = vmul.f32 %v569, 0.2
        %v604 = vmul.f32 %v571, 0.2
        %v605 = vsel %vm573, %v436, %v589
        %v606 = vsel %vm574, %v438, %v590
        %v607 = vsel %vm575, %v479, %v591
        %v608 = vsel %vm576, %v481, %v592
        %v609 = vsel %vm577, %v522, %v593
        %v610 = vsel %vm578, %v524, %v594
        %v611 = vsel %vm579, %v565, %v595
        %v612 = vsel %vm580, %v567, %v596
        %v613 = vsel %vm581, %v440, %v597
        %v614 = vsel %vm582, %v442, %v598
        %v615 = vsel %vm583, %v483, %v599
        %v616 = vsel %vm584, %v485, %v600
        %v617 = vsel %vm585, %v526, %v601
        %v618 = vsel %vm586, %v528, %v602
        %v619 = vsel %vm587, %v569, %v603
        %v620 = vsel %vm588, %v571, %v604
        %v621 = vpack.c.bf16 %v613, %v605
        %v622 = vpack.c.bf16 %v614, %v606
        %v623 = vpack.c.bf16 %v615, %v607
        %v624 = vpack.c.bf16 %v616, %v608
        %v625 = vpack.c.bf16 %v617, %v609
        %v626 = vpack.c.bf16 %v618, %v610
        %v627 = vpack.c.bf16 %v619, %v611
        %v628 = vpack.c.bf16 %v620, %v612
        %v637 = vunpack.c.l.b16 %v621
        %v638 = vunpack.c.l.b16 %v622
        %v639 = vunpack.c.l.b16 %v623
        %v640 = vunpack.c.l.b16 %v624
        %v641 = vunpack.c.l.b16 %v625
        %v642 = vunpack.c.l.b16 %v626
        %v643 = vunpack.c.l.b16 %v627
        %v644 = vunpack.c.l.b16 %v628
        %v645 = vunpack.c.h.b16 %v621
        %v646 = vunpack.c.h.b16 %v622
        %v647 = vunpack.c.h.b16 %v623
        %v648 = vunpack.c.h.b16 %v624
        %v649 = vunpack.c.h.b16 %v625
        %v650 = vunpack.c.h.b16 %v626
        %v651 = vunpack.c.h.b16 %v627
        %v652 = vunpack.c.h.b16 %v628
        %v653 = vpack.c.b16 %v638, %v637
        %v654 = vpack.c.b16 %v640, %v639
        %v655 = vpack.c.b16 %v642, %v641
        %v656 = vpack.c.b16 %v644, %v643
        %v657 = vpack.c.b16 %v646, %v645
        %v658 = vpack.c.b16 %v648, %v647
        %v659 = vpack.c.b16 %v650, %v649
        %v660 = vpack.c.b16 %v652, %v651
        %669 = vst [vmem:[%s230] sm:$0xff] %v653
        %670 = vst [vmem:[%s230 + $0x8] sm:$0xff] %v654
        %671 = vst [vmem:[%s230 + $0x10] sm:$0xff] %v655
        %672 = vst [vmem:[%s230 + $0x18] sm:$0xff] %v656
        %673 = vst [vmem:[%s230 + $0x20] sm:$0xff] %v657
        %674 = vst [vmem:[%s230 + $0x28] sm:$0xff] %v658
        %675 = vst [vmem:[%s230 + $0x30] sm:$0xff] %v659
        %676 = vst [vmem:[%s230 + $0x38] sm:$0xff] %v660
        %s677 = sand.u32 %s90, 1
        %s678 = sand.u32 %s90, 1
        %s679 = smul.addr %s678, 64
        %s680 = scalar_lea.vmem [#allocation3], %s679
        // Predicated region
        $region56: #{forward.15} parent=50 // pred_check
          %p681 = pneg %p100
        $region57: #{forward.15} parent=50 // pred_check_branch
          %683 = sbr.rel (%p681) target = $region59
        $region58: #{forward.15} parent=50 // pred_region
          %s684 = smul.u32 8, %s14
          %s685 = smul.addr %s684, 4
          %s686 = scalar_lea.vmem %s3, %s685
          // Predicated region
          $region60: #{forward.15} parent=58 // pred_check
            _
          $region61: #{forward.15} parent=58 // pred_check_branch
            %688 = sbr.rel (0) target = $region63
          $region62: #{forward.15} parent=58 // pred_region
            // Predicated region
            $region64: #{forward.15} parent=62 // pred_check
              _
            $region65: #{forward.15} parent=62 // pred_check_branch
              %690 = sbr.rel (0) target = $region67
            $region66: #{forward.15} parent=62 // pred_region
              loop: start=0, step=1, limit=1
              $region68: #{forward.15} parent=66 // loop_pre_header
                _
              $region69: #{forward.15} parent=66 // loop_header
                %s692 = sphi 0, %s696
                %p693 = scmp.ge.s32.totalorder %s692, 1
                %s697 = sphi %s680, %s680
                %s698 = sphi %s686, %s686
              $region70: #{forward.15} parent=66 // loop_header_branch
                %695 = sbr.rel (%p693) target = $region74
              $region71: #{forward.15} parent=66 // loop_body
                %v699 = vld [vmem:[%s697] sm:$0xff]
                %700 = vst [vmem:[%s698] sm:$0xff] %v699
                %v701 = vld [vmem:[%s697 + $0x8] sm:$0xff]
                %702 = vst [vmem:[%s698 + $0x8] sm:$0xff] %v701
                %v703 = vld [vmem:[%s697 + $0x10] sm:$0xff]
                %704 = vst [vmem:[%s698 + $0x10] sm:$0xff] %v703
                %v705 = vld [vmem:[%s697 + $0x18] sm:$0xff]
                %706 = vst [vmem:[%s698 + $0x18] sm:$0xff] %v705
                %v707 = vld [vmem:[%s697 + $0x20] sm:$0xff]
                %708 = vst [vmem:[%s698 + $0x200] sm:$0xff] %v707
                %v709 = vld [vmem:[%s697 + $0x28] sm:$0xff]
                %710 = vst [vmem:[%s698 + $0x208] sm:$0xff] %v709
                %v711 = vld [vmem:[%s697 + $0x30] sm:$0xff]
                %712 = vst [vmem:[%s698 + $0x210] sm:$0xff] %v711
                %v713 = vld [vmem:[%s697 + $0x38] sm:$0xff]
                %714 = vst [vmem:[%s698 + $0x218] sm:$0xff] %v713
              $region72: #{forward.15} parent=66 // loop_footer
                %s696 = sadd.s32 1, %s692
              $region73: #{forward.15} parent=66 // loop_footer_branch
                %691 = sbr.rel target = $region69
              $region74: #{forward.15} parent=66 // loop_exit
                _
            $region67: #{forward.15} parent=62 // pred_fallthru
              _
            // Predicated region
            $region75: #{forward.15} parent=62 // pred_check
              _
            $region76: #{forward.15} parent=62 // pred_check_branch
              %716 = sbr.rel target = $region78
            $region77: #{forward.15} parent=62 // pred_region
              _
            $region78: #{forward.15} parent=62 // pred_fallthru
              _
          $region63: #{forward.15} parent=58 // pred_fallthru
            _
          %717 = vnop
        $region59: #{forward.15} parent=50 // pred_fallthru
          _
      $region51: #{forward.15} parent=5 // pred_fallthru
        _
      %p718 = scmp.le.s32.totalorder 2, %s9
      // Predicated region
      $region79: #{forward.15} parent=5 // pred_check
        %p719 = pneg %p718
      $region80: #{forward.15} parent=5 // pred_check_branch
        %721 = sbr.rel (%p719) target = $region82
      $region81: #{forward.15} parent=5 // pred_region
        %s722 = ssub.s32 %s9, 2
        // Predicated region
        $region83: #{forward.15} parent=81 // pred_check
          %p723 = pneg %p106
        $region84: #{forward.15} parent=81 // pred_check_branch
          %725 = sbr.rel (%p723) target = $region86
        $region85: #{forward.15} parent=81 // pred_region
          %s726 = sand.u32 %s91, 1
          %s727 = sand.u32 %s91, 1
          %s728 = smul.addr %s727, 64
          %s729 = scalar_lea.vmem [#allocation3], %s728
        $region86: #{forward.15} parent=81 // pred_fallthru
          _
      $region82: #{forward.15} parent=5 // pred_fallthru
        _
    $region6: #{forward.15} parent=1 // loop_footer
      %s13 = sadd.s32 1, %s9
    $region7: #{forward.15} parent=1 // loop_footer_branch
      %8 = sbr.rel target = $region3
    $region8: #{forward.15} parent=1 // loop_exit
      _

// kernel: forward.16
$region0: #{forward.16}
  #allocation0 [shape = 'u32[]', space=smem, size = 0x4, offset = 0x4, fixed_abs, tag = 'smem constant byte address 0x4 - core index']
  #allocation1 [shape = 'u32[144,128]{1,0:T(1,128)}', space=vmem, size = 0x12000, scoped, tag = 'internal scratch']
  %s0 = inlined_call_operand.vmem [shape: bf16[16,64], index: 0, kind: input, shape index: {}]
  %s1 = inlined_call_operand.vmem [shape: bf16[64,4096], index: 1, kind: input, shape index: {}]
  %s2 = inlined_call_operand.vmem [shape: f32[16,1], index: 2, kind: input, shape index: {}]
  %s3 = inlined_call_operand.vmem [shape: bf16[16,4096], index: 3, kind: output, shape index: {}]
  %s4 = sld [smem:[#allocation0]]
  $region87: #{forward.16} parent=0
    _
  %s6 = ssub.s32 1, %s4
  %s7 = scalar_select 0, %s6, %s4
  $region1: #{forward.16} parent=0
    #allocation2 [shape = 'u8[131072]{0}', space=vmem, size = 0x20000, scoped, tag = 'input window, operand 1']
    #allocation3 [shape = 'u8[32768]{0}', space=vmem, size = 0x8000, scoped, tag = 'output window, operand 0']
    loop: start=0, step=1, limit=10
    $region2: #{forward.16} parent=1 // loop_pre_header
      _
    $region3: #{forward.16} parent=1 // loop_header
      %s9 = sphi 0, %s13
      %p10 = scmp.ge.s32.totalorder %s9, 10
      %s17 = sphi 0, %s17
      %s19 = sphi 0, %s17
      %s20 = sphi 0, %s19
      %s34 = sphi 0, %s20
      %s40 = sphi 0, %s42
      %s43 = sphi 0, %s40
      %s44 = sphi 0, %s43
      %s60 = sphi 0, %s44
      %s64 = sphi 0, %s64
      %s66 = sphi 0, %s64
      %s67 = sphi 0, %s66
      %s81 = sphi 0, %s67
      %s87 = sphi 0, %s89
      %s90 = sphi 0, %s87
      %s91 = sphi 0, %s90
      %s107 = sphi 0, %s91
    $region4: #{forward.16} parent=1 // loop_header_branch
      %12 = sbr.rel (%p10) target = $region8
    $region5: #{forward.16} parent=1 // loop_body
      %s14 = ssub.s32 %s9, 1
      %s15 = ssub.s32 %s9, 2
      %s16 = sadd.s32 %s9, 1
      %s18 = sadd.s32 %s17, 1
      %p21 = scmp.eq.s32.totalorder %s9, 7
      %p22 = scmp.ne.s32.totalorder %s17, %s19
      %p23 = scmp.eq.s32.totalorder %s9, 0
      %p24 = por %p22, %p23
      %p25 = scmp.ne.s32.totalorder %s17, %s19
      %p26 = scmp.eq.s32.totalorder %s14, 7
      %p27 = por %p25, %p26
      %p28 = scmp.ne.s32.totalorder %s19, %s20
      %p29 = scmp.eq.s32.totalorder %s14, 0
      %p30 = por %p28, %p29
      %p31 = scmp.ne.s32.totalorder %s19, %s20
      %p32 = scmp.eq.s32.totalorder %s15, 7
      %p33 = por %p31, %p32
      %p35 = scmp.ne.s32.totalorder %s20, %s34
      %p36 = scmp.eq.s32.totalorder %s15, 0
      %p37 = por %p35, %p36
      %s38 = ssub.s32 %s9, %s16
      %p39 = scmp.eq.s32.totalorder %s38, 0
      %s41 = sadd.s32 %s40, 1
      %s42 = scalar_select %p39, %s40, %s41
      %p45 = pneg %p39
      %p46 = scmp.eq.s32.totalorder %s9, 7
      %p47 = por %p45, %p46
      %p48 = scmp.ne.s32.totalorder %s40, %s43
      %p49 = scmp.eq.s32.totalorder %s9, 0
      %p50 = por %p48, %p49
      %p51 = scmp.ne.s32.totalorder %s40, %s43
      %p52 = scmp.eq.s32.totalorder %s14, 7
      %p53 = por %p51, %p52
      %p54 = scmp.ne.s32.totalorder %s43, %s44
      %p55 = scmp.eq.s32.totalorder %s14, 0
      %p56 = por %p54, %p55
      %p57 = scmp.ne.s32.totalorder %s43, %s44
      %p58 = scmp.eq.s32.totalorder %s15, 7
      %p59 = por %p57, %p58
      %p61 = scmp.ne.s32.totalorder %s44, %s60
      %p62 = scmp.eq.s32.totalorder %s15, 0
      %p63 = por %p61, %p62
      %s65 = sadd.s32 %s64, 1
      %p68 = scmp.eq.s32.totalorder %s9, 7
      %p69 = scmp.ne.s32.totalorder %s64, %s66
      %p70 = scmp.eq.s32.totalorder %s9, 0
      %p71 = por %p69, %p70
      %p72 = scmp.ne.s32.totalorder %s64, %s66
      %p73 = scmp.eq.s32.totalorder %s14, 7
      %p74 = por %p72, %p73
      %p75 = scmp.ne.s32.totalorder %s66, %s67
      %p76 = scmp.eq.s32.totalorder %s14, 0
      %p77 = por %p75, %p76
      %p78 = scmp.ne.s32.totalorder %s66, %s67
      %p79 = scmp.eq.s32.totalorder %s15, 7
      %p80 = por %p78, %p79
      %p82 = scmp.ne.s32.totalorder %s67, %s81
      %p83 = scmp.eq.s32.totalorder %s15, 0
      %p84 = por %p82, %p83
      %s85 = ssub.s32 %s9, %s16
      %p86 = scmp.eq.s32.totalorder %s85, 0
      %s88 = sadd.s32 %s87, 1
      %s89 = scalar_select %p86, %s87, %s88
      %p92 = pneg %p86
      %p93 = scmp.eq.s32.totalorder %s9, 7
      %p94 = por %p92, %p93
      %p95 = scmp.ne.s32.totalorder %s87, %s90
      %p96 = scmp.eq.s32.totalorder %s9, 0
      %p97 = por %p95, %p96
      %p98 = scmp.ne.s32.totalorder %s87, %s90
      %p99 = scmp.eq.s32.totalorder %s14, 7
      %p100 = por %p98, %p99
      %p101 = scmp.ne.s32.totalorder %s90, %s91
      %p102 = scmp.eq.s32.totalorder %s14, 0
      %p103 = por %p101, %p102
      %p104 = scmp.ne.s32.totalorder %s90, %s91
      %p105 = scmp.eq.s32.totalorder %s15, 7
      %p106 = por %p104, %p105
      %p108 = scmp.ne.s32.totalorder %s91, %s107
      %p109 = scmp.eq.s32.totalorder %s15, 0
      %p110 = por %p108, %p109
      %p111 = scmp.le.s32.totalorder 1, %s9
      %p112 = scmp.lt.s32.totalorder %s9, 9
      %p113 = pnand %p111, %p112
      %p114 = pneg %p113
      // Predicated region
      $region9: #{forward.16} parent=5 // pred_check
        _
      $region10: #{forward.16} parent=5 // pred_check_branch
        %116 = sbr.rel (%p113) target = $region12
      $region11: #{forward.16} parent=5 // pred_region
        %s117 = ssub.s32 %s9, 1
        // Predicated region
        $region13: #{forward.16} parent=11 // pred_check
          %p118 = pneg %p30
        $region14: #{forward.16} parent=11 // pred_check_branch
          %120 = sbr.rel (%p118) target = $region16
        $region15: #{forward.16} parent=11 // pred_region
          _
        $region16: #{forward.16} parent=11 // pred_fallthru
          _
        // Predicated region
        $region17: #{forward.16} parent=11 // pred_check
          %p121 = pneg %p77
        $region18: #{forward.16} parent=11 // pred_check_branch
          %123 = sbr.rel (%p121) target = $region20
        $region19: #{forward.16} parent=11 // pred_region
          _
        $region20: #{forward.16} parent=11 // pred_fallthru
          _
      $region12: #{forward.16} parent=5 // pred_fallthru
        _
      %p124 = scmp.lt.s32.totalorder %s9, 8
      // Predicated region
      $region21: #{forward.16} parent=5 // pred_check
        %p125 = pneg %p124
      $region22: #{forward.16} parent=5 // pred_check_branch
        %127 = sbr.rel (%p125) target = $region24
      $region23: #{forward.16} parent=5 // pred_region
        // Predicated region
        $region25: #{forward.16} parent=23 // pred_check
          %p128 = pneg %p50
        $region26: #{forward.16} parent=23 // pred_check_branch
          %130 = sbr.rel (%p128) target = $region28
        $region27: #{forward.16} parent=23 // pred_region
          %s131 = sand.u32 %s40, 1
          %s132 = sand.u32 %s40, 1
          %s133 = smul.addr %s132, 128
          %s134 = scalar_lea.vmem [#allocation2], %s133
          %s135 = smul.u32 4, %s9
          %s136 = smul.addr %s135, 4
          %s137 = scalar_lea.vmem %s1, %s136
          // Predicated region
          $region29: #{forward.16} parent=27 // pred_check
            _
          $region30: #{forward.16} parent=27 // pred_check_branch
            %139 = sbr.rel (0) target = $region32
          $region31: #{forward.16} parent=27 // pred_region
            // Predicated region
            $region33: #{forward.16} parent=31 // pred_check
              _
            $region34: #{forward.16} parent=31 // pred_check_branch
              %141 = sbr.rel (0) target = $region36
            $region35: #{forward.16} parent=31 // pred_region
              loop: start=0, step=1, limit=1
              $region37: #{forward.16} parent=35 // loop_pre_header
                _
              $region38: #{forward.16} parent=35 // loop_header
                %s143 = sphi 0, %s147
                %p144 = scmp.ge.s32.totalorder %s143, 1
                %s148 = sphi %s137, %s137
                %s149 = sphi %s134, %s134
              $region39: #{forward.16} parent=35 // loop_header_branch
                %146 = sbr.rel (%p144) target = $region43
              $region40: #{forward.16} parent=35 // loop_body
                %v150 = vld [vmem:[%s148] sm:$0xff]
                %151 = vst [vmem:[%s149] sm:$0xff] %v150
                %v152 = vld [vmem:[%s148 + $0x8] sm:$0xff]
                %153 = vst [vmem:[%s149 + $0x8] sm:$0xff] %v152
                %v154 = vld [vmem:[%s148 + $0x80] sm:$0xff]
                %155 = vst [vmem:[%s149 + $0x10] sm:$0xff] %v154
                %v156 = vld [vmem:[%s148 + $0x88] sm:$0xff]
                %157 = vst [vmem:[%s149 + $0x18] sm:$0xff] %v156
                %v158 = vld [vmem:[%s148 + $0x100] sm:$0xff]
                %159 = vst [vmem:[%s149 + $0x20] sm:$0xff] %v158
                %v160 = vld [vmem:[%s148 + $0x108] sm:$0xff]
                %161 = vst [vmem:[%s149 + $0x28] sm:$0xff] %v160
                %v162 = vld [vmem:[%s148 + $0x180] sm:$0xff]
                %163 = vst [vmem:[%s149 + $0x30] sm:$0xff] %v162
                %v164 = vld [vmem:[%s148 + $0x188] sm:$0xff]
                %165 = vst [vmem:[%s149 + $0x38] sm:$0xff] %v164
                %v166 = vld [vmem:[%s148 + $0x200] sm:$0xff]
                %167 = vst [vmem:[%s149 + $0x40] sm:$0xff] %v166
                %v168 = vld [vmem:[%s148 + $0x208] sm:$0xff]
                %169 = vst [vmem:[%s149 + $0x48] sm:$0xff] %v168
                %v170 = vld [vmem:[%s148 + $0x280] sm:$0xff]
                %171 = vst [vmem:[%s149 + $0x50] sm:$0xff] %v170
                %v172 = vld [vmem:[%s148 + $0x288] sm:$0xff]
                %173 = vst [vmem:[%s149 + $0x58] sm:$0xff] %v172
                %v174 = vld [vmem:[%s148 + $0x300] sm:$0xff]
                %175 = vst [vmem:[%s149 + $0x60] sm:$0xff] %v174
                %v176 = vld [vmem:[%s148 + $0x308] sm:$0xff]
                %177 = vst [vmem:[%s149 + $0x68] sm:$0xff] %v176
                %v178 = vld [vmem:[%s148 + $0x380] sm:$0xff]
                %179 = vst [vmem:[%s149 + $0x70] sm:$0xff] %v178
                %v180 = vld [vmem:[%s148 + $0x388] sm:$0xff]
                %181 = vst [vmem:[%s149 + $0x78] sm:$0xff] %v180
              $region41: #{forward.16} parent=35 // loop_footer
                %s147 = sadd.s32 1, %s143
              $region42: #{forward.16} parent=35 // loop_footer_branch
                %142 = sbr.rel target = $region38
              $region43: #{forward.16} parent=35 // loop_exit
                _
            $region36: #{forward.16} parent=31 // pred_fallthru
              _
            // Predicated region
            $region44: #{forward.16} parent=31 // pred_check
              _
            $region45: #{forward.16} parent=31 // pred_check_branch
              %183 = sbr.rel target = $region47
            $region46: #{forward.16} parent=31 // pred_region
              _
            $region47: #{forward.16} parent=31 // pred_fallthru
              _
          $region32: #{forward.16} parent=27 // pred_fallthru
            _
          %184 = vnop
        $region28: #{forward.16} parent=23 // pred_fallthru
          _
      $region24: #{forward.16} parent=5 // pred_fallthru
        _
      %p185 = scmp.le.s32.totalorder 1, %s9
      %p186 = scmp.lt.s32.totalorder %s9, 9
      %p187 = pnand %p185, %p186
      %p188 = pneg %p187
      // Predicated region
      $region48: #{forward.16} parent=5 // pred_check
        _
      $region49: #{forward.16} parent=5 // pred_check_branch
        %190 = sbr.rel (%p187) target = $region51
      $region50: #{forward.16} parent=5 // pred_region
        %s191 = ssub.s32 %s9, 1
        %s192 = sand.u32 %s43, 1
        %s193 = sand.u32 %s43, 1
        %s194 = smul.addr %s193, 128
        %s195 = scalar_lea.vmem [#allocation2], %s194
        // Predicated region
        $region52: #{forward.16} parent=50 // pred_check
          %p196 = pneg %p56
        $region53: #{forward.16} parent=50 // pred_check_branch
          %198 = sbr.rel (%p196) target = $region55
        $region54: #{forward.16} parent=50 // pred_region
          _
        $region55: #{forward.16} parent=50 // pred_fallthru
          _
        %p199 = pneg %p30
        %p200 = pneg %p27
        %s201 = sand.u32 %s43, 1
        %s202 = sand.u32 %s43, 1
        %s203 = smul.addr %s202, 128
        %s204 = scalar_lea.vmem [#allocation2], %s203
        %p205 = pneg %p56
        %p206 = pneg %p53
        %p207 = pneg %p77
        %p208 = pneg %p74
        %p209 = pneg %p103
        %p210 = pneg %p100
        %s211 = sand.u32 %s90, 1
        %s212 = sand.u32 %s90, 1
        %s213 = smul.addr %s212, 32
        %s214 = scalar_lea.vmem [#allocation3], %s213
        %s215 = smul.u32 4, %s14
        %s216 = smul.u32 4, %s14
        %v218 = vld [vmem:[%s0] sm:$0xf]
        %v219 = vld [vmem:[%s0 + $0x4] sm:$0xf]
        %v220 = vld [vmem:[%s195] sm:$0xff]
        %v221 = vld [vmem:[%s195 + $0x8] sm:$0xff]
        %v222 = vld [vmem:[%s195 + $0x10] sm:$0xff]
        %v223 = vld [vmem:[%s195 + $0x18] sm:$0xff]
        %v224 = vld [vmem:[%s195 + $0x20] sm:$0xff]
        %v225 = vld [vmem:[%s195 + $0x28] sm:$0xff]
        %v226 = vld [vmem:[%s195 + $0x30] sm:$0xff]
        %v227 = vld [vmem:[%s195 + $0x38] sm:$0xff]
        %v228 = vld [vmem:[%s195 + $0x40] sm:$0xff]
        %v229 = vld [vmem:[%s195 + $0x48] sm:$0xff]
        %v230 = vld [vmem:[%s195 + $0x50] sm:$0xff]
        %v231 = vld [vmem:[%s195 + $0x58] sm:$0xff]
        %v232 = vld [vmem:[%s195 + $0x60] sm:$0xff]
        %v233 = vld [vmem:[%s195 + $0x68] sm:$0xff]
        %v234 = vld [vmem:[%s195 + $0x70] sm:$0xff]
        %v235 = vld [vmem:[%s195 + $0x78] sm:$0xff]
        %v236 = vld [vmem:[%s2] sm:$0xff]
        %v237 = vld [vmem:[%s2 + $0x8] sm:$0xff]
        %239 = vset.pattern.permute.xlu0 0
        %240 = vperm.xlu0 %239, %v236
        %v241 = vpop.permute.xlu0 %240
        %244 = vset.pattern.permute.xlu0 0
        %245 = vperm.xlu0 %244, %v237
        %v246 = vpop.permute.xlu0 %245
        %v250 = vunpack.c.l.b16 %v218
        %v251 = vunpack.c.l.b16 %v219
        %v252 = vpack.c.b16 %v251, %v250
        %v269 = vunpack.c.l.b16 %v220
        %v270 = vunpack.c.h.b16 %v220
        %v271 = vunpack.c.l.b16 %v221
        %v272 = vunpack.c.h.b16 %v221
        %v273 = vunpack.c.l.b16 %v222
        %v274 = vunpack.c.h.b16 %v222
        %v275 = vunpack.c.l.b16 %v223
        %v276 = vunpack.c.h.b16 %v223
        %v277 = vunpack.c.l.b16 %v224
        %v278 = vunpack.c.h.b16 %v224
        %v279 = vunpack.c.l.b16 %v225
        %v280 = vunpack.c.h.b16 %v225
        %v281 = vunpack.c.l.b16 %v226
        %v282 = vunpack.c.h.b16 %v226
        %v283 = vunpack.c.l.b16 %v227
        %v284 = vunpack.c.h.b16 %v227
        %v285 = vunpack.c.l.b16 %v228
        %v286 = vunpack.c.h.b16 %v228
        %v287 = vunpack.c.l.b16 %v229
        %v288 = vunpack.c.h.b16 %v229
        %v289 = vunpack.c.l.b16 %v230
        %v290 = vunpack.c.h.b16 %v230
        %v291 = vunpack.c.l.b16 %v231
        %v292 = vunpack.c.h.b16 %v231
        %v293 = vunpack.c.l.b16 %v232
        %v294 = vunpack.c.h.b16 %v232
        %v295 = vunpack.c.l.b16 %v233
        %v296 = vunpack.c.h.b16 %v233
        %v297 = vunpack.c.l.b16 %v234
        %v298 = vunpack.c.h.b16 %v234
        %v299 = vunpack.c.l.b16 %v235
        %v300 = vunpack.c.h.b16 %v235
        %v301 = vpack.c.b16 %v273, %v269
        %v302 = vpack.c.b16 %v274, %v270
        %v303 = vpack.c.b16 %v275, %v271
        %v304 = vpack.c.b16 %v276, %v272
        %v305 = vpack.c.b16 %v281, %v277
        %v306 = vpack.c.b16 %v282, %v278
        %v307 = vpack.c.b16 %v283, %v279
        %v308 = vpack.c.b16 %v284, %v280
        %v309 = vpack.c.b16 %v289, %v285
        %v310 = vpack.c.b16 %v290, %v286
        %v311 = vpack.c.b16 %v291, %v287
        %v312 = vpack.c.b16 %v292, %v288
        %v313 = vpack.c.b16 %v297, %v293
        %v314 = vpack.c.b16 %v298, %v294
        %v315 = vpack.c.b16 %v299, %v295
        %v316 = vpack.c.b16 %v300, %v296
        %vm333 = vcmask 523264
        %v335 = vsel %vm333, %v252, 0
        %337 = vmatprep.subr.bf16.mxu0 %v302
        %338 = vmatpush1.bf16.msra.mxu0 %v301
        %339 = vmatprep.subr.bf16.mxu0 %v306
        %340 = vmatpush1.bf16.msra.mxu0 %v305
        %341 = vmatprep.subr.bf16.mxu0 %v310
        %342 = vmatpush1.bf16.msra.mxu0 %v309
        %343 = vmatprep.subr.bf16.mxu0 %v314
        %344 = vmatpush1.bf16.msra.mxu0 %v313
        %345 = vmatprep.subr.bf16.mxu0 0
        %346 = vmatpush1.bf16.msra.mxu0 0
        %347 = vmatprep.subr.bf16.mxu0 0
        %348 = vmatpush1.bf16.msra.mxu0 0
        %349 = vmatprep.subr.bf16.mxu0 0
        %350 = vmatpush1.bf16.msra.mxu0 0
        %351 = vmatprep.subr.bf16.mxu0 0
        %352 = vmatpush1.bf16.msra.mxu0 0
        %353 = vmatprep.subr.bf16.mxu0 0
        %354 = vmatpush1.bf16.msra.mxu0 0
        %355 = vmatprep.subr.bf16.mxu0 0
        %356 = vmatpush1.bf16.msra.mxu0 0
        %357 = vmatprep.subr.bf16.mxu0 0
        %358 = vmatpush1.bf16.msra.mxu0 0
        %359 = vmatprep.subr.bf16.mxu0 0
        %360 = vmatpush1.bf16.msra.mxu0 0
        %361 = vmatprep.subr.bf16.mxu0 0
        %362 = vmatpush1.bf16.msra.mxu0 0
        %363 = vmatprep.subr.bf16.mxu0 0
        %364 = vmatpush1.bf16.msra.mxu0 0
        %365 = vmatprep.subr.bf16.mxu0 0
        %366 = vmatpush1.bf16.msra.mxu0 0
        %367 = vmatprep.subr.bf16.mxu0 0
        %368 = vmatpush1.bf16.msra.mxu0 0
        %369 = vmatprep.mubr.bf16.mxu0 0
        %370 = vmatmul.mubr.bf16.gmra.mrb[0].mxu0 %v335
        %v371 = vpop.f32.mrb[0].mxu0
        %v372 = vadd.f32 %v241, %v371
        %v373 = vpop.f32.mrb[0].mxu0
        %v374 = vadd.f32 %v241, %v373
        %v375 = vpop.f32.mrb[0].mxu0
        %v376 = vadd.f32 %v246, %v375
        %v377 = vpop.f32.mrb[0].mxu0
        %v378 = vadd.f32 %v246, %v377
        %379 = vdwg.mxu0
        %380 = vmatprep.subr.bf16.mxu0 %v304
        %381 = vmatpush1.bf16.msra.mxu0 %v303
        %382 = vmatprep.subr.bf16.mxu0 %v308
        %383 = vmatpush1.bf16.msra.mxu0 %v307
        %384 = vmatprep.subr.bf16.mxu0 %v312
        %385 = vmatpush1.bf16.msra.mxu0 %v311
        %386 = vmatprep.subr.bf16.mxu0 %v316
        %387 = vmatpush1.bf16.msra.mxu0 %v315
        %388 = vmatprep.subr.bf16.mxu0 0
        %389 = vmatpush1.bf16.msra.mxu0 0
        %390 = vmatprep.subr.bf16.mxu0 0
        %391 = vmatpush1.bf16.msra.mxu0 0
        %392 = vmatprep.subr.bf16.mxu0 0
        %393 = vmatpush1.bf16.msra.mxu0 0
        %394 = vmatprep.subr.bf16.mxu0 0
        %395 = vmatpush1.bf16.msra.mxu0 0
        %396 = vmatprep.subr.bf16.mxu0 0
        %397 = vmatpush1.bf16.msra.mxu0 0
        %398 = vmatprep.subr.bf16.mxu0 0
        %399 = vmatpush1.bf16.msra.mxu0 0
        %400 = vmatprep.subr.bf16.mxu0 0
        %401 = vmatpush1.bf16.msra.mxu0 0
        %402 = vmatprep.subr.bf16.mxu0 0
        %403 = vmatpush1.bf16.msra.mxu0 0
        %404 = vmatprep.subr.bf16.mxu0 0
        %405 = vmatpush1.bf16.msra.mxu0 0
        %406 = vmatprep.subr.bf16.mxu0 0
        %407 = vmatpush1.bf16.msra.mxu0 0
        %408 = vmatprep.subr.bf16.mxu0 0
        %409 = vmatpush1.bf16.msra.mxu0 0
        %410 = vmatprep.subr.bf16.mxu0 0
        %411 = vmatpush1.bf16.msra.mxu0 0
        %412 = vmatprep.mubr.bf16.mxu0 0
        %413 = vmatmul.mubr.bf16.gmra.mrb[0].mxu0 %v335
        %v414 = vpop.f32.mrb[0].mxu0
        %v415 = vadd.f32 %v241, %v414
        %v416 = vpop.f32.mrb[0].mxu0
        %v417 = vadd.f32 %v241, %v416
        %v418 = vpop.f32.mrb[0].mxu0
        %v419 = vadd.f32 %v246, %v418
        %v420 = vpop.f32.mrb[0].mxu0
        %v421 = vadd.f32 %v246, %v420
        %422 = vdwg.mxu0
        %vm423 = vcmp.gt.f32.partialorder %v372, 0.0
        %vm424 = vcmp.gt.f32.partialorder %v374, 0.0
        %vm425 = vcmp.gt.f32.partialorder %v415, 0.0
        %vm426 = vcmp.gt.f32.partialorder %v417, 0.0
        %vm427 = vcmp.gt.f32.partialorder %v376, 0.0
        %vm428 = vcmp.gt.f32.partialorder %v378, 0.0
        %vm429 = vcmp.gt.f32.partialorder %v419, 0.0
        %vm430 = vcmp.gt.f32.partialorder %v421, 0.0
        %v431 = vmul.f32 %v372, 0.2
        %v432 = vmul.f32 %v374, 0.2
        %v433 = vmul.f32 %v415, 0.2
        %v434 = vmul.f32 %v417, 0.2
        %v435 = vmul.f32 %v376, 0.2
        %v436 = vmul.f32 %v378, 0.2
        %v437 = vmul.f32 %v419, 0.2
        %v438 = vmul.f32 %v421, 0.2
        %v439 = vsel %vm423, %v372, %v431
        %v440 = vsel %vm424, %v374, %v432
        %v441 = vsel %vm425, %v415, %v433
        %v442 = vsel %vm426, %v417, %v434
        %v443 = vsel %vm427, %v376, %v435
        %v444 = vsel %vm428, %v378, %v436
        %v445 = vsel %vm429, %v419, %v437
        %v446 = vsel %vm430, %v421, %v438
        %v447 = vpack.c.bf16 %v443, %v439
        %v448 = vpack.c.bf16 %v444, %v440
        %v449 = vpack.c.bf16 %v445, %v441
        %v450 = vpack.c.bf16 %v446, %v442
        %v455 = vunpack.c.l.b16 %v447
        %v456 = vunpack.c.l.b16 %v448
        %v457 = vunpack.c.l.b16 %v449
        %v458 = vunpack.c.l.b16 %v450
        %v459 = vunpack.c.h.b16 %v447
        %v460 = vunpack.c.h.b16 %v448
        %v461 = vunpack.c.h.b16 %v449
        %v462 = vunpack.c.h.b16 %v450
        %v463 = vpack.c.b16 %v456, %v455
        %v464 = vpack.c.b16 %v458, %v457
        %v465 = vpack.c.b16 %v460, %v459
        %v466 = vpack.c.b16 %v462, %v461
        %471 = vst [vmem:[%s214] sm:$0xff] %v463
        %472 = vst [vmem:[%s214 + $0x8] sm:$0xff] %v464
        %473 = vst [vmem:[%s214 + $0x10] sm:$0xff] %v465
        %474 = vst [vmem:[%s214 + $0x18] sm:$0xff] %v466
        %s475 = sand.u32 %s90, 1
        %s476 = sand.u32 %s90, 1
        %s477 = smul.addr %s476, 32
        %s478 = scalar_lea.vmem [#allocation3], %s477
        // Predicated region
        $region56: #{forward.16} parent=50 // pred_check
          %p479 = pneg %p100
        $region57: #{forward.16} parent=50 // pred_check_branch
          %481 = sbr.rel (%p479) target = $region59
        $region58: #{forward.16} parent=50 // pred_region
          %s482 = smul.u32 4, %s14
          %s483 = smul.addr %s482, 4
          %s484 = scalar_lea.vmem %s3, %s483
          // Predicated region
          $region60: #{forward.16} parent=58 // pred_check
            _
          $region61: #{forward.16} parent=58 // pred_check_branch
            %486 = sbr.rel (0) target = $region63
          $region62: #{forward.16} parent=58 // pred_region
            // Predicated region
            $region64: #{forward.16} parent=62 // pred_check
              _
            $region65: #{forward.16} parent=62 // pred_check_branch
              %488 = sbr.rel (0) target = $region67
            $region66: #{forward.16} parent=62 // pred_region
              loop: start=0, step=1, limit=1
              $region68: #{forward.16} parent=66 // loop_pre_header
                _
              $region69: #{forward.16} parent=66 // loop_header
                %s490 = sphi 0, %s494
                %p491 = scmp.ge.s32.totalorder %s490, 1
                %s495 = sphi %s478, %s478
                %s496 = sphi %s484, %s484
              $region70: #{forward.16} parent=66 // loop_header_branch
                %493 = sbr.rel (%p491) target = $region74
              $region71: #{forward.16} parent=66 // loop_body
                %v497 = vld [vmem:[%s495] sm:$0xff]
                %498 = vst [vmem:[%s496] sm:$0xff] %v497
                %v499 = vld [vmem:[%s495 + $0x8] sm:$0xff]
                %500 = vst [vmem:[%s496 + $0x8] sm:$0xff] %v499
                %v501 = vld [vmem:[%s495 + $0x10] sm:$0xff]
                %502 = vst [vmem:[%s496 + $0x80] sm:$0xff] %v501
                %v503 = vld [vmem:[%s495 + $0x18] sm:$0xff]
                %504 = vst [vmem:[%s496 + $0x88] sm:$0xff] %v503
              $region72: #{forward.16} parent=66 // loop_footer
                %s494 = sadd.s32 1, %s490
              $region73: #{forward.16} parent=66 // loop_footer_branch
                %489 = sbr.rel target = $region69
              $region74: #{forward.16} parent=66 // loop_exit
                _
            $region67: #{forward.16} parent=62 // pred_fallthru
              _
            // Predicated region
            $region75: #{forward.16} parent=62 // pred_check
              _
            $region76: #{forward.16} parent=62 // pred_check_branch
              %506 = sbr.rel target = $region78
            $region77: #{forward.16} parent=62 // pred_region
              _
            $region78: #{forward.16} parent=62 // pred_fallthru
              _
          $region63: #{forward.16} parent=58 // pred_fallthru
            _
          %507 = vnop
        $region59: #{forward.16} parent=50 // pred_fallthru
          _
      $region51: #{forward.16} parent=5 // pred_fallthru
        _
      %p508 = scmp.le.s32.totalorder 2, %s9
      // Predicated region
      $region79: #{forward.16} parent=5 // pred_check
        %p509 = pneg %p508
      $region80: #{forward.16} parent=5 // pred_check_branch
        %511 = sbr.rel (%p509) target = $region82
      $region81: #{forward.16} parent=5 // pred_region
        %s512 = ssub.s32 %s9, 2
        // Predicated region
        $region83: #{forward.16} parent=81 // pred_check
          %p513 = pneg %p106
        $region84: #{forward.16} parent=81 // pred_check_branch
          %515 = sbr.rel (%p513) target = $region86
        $region85: #{forward.16} parent=81 // pred_region
          %s516 = sand.u32 %s91, 1
          %s517 = sand.u32 %s91, 1
          %s518 = smul.addr %s517, 32
          %s519 = scalar_lea.vmem [#allocation3], %s518
        $region86: #{forward.16} parent=81 // pred_fallthru
          _
      $region82: #{forward.16} parent=5 // pred_fallthru
        _
    $region6: #{forward.16} parent=1 // loop_footer
      %s13 = sadd.s32 1, %s9
    $region7: #{forward.16} parent=1 // loop_footer_branch
      %8 = sbr.rel target = $region3
    $region8: #{forward.16} parent=1 // loop_exit
      _

// kernel: forward.17
$region0: #{forward.17}
  #allocation0 [shape = 'u32[]', space=smem, size = 0x4, offset = 0x4, fixed_abs, tag = 'smem constant byte address 0x4 - core index']
  #allocation1 [shape = 'u32[144,128]{1,0:T(1,128)}', space=vmem, size = 0x12000, scoped, tag = 'internal scratch']
  %s0 = inlined_call_operand.vmem [shape: bf16[16,128], index: 0, kind: input, shape index: {}]
  %s1 = inlined_call_operand.vmem [shape: bf16[128,1024], index: 1, kind: input, shape index: {}]
  %s2 = inlined_call_operand.vmem [shape: f32[16,1], index: 2, kind: input, shape index: {}]
  %s3 = inlined_call_operand.vmem [shape: bf16[16,1024], index: 3, kind: output, shape index: {}]
  %s4 = sld [smem:[#allocation0]]
  $region117: #{forward.17} parent=0
    _
  %s6 = ssub.s32 1, %s4
  %s7 = scalar_select 0, %s6, %s4
  $region1: #{forward.17} parent=0
    #allocation2 [shape = 'u8[131072]{0}', space=vmem, size = 0x20000, scoped, tag = 'input window, operand 1']
    #allocation3 [shape = 'u8[16384]{0}', space=vmem, size = 0x4000, scoped, tag = 'output window, operand 0']
    loop: start=0, step=1, limit=6
    $region2: #{forward.17} parent=1 // loop_pre_header
      _
    $region3: #{forward.17} parent=1 // loop_header
      %s9 = sphi 0, %s13
      %p10 = scmp.ge.s32.totalorder %s9, 6
      %s17 = sphi 0, %s17
      %s19 = sphi 0, %s17
      %s20 = sphi 0, %s19
      %s34 = sphi 0, %s20
      %s40 = sphi 0, %s42
      %s43 = sphi 0, %s40
      %s44 = sphi 0, %s43
      %s60 = sphi 0, %s44
      %s64 = sphi 0, %s64
      %s66 = sphi 0, %s64
      %s67 = sphi 0, %s66
      %s81 = sphi 0, %s67
      %s87 = sphi 0, %s89
      %s90 = sphi 0, %s87
      %s91 = sphi 0, %s90
      %s107 = sphi 0, %s91
    $region4: #{forward.17} parent=1 // loop_header_branch
      %12 = sbr.rel (%p10) target = $region8
    $region5: #{forward.17} parent=1 // loop_body
      %s14 = ssub.s32 %s9, 1
      %s15 = ssub.s32 %s9, 2
      %s16 = sadd.s32 %s9, 1
      %s18 = sadd.s32 %s17, 1
      %p21 = scmp.eq.s32.totalorder %s9, 3
      %p22 = scmp.ne.s32.totalorder %s17, %s19
      %p23 = scmp.eq.s32.totalorder %s9, 0
      %p24 = por %p22, %p23
      %p25 = scmp.ne.s32.totalorder %s17, %s19
      %p26 = scmp.eq.s32.totalorder %s14, 3
      %p27 = por %p25, %p26
      %p28 = scmp.ne.s32.totalorder %s19, %s20
      %p29 = scmp.eq.s32.totalorder %s14, 0
      %p30 = por %p28, %p29
      %p31 = scmp.ne.s32.totalorder %s19, %s20
      %p32 = scmp.eq.s32.totalorder %s15, 3
      %p33 = por %p31, %p32
      %p35 = scmp.ne.s32.totalorder %s20, %s34
      %p36 = scmp.eq.s32.totalorder %s15, 0
      %p37 = por %p35, %p36
      %s38 = ssub.s32 %s9, %s16
      %p39 = scmp.eq.s32.totalorder %s38, 0
      %s41 = sadd.s32 %s40, 1
      %s42 = scalar_select %p39, %s40, %s41
      %p45 = pneg %p39
      %p46 = scmp.eq.s32.totalorder %s9, 3
      %p47 = por %p45, %p46
      %p48 = scmp.ne.s32.totalorder %s40, %s43
      %p49 = scmp.eq.s32.totalorder %s9, 0
      %p50 = por %p48, %p49
      %p51 = scmp.ne.s32.totalorder %s40, %s43
      %p52 = scmp.eq.s32.totalorder %s14, 3
      %p53 = por %p51, %p52
      %p54 = scmp.ne.s32.totalorder %s43, %s44
      %p55 = scmp.eq.s32.totalorder %s14, 0
      %p56 = por %p54, %p55
      %p57 = scmp.ne.s32.totalorder %s43, %s44
      %p58 = scmp.eq.s32.totalorder %s15, 3
      %p59 = por %p57, %p58
      %p61 = scmp.ne.s32.totalorder %s44, %s60
      %p62 = scmp.eq.s32.totalorder %s15, 0
      %p63 = por %p61, %p62
      %s65 = sadd.s32 %s64, 1
      %p68 = scmp.eq.s32.totalorder %s9, 3
      %p69 = scmp.ne.s32.totalorder %s64, %s66
      %p70 = scmp.eq.s32.totalorder %s9, 0
      %p71 = por %p69, %p70
      %p72 = scmp.ne.s32.totalorder %s64, %s66
      %p73 = scmp.eq.s32.totalorder %s14, 3
      %p74 = por %p72, %p73
      %p75 = scmp.ne.s32.totalorder %s66, %s67
      %p76 = scmp.eq.s32.totalorder %s14, 0
      %p77 = por %p75, %p76
      %p78 = scmp.ne.s32.totalorder %s66, %s67
      %p79 = scmp.eq.s32.totalorder %s15, 3
      %p80 = por %p78, %p79
      %p82 = scmp.ne.s32.totalorder %s67, %s81
      %p83 = scmp.eq.s32.totalorder %s15, 0
      %p84 = por %p82, %p83
      %s85 = ssub.s32 %s9, %s16
      %p86 = scmp.eq.s32.totalorder %s85, 0
      %s88 = sadd.s32 %s87, 1
      %s89 = scalar_select %p86, %s87, %s88
      %p92 = pneg %p86
      %p93 = scmp.eq.s32.totalorder %s9, 3
      %p94 = por %p92, %p93
      %p95 = scmp.ne.s32.totalorder %s87, %s90
      %p96 = scmp.eq.s32.totalorder %s9, 0
      %p97 = por %p95, %p96
      %p98 = scmp.ne.s32.totalorder %s87, %s90
      %p99 = scmp.eq.s32.totalorder %s14, 3
      %p100 = por %p98, %p99
      %p101 = scmp.ne.s32.totalorder %s90, %s91
      %p102 = scmp.eq.s32.totalorder %s14, 0
      %p103 = por %p101, %p102
      %p104 = scmp.ne.s32.totalorder %s90, %s91
      %p105 = scmp.eq.s32.totalorder %s15, 3
      %p106 = por %p104, %p105
      %p108 = scmp.ne.s32.totalorder %s91, %s107
      %p109 = scmp.eq.s32.totalorder %s15, 0
      %p110 = por %p108, %p109
      %p111 = scmp.le.s32.totalorder 1, %s9
      %p112 = scmp.lt.s32.totalorder %s9, 5
      %p113 = pnand %p111, %p112
      %p114 = pneg %p113
      // Predicated region
      $region9: #{forward.17} parent=5 // pred_check
        _
      $region10: #{forward.17} parent=5 // pred_check_branch
        %116 = sbr.rel (%p113) target = $region12
      $region11: #{forward.17} parent=5 // pred_region
        %s117 = ssub.s32 %s9, 1
        // Predicated region
        $region13: #{forward.17} parent=11 // pred_check
          %p118 = pneg %p30
        $region14: #{forward.17} parent=11 // pred_check_branch
          %120 = sbr.rel (%p118) target = $region16
        $region15: #{forward.17} parent=11 // pred_region
          _
        $region16: #{forward.17} parent=11 // pred_fallthru
          _
        // Predicated region
        $region17: #{forward.17} parent=11 // pred_check
          %p121 = pneg %p77
        $region18: #{forward.17} parent=11 // pred_check_branch
          %123 = sbr.rel (%p121) target = $region20
        $region19: #{forward.17} parent=11 // pred_region
          _
        $region20: #{forward.17} parent=11 // pred_fallthru
          _
      $region12: #{forward.17} parent=5 // pred_fallthru
        _
      %p124 = scmp.lt.s32.totalorder %s9, 4
      // Predicated region
      $region21: #{forward.17} parent=5 // pred_check
        %p125 = pneg %p124
      $region22: #{forward.17} parent=5 // pred_check_branch
        %127 = sbr.rel (%p125) target = $region24
      $region23: #{forward.17} parent=5 // pred_region
        // Predicated region
        $region25: #{forward.17} parent=23 // pred_check
          %p128 = pneg %p50
        $region26: #{forward.17} parent=23 // pred_check_branch
          %130 = sbr.rel (%p128) target = $region28
        $region27: #{forward.17} parent=23 // pred_region
          %s131 = sand.u32 %s40, 1
          %s132 = sand.u32 %s40, 1
          %s133 = smul.addr %s132, 128
          %s134 = scalar_lea.vmem [#allocation2], %s133
          %s135 = smul.u32 2, %s9
          %s136 = smul.addr %s135, 4
          %s137 = scalar_lea.vmem %s1, %s136
          // Predicated region
          $region29: #{forward.17} parent=27 // pred_check
            _
          $region30: #{forward.17} parent=27 // pred_check_branch
            %139 = sbr.rel (0) target = $region32
          $region31: #{forward.17} parent=27 // pred_region
            // Predicated region
            $region33: #{forward.17} parent=31 // pred_check
              _
            $region34: #{forward.17} parent=31 // pred_check_branch
              %141 = sbr.rel (0) target = $region36
            $region35: #{forward.17} parent=31 // pred_region
              // Predicated region
              $region48: #{forward.17} parent=35 // pred_check
                _
              $region49: #{forward.17} parent=35 // pred_check_branch
                %186 = sbr.rel (0) target = $region51
              $region50: #{forward.17} parent=35 // pred_region
                loop: start=0, step=1, limit=1
                $region52: #{forward.17} parent=50 // loop_pre_header
                  _
                $region53: #{forward.17} parent=50 // loop_header
                  %s188 = sphi 0, %s192
                  %p189 = scmp.ge.s32.totalorder %s188, 1
                  %s193 = sphi %s137, %s137
                  %s194 = sphi %s134, %s134
                $region54: #{forward.17} parent=50 // loop_header_branch
                  %191 = sbr.rel (%p189) target = $region58
                $region55: #{forward.17} parent=50 // loop_body
                  %v195 = vld [vmem:[%s193] sm:$0xff]
                  %196 = vst [vmem:[%s194] sm:$0xff] %v195
                  %v197 = vld [vmem:[%s193 + $0x20] sm:$0xff]
                  %198 = vst [vmem:[%s194 + $0x8] sm:$0xff] %v197
                  %v199 = vld [vmem:[%s193 + $0x40] sm:$0xff]
                  %200 = vst [vmem:[%s194 + $0x10] sm:$0xff] %v199
                  %v201 = vld [vmem:[%s193 + $0x60] sm:$0xff]
                  %202 = vst [vmem:[%s194 + $0x18] sm:$0xff] %v201
                  %v203 = vld [vmem:[%s193 + $0x80] sm:$0xff]
                  %204 = vst [vmem:[%s194 + $0x20] sm:$0xff] %v203
                  %v205 = vld [vmem:[%s193 + $0xa0] sm:$0xff]
                  %206 = vst [vmem:[%s194 + $0x28] sm:$0xff] %v205
                  %v207 = vld [vmem:[%s193 + $0xc0] sm:$0xff]
                  %208 = vst [vmem:[%s194 + $0x30] sm:$0xff] %v207
                  %v209 = vld [vmem:[%s193 + $0xe0] sm:$0xff]
                  %210 = vst [vmem:[%s194 + $0x38] sm:$0xff] %v209
                  %v211 = vld [vmem:[%s193 + $0x100] sm:$0xff]
                  %212 = vst [vmem:[%s194 + $0x40] sm:$0xff] %v211
                  %v213 = vld [vmem:[%s193 + $0x120] sm:$0xff]
                  %214 = vst [vmem:[%s194 + $0x48] sm:$0xff] %v213
                  %v215 = vld [vmem:[%s193 + $0x140] sm:$0xff]
                  %216 = vst [vmem:[%s194 + $0x50] sm:$0xff] %v215
                  %v217 = vld [vmem:[%s193 + $0x160] sm:$0xff]
                  %218 = vst [vmem:[%s194 + $0x58] sm:$0xff] %v217
                  %v219 = vld [vmem:[%s193 + $0x180] sm:$0xff]
                  %220 = vst [vmem:[%s194 + $0x60] sm:$0xff] %v219
                  %v221 = vld [vmem:[%s193 + $0x1a0] sm:$0xff]
                  %222 = vst [vmem:[%s194 + $0x68] sm:$0xff] %v221
                  %v223 = vld [vmem:[%s193 + $0x1c0] sm:$0xff]
                  %224 = vst [vmem:[%s194 + $0x70] sm:$0xff] %v223
                  %v225 = vld [vmem:[%s193 + $0x1e0] sm:$0xff]
                  %226 = vst [vmem:[%s194 + $0x78] sm:$0xff] %v225
                $region56: #{forward.17} parent=50 // loop_footer
                  %s192 = sadd.s32 1, %s188
                $region57: #{forward.17} parent=50 // loop_footer_branch
                  %187 = sbr.rel target = $region53
                $region58: #{forward.17} parent=50 // loop_exit
                  _
              $region51: #{forward.17} parent=35 // pred_fallthru
                _
              // Predicated region
              $region59: #{forward.17} parent=35 // pred_check
                _
              $region60: #{forward.17} parent=35 // pred_check_branch
                %228 = sbr.rel target = $region62
              $region61: #{forward.17} parent=35 // pred_region
                _
              $region62: #{forward.17} parent=35 // pred_fallthru
                _
            $region36: #{forward.17} parent=31 // pred_fallthru
              _
            // Predicated region
            $region37: #{forward.17} parent=31 // pred_check
              _
            $region38: #{forward.17} parent=31 // pred_check_branch
              %143 = sbr.rel target = $region40
            $region39: #{forward.17} parent=31 // pred_region
              loop: start=0, step=1, limit=1
              $region41: #{forward.17} parent=39 // loop_pre_header
                _
              $region42: #{forward.17} parent=39 // loop_header
                %s146 = sphi 0, %s150
                %p147 = scmp.ge.s32.totalorder %s146, 1
                %s151 = sphi %s137, %s137
                %s152 = sphi %s134, %s134
              $region43: #{forward.17} parent=39 // loop_header_branch
                %149 = sbr.rel (%p147) target = $region47
              $region44: #{forward.17} parent=39 // loop_body
                %v153 = vld [vmem:[%s151] sm:$0xff]
                %154 = vst [vmem:[%s152] sm:$0xff] %v153
                %v155 = vld [vmem:[%s151 + $0x20] sm:$0xff]
                %156 = vst [vmem:[%s152 + $0x8] sm:$0xff] %v155
                %v157 = vld [vmem:[%s151 + $0x40] sm:$0xff]
                %158 = vst [vmem:[%s152 + $0x10] sm:$0xff] %v157
                %v159 = vld [vmem:[%s151 + $0x60] sm:$0xff]
                %160 = vst [vmem:[%s152 + $0x18] sm:$0xff] %v159
                %v161 = vld [vmem:[%s151 + $0x80] sm:$0xff]
                %162 = vst [vmem:[%s152 + $0x20] sm:$0xff] %v161
                %v163 = vld [vmem:[%s151 + $0xa0] sm:$0xff]
                %164 = vst [vmem:[%s152 + $0x28] sm:$0xff] %v163
                %v165 = vld [vmem:[%s151 + $0xc0] sm:$0xff]
                %166 = vst [vmem:[%s152 + $0x30] sm:$0xff] %v165
                %v167 = vld [vmem:[%s151 + $0xe0] sm:$0xff]
                %168 = vst [vmem:[%s152 + $0x38] sm:$0xff] %v167
                %v169 = vld [vmem:[%s151 + $0x100] sm:$0xff]
                %170 = vst [vmem:[%s152 + $0x40] sm:$0xff] %v169
                %v171 = vld [vmem:[%s151 + $0x120] sm:$0xff]
                %172 = vst [vmem:[%s152 + $0x48] sm:$0xff] %v171
                %v173 = vld [vmem:[%s151 + $0x140] sm:$0xff]
                %174 = vst [vmem:[%s152 + $0x50] sm:$0xff] %v173
                %v175 = vld [vmem:[%s151 + $0x160] sm:$0xff]
                %176 = vst [vmem:[%s152 + $0x58] sm:$0xff] %v175
                %v177 = vld [vmem:[%s151 + $0x180] sm:$0xff]
                %178 = vst [vmem:[%s152 + $0x60] sm:$0xff] %v177
                %v179 = vld [vmem:[%s151 + $0x1a0] sm:$0xff]
                %180 = vst [vmem:[%s152 + $0x68] sm:$0xff] %v179
                %v181 = vld [vmem:[%s151 + $0x1c0] sm:$0xff]
                %182 = vst [vmem:[%s152 + $0x70] sm:$0xff] %v181
                %v183 = vld [vmem:[%s151 + $0x1e0] sm:$0xff]
                %184 = vst [vmem:[%s152 + $0x78] sm:$0xff] %v183
              $region45: #{forward.17} parent=39 // loop_footer
                %s150 = sadd.s32 1, %s146
              $region46: #{forward.17} parent=39 // loop_footer_branch
                %145 = sbr.rel target = $region42
              $region47: #{forward.17} parent=39 // loop_exit
                _
            $region40: #{forward.17} parent=31 // pred_fallthru
              _
          $region32: #{forward.17} parent=27 // pred_fallthru
            _
          %229 = vnop
        $region28: #{forward.17} parent=23 // pred_fallthru
          _
      $region24: #{forward.17} parent=5 // pred_fallthru
        _
      %p230 = scmp.le.s32.totalorder 1, %s9
      %p231 = scmp.lt.s32.totalorder %s9, 5
      %p232 = pnand %p230, %p231
      %p233 = pneg %p232
      // Predicated region
      $region63: #{forward.17} parent=5 // pred_check
        _
      $region64: #{forward.17} parent=5 // pred_check_branch
        %235 = sbr.rel (%p232) target = $region66
      $region65: #{forward.17} parent=5 // pred_region
        %s236 = ssub.s32 %s9, 1
        %s237 = sand.u32 %s43, 1
        %s238 = sand.u32 %s43, 1
        %s239 = smul.addr %s238, 128
        %s240 = scalar_lea.vmem [#allocation2], %s239
        // Predicated region
        $region67: #{forward.17} parent=65 // pred_check
          %p241 = pneg %p56
        $region68: #{forward.17} parent=65 // pred_check_branch
          %243 = sbr.rel (%p241) target = $region70
        $region69: #{forward.17} parent=65 // pred_region
          _
        $region70: #{forward.17} parent=65 // pred_fallthru
          _
        %p244 = pneg %p30
        %p245 = pneg %p27
        %s246 = sand.u32 %s43, 1
        %s247 = sand.u32 %s43, 1
        %s248 = smul.addr %s247, 128
        %s249 = scalar_lea.vmem [#allocation2], %s248
        %p250 = pneg %p56
        %p251 = pneg %p53
        %p252 = pneg %p77
        %p253 = pneg %p74
        %p254 = pneg %p103
        %p255 = pneg %p100
        %s256 = sand.u32 %s90, 1
        %s257 = sand.u32 %s90, 1
        %s258 = smul.addr %s257, 16
        %s259 = scalar_lea.vmem [#allocation3], %s258
        %s260 = smul.u32 2, %s14
        %s261 = smul.u32 2, %s14
        %v263 = vld [vmem:[%s0] sm:$0xf]
        %v264 = vld [vmem:[%s0 + $0x4] sm:$0xf]
        %v265 = vld [vmem:[%s240] sm:$0xff]
        %v266 = vld [vmem:[%s240 + $0x8] sm:$0xff]
        %v267 = vld [vmem:[%s240 + $0x10] sm:$0xff]
        %v268 = vld [vmem:[%s240 + $0x18] sm:$0xff]
        %v269 = vld [vmem:[%s240 + $0x20] sm:$0xff]
        %v270 = vld [vmem:[%s240 + $0x28] sm:$0xff]
        %v271 = vld [vmem:[%s240 + $0x30] sm:$0xff]
        %v272 = vld [vmem:[%s240 + $0x38] sm:$0xff]
        %v273 = vld [vmem:[%s240 + $0x40] sm:$0xff]
        %v274 = vld [vmem:[%s240 + $0x48] sm:$0xff]
        %v275 = vld [vmem:[%s240 + $0x50] sm:$0xff]
        %v276 = vld [vmem:[%s240 + $0x58] sm:$0xff]
        %v277 = vld [vmem:[%s240 + $0x60] sm:$0xff]
        %v278 = vld [vmem:[%s240 + $0x68] sm:$0xff]
        %v279 = vld [vmem:[%s240 + $0x70] sm:$0xff]
        %v280 = vld [vmem:[%s240 + $0x78] sm:$0xff]
        %v281 = vld [vmem:[%s2] sm:$0xff]
        %v282 = vld [vmem:[%s2 + $0x8] sm:$0xff]
        %284 = vset.pattern.permute.xlu0 0
        %285 = vperm.xlu0 %284, %v281
        %v286 = vpop.permute.xlu0 %285
        %289 = vset.pattern.permute.xlu0 0
        %290 = vperm.xlu0 %289, %v282
        %v291 = vpop.permute.xlu0 %290
        %v295 = vunpack.c.l.b16 %v263
        %v296 = vunpack.c.l.b16 %v264
        %v297 = vpack.c.b16 %v296, %v295
        %v315 = vunpack.c.l.b16 %v265
        %v316 = vunpack.c.h.b16 %v265
        %v317 = vunpack.c.l.b16 %v266
        %v318 = vunpack.c.h.b16 %v266
        %v319 = vunpack.c.l.b16 %v267
        %v320 = vunpack.c.h.b16 %v267
        %v321 = vunpack.c.l.b16 %v268
        %v322 = vunpack.c.h.b16 %v268
        %v323 = vunpack.c.l.b16 %v269
        %v324 = vunpack.c.h.b16 %v269
        %v325 = vunpack.c.l.b16 %v270
        %v326 = vunpack.c.h.b16 %v270
        %v327 = vunpack.c.l.b16 %v271
        %v328 = vunpack.c.h.b16 %v271
        %v329 = vunpack.c.l.b16 %v272
        %v330 = vunpack.c.h.b16 %v272
        %v331 = vunpack.c.l.b16 %v273
        %v332 = vunpack.c.h.b16 %v273
        %v333 = vunpack.c.l.b16 %v274
        %v334 = vunpack.c.h.b16 %v274
        %v335 = vunpack.c.l.b16 %v275
        %v336 = vunpack.c.h.b16 %v275
        %v337 = vunpack.c.l.b16 %v276
        %v338 = vunpack.c.h.b16 %v276
        %v339 = vunpack.c.l.b16 %v277
        %v340 = vunpack.c.h.b16 %v277
        %v341 = vunpack.c.l.b16 %v278
        %v342 = vunpack.c.h.b16 %v278
        %v343 = vunpack.c.l.b16 %v279
        %v344 = vunpack.c.h.b16 %v279
        %v345 = vunpack.c.l.b16 %v280
        %v346 = vunpack.c.h.b16 %v280
        %v347 = vpack.c.b16 %v317, %v315
        %v348 = vpack.c.b16 %v318, %v316
        %v349 = vpack.c.b16 %v321, %v319
        %v350 = vpack.c.b16 %v322, %v320
        %v351 = vpack.c.b16 %v325, %v323
        %v352 = vpack.c.b16 %v326, %v324
        %v353 = vpack.c.b16 %v329, %v327
        %v354 = vpack.c.b16 %v330, %v328
        %v355 = vpack.c.b16 %v333, %v331
        %v356 = vpack.c.b16 %v334, %v332
        %v357 = vpack.c.b16 %v337, %v335
        %v358 = vpack.c.b16 %v338, %v336
        %v359 = vpack.c.b16 %v341, %v339
        %v360 = vpack.c.b16 %v342, %v340
        %v361 = vpack.c.b16 %v345, %v343
        %v362 = vpack.c.b16 %v346, %v344
        %379 = vmatprep.subr.bf16.mxu0 %v348
        %380 = vmatpush1.bf16.msra.mxu0 %v347
        %381 = vmatprep.subr.bf16.mxu0 %v350
        %382 = vmatpush1.bf16.msra.mxu0 %v349
        %383 = vmatprep.subr.bf16.mxu0 %v352
        %384 = vmatpush1.bf16.msra.mxu0 %v351
        %385 = vmatprep.subr.bf16.mxu0 %v354
        %386 = vmatpush1.bf16.msra.mxu0 %v353
        %387 = vmatprep.subr.bf16.mxu0 %v356
        %388 = vmatpush1.bf16.msra.mxu0 %v355
        %389 = vmatprep.subr.bf16.mxu0 %v358
        %390 = vmatpush1.bf16.msra.mxu0 %v357
        %391 = vmatprep.subr.bf16.mxu0 %v360
        %392 = vmatpush1.bf16.msra.mxu0 %v359
        %393 = vmatprep.subr.bf16.mxu0 %v362
        %394 = vmatpush1.bf16.msra.mxu0 %v361
        %395 = vmatprep.subr.bf16.mxu0 0
        %396 = vmatpush1.bf16.msra.mxu0 0
        %397 = vmatprep.subr.bf16.mxu0 0
        %398 = vmatpush1.bf16.msra.mxu0 0
        %399 = vmatprep.subr.bf16.mxu0 0
        %400 = vmatpush1.bf16.msra.mxu0 0
        %401 = vmatprep.subr.bf16.mxu0 0
        %402 = vmatpush1.bf16.msra.mxu0 0
        %403 = vmatprep.subr.bf16.mxu0 0
        %404 = vmatpush1.bf16.msra.mxu0 0
        %405 = vmatprep.subr.bf16.mxu0 0
        %406 = vmatpush1.bf16.msra.mxu0 0
        %407 = vmatprep.subr.bf16.mxu0 0
        %408 = vmatpush1.bf16.msra.mxu0 0
        %409 = vmatprep.subr.bf16.mxu0 0
        %410 = vmatpush1.bf16.msra.mxu0 0
        %411 = vmatprep.mubr.bf16.mxu0 0
        %412 = vmatmul.mubr.bf16.gmra.mrb[0].mxu0 %v297
        %v413 = vpop.f32.mrb[0].mxu0
        %v414 = vadd.f32 %v286, %v413
        %v415 = vpop.f32.mrb[0].mxu0
        %v416 = vadd.f32 %v286, %v415
        %v417 = vpop.f32.mrb[0].mxu0
        %v418 = vadd.f32 %v291, %v417
        %v419 = vpop.f32.mrb[0].mxu0
        %v420 = vadd.f32 %v291, %v419
        %421 = vdwg.mxu0
        %vm422 = vcmp.gt.f32.partialorder %v414, 0.0
        %vm423 = vcmp.gt.f32.partialorder %v416, 0.0
        %vm424 = vcmp.gt.f32.partialorder %v418, 0.0
        %vm425 = vcmp.gt.f32.partialorder %v420, 0.0
        %v426 = vmul.f32 %v414, 0.2
        %v427 = vmul.f32 %v416, 0.2
        %v428 = vmul.f32 %v418, 0.2
        %v429 = vmul.f32 %v420, 0.2
        %v430 = vsel %vm422, %v414, %v426
        %v431 = vsel %vm423, %v416, %v427
        %v432 = vsel %vm424, %v418, %v428
        %v433 = vsel %vm425, %v420, %v429
        %v434 = vpack.c.bf16 %v432, %v430
        %v435 = vpack.c.bf16 %v433, %v431
        %v438 = vunpack.c.l.b16 %v434
        %v439 = vunpack.c.l.b16 %v435
        %v440 = vunpack.c.h.b16 %v434
        %v441 = vunpack.c.h.b16 %v435
        %v442 = vpack.c.b16 %v439, %v438
        %v443 = vpack.c.b16 %v441, %v440
        %446 = vst [vmem:[%s259] sm:$0xff] %v442
        %447 = vst [vmem:[%s259 + $0x8] sm:$0xff] %v443
        %s448 = sand.u32 %s90, 1
        %s449 = sand.u32 %s90, 1
        %s450 = smul.addr %s449, 16
        %s451 = scalar_lea.vmem [#allocation3], %s450
        // Predicated region
        $region71: #{forward.17} parent=65 // pred_check
          %p452 = pneg %p100
        $region72: #{forward.17} parent=65 // pred_check_branch
          %454 = sbr.rel (%p452) target = $region74
        $region73: #{forward.17} parent=65 // pred_region
          %s455 = smul.u32 2, %s14
          %s456 = smul.addr %s455, 4
          %s457 = scalar_lea.vmem %s3, %s456
          // Predicated region
          $region75: #{forward.17} parent=73 // pred_check
            _
          $region76: #{forward.17} parent=73 // pred_check_branch
            %459 = sbr.rel (0) target = $region78
          $region77: #{forward.17} parent=73 // pred_region
            // Predicated region
            $region79: #{forward.17} parent=77 // pred_check
              _
            $region80: #{forward.17} parent=77 // pred_check_branch
              %461 = sbr.rel (0) target = $region82
            $region81: #{forward.17} parent=77 // pred_region
              // Predicated region
              $region94: #{forward.17} parent=81 // pred_check
                _
              $region95: #{forward.17} parent=81 // pred_check_branch
                %478 = sbr.rel (0) target = $region97
              $region96: #{forward.17} parent=81 // pred_region
                loop: start=0, step=1, limit=1
                $region98: #{forward.17} parent=96 // loop_pre_header
                  _
                $region99: #{forward.17} parent=96 // loop_header
                  %s480 = sphi 0, %s484
                  %p481 = scmp.ge.s32.totalorder %s480, 1
                  %s485 = sphi %s451, %s451
                  %s486 = sphi %s457, %s457
                $region100: #{forward.17} parent=96 // loop_header_branch
                  %483 = sbr.rel (%p481) target = $region104
                $region101: #{forward.17} parent=96 // loop_body
                  %v487 = vld [vmem:[%s485] sm:$0xff]
                  %488 = vst [vmem:[%s486] sm:$0xff] %v487
                  %v489 = vld [vmem:[%s485 + $0x8] sm:$0xff]
                  %490 = vst [vmem:[%s486 + $0x20] sm:$0xff] %v489
                $region102: #{forward.17} parent=96 // loop_footer
                  %s484 = sadd.s32 1, %s480
                $region103: #{forward.17} parent=96 // loop_footer_branch
                  %479 = sbr.rel target = $region99
                $region104: #{forward.17} parent=96 // loop_exit
                  _
              $region97: #{forward.17} parent=81 // pred_fallthru
                _
              // Predicated region
              $region105: #{forward.17} parent=81 // pred_check
                _
              $region106: #{forward.17} parent=81 // pred_check_branch
                %492 = sbr.rel target = $region108
              $region107: #{forward.17} parent=81 // pred_region
                _
              $region108: #{forward.17} parent=81 // pred_fallthru
                _
            $region82: #{forward.17} parent=77 // pred_fallthru
              _
            // Predicated region
            $region83: #{forward.17} parent=77 // pred_check
              _
            $region84: #{forward.17} parent=77 // pred_check_branch
              %463 = sbr.rel target = $region86
            $region85: #{forward.17} parent=77 // pred_region
              loop: start=0, step=1, limit=1
              $region87: #{forward.17} parent=85 // loop_pre_header
                _
              $region88: #{forward.17} parent=85 // loop_header
                %s466 = sphi 0, %s470
                %p467 = scmp.ge.s32.totalorder %s466, 1
                %s471 = sphi %s451, %s451
                %s472 = sphi %s457, %s457
              $region89: #{forward.17} parent=85 // loop_header_branch
                %469 = sbr.rel (%p467) target = $region93
              $region90: #{forward.17} parent=85 // loop_body
                %v473 = vld [vmem:[%s471] sm:$0xff]
                %474 = vst [vmem:[%s472] sm:$0xff] %v473
                %v475 = vld [vmem:[%s471 + $0x8] sm:$0xff]
                %476 = vst [vmem:[%s472 + $0x20] sm:$0xff] %v475
              $region91: #{forward.17} parent=85 // loop_footer
                %s470 = sadd.s32 1, %s466
              $region92: #{forward.17} parent=85 // loop_footer_branch
                %465 = sbr.rel target = $region88
              $region93: #{forward.17} parent=85 // loop_exit
                _
            $region86: #{forward.17} parent=77 // pred_fallthru
              _
          $region78: #{forward.17} parent=73 // pred_fallthru
            _
          %493 = vnop
        $region74: #{forward.17} parent=65 // pred_fallthru
          _
      $region66: #{forward.17} parent=5 // pred_fallthru
        _
      %p494 = scmp.le.s32.totalorder 2, %s9
      // Predicated region
      $region109: #{forward.17} parent=5 // pred_check
        %p495 = pneg %p494
      $region110: #{forward.17} parent=5 // pred_check_branch
        %497 = sbr.rel (%p495) target = $region112
      $region111: #{forward.17} parent=5 // pred_region
        %s498 = ssub.s32 %s9, 2
        // Predicated region
        $region113: #{forward.17} parent=111 // pred_check
          %p499 = pneg %p106
        $region114: #{forward.17} parent=111 // pred_check_branch
          %501 = sbr.rel (%p499) target = $region116
        $region115: #{forward.17} parent=111 // pred_region
          %s502 = sand.u32 %s91, 1
          %s503 = sand.u32 %s91, 1
          %s504 = smul.addr %s503, 16
          %s505 = scalar_lea.vmem [#allocation3], %s504
        $region116: #{forward.17} parent=111 // pred_fallthru
          _
      $region112: #{forward.17} parent=5 // pred_fallthru
        _
    $region6: #{forward.17} parent=1 // loop_footer
      %s13 = sadd.s32 1, %s9
    $region7: #{forward.17} parent=1 // loop_footer_branch
      %8 = sbr.rel target = $region3
    $region8: #{forward.17} parent=1 // loop_exit
      _

// kernel: forward.18
$region0: #{forward.18}
  #allocation0 [shape = 'u32[]', space=smem, size = 0x4, offset = 0x4, fixed_abs, tag = 'smem constant byte address 0x4 - core index']
  #allocation1 [shape = 'u32[144,128]{1,0:T(1,128)}', space=vmem, size = 0x12000, scoped, tag = 'internal scratch']
  %s0 = inlined_call_operand.vmem [shape: bf16[32,256], index: 0, kind: input, shape index: {}]
  %s1 = inlined_call_operand.vmem [shape: bf16[256,256], index: 1, kind: input, shape index: {}]
  %s2 = inlined_call_operand.vmem [shape: f32[32,1], index: 2, kind: input, shape index: {}]
  %s3 = inlined_call_operand.vmem [shape: bf16[32,256], index: 3, kind: output, shape index: {}]
  %s4 = sld [smem:[#allocation0]]
  $region22: #{forward.18} parent=0
    _
  %s6 = ssub.s32 1, %s4
  %s7 = scalar_select 0, %s6, %s4
  // Predicated region
  $region2: #{forward.18} parent=0 // pred_check
    _
  $region3: #{forward.18} parent=0 // pred_check_branch
    %9 = sbr.rel (0) target = $region5
  $region4: #{forward.18} parent=0 // pred_region
    _
  $region5: #{forward.18} parent=0 // pred_fallthru
    _
  // Predicated region
  $region6: #{forward.18} parent=0 // pred_check
    _
  $region7: #{forward.18} parent=0 // pred_check_branch
    %11 = sbr.rel (0) target = $region9
  $region8: #{forward.18} parent=0 // pred_region
    _
  $region9: #{forward.18} parent=0 // pred_fallthru
    _
  // Predicated region
  $region10: #{forward.18} parent=0 // pred_check
    _
  $region11: #{forward.18} parent=0 // pred_check_branch
    %13 = sbr.rel (0) target = $region13
  $region12: #{forward.18} parent=0 // pred_region
    _
  $region13: #{forward.18} parent=0 // pred_fallthru
    _
  %v14 = vld [vmem:[%s0] sm:$0xff]
  %v15 = vld [vmem:[%s0 + $0x8] sm:$0xff]
  %v16 = vld [vmem:[%s0 + $0x10] sm:$0xff]
  %v17 = vld [vmem:[%s0 + $0x18] sm:$0xff]
  %v18 = vld [vmem:[%s1] sm:$0xff]
  %v19 = vld [vmem:[%s1 + $0x8] sm:$0xff]
  %v20 = vld [vmem:[%s1 + $0x10] sm:$0xff]
  %v21 = vld [vmem:[%s1 + $0x18] sm:$0xff]
  %v22 = vld [vmem:[%s1 + $0x20] sm:$0xff]
  %v23 = vld [vmem:[%s1 + $0x28] sm:$0xff]
  %v24 = vld [vmem:[%s1 + $0x30] sm:$0xff]
  %v25 = vld [vmem:[%s1 + $0x38] sm:$0xff]
  %v26 = vld [vmem:[%s1 + $0x40] sm:$0xff]
  %v27 = vld [vmem:[%s1 + $0x48] sm:$0xff]
  %v28 = vld [vmem:[%s1 + $0x50] sm:$0xff]
  %v29 = vld [vmem:[%s1 + $0x58] sm:$0xff]
  %v30 = vld [vmem:[%s1 + $0x60] sm:$0xff]
  %v31 = vld [vmem:[%s1 + $0x68] sm:$0xff]
  %v32 = vld [vmem:[%s1 + $0x70] sm:$0xff]
  %v33 = vld [vmem:[%s1 + $0x78] sm:$0xff]
  %v34 = vld [vmem:[%s1 + $0x80] sm:$0xff]
  %v35 = vld [vmem:[%s1 + $0x88] sm:$0xff]
  %v36 = vld [vmem:[%s1 + $0x90] sm:$0xff]
  %v37 = vld [vmem:[%s1 + $0x98] sm:$0xff]
  %v38 = vld [vmem:[%s1 + $0xa0] sm:$0xff]
  %v39 = vld [vmem:[%s1 + $0xa8] sm:$0xff]
  %v40 = vld [vmem:[%s1 + $0xb0] sm:$0xff]
  %v41 = vld [vmem:[%s1 + $0xb8] sm:$0xff]
  %v42 = vld [vmem:[%s1 + $0xc0] sm:$0xff]
  %v43 = vld [vmem:[%s1 + $0xc8] sm:$0xff]
  %v44 = vld [vmem:[%s1 + $0xd0] sm:$0xff]
  %v45 = vld [vmem:[%s1 + $0xd8] sm:$0xff]
  %v46 = vld [vmem:[%s1 + $0xe0] sm:$0xff]
  %v47 = vld [vmem:[%s1 + $0xe8] sm:$0xff]
  %v48 = vld [vmem:[%s1 + $0xf0] sm:$0xff]
  %v49 = vld [vmem:[%s1 + $0xf8] sm:$0xff]
  %v50 = vld [vmem:[%s2] sm:$0xff]
  %v51 = vld [vmem:[%s2 + $0x8] sm:$0xff]
  %v52 = vld [vmem:[%s2 + $0x10] sm:$0xff]
  %v53 = vld [vmem:[%s2 + $0x18] sm:$0xff]
  %55 = vset.pattern.permute.xlu0 0
  %56 = vperm.xlu0 %55, %v50
  %v57 = vpop.permute.xlu0 %56
  %60 = vset.pattern.permute.xlu0 0
  %61 = vperm.xlu0 %60, %v51
  %v62 = vpop.permute.xlu0 %61
  %65 = vset.pattern.permute.xlu0 0
  %66 = vperm.xlu0 %65, %v52
  %v67 = vpop.permute.xlu0 %66
  %70 = vset.pattern.permute.xlu0 0
  %71 = vperm.xlu0 %70, %v53
  %v72 = vpop.permute.xlu0 %71
  %v78 = vunpack.c.l.b16 %v14
  %v79 = vunpack.c.h.b16 %v14
  %v80 = vunpack.c.l.b16 %v15
  %v81 = vunpack.c.h.b16 %v15
  %v82 = vunpack.c.l.b16 %v16
  %v83 = vunpack.c.h.b16 %v16
  %v84 = vunpack.c.l.b16 %v17
  %v85 = vunpack.c.h.b16 %v17
  %v86 = vpack.c.b16 %v80, %v78
  %v87 = vpack.c.b16 %v81, %v79
  %v88 = vpack.c.b16 %v84, %v82
  %v89 = vpack.c.b16 %v85, %v83
  %v126 = vunpack.c.l.b16 %v18
  %v127 = vunpack.c.h.b16 %v18
  %v128 = vunpack.c.l.b16 %v19
  %v129 = vunpack.c.h.b16 %v19
  %v130 = vunpack.c.l.b16 %v20
  %v131 = vunpack.c.h.b16 %v20
  %v132 = vunpack.c.l.b16 %v21
  %v133 = vunpack.c.h.b16 %v21
  %v134 = vunpack.c.l.b16 %v22
  %v135 = vunpack.c.h.b16 %v22
  %v136 = vunpack.c.l.b16 %v23
  %v137 = vunpack.c.h.b16 %v23
  %v138 = vunpack.c.l.b16 %v24
  %v139 = vunpack.c.h.b16 %v24
  %v140 = vunpack.c.l.b16 %v25
  %v141 = vunpack.c.h.b16 %v25
  %v142 = vunpack.c.l.b16 %v26
  %v143 = vunpack.c.h.b16 %v26
  %v144 = vunpack.c.l.b16 %v27
  %v145 = vunpack.c.h.b16 %v27
  %v146 = vunpack.c.l.b16 %v28
  %v147 = vunpack.c.h.b16 %v28
  %v148 = vunpack.c.l.b16 %v29
  %v149 = vunpack.c.h.b16 %v29
  %v150 = vunpack.c.l.b16 %v30
  %v151 = vunpack.c.h.b16 %v30
  %v152 = vunpack.c.l.b16 %v31
  %v153 = vunpack.c.h.b16 %v31
  %v154 = vunpack.c.l.b16 %v32
  %v155 = vunpack.c.h.b16 %v32
  %v156 = vunpack.c.l.b16 %v33
  %v157 = vunpack.c.h.b16 %v33
  %v158 = vunpack.c.l.b16 %v34
  %v159 = vunpack.c.h.b16 %v34
  %v160 = vunpack.c.l.b16 %v35
  %v161 = vunpack.c.h.b16 %v35
  %v162 = vunpack.c.l.b16 %v36
  %v163 = vunpack.c.h.b16 %v36
  %v164 = vunpack.c.l.b16 %v37
  %v165 = vunpack.c.h.b16 %v37
  %v166 = vunpack.c.l.b16 %v38
  %v167 = vunpack.c.h.b16 %v38
  %v168 = vunpack.c.l.b16 %v39
  %v169 = vunpack.c.h.b16 %v39
  %v170 = vunpack.c.l.b16 %v40
  %v171 = vunpack.c.h.b16 %v40
  %v172 = vunpack.c.l.b16 %v41
  %v173 = vunpack.c.h.b16 %v41
  %v174 = vunpack.c.l.b16 %v42
  %v175 = vunpack.c.h.b16 %v42
  %v176 = vunpack.c.l.b16 %v43
  %v177 = vunpack.c.h.b16 %v43
  %v178 = vunpack.c.l.b16 %v44
  %v179 = vunpack.c.h.b16 %v44
  %v180 = vunpack.c.l.b16 %v45
  %v181 = vunpack.c.h.b16 %v45
  %v182 = vunpack.c.l.b16 %v46
  %v183 = vunpack.c.h.b16 %v46
  %v184 = vunpack.c.l.b16 %v47
  %v185 = vunpack.c.h.b16 %v47
  %v186 = vunpack.c.l.b16 %v48
  %v187 = vunpack.c.h.b16 %v48
  %v188 = vunpack.c.l.b16 %v49
  %v189 = vunpack.c.h.b16 %v49
  %v190 = vpack.c.b16 %v128, %v126
  %v191 = vpack.c.b16 %v129, %v127
  %v192 = vpack.c.b16 %v132, %v130
  %v193 = vpack.c.b16 %v133, %v131
  %v194 = vpack.c.b16 %v136, %v134
  %v195 = vpack.c.b16 %v137, %v135
  %v196 = vpack.c.b16 %v140, %v138
  %v197 = vpack.c.b16 %v141, %v139
  %v198 = vpack.c.b16 %v144, %v142
  %v199 = vpack.c.b16 %v145, %v143
  %v200 = vpack.c.b16 %v148, %v146
  %v201 = vpack.c.b16 %v149, %v147
  %v202 = vpack.c.b16 %v152, %v150
  %v203 = vpack.c.b16 %v153, %v151
  %v204 = vpack.c.b16 %v156, %v154
  %v205 = vpack.c.b16 %v157, %v155
  %v206 = vpack.c.b16 %v160, %v158
  %v207 = vpack.c.b16 %v161, %v159
  %v208 = vpack.c.b16 %v164, %v162
  %v209 = vpack.c.b16 %v165, %v163
  %v210 = vpack.c.b16 %v168, %v166
  %v211 = vpack.c.b16 %v169, %v167
  %v212 = vpack.c.b16 %v172, %v170
  %v213 = vpack.c.b16 %v173, %v171
  %v214 = vpack.c.b16 %v176, %v174
  %v215 = vpack.c.b16 %v177, %v175
  %v216 = vpack.c.b16 %v180, %v178
  %v217 = vpack.c.b16 %v181, %v179
  %v218 = vpack.c.b16 %v184, %v182
  %v219 = vpack.c.b16 %v185, %v183
  %v220 = vpack.c.b16 %v188, %v186
  %v221 = vpack.c.b16 %v189, %v187
  %254 = vmatprep.subr.bf16.mxu0 %v191
  %255 = vmatpush1.bf16.msra.mxu0 %v190
  %256 = vmatprep.subr.bf16.mxu0 %v193
  %257 = vmatpush1.bf16.msra.mxu0 %v192
  %258 = vmatprep.subr.bf16.mxu0 %v195
  %259 = vmatpush1.bf16.msra.mxu0 %v194
  %260 = vmatprep.subr.bf16.mxu0 %v197
  %261 = vmatpush1.bf16.msra.mxu0 %v196
  %262 = vmatprep.subr.bf16.mxu0 %v199
  %263 = vmatpush1.bf16.msra.mxu0 %v198
  %264 = vmatprep.subr.bf16.mxu0 %v201
  %265 = vmatpush1.bf16.msra.mxu0 %v200
  %266 = vmatprep.subr.bf16.mxu0 %v203
  %267 = vmatpush1.bf16.msra.mxu0 %v202
  %268 = vmatprep.subr.bf16.mxu0 %v205
  %269 = vmatpush1.bf16.msra.mxu0 %v204
  %270 = vmatprep.subr.bf16.mxu0 %v207
  %271 = vmatpush1.bf16.msra.mxu0 %v206
  %272 = vmatprep.subr.bf16.mxu0 %v209
  %273 = vmatpush1.bf16.msra.mxu0 %v208
  %274 = vmatprep.subr.bf16.mxu0 %v211
  %275 = vmatpush1.bf16.msra.mxu0 %v210
  %276 = vmatprep.subr.bf16.mxu0 %v213
  %277 = vmatpush1.bf16.msra.mxu0 %v212
  %278 = vmatprep.subr.bf16.mxu0 %v215
  %279 = vmatpush1.bf16.msra.mxu0 %v214
  %280 = vmatprep.subr.bf16.mxu0 %v217
  %281 = vmatpush1.bf16.msra.mxu0 %v216
  %282 = vmatprep.subr.bf16.mxu0 %v219
  %283 = vmatpush1.bf16.msra.mxu0 %v218
  %284 = vmatprep.subr.bf16.mxu0 %v221
  %285 = vmatpush1.bf16.msra.mxu0 %v220
  %286 = vmatprep.mubr.bf16.mxu0 %v87
  %287 = vmatmul.mubr.bf16.gmra.mrb[0].mxu0 %v86
  %v288 = vpop.f32.mrb[0].mxu0
  %v289 = vadd.f32 %v57, %v288
  %v290 = vpop.f32.mrb[0].mxu0
  %v291 = vadd.f32 %v57, %v290
  %v292 = vpop.f32.mrb[0].mxu0
  %v293 = vadd.f32 %v62, %v292
  %v294 = vpop.f32.mrb[0].mxu0
  %v295 = vadd.f32 %v62, %v294
  %296 = vmatprep.mubr.bf16.mxu0 %v89
  %297 = vmatmul.mubr.bf16.gmra.mrb[0].mxu0 %v88
  %v298 = vpop.f32.mrb[0].mxu0
  %v299 = vadd.f32 %v67, %v298
  %v300 = vpop.f32.mrb[0].mxu0
  %v301 = vadd.f32 %v67, %v300
  %v302 = vpop.f32.mrb[0].mxu0
  %v303 = vadd.f32 %v72, %v302
  %v304 = vpop.f32.mrb[0].mxu0
  %v305 = vadd.f32 %v72, %v304
  %306 = vdwg.mxu0
  %vm307 = vcmp.gt.f32.partialorder %v289, 0.0
  %vm308 = vcmp.gt.f32.partialorder %v291, 0.0
  %vm309 = vcmp.gt.f32.partialorder %v293, 0.0
  %vm310 = vcmp.gt.f32.partialorder %v295, 0.0
  %vm311 = vcmp.gt.f32.partialorder %v299, 0.0
  %vm312 = vcmp.gt.f32.partialorder %v301, 0.0
  %vm313 = vcmp.gt.f32.partialorder %v303, 0.0
  %vm314 = vcmp.gt.f32.partialorder %v305, 0.0
  %v315 = vmul.f32 %v289, 0.2
  %v316 = vmul.f32 %v291, 0.2
  %v317 = vmul.f32 %v293, 0.2
  %v318 = vmul.f32 %v295, 0.2
  %v319 = vmul.f32 %v299, 0.2
  %v320 = vmul.f32 %v301, 0.2
  %v321 = vmul.f32 %v303, 0.2
  %v322 = vmul.f32 %v305, 0.2
  %v323 = vsel %vm307, %v289, %v315
  %v324 = vsel %vm308, %v291, %v316
  %v325 = vsel %vm309, %v293, %v317
  %v326 = vsel %vm310, %v295, %v318
  %v327 = vsel %vm311, %v299, %v319
  %v328 = vsel %vm312, %v301, %v320
  %v329 = vsel %vm313, %v303, %v321
  %v330 = vsel %vm314, %v305, %v322
  %v331 = vpack.c.bf16 %v325, %v323
  %v332 = vpack.c.bf16 %v326, %v324
  %v333 = vpack.c.bf16 %v329, %v327
  %v334 = vpack.c.bf16 %v330, %v328
  %v339 = vunpack.c.l.b16 %v331
  %v340 = vunpack.c.l.b16 %v332
  %v341 = vunpack.c.h.b16 %v331
  %v342 = vunpack.c.h.b16 %v332
  %v343 = vunpack.c.l.b16 %v333
  %v344 = vunpack.c.l.b16 %v334
  %v345 = vunpack.c.h.b16 %v333
  %v346 = vunpack.c.h.b16 %v334
  %v347 = vpack.c.b16 %v340, %v339
  %v348 = vpack.c.b16 %v342, %v341
  %v349 = vpack.c.b16 %v344, %v343
  %v350 = vpack.c.b16 %v346, %v345
  %355 = vst [vmem:[%s3] sm:$0xff] %v347
  %356 = vst [vmem:[%s3 + $0x8] sm:$0xff] %v348
  %357 = vst [vmem:[%s3 + $0x10] sm:$0xff] %v349
  %358 = vst [vmem:[%s3 + $0x18] sm:$0xff] %v350
  // Predicated region
  $region14: #{forward.18} parent=0 // pred_check
    _
  $region15: #{forward.18} parent=0 // pred_check_branch
    %360 = sbr.rel (0) target = $region17
  $region16: #{forward.18} parent=0 // pred_region
    _
  $region17: #{forward.18} parent=0 // pred_fallthru
    _
  // Predicated region
  $region18: #{forward.18} parent=0 // pred_check
    _
  $region19: #{forward.18} parent=0 // pred_check_branch
    %362 = sbr.rel (0) target = $region21
  $region20: #{forward.18} parent=0 // pred_region
    _
  $region21: #{forward.18} parent=0 // pred_fallthru
    _

// kernel: forward.19
$region0: #{forward.19}
  #allocation0 [shape = 'u32[]', space=smem, size = 0x4, offset = 0x4, fixed_abs, tag = 'smem constant byte address 0x4 - core index']
  #allocation1 [shape = 'u32[144,128]{1,0:T(1,128)}', space=vmem, size = 0x12000, scoped, tag = 'internal scratch']
  %s0 = inlined_call_operand.vmem [shape: bf16[32,512], index: 0, kind: input, shape index: {}]
  %s1 = inlined_call_operand.vmem [shape: bf16[512,128], index: 1, kind: input, shape index: {}]
  %s2 = inlined_call_operand.vmem [shape: f32[32,1], index: 2, kind: input, shape index: {}]
  %s3 = inlined_call_operand.vmem [shape: bf16[32,128], index: 3, kind: output, shape index: {}]
  %s4 = sld [smem:[#allocation0]]
  $region22: #{forward.19} parent=0
    _
  %s6 = ssub.s32 1, %s4
  %s7 = scalar_select 0, %s6, %s4
  // Predicated region
  $region2: #{forward.19} parent=0 // pred_check
    _
  $region3: #{forward.19} parent=0 // pred_check_branch
    %9 = sbr.rel (0) target = $region5
  $region4: #{forward.19} parent=0 // pred_region
    _
  $region5: #{forward.19} parent=0 // pred_fallthru
    _
  // Predicated region
  $region6: #{forward.19} parent=0 // pred_check
    _
  $region7: #{forward.19} parent=0 // pred_check_branch
    %11 = sbr.rel (0) target = $region9
  $region8: #{forward.19} parent=0 // pred_region
    _
  $region9: #{forward.19} parent=0 // pred_fallthru
    _
  // Predicated region
  $region10: #{forward.19} parent=0 // pred_check
    _
  $region11: #{forward.19} parent=0 // pred_check_branch
    %13 = sbr.rel (0) target = $region13
  $region12: #{forward.19} parent=0 // pred_region
    _
  $region13: #{forward.19} parent=0 // pred_fallthru
    _
  %v15 = vld [vmem:[%s0] sm:$0xff]
  %v16 = vld [vmem:[%s0 + $0x8] sm:$0xff]
  %v17 = vld [vmem:[%s0 + $0x10] sm:$0xff]
  %v18 = vld [vmem:[%s0 + $0x18] sm:$0xff]
  %v19 = vld [vmem:[%s0 + $0x20] sm:$0xff]
  %v20 = vld [vmem:[%s0 + $0x28] sm:$0xff]
  %v21 = vld [vmem:[%s0 + $0x30] sm:$0xff]
  %v22 = vld [vmem:[%s0 + $0x38] sm:$0xff]
  %v23 = vld [vmem:[%s1] sm:$0xf]
  %v24 = vld [vmem:[%s1 + $0x4] sm:$0xf]
  %v25 = vld [vmem:[%s1 + $0x8] sm:$0xf]
  %v26 = vld [vmem:[%s1 + $0xc] sm:$0xf]
  %v27 = vld [vmem:[%s1 + $0x10] sm:$0xf]
  %v28 = vld [vmem:[%s1 + $0x14] sm:$0xf]
  %v29 = vld [vmem:[%s1 + $0x18] sm:$0xf]
  %v30 = vld [vmem:[%s1 + $0x1c] sm:$0xf]
  %v31 = vld [vmem:[%s1 + $0x20] sm:$0xf]
  %v32 = vld [vmem:[%s1 + $0x24] sm:$0xf]
  %v33 = vld [vmem:[%s1 + $0x28] sm:$0xf]
  %v34 = vld [vmem:[%s1 + $0x2c] sm:$0xf]
  %v35 = vld [vmem:[%s1 + $0x30] sm:$0xf]
  %v36 = vld [vmem:[%s1 + $0x34] sm:$0xf]
  %v37 = vld [vmem:[%s1 + $0x38] sm:$0xf]
  %v38 = vld [vmem:[%s1 + $0x3c] sm:$0xf]
  %v39 = vld [vmem:[%s1 + $0x40] sm:$0xf]
  %v40 = vld [vmem:[%s1 + $0x44] sm:$0xf]
  %v41 = vld [vmem:[%s1 + $0x48] sm:$0xf]
  %v42 = vld [vmem:[%s1 + $0x4c] sm:$0xf]
  %v43 = vld [vmem:[%s1 + $0x50] sm:$0xf]
  %v44 = vld [vmem:[%s1 + $0x54] sm:$0xf]
  %v45 = vld [vmem:[%s1 + $0x58] sm:$0xf]
  %v46 = vld [vmem:[%s1 + $0x5c] sm:$0xf]
  %v47 = vld [vmem:[%s1 + $0x60] sm:$0xf]
  %v48 = vld [vmem:[%s1 + $0x64] sm:$0xf]
  %v49 = vld [vmem:[%s1 + $0x68] sm:$0xf]
  %v50 = vld [vmem:[%s1 + $0x6c] sm:$0xf]
  %v51 = vld [vmem:[%s1 + $0x70] sm:$0xf]
  %v52 = vld [vmem:[%s1 + $0x74] sm:$0xf]
  %v53 = vld [vmem:[%s1 + $0x78] sm:$0xf]
  %v54 = vld [vmem:[%s1 + $0x7c] sm:$0xf]
  %v55 = vld [vmem:[%s1 + $0x80] sm:$0xf]
  %v56 = vld [vmem:[%s1 + $0x84] sm:$0xf]
  %v57 = vld [vmem:[%s1 + $0x88] sm:$0xf]
  %v58 = vld [vmem:[%s1 + $0x8c] sm:$0xf]
  %v59 = vld [vmem:[%s1 + $0x90] sm:$0xf]
  %v60 = vld [vmem:[%s1 + $0x94] sm:$0xf]
  %v61 = vld [vmem:[%s1 + $0x98] sm:$0xf]
  %v62 = vld [vmem:[%s1 + $0x9c] sm:$0xf]
  %v63 = vld [vmem:[%s1 + $0xa0] sm:$0xf]
  %v64 = vld [vmem:[%s1 + $0xa4] sm:$0xf]
  %v65 = vld [vmem:[%s1 + $0xa8] sm:$0xf]
  %v66 = vld [vmem:[%s1 + $0xac] sm:$0xf]
  %v67 = vld [vmem:[%s1 + $0xb0] sm:$0xf]
  %v68 = vld [vmem:[%s1 + $0xb4] sm:$0xf]
  %v69 = vld [vmem:[%s1 + $0xb8] sm:$0xf]
  %v70 = vld [vmem:[%s1 + $0xbc] sm:$0xf]
  %v71 = vld [vmem:[%s1 + $0xc0] sm:$0xf]
  %v72 = vld [vmem:[%s1 + $0xc4] sm:$0xf]
  %v73 = vld [vmem:[%s1 + $0xc8] sm:$0xf]
  %v74 = vld [vmem:[%s1 + $0xcc] sm:$0xf]
  %v75 = vld [vmem:[%s1 + $0xd0] sm:$0xf]
  %v76 = vld [vmem:[%s1 + $0xd4] sm:$0xf]
  %v77 = vld [vmem:[%s1 + $0xd8] sm:$0xf]
  %v78 = vld [vmem:[%s1 + $0xdc] sm:$0xf]
  %v79 = vld [vmem:[%s1 + $0xe0] sm:$0xf]
  %v80 = vld [vmem:[%s1 + $0xe4] sm:$0xf]
  %v81 = vld [vmem:[%s1 + $0xe8] sm:$0xf]
  %v82 = vld [vmem:[%s1 + $0xec] sm:$0xf]
  %v83 = vld [vmem:[%s1 + $0xf0] sm:$0xf]
  %v84 = vld [vmem:[%s1 + $0xf4] sm:$0xf]
  %v85 = vld [vmem:[%s1 + $0xf8] sm:$0xf]
  %v86 = vld [vmem:[%s1 + $0xfc] sm:$0xf]
  %v87 = vld [vmem:[%s2] sm:$0xff]
  %v88 = vld [vmem:[%s2 + $0x8] sm:$0xff]
  %v89 = vld [vmem:[%s2 + $0x10] sm:$0xff]
  %v90 = vld [vmem:[%s2 + $0x18] sm:$0xff]
  %92 = vset.pattern.permute.xlu0 0
  %93 = vperm.xlu0 %92, %v87
  %v94 = vpop.permute.xlu0 %93
  %97 = vset.pattern.permute.xlu0 0
  %98 = vperm.xlu0 %97, %v88
  %v99 = vpop.permute.xlu0 %98
  %102 = vset.pattern.permute.xlu0 0
  %103 = vperm.xlu0 %102, %v89
  %v104 = vpop.permute.xlu0 %103
  %107 = vset.pattern.permute.xlu0 0
  %108 = vperm.xlu0 %107, %v90
  %v109 = vpop.permute.xlu0 %108
  %v119 = vunpack.c.l.b16 %v15
  %v120 = vunpack.c.h.b16 %v15
  %v121 = vunpack.c.l.b16 %v16
  %v122 = vunpack.c.h.b16 %v16
  %v123 = vunpack.c.l.b16 %v17
  %v124 = vunpack.c.h.b16 %v17
  %v125 = vunpack.c.l.b16 %v18
  %v126 = vunpack.c.h.b16 %v18
  %v127 = vunpack.c.l.b16 %v19
  %v128 = vunpack.c.h.b16 %v19
  %v129 = vunpack.c.l.b16 %v20
  %v130 = vunpack.c.h.b16 %v20
  %v131 = vunpack.c.l.b16 %v21
  %v132 = vunpack.c.h.b16 %v21
  %v133 = vunpack.c.l.b16 %v22
  %v134 = vunpack.c.h.b16 %v22
  %v135 = vpack.c.b16 %v123, %v119
  %v136 = vpack.c.b16 %v124, %v120
  %v137 = vpack.c.b16 %v125, %v121
  %v138 = vpack.c.b16 %v126, %v122
  %v139 = vpack.c.b16 %v131, %v127
  %v140 = vpack.c.b16 %v132, %v128
  %v141 = vpack.c.b16 %v133, %v129
  %v142 = vpack.c.b16 %v134, %v130
  %v215 = vunpack.c.l.b16 %v23
  %v216 = vunpack.c.l.b16 %v24
  %v217 = vunpack.c.l.b16 %v25
  %v218 = vunpack.c.l.b16 %v26
  %v219 = vunpack.c.l.b16 %v27
  %v220 = vunpack.c.l.b16 %v28
  %v221 = vunpack.c.l.b16 %v29
  %v222 = vunpack.c.l.b16 %v30
  %v223 = vunpack.c.l.b16 %v31
  %v224 = vunpack.c.l.b16 %v32
  %v225 = vunpack.c.l.b16 %v33
  %v226 = vunpack.c.l.b16 %v34
  %v227 = vunpack.c.l.b16 %v35
  %v228 = vunpack.c.l.b16 %v36
  %v229 = vunpack.c.l.b16 %v37
  %v230 = vunpack.c.l.b16 %v38
  %v231 = vunpack.c.l.b16 %v39
  %v232 = vunpack.c.l.b16 %v40
  %v233 = vunpack.c.l.b16 %v41
  %v234 = vunpack.c.l.b16 %v42
  %v235 = vunpack.c.l.b16 %v43
  %v236 = vunpack.c.l.b16 %v44
  %v237 = vunpack.c.l.b16 %v45
  %v238 = vunpack.c.l.b16 %v46
  %v239 = vunpack.c.l.b16 %v47
  %v240 = vunpack.c.l.b16 %v48
  %v241 = vunpack.c.l.b16 %v49
  %v242 = vunpack.c.l.b16 %v50
  %v243 = vunpack.c.l.b16 %v51
  %v244 = vunpack.c.l.b16 %v52
  %v245 = vunpack.c.l.b16 %v53
  %v246 = vunpack.c.l.b16 %v54
  %v247 = vunpack.c.l.b16 %v55
  %v248 = vunpack.c.l.b16 %v56
  %v249 = vunpack.c.l.b16 %v57
  %v250 = vunpack.c.l.b16 %v58
  %v251 = vunpack.c.l.b16 %v59
  %v252 = vunpack.c.l.b16 %v60
  %v253 = vunpack.c.l.b16 %v61
  %v254 = vunpack.c.l.b16 %v62
  %v255 = vunpack.c.l.b16 %v63
  %v256 = vunpack.c.l.b16 %v64
  %v257 = vunpack.c.l.b16 %v65
  %v258 = vunpack.c.l.b16 %v66
  %v259 = vunpack.c.l.b16 %v67
  %v260 = vunpack.c.l.b16 %v68
  %v261 = vunpack.c.l.b16 %v69
  %v262 = vunpack.c.l.b16 %v70
  %v263 = vunpack.c.l.b16 %v71
  %v264 = vunpack.c.l.b16 %v72
  %v265 = vunpack.c.l.b16 %v73
  %v266 = vunpack.c.l.b16 %v74
  %v267 = vunpack.c.l.b16 %v75
  %v268 = vunpack.c.l.b16 %v76
  %v269 = vunpack.c.l.b16 %v77
  %v270 = vunpack.c.l.b16 %v78
  %v271 = vunpack.c.l.b16 %v79
  %v272 = vunpack.c.l.b16 %v80
  %v273 = vunpack.c.l.b16 %v81
  %v274 = vunpack.c.l.b16 %v82
  %v275 = vunpack.c.l.b16 %v83
  %v276 = vunpack.c.l.b16 %v84
  %v277 = vunpack.c.l.b16 %v85
  %v278 = vunpack.c.l.b16 %v86
  %v279 = vpack.c.b16 %v216, %v215
  %v280 = vpack.c.b16 %v218, %v217
  %v281 = vpack.c.b16 %v220, %v219
  %v282 = vpack.c.b16 %v222, %v221
  %v283 = vpack.c.b16 %v224, %v223
  %v284 = vpack.c.b16 %v226, %v225
  %v285 = vpack.c.b16 %v228, %v227
  %v286 = vpack.c.b16 %v230, %v229
  %v287 = vpack.c.b16 %v232, %v231
  %v288 = vpack.c.b16 %v234, %v233
  %v289 = vpack.c.b16 %v236, %v235
  %v290 = vpack.c.b16 %v238, %v237
  %v291 = vpack.c.b16 %v240, %v239
  %v292 = vpack.c.b16 %v242, %v241
  %v293 = vpack.c.b16 %v244, %v243
  %v294 = vpack.c.b16 %v246, %v245
  %v295 = vpack.c.b16 %v248, %v247
  %v296 = vpack.c.b16 %v250, %v249
  %v297 = vpack.c.b16 %v252, %v251
  %v298 = vpack.c.b16 %v254, %v253
  %v299 = vpack.c.b16 %v256, %v255
  %v300 = vpack.c.b16 %v258, %v257
  %v301 = vpack.c.b16 %v260, %v259
  %v302 = vpack.c.b16 %v262, %v261
  %v303 = vpack.c.b16 %v264, %v263
  %v304 = vpack.c.b16 %v266, %v265
  %v305 = vpack.c.b16 %v268, %v267
  %v306 = vpack.c.b16 %v270, %v269
  %v307 = vpack.c.b16 %v272, %v271
  %v308 = vpack.c.b16 %v274, %v273
  %v309 = vpack.c.b16 %v276, %v275
  %v310 = vpack.c.b16 %v278, %v277
  %343 = vmatprep.subr.bf16.mxu0 0
  %344 = vmatpush1.bf16.msra.mxu0 %v279
  %345 = vmatprep.subr.bf16.mxu0 0
  %346 = vmatpush1.bf16.msra.mxu0 %v280
  %347 = vmatprep.subr.bf16.mxu0 0
  %348 = vmatpush1.bf16.msra.mxu0 %v281
  %349 = vmatprep.subr.bf16.mxu0 0
  %350 = vmatpush1.bf16.msra.mxu0 %v282
  %351 = vmatprep.subr.bf16.mxu0 0
  %352 = vmatpush1.bf16.msra.mxu0 %v283
  %353 = vmatprep.subr.bf16.mxu0 0
  %354 = vmatpush1.bf16.msra.mxu0 %v284
  %355 = vmatprep.subr.bf16.mxu0 0
  %356 = vmatpush1.bf16.msra.mxu0 %v285
  %357 = vmatprep.subr.bf16.mxu0 0
  %358 = vmatpush1.bf16.msra.mxu0 %v286
  %359 = vmatprep.subr.bf16.mxu0 0
  %360 = vmatpush1.bf16.msra.mxu0 %v287
  %361 = vmatprep.subr.bf16.mxu0 0
  %362 = vmatpush1.bf16.msra.mxu0 %v288
  %363 = vmatprep.subr.bf16.mxu0 0
  %364 = vmatpush1.bf16.msra.mxu0 %v289
  %365 = vmatprep.subr.bf16.mxu0 0
  %366 = vmatpush1.bf16.msra.mxu0 %v290
  %367 = vmatprep.subr.bf16.mxu0 0
  %368 = vmatpush1.bf16.msra.mxu0 %v291
  %369 = vmatprep.subr.bf16.mxu0 0
  %370 = vmatpush1.bf16.msra.mxu0 %v292
  %371 = vmatprep.subr.bf16.mxu0 0
  %372 = vmatpush1.bf16.msra.mxu0 %v293
  %373 = vmatprep.subr.bf16.mxu0 0
  %374 = vmatpush1.bf16.msra.mxu0 %v294
  %375 = vmatprep.mubr.bf16.mxu0 %v136
  %376 = vmatmul.mubr.bf16.gmra.mrb[0].mxu0 %v135
  %v377 = vpop.f32.mrb[0].mxu0
  %v378 = vadd.f32 %v94, %v377
  %v379 = vpop.f32.mrb[0].mxu0
  %v380 = vpop.f32.mrb[0].mxu0
  %v381 = vadd.f32 %v99, %v380
  %v382 = vpop.f32.mrb[0].mxu0
  %383 = vmatprep.mubr.bf16.mxu0 %v140
  %384 = vmatmul.mubr.bf16.gmra.mrb[0].mxu0 %v139
  %v385 = vpop.f32.mrb[0].mxu0
  %v386 = vadd.f32 %v104, %v385
  %v387 = vpop.f32.mrb[0].mxu0
  %v388 = vpop.f32.mrb[0].mxu0
  %v389 = vadd.f32 %v109, %v388
  %v390 = vpop.f32.mrb[0].mxu0
  %391 = vdwg.mxu0
  %392 = vmatprep.subr.bf16.mxu0 0
  %393 = vmatpush1.bf16.msra.mxu0 %v295
  %394 = vmatprep.subr.bf16.mxu0 0
  %395 = vmatpush1.bf16.msra.mxu0 %v296
  %396 = vmatprep.subr.bf16.mxu0 0
  %397 = vmatpush1.bf16.msra.mxu0 %v297
  %398 = vmatprep.subr.bf16.mxu0 0
  %399 = vmatpush1.bf16.msra.mxu0 %v298
  %400 = vmatprep.subr.bf16.mxu0 0
  %401 = vmatpush1.bf16.msra.mxu0 %v299
  %402 = vmatprep.subr.bf16.mxu0 0
  %403 = vmatpush1.bf16.msra.mxu0 %v300
  %404 = vmatprep.subr.bf16.mxu0 0
  %405 = vmatpush1.bf16.msra.mxu0 %v301
  %406 = vmatprep.subr.bf16.mxu0 0
  %407 = vmatpush1.bf16.msra.mxu0 %v302
  %408 = vmatprep.subr.bf16.mxu0 0
  %409 = vmatpush1.bf16.msra.mxu0 %v303
  %410 = vmatprep.subr.bf16.mxu0 0
  %411 = vmatpush1.bf16.msra.mxu0 %v304
  %412 = vmatprep.subr.bf16.mxu0 0
  %413 = vmatpush1.bf16.msra.mxu0 %v305
  %414 = vmatprep.subr.bf16.mxu0 0
  %415 = vmatpush1.bf16.msra.mxu0 %v306
  %416 = vmatprep.subr.bf16.mxu0 0
  %417 = vmatpush1.bf16.msra.mxu0 %v307
  %418 = vmatprep.subr.bf16.mxu0 0
  %419 = vmatpush1.bf16.msra.mxu0 %v308
  %420 = vmatprep.subr.bf16.mxu0 0
  %421 = vmatpush1.bf16.msra.mxu0 %v309
  %422 = vmatprep.subr.bf16.mxu0 0
  %423 = vmatpush1.bf16.msra.mxu0 %v310
  %424 = vmatprep.mubr.bf16.mxu0 %v138
  %425 = vmatmul.mubr.bf16.gmra.mrb[0].mxu0 %v137
  %v426 = vpop.f32.mrb[0].mxu0
  %v427 = vadd.f32 %v378, %v426
  %v428 = vpop.f32.mrb[0].mxu0
  %v429 = vpop.f32.mrb[0].mxu0
  %v430 = vadd.f32 %v381, %v429
  %v431 = vpop.f32.mrb[0].mxu0
  %432 = vmatprep.mubr.bf16.mxu0 %v142
  %433 = vmatmul.mubr.bf16.gmra.mrb[0].mxu0 %v141
  %v434 = vpop.f32.mrb[0].mxu0
  %v435 = vadd.f32 %v386, %v434
  %v436 = vpop.f32.mrb[0].mxu0
  %v437 = vpop.f32.mrb[0].mxu0
  %v438 = vadd.f32 %v389, %v437
  %v439 = vpop.f32.mrb[0].mxu0
  %440 = vdwg.mxu0
  %vm441 = vcmp.gt.f32.partialorder %v427, 0.0
  %vm442 = vcmp.gt.f32.partialorder %v430, 0.0
  %vm443 = vcmp.gt.f32.partialorder %v435, 0.0
  %vm444 = vcmp.gt.f32.partialorder %v438, 0.0
  %v445 = vmul.f32 %v427, 0.2
  %v446 = vmul.f32 %v430, 0.2
  %v447 = vmul.f32 %v435, 0.2
  %v448 = vmul.f32 %v438, 0.2
  %v449 = vsel %vm441, %v427, %v445
  %v450 = vsel %vm442, %v430, %v446
  %v451 = vsel %vm443, %v435, %v447
  %v452 = vsel %vm444, %v438, %v448
  %v453 = vpack.c.bf16 %v450, %v449
  %v454 = vpack.c.bf16 %v452, %v451
  %v457 = vunpack.c.l.b16 %v453
  %v458 = vunpack.c.h.b16 %v453
  %v459 = vunpack.c.l.b16 %v454
  %v460 = vunpack.c.h.b16 %v454
  %v461 = vpack.c.b16 %v457, %v457
  %v462 = vpack.c.b16 %v458, %v458
  %v463 = vpack.c.b16 %v459, %v459
  %v464 = vpack.c.b16 %v460, %v460
  %469 = vst [vmem:[%s3] sm:$0xf] %v461
  %470 = vst [vmem:[%s3 + $0x4] sm:$0xf] %v462
  %471 = vst [vmem:[%s3 + $0x8] sm:$0xf] %v463
  %472 = vst [vmem:[%s3 + $0xc] sm:$0xf] %v464
  // Predicated region
  $region14: #{forward.19} parent=0 // pred_check
    _
  $region15: #{forward.19} parent=0 // pred_check_branch
    %474 = sbr.rel (0) target = $region17
  $region16: #{forward.19} parent=0 // pred_region
    _
  $region17: #{forward.19} parent=0 // pred_fallthru
    _
  // Predicated region
  $region18: #{forward.19} parent=0 // pred_check
    _
  $region19: #{forward.19} parent=0 // pred_check_branch
    %476 = sbr.rel (0) target = $region21
  $region20: #{forward.19} parent=0 // pred_region
    _
  $region21: #{forward.19} parent=0 // pred_fallthru
    _

// kernel: forward.22
$region0: #{forward.22}
  #allocation0 [shape = 'u32[]', space=smem, size = 0x4, offset = 0x4, fixed_abs, tag = 'smem constant byte address 0x4 - core index']
  #allocation1 [shape = 'u32[144,128]{1,0:T(1,128)}', space=vmem, size = 0x12000, scoped, tag = 'internal scratch']
  %s0 = inlined_call_operand.vmem [shape: bf16[32,512], index: 0, kind: input, shape index: {}]
  %s1 = inlined_call_operand.vmem [shape: bf16[512,128], index: 1, kind: input, shape index: {}]
  %s2 = inlined_call_operand.vmem [shape: f32[32,1], index: 2, kind: input, shape index: {}]
  %s3 = inlined_call_operand.vmem [shape: bf16[32,128], index: 3, kind: output, shape index: {}]
  %s4 = sld [smem:[#allocation0]]
  $region22: #{forward.22} parent=0
    _
  %s6 = ssub.s32 1, %s4
  %s7 = scalar_select 0, %s6, %s4
  // Predicated region
  $region2: #{forward.22} parent=0 // pred_check
    _
  $region3: #{forward.22} parent=0 // pred_check_branch
    %9 = sbr.rel (0) target = $region5
  $region4: #{forward.22} parent=0 // pred_region
    _
  $region5: #{forward.22} parent=0 // pred_fallthru
    _
  // Predicated region
  $region6: #{forward.22} parent=0 // pred_check
    _
  $region7: #{forward.22} parent=0 // pred_check_branch
    %11 = sbr.rel (0) target = $region9
  $region8: #{forward.22} parent=0 // pred_region
    _
  $region9: #{forward.22} parent=0 // pred_fallthru
    _
  // Predicated region
  $region10: #{forward.22} parent=0 // pred_check
    _
  $region11: #{forward.22} parent=0 // pred_check_branch
    %13 = sbr.rel (0) target = $region13
  $region12: #{forward.22} parent=0 // pred_region
    _
  $region13: #{forward.22} parent=0 // pred_fallthru
    _
  %v15 = vld [vmem:[%s0] sm:$0xff]
  %v16 = vld [vmem:[%s0 + $0x8] sm:$0xff]
  %v17 = vld [vmem:[%s0 + $0x10] sm:$0xff]
  %v18 = vld [vmem:[%s0 + $0x18] sm:$0xff]
  %v19 = vld [vmem:[%s0 + $0x20] sm:$0xff]
  %v20 = vld [vmem:[%s0 + $0x28] sm:$0xff]
  %v21 = vld [vmem:[%s0 + $0x30] sm:$0xff]
  %v22 = vld [vmem:[%s0 + $0x38] sm:$0xff]
  %v23 = vld [vmem:[%s1] sm:$0xf]
  %v24 = vld [vmem:[%s1 + $0x4] sm:$0xf]
  %v25 = vld [vmem:[%s1 + $0x8] sm:$0xf]
  %v26 = vld [vmem:[%s1 + $0xc] sm:$0xf]
  %v27 = vld [vmem:[%s1 + $0x10] sm:$0xf]
  %v28 = vld [vmem:[%s1 + $0x14] sm:$0xf]
  %v29 = vld [vmem:[%s1 + $0x18] sm:$0xf]
  %v30 = vld [vmem:[%s1 + $0x1c] sm:$0xf]
  %v31 = vld [vmem:[%s1 + $0x20] sm:$0xf]
  %v32 = vld [vmem:[%s1 + $0x24] sm:$0xf]
  %v33 = vld [vmem:[%s1 + $0x28] sm:$0xf]
  %v34 = vld [vmem:[%s1 + $0x2c] sm:$0xf]
  %v35 = vld [vmem:[%s1 + $0x30] sm:$0xf]
  %v36 = vld [vmem:[%s1 + $0x34] sm:$0xf]
  %v37 = vld [vmem:[%s1 + $0x38] sm:$0xf]
  %v38 = vld [vmem:[%s1 + $0x3c] sm:$0xf]
  %v39 = vld [vmem:[%s1 + $0x40] sm:$0xf]
  %v40 = vld [vmem:[%s1 + $0x44] sm:$0xf]
  %v41 = vld [vmem:[%s1 + $0x48] sm:$0xf]
  %v42 = vld [vmem:[%s1 + $0x4c] sm:$0xf]
  %v43 = vld [vmem:[%s1 + $0x50] sm:$0xf]
  %v44 = vld [vmem:[%s1 + $0x54] sm:$0xf]
  %v45 = vld [vmem:[%s1 + $0x58] sm:$0xf]
  %v46 = vld [vmem:[%s1 + $0x5c] sm:$0xf]
  %v47 = vld [vmem:[%s1 + $0x60] sm:$0xf]
  %v48 = vld [vmem:[%s1 + $0x64] sm:$0xf]
  %v49 = vld [vmem:[%s1 + $0x68] sm:$0xf]
  %v50 = vld [vmem:[%s1 + $0x6c] sm:$0xf]
  %v51 = vld [vmem:[%s1 + $0x70] sm:$0xf]
  %v52 = vld [vmem:[%s1 + $0x74] sm:$0xf]
  %v53 = vld [vmem:[%s1 + $0x78] sm:$0xf]
  %v54 = vld [vmem:[%s1 + $0x7c] sm:$0xf]
  %v55 = vld [vmem:[%s1 + $0x80] sm:$0xf]
  %v56 = vld [vmem:[%s1 + $0x84] sm:$0xf]
  %v57 = vld [vmem:[%s1 + $0x88] sm:$0xf]
  %v58 = vld [vmem:[%s1 + $0x8c] sm:$0xf]
  %v59 = vld [vmem:[%s1 + $0x90] sm:$0xf]
  %v60 = vld [vmem:[%s1 + $0x94] sm:$0xf]
  %v61 = vld [vmem:[%s1 + $0x98] sm:$0xf]
  %v62 = vld [vmem:[%s1 + $0x9c] sm:$0xf]
  %v63 = vld [vmem:[%s1 + $0xa0] sm:$0xf]
  %v64 = vld [vmem:[%s1 + $0xa4] sm:$0xf]
  %v65 = vld [vmem:[%s1 + $0xa8] sm:$0xf]
  %v66 = vld [vmem:[%s1 + $0xac] sm:$0xf]
  %v67 = vld [vmem:[%s1 + $0xb0] sm:$0xf]
  %v68 = vld [vmem:[%s1 + $0xb4] sm:$0xf]
  %v69 = vld [vmem:[%s1 + $0xb8] sm:$0xf]
  %v70 = vld [vmem:[%s1 + $0xbc] sm:$0xf]
  %v71 = vld [vmem:[%s1 + $0xc0] sm:$0xf]
  %v72 = vld [vmem:[%s1 + $0xc4] sm:$0xf]
  %v73 = vld [vmem:[%s1 + $0xc8] sm:$0xf]
  %v74 = vld [vmem:[%s1 + $0xcc] sm:$0xf]
  %v75 = vld [vmem:[%s1 + $0xd0] sm:$0xf]
  %v76 = vld [vmem:[%s1 + $0xd4] sm:$0xf]
  %v77 = vld [vmem:[%s1 + $0xd8] sm:$0xf]
  %v78 = vld [vmem:[%s1 + $0xdc] sm:$0xf]
  %v79 = vld [vmem:[%s1 + $0xe0] sm:$0xf]
  %v80 = vld [vmem:[%s1 + $0xe4] sm:$0xf]
  %v81 = vld [vmem:[%s1 + $0xe8] sm:$0xf]
  %v82 = vld [vmem:[%s1 + $0xec] sm:$0xf]
  %v83 = vld [vmem:[%s1 + $0xf0] sm:$0xf]
  %v84 = vld [vmem:[%s1 + $0xf4] sm:$0xf]
  %v85 = vld [vmem:[%s1 + $0xf8] sm:$0xf]
  %v86 = vld [vmem:[%s1 + $0xfc] sm:$0xf]
  %v87 = vld [vmem:[%s2] sm:$0xff]
  %v88 = vld [vmem:[%s2 + $0x8] sm:$0xff]
  %v89 = vld [vmem:[%s2 + $0x10] sm:$0xff]
  %v90 = vld [vmem:[%s2 + $0x18] sm:$0xff]
  %92 = vset.pattern.permute.xlu0 0
  %93 = vperm.xlu0 %92, %v87
  %v94 = vpop.permute.xlu0 %93
  %97 = vset.pattern.permute.xlu0 0
  %98 = vperm.xlu0 %97, %v88
  %v99 = vpop.permute.xlu0 %98
  %102 = vset.pattern.permute.xlu0 0
  %103 = vperm.xlu0 %102, %v89
  %v104 = vpop.permute.xlu0 %103
  %107 = vset.pattern.permute.xlu0 0
  %108 = vperm.xlu0 %107, %v90
  %v109 = vpop.permute.xlu0 %108
  %v119 = vunpack.c.l.b16 %v15
  %v120 = vunpack.c.h.b16 %v15
  %v121 = vunpack.c.l.b16 %v16
  %v122 = vunpack.c.h.b16 %v16
  %v123 = vunpack.c.l.b16 %v17
  %v124 = vunpack.c.h.b16 %v17
  %v125 = vunpack.c.l.b16 %v18
  %v126 = vunpack.c.h.b16 %v18
  %v127 = vunpack.c.l.b16 %v19
  %v128 = vunpack.c.h.b16 %v19
  %v129 = vunpack.c.l.b16 %v20
  %v130 = vunpack.c.h.b16 %v20
  %v131 = vunpack.c.l.b16 %v21
  %v132 = vunpack.c.h.b16 %v21
  %v133 = vunpack.c.l.b16 %v22
  %v134 = vunpack.c.h.b16 %v22
  %v135 = vpack.c.b16 %v123, %v119
  %v136 = vpack.c.b16 %v124, %v120
  %v137 = vpack.c.b16 %v125, %v121
  %v138 = vpack.c.b16 %v126, %v122
  %v139 = vpack.c.b16 %v131, %v127
  %v140 = vpack.c.b16 %v132, %v128
  %v141 = vpack.c.b16 %v133, %v129
  %v142 = vpack.c.b16 %v134, %v130
  %v215 = vunpack.c.l.b16 %v23
  %v216 = vunpack.c.l.b16 %v24
  %v217 = vunpack.c.l.b16 %v25
  %v218 = vunpack.c.l.b16 %v26
  %v219 = vunpack.c.l.b16 %v27
  %v220 = vunpack.c.l.b16 %v28
  %v221 = vunpack.c.l.b16 %v29
  %v222 = vunpack.c.l.b16 %v30
  %v223 = vunpack.c.l.b16 %v31
  %v224 = vunpack.c.l.b16 %v32
  %v225 = vunpack.c.l.b16 %v33
  %v226 = vunpack.c.l.b16 %v34
  %v227 = vunpack.c.l.b16 %v35
  %v228 = vunpack.c.l.b16 %v36
  %v229 = vunpack.c.l.b16 %v37
  %v230 = vunpack.c.l.b16 %v38
  %v231 = vunpack.c.l.b16 %v39
  %v232 = vunpack.c.l.b16 %v40
  %v233 = vunpack.c.l.b16 %v41
  %v234 = vunpack.c.l.b16 %v42
  %v235 = vunpack.c.l.b16 %v43
  %v236 = vunpack.c.l.b16 %v44
  %v237 = vunpack.c.l.b16 %v45
  %v238 = vunpack.c.l.b16 %v46
  %v239 = vunpack.c.l.b16 %v47
  %v240 = vunpack.c.l.b16 %v48
  %v241 = vunpack.c.l.b16 %v49
  %v242 = vunpack.c.l.b16 %v50
  %v243 = vunpack.c.l.b16 %v51
  %v244 = vunpack.c.l.b16 %v52
  %v245 = vunpack.c.l.b16 %v53
  %v246 = vunpack.c.l.b16 %v54
  %v247 = vunpack.c.l.b16 %v55
  %v248 = vunpack.c.l.b16 %v56
  %v249 = vunpack.c.l.b16 %v57
  %v250 = vunpack.c.l.b16 %v58
  %v251 = vunpack.c.l.b16 %v59
  %v252 = vunpack.c.l.b16 %v60
  %v253 = vunpack.c.l.b16 %v61
  %v254 = vunpack.c.l.b16 %v62
  %v255 = vunpack.c.l.b16 %v63
  %v256 = vunpack.c.l.b16 %v64
  %v257 = vunpack.c.l.b16 %v65
  %v258 = vunpack.c.l.b16 %v66
  %v259 = vunpack.c.l.b16 %v67
  %v260 = vunpack.c.l.b16 %v68
  %v261 = vunpack.c.l.b16 %v69
  %v262 = vunpack.c.l.b16 %v70
  %v263 = vunpack.c.l.b16 %v71
  %v264 = vunpack.c.l.b16 %v72
  %v265 = vunpack.c.l.b16 %v73
  %v266 = vunpack.c.l.b16 %v74
  %v267 = vunpack.c.l.b16 %v75
  %v268 = vunpack.c.l.b16 %v76
  %v269 = vunpack.c.l.b16 %v77
  %v270 = vunpack.c.l.b16 %v78
  %v271 = vunpack.c.l.b16 %v79
  %v272 = vunpack.c.l.b16 %v80
  %v273 = vunpack.c.l.b16 %v81
  %v274 = vunpack.c.l.b16 %v82
  %v275 = vunpack.c.l.b16 %v83
  %v276 = vunpack.c.l.b16 %v84
  %v277 = vunpack.c.l.b16 %v85
  %v278 = vunpack.c.l.b16 %v86
  %v279 = vpack.c.b16 %v216, %v215
  %v280 = vpack.c.b16 %v218, %v217
  %v281 = vpack.c.b16 %v220, %v219
  %v282 = vpack.c.b16 %v222, %v221
  %v283 = vpack.c.b16 %v224, %v223
  %v284 = vpack.c.b16 %v226, %v225
  %v285 = vpack.c.b16 %v228, %v227
  %v286 = vpack.c.b16 %v230, %v229
  %v287 = vpack.c.b16 %v232, %v231
  %v288 = vpack.c.b16 %v234, %v233
  %v289 = vpack.c.b16 %v236, %v235
  %v290 = vpack.c.b16 %v238, %v237
  %v291 = vpack.c.b16 %v240, %v239
  %v292 = vpack.c.b16 %v242, %v241
  %v293 = vpack.c.b16 %v244, %v243
  %v294 = vpack.c.b16 %v246, %v245
  %v295 = vpack.c.b16 %v248, %v247
  %v296 = vpack.c.b16 %v250, %v249
  %v297 = vpack.c.b16 %v252, %v251
  %v298 = vpack.c.b16 %v254, %v253
  %v299 = vpack.c.b16 %v256, %v255
  %v300 = vpack.c.b16 %v258, %v257
  %v301 = vpack.c.b16 %v260, %v259
  %v302 = vpack.c.b16 %v262, %v261
  %v303 = vpack.c.b16 %v264, %v263
  %v304 = vpack.c.b16 %v266, %v265
  %v305 = vpack.c.b16 %v268, %v267
  %v306 = vpack.c.b16 %v270, %v269
  %v307 = vpack.c.b16 %v272, %v271
  %v308 = vpack.c.b16 %v274, %v273
  %v309 = vpack.c.b16 %v276, %v275
  %v310 = vpack.c.b16 %v278, %v277
  %343 = vmatprep.subr.bf16.mxu0 0
  %344 = vmatpush1.bf16.msra.mxu0 %v279
  %345 = vmatprep.subr.bf16.mxu0 0
  %346 = vmatpush1.bf16.msra.mxu0 %v280
  %347 = vmatprep.subr.bf16.mxu0 0
  %348 = vmatpush1.bf16.msra.mxu0 %v281
  %349 = vmatprep.subr.bf16.mxu0 0
  %350 = vmatpush1.bf16.msra.mxu0 %v282
  %351 = vmatprep.subr.bf16.mxu0 0
  %352 = vmatpush1.bf16.msra.mxu0 %v283
  %353 = vmatprep.subr.bf16.mxu0 0
  %354 = vmatpush1.bf16.msra.mxu0 %v284
  %355 = vmatprep.subr.bf16.mxu0 0
  %356 = vmatpush1.bf16.msra.mxu0 %v285
  %357 = vmatprep.subr.bf16.mxu0 0
  %358 = vmatpush1.bf16.msra.mxu0 %v286
  %359 = vmatprep.subr.bf16.mxu0 0
  %360 = vmatpush1.bf16.msra.mxu0 %v287
  %361 = vmatprep.subr.bf16.mxu0 0
  %362 = vmatpush1.bf16.msra.mxu0 %v288
  %363 = vmatprep.subr.bf16.mxu0 0
  %364 = vmatpush1.bf16.msra.mxu0 %v289
  %365 = vmatprep.subr.bf16.mxu0 0
  %366 = vmatpush1.bf16.msra.mxu0 %v290
  %367 = vmatprep.subr.bf16.mxu0 0
  %368 = vmatpush1.bf16.msra.mxu0 %v291
  %369 = vmatprep.subr.bf16.mxu0 0
  %370 = vmatpush1.bf16.msra.mxu0 %v292
  %371 = vmatprep.subr.bf16.mxu0 0
  %372 = vmatpush1.bf16.msra.mxu0 %v293
  %373 = vmatprep.subr.bf16.mxu0 0
  %374 = vmatpush1.bf16.msra.mxu0 %v294
  %375 = vmatprep.mubr.bf16.mxu0 %v136
  %376 = vmatmul.mubr.bf16.gmra.mrb[0].mxu0 %v135
  %v377 = vpop.f32.mrb[0].mxu0
  %v378 = vadd.f32 %v94, %v377
  %v379 = vpop.f32.mrb[0].mxu0
  %v380 = vpop.f32.mrb[0].mxu0
  %v381 = vadd.f32 %v99, %v380
  %v382 = vpop.f32.mrb[0].mxu0
  %383 = vmatprep.mubr.bf16.mxu0 %v140
  %384 = vmatmul.mubr.bf16.gmra.mrb[0].mxu0 %v139
  %v385 = vpop.f32.mrb[0].mxu0
  %v386 = vadd.f32 %v104, %v385
  %v387 = vpop.f32.mrb[0].mxu0
  %v388 = vpop.f32.mrb[0].mxu0
  %v389 = vadd.f32 %v109, %v388
  %v390 = vpop.f32.mrb[0].mxu0
  %391 = vdwg.mxu0
  %392 = vmatprep.subr.bf16.mxu0 0
  %393 = vmatpush1.bf16.msra.mxu0 %v295
  %394 = vmatprep.subr.bf16.mxu0 0
  %395 = vmatpush1.bf16.msra.mxu0 %v296
  %396 = vmatprep.subr.bf16.mxu0 0
  %397 = vmatpush1.bf16.msra.mxu0 %v297
  %398 = vmatprep.subr.bf16.mxu0 0
  %399 = vmatpush1.bf16.msra.mxu0 %v298
  %400 = vmatprep.subr.bf16.mxu0 0
  %401 = vmatpush1.bf16.msra.mxu0 %v299
  %402 = vmatprep.subr.bf16.mxu0 0
  %403 = vmatpush1.bf16.msra.mxu0 %v300
  %404 = vmatprep.subr.bf16.mxu0 0
  %405 = vmatpush1.bf16.msra.mxu0 %v301
  %406 = vmatprep.subr.bf16.mxu0 0
  %407 = vmatpush1.bf16.msra.mxu0 %v302
  %408 = vmatprep.subr.bf16.mxu0 0
  %409 = vmatpush1.bf16.msra.mxu0 %v303
  %410 = vmatprep.subr.bf16.mxu0 0
  %411 = vmatpush1.bf16.msra.mxu0 %v304
  %412 = vmatprep.subr.bf16.mxu0 0
  %413 = vmatpush1.bf16.msra.mxu0 %v305
  %414 = vmatprep.subr.bf16.mxu0 0
  %415 = vmatpush1.bf16.msra.mxu0 %v306
  %416 = vmatprep.subr.bf16.mxu0 0
  %417 = vmatpush1.bf16.msra.mxu0 %v307
  %418 = vmatprep.subr.bf16.mxu0 0
  %419 = vmatpush1.bf16.msra.mxu0 %v308
  %420 = vmatprep.subr.bf16.mxu0 0
  %421 = vmatpush1.bf16.msra.mxu0 %v309
  %422 = vmatprep.subr.bf16.mxu0 0
  %423 = vmatpush1.bf16.msra.mxu0 %v310
  %424 = vmatprep.mubr.bf16.mxu0 %v138
  %425 = vmatmul.mubr.bf16.gmra.mrb[0].mxu0 %v137
  %v426 = vpop.f32.mrb[0].mxu0
  %v427 = vadd.f32 %v378, %v426
  %v428 = vpop.f32.mrb[0].mxu0
  %v429 = vpop.f32.mrb[0].mxu0
  %v430 = vadd.f32 %v381, %v429
  %v431 = vpop.f32.mrb[0].mxu0
  %432 = vmatprep.mubr.bf16.mxu0 %v142
  %433 = vmatmul.mubr.bf16.gmra.mrb[0].mxu0 %v141
  %v434 = vpop.f32.mrb[0].mxu0
  %v435 = vadd.f32 %v386, %v434
  %v436 = vpop.f32.mrb[0].mxu0
  %v437 = vpop.f32.mrb[0].mxu0
  %v438 = vadd.f32 %v389, %v437
  %v439 = vpop.f32.mrb[0].mxu0
  %440 = vdwg.mxu0
  %v441 = vmax.f32 %v427, 0.0
  %v442 = vmax.f32 %v430, 0.0
  %v443 = vmax.f32 %v435, 0.0
  %v444 = vmax.f32 %v438, 0.0
  %v445 = vpack.c.bf16 %v442, %v441
  %v446 = vpack.c.bf16 %v444, %v443
  %v449 = vunpack.c.l.b16 %v445
  %v450 = vunpack.c.h.b16 %v445
  %v451 = vunpack.c.l.b16 %v446
  %v452 = vunpack.c.h.b16 %v446
  %v453 = vpack.c.b16 %v449, %v449
  %v454 = vpack.c.b16 %v450, %v450
  %v455 = vpack.c.b16 %v451, %v451
  %v456 = vpack.c.b16 %v452, %v452
  %461 = vst [vmem:[%s3] sm:$0xf] %v453
  %462 = vst [vmem:[%s3 + $0x4] sm:$0xf] %v454
  %463 = vst [vmem:[%s3 + $0x8] sm:$0xf] %v455
  %464 = vst [vmem:[%s3 + $0xc] sm:$0xf] %v456
  // Predicated region
  $region14: #{forward.22} parent=0 // pred_check
    _
  $region15: #{forward.22} parent=0 // pred_check_branch
    %466 = sbr.rel (0) target = $region17
  $region16: #{forward.22} parent=0 // pred_region
    _
  $region17: #{forward.22} parent=0 // pred_fallthru
    _
  // Predicated region
  $region18: #{forward.22} parent=0 // pred_check
    _
  $region19: #{forward.22} parent=0 // pred_check_branch
    %468 = sbr.rel (0) target = $region21
  $region20: #{forward.22} parent=0 // pred_region
    _
  $region21: #{forward.22} parent=0 // pred_fallthru
    _

// kernel: forward.23
$region0: #{forward.23}
  #allocation0 [shape = 'u32[]', space=smem, size = 0x4, offset = 0x4, fixed_abs, tag = 'smem constant byte address 0x4 - core index']
  #allocation1 [shape = 'u32[144,128]{1,0:T(1,128)}', space=vmem, size = 0x12000, scoped, tag = 'internal scratch']
  %s0 = inlined_call_operand.vmem [shape: bf16[128,288], index: 0, kind: input, shape index: {}]
  %s1 = inlined_call_operand.vmem [shape: bf16[288,128], index: 1, kind: input, shape index: {}]
  %s2 = inlined_call_operand.vmem [shape: f32[128,1], index: 2, kind: input, shape index: {}]
  %s3 = inlined_call_operand.vmem [shape: bf16[128,128], index: 3, kind: output, shape index: {}]
  %s4 = sld [smem:[#allocation0]]
  $region22: #{forward.23} parent=0
    _
  %s6 = ssub.s32 1, %s4
  %s7 = scalar_select 0, %s6, %s4
  // Predicated region
  $region2: #{forward.23} parent=0 // pred_check
    _
  $region3: #{forward.23} parent=0 // pred_check_branch
    %9 = sbr.rel (0) target = $region5
  $region4: #{forward.23} parent=0 // pred_region
    _
  $region5: #{forward.23} parent=0 // pred_fallthru
    _
  // Predicated region
  $region6: #{forward.23} parent=0 // pred_check
    _
  $region7: #{forward.23} parent=0 // pred_check_branch
    %11 = sbr.rel (0) target = $region9
  $region8: #{forward.23} parent=0 // pred_region
    _
  $region9: #{forward.23} parent=0 // pred_fallthru
    _
  // Predicated region
  $region10: #{forward.23} parent=0 // pred_check
    _
  $region11: #{forward.23} parent=0 // pred_check_branch
    %13 = sbr.rel (0) target = $region13
  $region12: #{forward.23} parent=0 // pred_region
    _
  $region13: #{forward.23} parent=0 // pred_fallthru
    _
  %v15 = vld [vmem:[%s0] sm:$0xff]
  %v16 = vld [vmem:[%s0 + $0x8] sm:$0xf]
  %v17 = vld [vmem:[%s0 + $0xc] sm:$0xff]
  %v18 = vld [vmem:[%s0 + $0x14] sm:$0xf]
  %v19 = vld [vmem:[%s0 + $0x18] sm:$0xff]
  %v20 = vld [vmem:[%s0 + $0x20] sm:$0xf]
  %v21 = vld [vmem:[%s0 + $0x24] sm:$0xff]
  %v22 = vld [vmem:[%s0 + $0x2c] sm:$0xf]
  %v23 = vld [vmem:[%s0 + $0x30] sm:$0xff]
  %v24 = vld [vmem:[%s0 + $0x38] sm:$0xf]
  %v25 = vld [vmem:[%s0 + $0x3c] sm:$0xff]
  %v26 = vld [vmem:[%s0 + $0x44] sm:$0xf]
  %v27 = vld [vmem:[%s0 + $0x48] sm:$0xff]
  %v28 = vld [vmem:[%s0 + $0x50] sm:$0xf]
  %v29 = vld [vmem:[%s0 + $0x54] sm:$0xff]
  %v30 = vld [vmem:[%s0 + $0x5c] sm:$0xf]
  %v31 = vld [vmem:[%s0 + $0x60] sm:$0xff]
  %v32 = vld [vmem:[%s0 + $0x68] sm:$0xf]
  %v33 = vld [vmem:[%s0 + $0x6c] sm:$0xff]
  %v34 = vld [vmem:[%s0 + $0x74] sm:$0xf]
  %v35 = vld [vmem:[%s0 + $0x78] sm:$0xff]
  %v36 = vld [vmem:[%s0 + $0x80] sm:$0xf]
  %v37 = vld [vmem:[%s0 + $0x84] sm:$0xff]
  %v38 = vld [vmem:[%s0 + $0x8c] sm:$0xf]
  %v39 = vld [vmem:[%s0 + $0x90] sm:$0xff]
  %v40 = vld [vmem:[%s0 + $0x98] sm:$0xf]
  %v41 = vld [vmem:[%s0 + $0x9c] sm:$0xff]
  %v42 = vld [vmem:[%s0 + $0xa4] sm:$0xf]
  %v43 = vld [vmem:[%s0 + $0xa8] sm:$0xff]
  %v44 = vld [vmem:[%s0 + $0xb0] sm:$0xf]
  %v45 = vld [vmem:[%s0 + $0xb4] sm:$0xff]
  %v46 = vld [vmem:[%s0 + $0xbc] sm:$0xf]
  %v47 = vld [vmem:[%s1] sm:$0xf]
  %v48 = vld [vmem:[%s1 + $0x4] sm:$0xf]
  %v49 = vld [vmem:[%s1 + $0x8] sm:$0xf]
  %v50 = vld [vmem:[%s1 + $0xc] sm:$0xf]
  %v51 = vld [vmem:[%s1 + $0x10] sm:$0xf]
  %v52 = vld [vmem:[%s1 + $0x14] sm:$0xf]
  %v53 = vld [vmem:[%s1 + $0x18] sm:$0xf]
  %v54 = vld [vmem:[%s1 + $0x1c] sm:$0xf]
  %v55 = vld [vmem:[%s1 + $0x20] sm:$0xf]
  %v56 = vld [vmem:[%s1 + $0x24] sm:$0xf]
  %v57 = vld [vmem:[%s1 + $0x28] sm:$0xf]
  %v58 = vld [vmem:[%s1 + $0x2c] sm:$0xf]
  %v59 = vld [vmem:[%s1 + $0x30] sm:$0xf]
  %v60 = vld [vmem:[%s1 + $0x34] sm:$0xf]
  %v61 = vld [vmem:[%s1 + $0x38] sm:$0xf]
  %v62 = vld [vmem:[%s1 + $0x3c] sm:$0xf]
  %v63 = vld [vmem:[%s1 + $0x40] sm:$0xf]
  %v64 = vld [vmem:[%s1 + $0x44] sm:$0xf]
  %v65 = vld [vmem:[%s1 + $0x48] sm:$0xf]
  %v66 = vld [vmem:[%s1 + $0x4c] sm:$0xf]
  %v67 = vld [vmem:[%s1 + $0x50] sm:$0xf]
  %v68 = vld [vmem:[%s1 + $0x54] sm:$0xf]
  %v69 = vld [vmem:[%s1 + $0x58] sm:$0xf]
  %v70 = vld [vmem:[%s1 + $0x5c] sm:$0xf]
  %v71 = vld [vmem:[%s1 + $0x60] sm:$0xf]
  %v72 = vld [vmem:[%s1 + $0x64] sm:$0xf]
  %v73 = vld [vmem:[%s1 + $0x68] sm:$0xf]
  %v74 = vld [vmem:[%s1 + $0x6c] sm:$0xf]
  %v75 = vld [vmem:[%s1 + $0x70] sm:$0xf]
  %v76 = vld [vmem:[%s1 + $0x74] sm:$0xf]
  %v77 = vld [vmem:[%s1 + $0x78] sm:$0xf]
  %v78 = vld [vmem:[%s1 + $0x7c] sm:$0xf]
  %v79 = vld [vmem:[%s1 + $0x80] sm:$0xf]
  %v80 = vld [vmem:[%s1 + $0x84] sm:$0xf]
  %v81 = vld [vmem:[%s1 + $0x88] sm:$0xf]
  %v82 = vld [vmem:[%s1 + $0x8c] sm:$0xf]
  %v83 = vld [vmem:[%s2] sm:$0xff]
  %v84 = vld [vmem:[%s2 + $0x8] sm:$0xff]
  %v85 = vld [vmem:[%s2 + $0x10] sm:$0xff]
  %v86 = vld [vmem:[%s2 + $0x18] sm:$0xff]
  %v87 = vld [vmem:[%s2 + $0x20] sm:$0xff]
  %v88 = vld [vmem:[%s2 + $0x28] sm:$0xff]
  %v89 = vld [vmem:[%s2 + $0x30] sm:$0xff]
  %v90 = vld [vmem:[%s2 + $0x38] sm:$0xff]
  %v91 = vld [vmem:[%s2 + $0x40] sm:$0xff]
  %v92 = vld [vmem:[%s2 + $0x48] sm:$0xff]
  %v93 = vld [vmem:[%s2 + $0x50] sm:$0xff]
  %v94 = vld [vmem:[%s2 + $0x58] sm:$0xff]
  %v95 = vld [vmem:[%s2 + $0x60] sm:$0xff]
  %v96 = vld [vmem:[%s2 + $0x68] sm:$0xff]
  %v97 = vld [vmem:[%s2 + $0x70] sm:$0xff]
  %v98 = vld [vmem:[%s2 + $0x78] sm:$0xff]
  %100 = vset.pattern.permute.xlu0 0
  %101 = vperm.xlu0 %100, %v83
  %v102 = vpop.permute.xlu0 %101
  %105 = vset.pattern.permute.xlu0 0
  %106 = vperm.xlu0 %105, %v84
  %v107 = vpop.permute.xlu0 %106
  %110 = vset.pattern.permute.xlu0 0
  %111 = vperm.xlu0 %110, %v85
  %v112 = vpop.permute.xlu0 %111
  %115 = vset.pattern.permute.xlu0 0
  %116 = vperm.xlu0 %115, %v86
  %v117 = vpop.permute.xlu0 %116
  %120 = vset.pattern.permute.xlu0 0
  %121 = vperm.xlu0 %120, %v87
  %v122 = vpop.permute.xlu0 %121
  %125 = vset.pattern.permute.xlu0 0
  %126 = vperm.xlu0 %125, %v88
  %v127 = vpop.permute.xlu0 %126
  %130 = vset.pattern.permute.xlu0 0
  %131 = vperm.xlu0 %130, %v89
  %v132 = vpop.permute.xlu0 %131
  %135 = vset.pattern.permute.xlu0 0
  %136 = vperm.xlu0 %135, %v90
  %v137 = vpop.permute.xlu0 %136
  %140 = vset.pattern.permute.xlu0 0
  %141 = vperm.xlu0 %140, %v91
  %v142 = vpop.permute.xlu0 %141
  %145 = vset.pattern.permute.xlu0 0
  %146 = vperm.xlu0 %145, %v92
  %v147 = vpop.permute.xlu0 %146
  %150 = vset.pattern.permute.xlu0 0
  %151 = vperm.xlu0 %150, %v93
  %v152 = vpop.permute.xlu0 %151
  %155 = vset.pattern.permute.xlu0 0
  %156 = vperm.xlu0 %155, %v94
  %v157 = vpop.permute.xlu0 %156
  %160 = vset.pattern.permute.xlu0 0
  %161 = vperm.xlu0 %160, %v95
  %v162 = vpop.permute.xlu0 %161
  %165 = vset.pattern.permute.xlu0 0
  %166 = vperm.xlu0 %165, %v96
  %v167 = vpop.permute.xlu0 %166
  %170 = vset.pattern.permute.xlu0 0
  %171 = vperm.xlu0 %170, %v97
  %v172 = vpop.permute.xlu0 %171
  %175 = vset.pattern.permute.xlu0 0
  %176 = vperm.xlu0 %175, %v98
  %v177 = vpop.permute.xlu0 %176
  %v211 = vunpack.c.l.b16 %v15
  %v212 = vunpack.c.h.b16 %v15
  %v213 = vunpack.c.l.b16 %v16
  %v214 = vunpack.c.l.b16 %v17
  %v215 = vunpack.c.h.b16 %v17
  %v216 = vunpack.c.l.b16 %v18
  %v217 = vunpack.c.l.b16 %v19
  %v218 = vunpack.c.h.b16 %v19
  %v219 = vunpack.c.l.b16 %v20
  %v220 = vunpack.c.l.b16 %v21
  %v221 = vunpack.c.h.b16 %v21
  %v222 = vunpack.c.l.b16 %v22
  %v223 = vunpack.c.l.b16 %v23
  %v224 = vunpack.c.h.b16 %v23
  %v225 = vunpack.c.l.b16 %v24
  %v226 = vunpack.c.l.b16 %v25
  %v227 = vunpack.c.h.b16 %v25
  %v228 = vunpack.c.l.b16 %v26
  %v229 = vunpack.c.l.b16 %v27
  %v230 = vunpack.c.h.b16 %v27
  %v231 = vunpack.c.l.b16 %v28
  %v232 = vunpack.c.l.b16 %v29
  %v233 = vunpack.c.h.b16 %v29
  %v234 = vunpack.c.l.b16 %v30
  %v235 = vunpack.c.l.b16 %v31
  %v236 = vunpack.c.h.b16 %v31
  %v237 = vunpack.c.l.b16 %v32
  %v238 = vunpack.c.l.b16 %v33
  %v239 = vunpack.c.h.b16 %v33
  %v240 = vunpack.c.l.b16 %v34
  %v241 = vunpack.c.l.b16 %v35
  %v242 = vunpack.c.h.b16 %v35
  %v243 = vunpack.c.l.b16 %v36
  %v244 = vunpack.c.l.b16 %v37
  %v245 = vunpack.c.h.b16 %v37
  %v246 = vunpack.c.l.b16 %v38
  %v247 = vunpack.c.l.b16 %v39
  %v248 = vunpack.c.h.b16 %v39
  %v249 = vunpack.c.l.b16 %v40
  %v250 = vunpack.c.l.b16 %v41
  %v251 = vunpack.c.h.b16 %v41
  %v252 = vunpack.c.l.b16 %v42
  %v253 = vunpack.c.l.b16 %v43
  %v254 = vunpack.c.h.b16 %v43
  %v255 = vunpack.c.l.b16 %v44
  %v256 = vunpack.c.l.b16 %v45
  %v257 = vunpack.c.h.b16 %v45
  %v258 = vunpack.c.l.b16 %v46
  %v259 = vpack.c.b16 %v214, %v211
  %v260 = vpack.c.b16 %v215, %v212
  %v261 = vpack.c.b16 %v216, %v213
  %v262 = vpack.c.b16 %v220, %v217
  %v263 = vpack.c.b16 %v221, %v218
  %v264 = vpack.c.b16 %v222, %v219
  %v265 = vpack.c.b16 %v226, %v223
  %v266 = vpack.c.b16 %v227, %v224
  %v267 = vpack.c.b16 %v228, %v225
  %v268 = vpack.c.b16 %v232, %v229
  %v269 = vpack.c.b16 %v233, %v230
  %v270 = vpack.c.b16 %v234, %v231
  %v271 = vpack.c.b16 %v238, %v235
  %v272 = vpack.c.b16 %v239, %v236
  %v273 = vpack.c.b16 %v240, %v237
  %v274 = vpack.c.b16 %v244, %v241
  %v275 = vpack.c.b16 %v245, %v242
  %v276 = vpack.c.b16 %v246, %v243
  %v277 = vpack.c.b16 %v250, %v247
  %v278 = vpack.c.b16 %v251, %v248
  %v279 = vpack.c.b16 %v252, %v249
  %v280 = vpack.c.b16 %v256, %v253
  %v281 = vpack.c.b16 %v257, %v254
  %v282 = vpack.c.b16 %v258, %v255
  %v335 = vunpack.c.l.b16 %v47
  %v336 = vunpack.c.l.b16 %v48
  %v337 = vunpack.c.l.b16 %v49
  %v338 = vunpack.c.l.b16 %v50
  %v339 = vunpack.c.l.b16 %v51
  %v340 = vunpack.c.l.b16 %v52
  %v341 = vunpack.c.l.b16 %v53
  %v342 = vunpack.c.l.b16 %v54
  %v343 = vunpack.c.l.b16 %v55
  %v344 = vunpack.c.l.b16 %v56
  %v345 = vunpack.c.l.b16 %v57
  %v346 = vunpack.c.l.b16 %v58
  %v347 = vunpack.c.l.b16 %v59
  %v348 = vunpack.c.l.b16 %v60
  %v349 = vunpack.c.l.b16 %v61
  %v350 = vunpack.c.l.b16 %v62
  %v351 = vunpack.c.l.b16 %v63
  %v352 = vunpack.c.l.b16 %v64
  %v353 = vunpack.c.l.b16 %v65
  %v354 = vunpack.c.l.b16 %v66
  %v355 = vunpack.c.l.b16 %v67
  %v356 = vunpack.c.l.b16 %v68
  %v357 = vunpack.c.l.b16 %v69
  %v358 = vunpack.c.l.b16 %v70
  %v359 = vunpack.c.l.b16 %v71
  %v360 = vunpack.c.l.b16 %v72
  %v361 = vunpack.c.l.b16 %v73
  %v362 = vunpack.c.l.b16 %v74
  %v363 = vunpack.c.l.b16 %v75
  %v364 = vunpack.c.l.b16 %v76
  %v365 = vunpack.c.l.b16 %v77
  %v366 = vunpack.c.l.b16 %v78
  %v367 = vunpack.c.l.b16 %v79
  %v368 = vunpack.c.l.b16 %v80
  %v369 = vunpack.c.l.b16 %v81
  %v370 = vunpack.c.l.b16 %v82
  %v371 = vpack.c.b16 %v336, %v335
  %v372 = vpack.c.b16 %v338, %v337
  %v373 = vpack.c.b16 %v340, %v339
  %v374 = vpack.c.b16 %v342, %v341
  %v375 = vpack.c.b16 %v344, %v343
  %v376 = vpack.c.b16 %v346, %v345
  %v377 = vpack.c.b16 %v348, %v347
  %v378 = vpack.c.b16 %v350, %v349
  %v379 = vpack.c.b16 %v352, %v351
  %v380 = vpack.c.b16 %v354, %v353
  %v381 = vpack.c.b16 %v356, %v355
  %v382 = vpack.c.b16 %v358, %v357
  %v383 = vpack.c.b16 %v360, %v359
  %v384 = vpack.c.b16 %v362, %v361
  %v385 = vpack.c.b16 %v364, %v363
  %v386 = vpack.c.b16 %v366, %v365
  %v387 = vpack.c.b16 %v368, %v367
  %v388 = vpack.c.b16 %v370, %v369
  %vm407 = vcmask 261120
  %v409 = vsel %vm407, %v261, 0
  %v412 = vsel %vm407, %v264, 0
  %v415 = vsel %vm407, %v267, 0
  %v418 = vsel %vm407, %v270, 0
  %v421 = vsel %vm407, %v273, 0
  %v424 = vsel %vm407, %v276, 0
  %v427 = vsel %vm407, %v279, 0
  %v430 = vsel %vm407, %v282, 0
  %432 = vmatprep.subr.bf16.mxu0 0
  %433 = vmatpush1.bf16.msra.mxu0 %v371
  %434 = vmatprep.subr.bf16.mxu0 0
  %435 = vmatpush1.bf16.msra.mxu0 %v372
  %436 = vmatprep.subr.bf16.mxu0 0
  %437 = vmatpush1.bf16.msra.mxu0 %v373
  %438 = vmatprep.subr.bf16.mxu0 0
  %439 = vmatpush1.bf16.msra.mxu0 %v374
  %440 = vmatprep.subr.bf16.mxu0 0
  %441 = vmatpush1.bf16.msra.mxu0 %v375
  %442 = vmatprep.subr.bf16.mxu0 0
  %443 = vmatpush1.bf16.msra.mxu0 %v376
  %444 = vmatprep.subr.bf16.mxu0 0
  %445 = vmatpush1.bf16.msra.mxu0 %v377
  %446 = vmatprep.subr.bf16.mxu0 0
  %447 = vmatpush1.bf16.msra.mxu0 %v378
  %448 = vmatprep.subr.bf16.mxu0 0
  %449 = vmatpush1.bf16.msra.mxu0 %v379
  %450 = vmatprep.subr.bf16.mxu0 0
  %451 = vmatpush1.bf16.msra.mxu0 %v380
  %452 = vmatprep.subr.bf16.mxu0 0
  %453 = vmatpush1.bf16.msra.mxu0 %v381
  %454 = vmatprep.subr.bf16.mxu0 0
  %455 = vmatpush1.bf16.msra.mxu0 %v382
  %456 = vmatprep.subr.bf16.mxu0 0
  %457 = vmatpush1.bf16.msra.mxu0 %v383
  %458 = vmatprep.subr.bf16.mxu0 0
  %459 = vmatpush1.bf16.msra.mxu0 %v384
  %460 = vmatprep.subr.bf16.mxu0 0
  %461 = vmatpush1.bf16.msra.mxu0 %v385
  %462 = vmatprep.subr.bf16.mxu0 0
  %463 = vmatpush1.bf16.msra.mxu0 %v386
  %464 = vmatprep.mubr.bf16.mxu0 %v260
  %465 = vmatmul.mubr.bf16.gmra.mrb[0].mxu0 %v259
  %v466 = vpop.f32.mrb[0].mxu0
  %v467 = vadd.f32 %v102, %v466
  %v468 = vpop.f32.mrb[0].mxu0
  %v469 = vpop.f32.mrb[0].mxu0
  %v470 = vadd.f32 %v107, %v469
  %v471 = vpop.f32.mrb[0].mxu0
  %472 = vmatprep.mubr.bf16.mxu0 %v263
  %473 = vmatmul.mubr.bf16.gmra.mrb[0].mxu0 %v262
  %v474 = vpop.f32.mrb[0].mxu0
  %v475 = vadd.f32 %v112, %v474
  %v476 = vpop.f32.mrb[0].mxu0
  %v477 = vpop.f32.mrb[0].mxu0
  %v478 = vadd.f32 %v117, %v477
  %v479 = vpop.f32.mrb[0].mxu0
  %480 = vmatprep.mubr.bf16.mxu0 %v266
  %481 = vmatmul.mubr.bf16.gmra.mrb[0].mxu0 %v265
  %v482 = vpop.f32.mrb[0].mxu0
  %v483 = vadd.f32 %v122, %v482
  %v484 = vpop.f32.mrb[0].mxu0
  %v485 = vpop.f32.mrb[0].mxu0
  %v486 = vadd.f32 %v127, %v485
  %v487 = vpop.f32.mrb[0].mxu0
  %488 = vmatprep.mubr.bf16.mxu0 %v269
  %489 = vmatmul.mubr.bf16.gmra.mrb[0].mxu0 %v268
  %v490 = vpop.f32.mrb[0].mxu0
  %v491 = vadd.f32 %v132, %v490
  %v492 = vpop.f32.mrb[0].mxu0
  %v493 = vpop.f32.mrb[0].mxu0
  %v494 = vadd.f32 %v137, %v493
  %v495 = vpop.f32.mrb[0].mxu0
  %496 = vmatprep.mubr.bf16.mxu0 %v272
  %497 = vmatmul.mubr.bf16.gmra.mrb[0].mxu0 %v271
  %v498 = vpop.f32.mrb[0].mxu0
  %v499 = vadd.f32 %v142, %v498
  %v500 = vpop.f32.mrb[0].mxu0
  %v501 = vpop.f32.mrb[0].mxu0
  %v502 = vadd.f32 %v147, %v501
  %v503 = vpop.f32.mrb[0].mxu0
  %504 = vmatprep.mubr.bf16.mxu0 %v275
  %505 = vmatmul.mubr.bf16.gmra.mrb[0].mxu0 %v274
  %v506 = vpop.f32.mrb[0].mxu0
  %v507 = vadd.f32 %v152, %v506
  %v508 = vpop.f32.mrb[0].mxu0
  %v509 = vpop.f32.mrb[0].mxu0
  %v510 = vadd.f32 %v157, %v509
  %v511 = vpop.f32.mrb[0].mxu0
  %512 = vmatprep.mubr.bf16.mxu0 %v278
  %513 = vmatmul.mubr.bf16.gmra.mrb[0].mxu0 %v277
  %v514 = vpop.f32.mrb[0].mxu0
  %v515 = vadd.f32 %v162, %v514
  %v516 = vpop.f32.mrb[0].mxu0
  %v517 = vpop.f32.mrb[0].mxu0
  %v518 = vadd.f32 %v167, %v517
  %v519 = vpop.f32.mrb[0].mxu0
  %520 = vmatprep.mubr.bf16.mxu0 %v281
  %521 = vmatmul.mubr.bf16.gmra.mrb[0].mxu0 %v280
  %v522 = vpop.f32.mrb[0].mxu0
  %v523 = vadd.f32 %v172, %v522
  %v524 = vpop.f32.mrb[0].mxu0
  %v525 = vpop.f32.mrb[0].mxu0
  %v526 = vadd.f32 %v177, %v525
  %v527 = vpop.f32.mrb[0].mxu0
  %528 = vdwg.mxu0
  %529 = vmatprep.subr.bf16.mxu0 0
  %530 = vmatpush1.bf16.msra.mxu0 %v387
  %531 = vmatprep.subr.bf16.mxu0 0
  %532 = vmatpush1.bf16.msra.mxu0 %v388
  %533 = vmatprep.subr.bf16.mxu0 0
  %534 = vmatpush1.bf16.msra.mxu0 0
  %535 = vmatprep.subr.bf16.mxu0 0
  %536 = vmatpush1.bf16.msra.mxu0 0
  %537 = vmatprep.subr.bf16.mxu0 0
  %538 = vmatpush1.bf16.msra.mxu0 0
  %539 = vmatprep.subr.bf16.mxu0 0
  %540 = vmatpush1.bf16.msra.mxu0 0
  %541 = vmatprep.subr.bf16.mxu0 0
  %542 = vmatpush1.bf16.msra.mxu0 0
  %543 = vmatprep.subr.bf16.mxu0 0
  %544 = vmatpush1.bf16.msra.mxu0 0
  %545 = vmatprep.subr.bf16.mxu0 0
  %546 = vmatpush1.bf16.msra.mxu0 0
  %547 = vmatprep.subr.bf16.mxu0 0
  %548 = vmatpush1.bf16.msra.mxu0 0
  %549 = vmatprep.subr.bf16.mxu0 0
  %550 = vmatpush1.bf16.msra.mxu0 0
  %551 = vmatprep.subr.bf16.mxu0 0
  %552 = vmatpush1.bf16.msra.mxu0 0
  %553 = vmatprep.subr.bf16.mxu0 0
  %554 = vmatpush1.bf16.msra.mxu0 0
  %555 = vmatprep.subr.bf16.mxu0 0
  %556 = vmatpush1.bf16.msra.mxu0 0
  %557 = vmatprep.subr.bf16.mxu0 0
  %558 = vmatpush1.bf16.msra.mxu0 0
  %559 = vmatprep.subr.bf16.mxu0 0
  %560 = vmatpush1.bf16.msra.mxu0 0
  %561 = vmatprep.mubr.bf16.mxu0 0
  %562 = vmatmul.mubr.bf16.gmra.mrb[0].mxu0 %v409
  %v563 = vpop.f32.mrb[0].mxu0
  %v564 = vadd.f32 %v467, %v563
  %v565 = vpop.f32.mrb[0].mxu0
  %v566 = vpop.f32.mrb[0].mxu0
  %v567 = vadd.f32 %v470, %v566
  %v568 = vpop.f32.mrb[0].mxu0
  %569 = vmatprep.mubr.bf16.mxu0 0
  %570 = vmatmul.mubr.bf16.gmra.mrb[0].mxu0 %v412
  %v571 = vpop.f32.mrb[0].mxu0
  %v572 = vadd.f32 %v475, %v571
  %v573 = vpop.f32.mrb[0].mxu0
  %v574 = vpop.f32.mrb[0].mxu0
  %v575 = vadd.f32 %v478, %v574
  %v576 = vpop.f32.mrb[0].mxu0
  %577 = vmatprep.mubr.bf16.mxu0 0
  %578 = vmatmul.mubr.bf16.gmra.mrb[0].mxu0 %v415
  %v579 = vpop.f32.mrb[0].mxu0
  %v580 = vadd.f32 %v483, %v579
  %v581 = vpop.f32.mrb[0].mxu0
  %v582 = vpop.f32.mrb[0].mxu0
  %v583 = vadd.f32 %v486, %v582
  %v584 = vpop.f32.mrb[0].mxu0
  %585 = vmatprep.mubr.bf16.mxu0 0
  %586 = vmatmul.mubr.bf16.gmra.mrb[0].mxu0 %v418
  %v587 = vpop.f32.mrb[0].mxu0
  %v588 = vadd.f32 %v491, %v587
  %v589 = vpop.f32.mrb[0].mxu0
  %v590 = vpop.f32.mrb[0].mxu0
  %v591 = vadd.f32 %v494, %v590
  %v592 = vpop.f32.mrb[0].mxu0
  %593 = vmatprep.mubr.bf16.mxu0 0
  %594 = vmatmul.mubr.bf16.gmra.mrb[0].mxu0 %v421
  %v595 = vpop.f32.mrb[0].mxu0
  %v596 = vadd.f32 %v499, %v595
  %v597 = vpop.f32.mrb[0].mxu0
  %v598 = vpop.f32.mrb[0].mxu0
  %v599 = vadd.f32 %v502, %v598
  %v600 = vpop.f32.mrb[0].mxu0
  %601 = vmatprep.mubr.bf16.mxu0 0
  %602 = vmatmul.mubr.bf16.gmra.mrb[0].mxu0 %v424
  %v603 = vpop.f32.mrb[0].mxu0
  %v604 = vadd.f32 %v507, %v603
  %v605 = vpop.f32.mrb[0].mxu0
  %v606 = vpop.f32.mrb[0].mxu0
  %v607 = vadd.f32 %v510, %v606
  %v608 = vpop.f32.mrb[0].mxu0
  %609 = vmatprep.mubr.bf16.mxu0 0
  %610 = vmatmul.mubr.bf16.gmra.mrb[0].mxu0 %v427
  %v611 = vpop.f32.mrb[0].mxu0
  %v612 = vadd.f32 %v515, %v611
  %v613 = vpop.f32.mrb[0].mxu0
  %v614 = vpop.f32.mrb[0].mxu0
  %v615 = vadd.f32 %v518, %v614
  %v616 = vpop.f32.mrb[0].mxu0
  %617 = vmatprep.mubr.bf16.mxu0 0
  %618 = vmatmul.mubr.bf16.gmra.mrb[0].mxu0 %v430
  %v619 = vpop.f32.mrb[0].mxu0
  %v620 = vadd.f32 %v523, %v619
  %v621 = vpop.f32.mrb[0].mxu0
  %v622 = vpop.f32.mrb[0].mxu0
  %v623 = vadd.f32 %v526, %v622
  %v624 = vpop.f32.mrb[0].mxu0
  %625 = vdwg.mxu0
  %v626 = vmax.f32 %v564, 0.0
  %v627 = vmax.f32 %v567, 0.0
  %v628 = vmax.f32 %v572, 0.0
  %v629 = vmax.f32 %v575, 0.0
  %v630 = vmax.f32 %v580, 0.0
  %v631 = vmax.f32 %v583, 0.0
  %v632 = vmax.f32 %v588, 0.0
  %v633 = vmax.f32 %v591, 0.0
  %v634 = vmax.f32 %v596, 0.0
  %v635 = vmax.f32 %v599, 0.0
  %v636 = vmax.f32 %v604, 0.0
  %v637 = vmax.f32 %v607, 0.0
  %v638 = vmax.f32 %v612, 0.0
  %v639 = vmax.f32 %v615, 0.0
  %v640 = vmax.f32 %v620, 0.0
  %v641 = vmax.f32 %v623, 0.0
  %v642 = vpack.c.bf16 %v627, %v626
  %v643 = vpack.c.bf16 %v629, %v628
  %v644 = vpack.c.bf16 %v631, %v630
  %v645 = vpack.c.bf16 %v633, %v632
  %v646 = vpack.c.bf16 %v635, %v634
  %v647 = vpack.c.bf16 %v637, %v636
  %v648 = vpack.c.bf16 %v639, %v638
  %v649 = vpack.c.bf16 %v641, %v640
  %v658 = vunpack.c.l.b16 %v642
  %v659 = vunpack.c.h.b16 %v642
  %v660 = vunpack.c.l.b16 %v643
  %v661 = vunpack.c.h.b16 %v643
  %v662 = vunpack.c.l.b16 %v644
  %v663 = vunpack.c.h.b16 %v644
  %v664 = vunpack.c.l.b16 %v645
  %v665 = vunpack.c.h.b16 %v645
  %v666 = vunpack.c.l.b16 %v646
  %v667 = vunpack.c.h.b16 %v646
  %v668 = vunpack.c.l.b16 %v647
  %v669 = vunpack.c.h.b16 %v647
  %v670 = vunpack.c.l.b16 %v648
  %v671 = vunpack.c.h.b16 %v648
  %v672 = vunpack.c.l.b16 %v649
  %v673 = vunpack.c.h.b16 %v649
  %v674 = vpack.c.b16 %v658, %v658
  %v675 = vpack.c.b16 %v659, %v659
  %v676 = vpack.c.b16 %v660, %v660
  %v677 = vpack.c.b16 %v661, %v661
  %v678 = vpack.c.b16 %v662, %v662
  %v679 = vpack.c.b16 %v663, %v663
  %v680 = vpack.c.b16 %v664, %v664
  %v681 = vpack.c.b16 %v665, %v665
  %v682 = vpack.c.b16 %v666, %v666
  %v683 = vpack.c.b16 %v667, %v667
  %v684 = vpack.c.b16 %v668, %v668
  %v685 = vpack.c.b16 %v669, %v669
  %v686 = vpack.c.b16 %v670, %v670
  %v687 = vpack.c.b16 %v671, %v671
  %v688 = vpack.c.b16 %v672, %v672
  %v689 = vpack.c.b16 %v673, %v673
  %706 = vst [vmem:[%s3] sm:$0xf] %v674
  %707 = vst [vmem:[%s3 + $0x4] sm:$0xf] %v675
  %708 = vst [vmem:[%s3 + $0x8] sm:$0xf] %v676
  %709 = vst [vmem:[%s3 + $0xc] sm:$0xf] %v677
  %710 = vst [vmem:[%s3 + $0x10] sm:$0xf] %v678
  %711 = vst [vmem:[%s3 + $0x14] sm:$0xf] %v679
  %712 = vst [vmem:[%s3 + $0x18] sm:$0xf] %v680
  %713 = vst [vmem:[%s3 + $0x1c] sm:$0xf] %v681
  %714 = vst [vmem:[%s3 + $0x20] sm:$0xf] %v682
  %715 = vst [vmem:[%s3 + $0x24] sm:$0xf] %v683
  %716 = vst [vmem:[%s3 + $0x28] sm:$0xf] %v684
  %717 = vst [vmem:[%s3 + $0x2c] sm:$0xf] %v685
  %718 = vst [vmem:[%s3 + $0x30] sm:$0xf] %v686
  %719 = vst [vmem:[%s3 + $0x34] sm:$0xf] %v687
  %720 = vst [vmem:[%s3 + $0x38] sm:$0xf] %v688
  %721 = vst [vmem:[%s3 + $0x3c] sm:$0xf] %v689
  // Predicated region
  $region14: #{forward.23} parent=0 // pred_check
    _
  $region15: #{forward.23} parent=0 // pred_check_branch
    %723 = sbr.rel (0) target = $region17
  $region16: #{forward.23} parent=0 // pred_region
    _
  $region17: #{forward.23} parent=0 // pred_fallthru
    _
  // Predicated region
  $region18: #{forward.23} parent=0 // pred_check
    _
  $region19: #{forward.23} parent=0 // pred_check_branch
    %725 = sbr.rel (0) target = $region21
  $region20: #{forward.23} parent=0 // pred_region
    _
  $region21: #{forward.23} parent=0 // pred_fallthru
    _

// kernel: forward.24
$region0: #{forward.24}
  #allocation0 [shape = 'u32[]', space=smem, size = 0x4, offset = 0x4, fixed_abs, tag = 'smem constant byte address 0x4 - core index']
  #allocation1 [shape = 'u32[144,128]{1,0:T(1,128)}', space=vmem, size = 0x12000, scoped, tag = 'internal scratch']
  %s0 = inlined_call_operand.vmem [shape: bf16[128,288], index: 0, kind: input, shape index: {}]
  %s1 = inlined_call_operand.vmem [shape: bf16[288,128], index: 1, kind: input, shape index: {}]
  %s2 = inlined_call_operand.vmem [shape: bf16[128,288], index: 2, kind: input, shape index: {}]
  %s3 = inlined_call_operand.vmem [shape: bf16[288,128], index: 3, kind: input, shape index: {}]
  %s4 = inlined_call_operand.vmem [shape: f32[128,1], index: 4, kind: input, shape index: {}]
  %s5 = inlined_call_operand.vmem [shape: bf16[128,128], index: 5, kind: output, shape index: {}]
  %s6 = sld [smem:[#allocation0]]
  $region30: #{forward.24} parent=0
    _
  %s8 = ssub.s32 1, %s6
  %s9 = scalar_select 0, %s8, %s6
  // Predicated region
  $region2: #{forward.24} parent=0 // pred_check
    _
  $region3: #{forward.24} parent=0 // pred_check_branch
    %11 = sbr.rel (0) target = $region5
  $region4: #{forward.24} parent=0 // pred_region
    _
  $region5: #{forward.24} parent=0 // pred_fallthru
    _
  // Predicated region
  $region6: #{forward.24} parent=0 // pred_check
    _
  $region7: #{forward.24} parent=0 // pred_check_branch
    %13 = sbr.rel (0) target = $region9
  $region8: #{forward.24} parent=0 // pred_region
    _
  $region9: #{forward.24} parent=0 // pred_fallthru
    _
  // Predicated region
  $region10: #{forward.24} parent=0 // pred_check
    _
  $region11: #{forward.24} parent=0 // pred_check_branch
    %15 = sbr.rel (0) target = $region13
  $region12: #{forward.24} parent=0 // pred_region
    _
  $region13: #{forward.24} parent=0 // pred_fallthru
    _
  // Predicated region
  $region14: #{forward.24} parent=0 // pred_check
    _
  $region15: #{forward.24} parent=0 // pred_check_branch
    %17 = sbr.rel (0) target = $region17
  $region16: #{forward.24} parent=0 // pred_region
    _
  $region17: #{forward.24} parent=0 // pred_fallthru
    _
  // Predicated region
  $region18: #{forward.24} parent=0 // pred_check
    _
  $region19: #{forward.24} parent=0 // pred_check_branch
    %19 = sbr.rel (0) target = $region21
  $region20: #{forward.24} parent=0 // pred_region
    _
  $region21: #{forward.24} parent=0 // pred_fallthru
    _
  %v21 = vld [vmem:[%s0] sm:$0xff]
  %v22 = vld [vmem:[%s0 + $0x8] sm:$0xf]
  %v23 = vld [vmem:[%s0 + $0xc] sm:$0xff]
  %v24 = vld [vmem:[%s0 + $0x14] sm:$0xf]
  %v25 = vld [vmem:[%s0 + $0x18] sm:$0xff]
  %v26 = vld [vmem:[%s0 + $0x20] sm:$0xf]
  %v27 = vld [vmem:[%s0 + $0x24] sm:$0xff]
  %v28 = vld [vmem:[%s0 + $0x2c] sm:$0xf]
  %v29 = vld [vmem:[%s0 + $0x30] sm:$0xff]
  %v30 = vld [vmem:[%s0 + $0x38] sm:$0xf]
  %v31 = vld [vmem:[%s0 + $0x3c] sm:$0xff]
  %v32 = vld [vmem:[%s0 + $0x44] sm:$0xf]
  %v33 = vld [vmem:[%s0 + $0x48] sm:$0xff]
  %v34 = vld [vmem:[%s0 + $0x50] sm:$0xf]
  %v35 = vld [vmem:[%s0 + $0x54] sm:$0xff]
  %v36 = vld [vmem:[%s0 + $0x5c] sm:$0xf]
  %v37 = vld [vmem:[%s0 + $0x60] sm:$0xff]
  %v38 = vld [vmem:[%s0 + $0x68] sm:$0xf]
  %v39 = vld [vmem:[%s0 + $0x6c] sm:$0xff]
  %v40 = vld [vmem:[%s0 + $0x74] sm:$0xf]
  %v41 = vld [vmem:[%s0 + $0x78] sm:$0xff]
  %v42 = vld [vmem:[%s0 + $0x80] sm:$0xf]
  %v43 = vld [vmem:[%s0 + $0x84] sm:$0xff]
  %v44 = vld [vmem:[%s0 + $0x8c] sm:$0xf]
  %v45 = vld [vmem:[%s0 + $0x90] sm:$0xff]
  %v46 = vld [vmem:[%s0 + $0x98] sm:$0xf]
  %v47 = vld [vmem:[%s0 + $0x9c] sm:$0xff]
  %v48 = vld [vmem:[%s0 + $0xa4] sm:$0xf]
  %v49 = vld [vmem:[%s0 + $0xa8] sm:$0xff]
  %v50 = vld [vmem:[%s0 + $0xb0] sm:$0xf]
  %v51 = vld [vmem:[%s0 + $0xb4] sm:$0xff]
  %v52 = vld [vmem:[%s0 + $0xbc] sm:$0xf]
  %v53 = vld [vmem:[%s1] sm:$0xf]
  %v54 = vld [vmem:[%s1 + $0x4] sm:$0xf]
  %v55 = vld [vmem:[%s1 + $0x8] sm:$0xf]
  %v56 = vld [vmem:[%s1 + $0xc] sm:$0xf]
  %v57 = vld [vmem:[%s1 + $0x10] sm:$0xf]
  %v58 = vld [vmem:[%s1 + $0x14] sm:$0xf]
  %v59 = vld [vmem:[%s1 + $0x18] sm:$0xf]
  %v60 = vld [vmem:[%s1 + $0x1c] sm:$0xf]
  %v61 = vld [vmem:[%s1 + $0x20] sm:$0xf]
  %v62 = vld [vmem:[%s1 + $0x24] sm:$0xf]
  %v63 = vld [vmem:[%s1 + $0x28] sm:$0xf]
  %v64 = vld [vmem:[%s1 + $0x2c] sm:$0xf]
  %v65 = vld [vmem:[%s1 + $0x30] sm:$0xf]
  %v66 = vld [vmem:[%s1 + $0x34] sm:$0xf]
  %v67 = vld [vmem:[%s1 + $0x38] sm:$0xf]
  %v68 = vld [vmem:[%s1 + $0x3c] sm:$0xf]
  %v69 = vld [vmem:[%s1 + $0x40] sm:$0xf]
  %v70 = vld [vmem:[%s1 + $0x44] sm:$0xf]
  %v71 = vld [vmem:[%s1 + $0x48] sm:$0xf]
  %v72 = vld [vmem:[%s1 + $0x4c] sm:$0xf]
  %v73 = vld [vmem:[%s1 + $0x50] sm:$0xf]
  %v74 = vld [vmem:[%s1 + $0x54] sm:$0xf]
  %v75 = vld [vmem:[%s1 + $0x58] sm:$0xf]
  %v76 = vld [vmem:[%s1 + $0x5c] sm:$0xf]
  %v77 = vld [vmem:[%s1 + $0x60] sm:$0xf]
  %v78 = vld [vmem:[%s1 + $0x64] sm:$0xf]
  %v79 = vld [vmem:[%s1 + $0x68] sm:$0xf]
  %v80 = vld [vmem:[%s1 + $0x6c] sm:$0xf]
  %v81 = vld [vmem:[%s1 + $0x70] sm:$0xf]
  %v82 = vld [vmem:[%s1 + $0x74] sm:$0xf]
  %v83 = vld [vmem:[%s1 + $0x78] sm:$0xf]
  %v84 = vld [vmem:[%s1 + $0x7c] sm:$0xf]
  %v85 = vld [vmem:[%s1 + $0x80] sm:$0xf]
  %v86 = vld [vmem:[%s1 + $0x84] sm:$0xf]
  %v87 = vld [vmem:[%s1 + $0x88] sm:$0xf]
  %v88 = vld [vmem:[%s1 + $0x8c] sm:$0xf]
  %v89 = vld [vmem:[%s2] sm:$0xff]
  %v90 = vld [vmem:[%s2 + $0x8] sm:$0xf]
  %v91 = vld [vmem:[%s2 + $0xc] sm:$0xff]
  %v92 = vld [vmem:[%s2 + $0x14] sm:$0xf]
  %v93 = vld [vmem:[%s2 + $0x18] sm:$0xff]
  %v94 = vld [vmem:[%s2 + $0x20] sm:$0xf]
  %v95 = vld [vmem:[%s2 + $0x24] sm:$0xff]
  %v96 = vld [vmem:[%s2 + $0x2c] sm:$0xf]
  %v97 = vld [vmem:[%s2 + $0x30] sm:$0xff]
  %v98 = vld [vmem:[%s2 + $0x38] sm:$0xf]
  %v99 = vld [vmem:[%s2 + $0x3c] sm:$0xff]
  %v100 = vld [vmem:[%s2 + $0x44] sm:$0xf]
  %v101 = vld [vmem:[%s2 + $0x48] sm:$0xff]
  %v102 = vld [vmem:[%s2 + $0x50] sm:$0xf]
  %v103 = vld [vmem:[%s2 + $0x54] sm:$0xff]
  %v104 = vld [vmem:[%s2 + $0x5c] sm:$0xf]
  %v105 = vld [vmem:[%s2 + $0x60] sm:$0xff]
  %v106 = vld [vmem:[%s2 + $0x68] sm:$0xf]
  %v107 = vld [vmem:[%s2 + $0x6c] sm:$0xff]
  %v108 = vld [vmem:[%s2 + $0x74] sm:$0xf]
  %v109 = vld [vmem:[%s2 + $0x78] sm:$0xff]
  %v110 = vld [vmem:[%s2 + $0x80] sm:$0xf]
  %v111 = vld [vmem:[%s2 + $0x84] sm:$0xff]
  %v112 = vld [vmem:[%s2 + $0x8c] sm:$0xf]
  %v113 = vld [vmem:[%s2 + $0x90] sm:$0xff]
  %v114 = vld [vmem:[%s2 + $0x98] sm:$0xf]
  %v115 = vld [vmem:[%s2 + $0x9c] sm:$0xff]
  %v116 = vld [vmem:[%s2 + $0xa4] sm:$0xf]
  %v117 = vld [vmem:[%s2 + $0xa8] sm:$0xff]
  %v118 = vld [vmem:[%s2 + $0xb0] sm:$0xf]
  %v119 = vld [vmem:[%s2 + $0xb4] sm:$0xff]
  %v120 = vld [vmem:[%s2 + $0xbc] sm:$0xf]
  %v121 = vld [vmem:[%s3] sm:$0xf]
  %v122 = vld [vmem:[%s3 + $0x4] sm:$0xf]
  %v123 = vld [vmem:[%s3 + $0x8] sm:$0xf]
  %v124 = vld [vmem:[%s3 + $0xc] sm:$0xf]
  %v125 = vld [vmem:[%s3 + $0x10] sm:$0xf]
  %v126 = vld [vmem:[%s3 + $0x14] sm:$0xf]
  %v127 = vld [vmem:[%s3 + $0x18] sm:$0xf]
  %v128 = vld [vmem:[%s3 + $0x1c] sm:$0xf]
  %v129 = vld [vmem:[%s3 + $0x20] sm:$0xf]
  %v130 = vld [vmem:[%s3 + $0x24] sm:$0xf]
  %v131 = vld [vmem:[%s3 + $0x28] sm:$0xf]
  %v132 = vld [vmem:[%s3 + $0x2c] sm:$0xf]
  %v133 = vld [vmem:[%s3 + $0x30] sm:$0xf]
  %v134 = vld [vmem:[%s3 + $0x34] sm:$0xf]
  %v135 = vld [vmem:[%s3 + $0x38] sm:$0xf]
  %v136 = vld [vmem:[%s3 + $0x3c] sm:$0xf]
  %v137 = vld [vmem:[%s3 + $0x40] sm:$0xf]
  %v138 = vld [vmem:[%s3 + $0x44] sm:$0xf]
  %v139 = vld [vmem:[%s3 + $0x48] sm:$0xf]
  %v140 = vld [vmem:[%s3 + $0x4c] sm:$0xf]
  %v141 = vld [vmem:[%s3 + $0x50] sm:$0xf]
  %v142 = vld [vmem:[%s3 + $0x54] sm:$0xf]
  %v143 = vld [vmem:[%s3 + $0x58] sm:$0xf]
  %v144 = vld [vmem:[%s3 + $0x5c] sm:$0xf]
  %v145 = vld [vmem:[%s3 + $0x60] sm:$0xf]
  %v146 = vld [vmem:[%s3 + $0x64] sm:$0xf]
  %v147 = vld [vmem:[%s3 + $0x68] sm:$0xf]
  %v148 = vld [vmem:[%s3 + $0x6c] sm:$0xf]
  %v149 = vld [vmem:[%s3 + $0x70] sm:$0xf]
  %v150 = vld [vmem:[%s3 + $0x74] sm:$0xf]
  %v151 = vld [vmem:[%s3 + $0x78] sm:$0xf]
  %v152 = vld [vmem:[%s3 + $0x7c] sm:$0xf]
  %v153 = vld [vmem:[%s3 + $0x80] sm:$0xf]
  %v154 = vld [vmem:[%s3 + $0x84] sm:$0xf]
  %v155 = vld [vmem:[%s3 + $0x88] sm:$0xf]
  %v156 = vld [vmem:[%s3 + $0x8c] sm:$0xf]
  %v189 = vunpack.c.l.b16 %v89
  %v190 = vunpack.c.h.b16 %v89
  %v191 = vunpack.c.l.b16 %v90
  %v192 = vunpack.c.l.b16 %v91
  %v193 = vunpack.c.h.b16 %v91
  %v194 = vunpack.c.l.b16 %v92
  %v195 = vunpack.c.l.b16 %v93
  %v196 = vunpack.c.h.b16 %v93
  %v197 = vunpack.c.l.b16 %v94
  %v198 = vunpack.c.l.b16 %v95
  %v199 = vunpack.c.h.b16 %v95
  %v200 = vunpack.c.l.b16 %v96
  %v201 = vunpack.c.l.b16 %v97
  %v202 = vunpack.c.h.b16 %v97
  %v203 = vunpack.c.l.b16 %v98
  %v204 = vunpack.c.l.b16 %v99
  %v205 = vunpack.c.h.b16 %v99
  %v206 = vunpack.c.l.b16 %v100
  %v207 = vunpack.c.l.b16 %v101
  %v208 = vunpack.c.h.b16 %v101
  %v209 = vunpack.c.l.b16 %v102
  %v210 = vunpack.c.l.b16 %v103
  %v211 = vunpack.c.h.b16 %v103
  %v212 = vunpack.c.l.b16 %v104
  %v213 = vunpack.c.l.b16 %v105
  %v214 = vunpack.c.h.b16 %v105
  %v215 = vunpack.c.l.b16 %v106
  %v216 = vunpack.c.l.b16 %v107
  %v217 = vunpack.c.h.b16 %v107
  %v218 = vunpack.c.l.b16 %v108
  %v219 = vunpack.c.l.b16 %v109
  %v220 = vunpack.c.h.b16 %v109
  %v221 = vunpack.c.l.b16 %v110
  %v222 = vunpack.c.l.b16 %v111
  %v223 = vunpack.c.h.b16 %v111
  %v224 = vunpack.c.l.b16 %v112
  %v225 = vunpack.c.l.b16 %v113
  %v226 = vunpack.c.h.b16 %v113
  %v227 = vunpack.c.l.b16 %v114
  %v228 = vunpack.c.l.b16 %v115
  %v229 = vunpack.c.h.b16 %v115
  %v230 = vunpack.c.l.b16 %v116
  %v231 = vunpack.c.l.b16 %v117
  %v232 = vunpack.c.h.b16 %v117
  %v233 = vunpack.c.l.b16 %v118
  %v234 = vunpack.c.l.b16 %v119
  %v235 = vunpack.c.h.b16 %v119
  %v236 = vunpack.c.l.b16 %v120
  %v237 = vpack.c.b16 %v192, %v189
  %v238 = vpack.c.b16 %v193, %v190
  %v239 = vpack.c.b16 %v194, %v191
  %v240 = vpack.c.b16 %v198, %v195
  %v241 = vpack.c.b16 %v199, %v196
  %v242 = vpack.c.b16 %v200, %v197
  %v243 = vpack.c.b16 %v204, %v201
  %v244 = vpack.c.b16 %v205, %v202
  %v245 = vpack.c.b16 %v206, %v203
  %v246 = vpack.c.b16 %v210, %v207
  %v247 = vpack.c.b16 %v211, %v208
  %v248 = vpack.c.b16 %v212, %v209
  %v249 = vpack.c.b16 %v216, %v213
  %v250 = vpack.c.b16 %v217, %v214
  %v251 = vpack.c.b16 %v218, %v215
  %v252 = vpack.c.b16 %v222, %v219
  %v253 = vpack.c.b16 %v223, %v220
  %v254 = vpack.c.b16 %v224, %v221
  %v255 = vpack.c.b16 %v228, %v225
  %v256 = vpack.c.b16 %v229, %v226
  %v257 = vpack.c.b16 %v230, %v227
  %v258 = vpack.c.b16 %v234, %v231
  %v259 = vpack.c.b16 %v235, %v232
  %v260 = vpack.c.b16 %v236, %v233
  %v313 = vunpack.c.l.b16 %v121
  %v314 = vunpack.c.l.b16 %v122
  %v315 = vunpack.c.l.b16 %v123
  %v316 = vunpack.c.l.b16 %v124
  %v317 = vunpack.c.l.b16 %v125
  %v318 = vunpack.c.l.b16 %v126
  %v319 = vunpack.c.l.b16 %v127
  %v320 = vunpack.c.l.b16 %v128
  %v321 = vunpack.c.l.b16 %v129
  %v322 = vunpack.c.l.b16 %v130
  %v323 = vunpack.c.l.b16 %v131
  %v324 = vunpack.c.l.b16 %v132
  %v325 = vunpack.c.l.b16 %v133
  %v326 = vunpack.c.l.b16 %v134
  %v327 = vunpack.c.l.b16 %v135
  %v328 = vunpack.c.l.b16 %v136
  %v329 = vunpack.c.l.b16 %v137
  %v330 = vunpack.c.l.b16 %v138
  %v331 = vunpack.c.l.b16 %v139
  %v332 = vunpack.c.l.b16 %v140
  %v333 = vunpack.c.l.b16 %v141
  %v334 = vunpack.c.l.b16 %v142
  %v335 = vunpack.c.l.b16 %v143
  %v336 = vunpack.c.l.b16 %v144
  %v337 = vunpack.c.l.b16 %v145
  %v338 = vunpack.c.l.b16 %v146
  %v339 = vunpack.c.l.b16 %v147
  %v340 = vunpack.c.l.b16 %v148
  %v341 = vunpack.c.l.b16 %v149
  %v342 = vunpack.c.l.b16 %v150
  %v343 = vunpack.c.l.b16 %v151
  %v344 = vunpack.c.l.b16 %v152
  %v345 = vunpack.c.l.b16 %v153
  %v346 = vunpack.c.l.b16 %v154
  %v347 = vunpack.c.l.b16 %v155
  %v348 = vunpack.c.l.b16 %v156
  %v349 = vpack.c.b16 %v314, %v313
  %v350 = vpack.c.b16 %v316, %v315
  %v351 = vpack.c.b16 %v318, %v317
  %v352 = vpack.c.b16 %v320, %v319
  %v353 = vpack.c.b16 %v322, %v321
  %v354 = vpack.c.b16 %v324, %v323
  %v355 = vpack.c.b16 %v326, %v325
  %v356 = vpack.c.b16 %v328, %v327
  %v357 = vpack.c.b16 %v330, %v329
  %v358 = vpack.c.b16 %v332, %v331
  %v359 = vpack.c.b16 %v334, %v333
  %v360 = vpack.c.b16 %v336, %v335
  %v361 = vpack.c.b16 %v338, %v337
  %v362 = vpack.c.b16 %v340, %v339
  %v363 = vpack.c.b16 %v342, %v341
  %v364 = vpack.c.b16 %v344, %v343
  %v365 = vpack.c.b16 %v346, %v345
  %v366 = vpack.c.b16 %v348, %v347
  %vm385 = vcmask 261120
  %v387 = vsel %vm385, %v239, 0
  %v390 = vsel %vm385, %v242, 0
  %v393 = vsel %vm385, %v245, 0
  %v396 = vsel %vm385, %v248, 0
  %v399 = vsel %vm385, %v251, 0
  %v402 = vsel %vm385, %v254, 0
  %v405 = vsel %vm385, %v257, 0
  %v408 = vsel %vm385, %v260, 0
  %410 = vmatprep.subr.bf16.mxu0 0
  %411 = vmatpush1.bf16.msra.mxu0 %v349
  %412 = vmatprep.subr.bf16.mxu0 0
  %413 = vmatpush1.bf16.msra.mxu0 %v350
  %414 = vmatprep.subr.bf16.mxu0 0
  %415 = vmatpush1.bf16.msra.mxu0 %v351
  %416 = vmatprep.subr.bf16.mxu0 0
  %417 = vmatpush1.bf16.msra.mxu0 %v352
  %418 = vmatprep.subr.bf16.mxu0 0
  %419 = vmatpush1.bf16.msra.mxu0 %v353
  %420 = vmatprep.subr.bf16.mxu0 0
  %421 = vmatpush1.bf16.msra.mxu0 %v354
  %422 = vmatprep.subr.bf16.mxu0 0
  %423 = vmatpush1.bf16.msra.mxu0 %v355
  %424 = vmatprep.subr.bf16.mxu0 0
  %425 = vmatpush1.bf16.msra.mxu0 %v356
  %426 = vmatprep.subr.bf16.mxu0 0
  %427 = vmatpush1.bf16.msra.mxu0 %v357
  %428 = vmatprep.subr.bf16.mxu0 0
  %429 = vmatpush1.bf16.msra.mxu0 %v358
  %430 = vmatprep.subr.bf16.mxu0 0
  %431 = vmatpush1.bf16.msra.mxu0 %v359
  %432 = vmatprep.subr.bf16.mxu0 0
  %433 = vmatpush1.bf16.msra.mxu0 %v360
  %434 = vmatprep.subr.bf16.mxu0 0
  %435 = vmatpush1.bf16.msra.mxu0 %v361
  %436 = vmatprep.subr.bf16.mxu0 0
  %437 = vmatpush1.bf16.msra.mxu0 %v362
  %438 = vmatprep.subr.bf16.mxu0 0
  %439 = vmatpush1.bf16.msra.mxu0 %v363
  %440 = vmatprep.subr.bf16.mxu0 0
  %441 = vmatpush1.bf16.msra.mxu0 %v364
  %442 = vmatprep.mubr.bf16.mxu0 %v238
  %443 = vmatmul.mubr.bf16.gmra.mrb[0].mxu0 %v237
  %v444 = vpop.f32.mrb[0].mxu0
  %v445 = vadd.f32 0.0, %v444
  %v446 = vpop.f32.mrb[0].mxu0
  %v447 = vpop.f32.mrb[0].mxu0
  %v448 = vadd.f32 0.0, %v447
  %v449 = vpop.f32.mrb[0].mxu0
  %450 = vmatprep.mubr.bf16.mxu0 %v241
  %451 = vmatmul.mubr.bf16.gmra.mrb[0].mxu0 %v240
  %v452 = vpop.f32.mrb[0].mxu0
  %v453 = vadd.f32 0.0, %v452
  %v454 = vpop.f32.mrb[0].mxu0
  %v455 = vpop.f32.mrb[0].mxu0
  %v456 = vadd.f32 0.0, %v455
  %v457 = vpop.f32.mrb[0].mxu0
  %458 = vmatprep.mubr.bf16.mxu0 %v244
  %459 = vmatmul.mubr.bf16.gmra.mrb[0].mxu0 %v243
  %v460 = vpop.f32.mrb[0].mxu0
  %v461 = vadd.f32 0.0, %v460
  %v462 = vpop.f32.mrb[0].mxu0
  %v463 = vpop.f32.mrb[0].mxu0
  %v464 = vadd.f32 0.0, %v463
  %v465 = vpop.f32.mrb[0].mxu0
  %466 = vmatprep.mubr.bf16.mxu0 %v247
  %467 = vmatmul.mubr.bf16.gmra.mrb[0].mxu0 %v246
  %v468 = vpop.f32.mrb[0].mxu0
  %v469 = vadd.f32 0.0, %v468
  %v470 = vpop.f32.mrb[0].mxu0
  %v471 = vpop.f32.mrb[0].mxu0
  %v472 = vadd.f32 0.0, %v471
  %v473 = vpop.f32.mrb[0].mxu0
  %474 = vmatprep.mubr.bf16.mxu0 %v250
  %475 = vmatmul.mubr.bf16.gmra.mrb[0].mxu0 %v249
  %v476 = vpop.f32.mrb[0].mxu0
  %v477 = vadd.f32 0.0, %v476
  %v478 = vpop.f32.mrb[0].mxu0
  %v479 = vpop.f32.mrb[0].mxu0
  %v480 = vadd.f32 0.0, %v479
  %v481 = vpop.f32.mrb[0].mxu0
  %482 = vmatprep.mubr.bf16.mxu0 %v253
  %483 = vmatmul.mubr.bf16.gmra.mrb[0].mxu0 %v252
  %v484 = vpop.f32.mrb[0].mxu0
  %v485 = vadd.f32 0.0, %v484
  %v486 = vpop.f32.mrb[0].mxu0
  %v487 = vpop.f32.mrb[0].mxu0
  %v488 = vadd.f32 0.0, %v487
  %v489 = vpop.f32.mrb[0].mxu0
  %490 = vmatprep.mubr.bf16.mxu0 %v256
  %491 = vmatmul.mubr.bf16.gmra.mrb[0].mxu0 %v255
  %v492 = vpop.f32.mrb[0].mxu0
  %v493 = vadd.f32 0.0, %v492
  %v494 = vpop.f32.mrb[0].mxu0
  %v495 = vpop.f32.mrb[0].mxu0
  %v496 = vadd.f32 0.0, %v495
  %v497 = vpop.f32.mrb[0].mxu0
  %498 = vmatprep.mubr.bf16.mxu0 %v259
  %499 = vmatmul.mubr.bf16.gmra.mrb[0].mxu0 %v258
  %v500 = vpop.f32.mrb[0].mxu0
  %v501 = vadd.f32 0.0, %v500
  %v502 = vpop.f32.mrb[0].mxu0
  %v503 = vpop.f32.mrb[0].mxu0
  %v504 = vadd.f32 0.0, %v503
  %v505 = vpop.f32.mrb[0].mxu0
  %506 = vdwg.mxu0
  %507 = vmatprep.subr.bf16.mxu0 0
  %508 = vmatpush1.bf16.msra.mxu0 %v365
  %509 = vmatprep.subr.bf16.mxu0 0
  %510 = vmatpush1.bf16.msra.mxu0 %v366
  %511 = vmatprep.subr.bf16.mxu0 0
  %512 = vmatpush1.bf16.msra.mxu0 0
  %513 = vmatprep.subr.bf16.mxu0 0
  %514 = vmatpush1.bf16.msra.mxu0 0
  %515 = vmatprep.subr.bf16.mxu0 0
  %516 = vmatpush1.bf16.msra.mxu0 0
  %517 = vmatprep.subr.bf16.mxu0 0
  %518 = vmatpush1.bf16.msra.mxu0 0
  %519 = vmatprep.subr.bf16.mxu0 0
  %520 = vmatpush1.bf16.msra.mxu0 0
  %521 = vmatprep.subr.bf16.mxu0 0
  %522 = vmatpush1.bf16.msra.mxu0 0
  %523 = vmatprep.subr.bf16.mxu0 0
  %524 = vmatpush1.bf16.msra.mxu0 0
  %525 = vmatprep.subr.bf16.mxu0 0
  %526 = vmatpush1.bf16.msra.mxu0 0
  %527 = vmatprep.subr.bf16.mxu0 0
  %528 = vmatpush1.bf16.msra.mxu0 0
  %529 = vmatprep.subr.bf16.mxu0 0
  %530 = vmatpush1.bf16.msra.mxu0 0
  %531 = vmatprep.subr.bf16.mxu0 0
  %532 = vmatpush1.bf16.msra.mxu0 0
  %533 = vmatprep.subr.bf16.mxu0 0
  %534 = vmatpush1.bf16.msra.mxu0 0
  %535 = vmatprep.subr.bf16.mxu0 0
  %536 = vmatpush1.bf16.msra.mxu0 0
  %537 = vmatprep.subr.bf16.mxu0 0
  %538 = vmatpush1.bf16.msra.mxu0 0
  %539 = vmatprep.mubr.bf16.mxu0 0
  %540 = vmatmul.mubr.bf16.gmra.mrb[0].mxu0 %v387
  %v541 = vpop.f32.mrb[0].mxu0
  %v542 = vadd.f32 %v445, %v541
  %v543 = vpop.f32.mrb[0].mxu0
  %v544 = vpop.f32.mrb[0].mxu0
  %v545 = vadd.f32 %v448, %v544
  %v546 = vpop.f32.mrb[0].mxu0
  %547 = vmatprep.mubr.bf16.mxu0 0
  %548 = vmatmul.mubr.bf16.gmra.mrb[0].mxu0 %v390
  %v549 = vpop.f32.mrb[0].mxu0
  %v550 = vadd.f32 %v453, %v549
  %v551 = vpop.f32.mrb[0].mxu0
  %v552 = vpop.f32.mrb[0].mxu0
  %v553 = vadd.f32 %v456, %v552
  %v554 = vpop.f32.mrb[0].mxu0
  %555 = vmatprep.mubr.bf16.mxu0 0
  %556 = vmatmul.mubr.bf16.gmra.mrb[0].mxu0 %v393
  %v557 = vpop.f32.mrb[0].mxu0
  %v558 = vadd.f32 %v461, %v557
  %v559 = vpop.f32.mrb[0].mxu0
  %v560 = vpop.f32.mrb[0].mxu0
  %v561 = vadd.f32 %v464, %v560
  %v562 = vpop.f32.mrb[0].mxu0
  %563 = vmatprep.mubr.bf16.mxu0 0
  %564 = vmatmul.mubr.bf16.gmra.mrb[0].mxu0 %v396
  %v565 = vpop.f32.mrb[0].mxu0
  %v566 = vadd.f32 %v469, %v565
  %v567 = vpop.f32.mrb[0].mxu0
  %v568 = vpop.f32.mrb[0].mxu0
  %v569 = vadd.f32 %v472, %v568
  %v570 = vpop.f32.mrb[0].mxu0
  %571 = vmatprep.mubr.bf16.mxu0 0
  %572 = vmatmul.mubr.bf16.gmra.mrb[0].mxu0 %v399
  %v573 = vpop.f32.mrb[0].mxu0
  %v574 = vadd.f32 %v477, %v573
  %v575 = vpop.f32.mrb[0].mxu0
  %v576 = vpop.f32.mrb[0].mxu0
  %v577 = vadd.f32 %v480, %v576
  %v578 = vpop.f32.mrb[0].mxu0
  %579 = vmatprep.mubr.bf16.mxu0 0
  %580 = vmatmul.mubr.bf16.gmra.mrb[0].mxu0 %v402
  %v581 = vpop.f32.mrb[0].mxu0
  %v582 = vadd.f32 %v485, %v581
  %v583 = vpop.f32.mrb[0].mxu0
  %v584 = vpop.f32.mrb[0].mxu0
  %v585 = vadd.f32 %v488, %v584
  %v586 = vpop.f32.mrb[0].mxu0
  %587 = vmatprep.mubr.bf16.mxu0 0
  %588 = vmatmul.mubr.bf16.gmra.mrb[0].mxu0 %v405
  %v589 = vpop.f32.mrb[0].mxu0
  %v590 = vadd.f32 %v493, %v589
  %v591 = vpop.f32.mrb[0].mxu0
  %v592 = vpop.f32.mrb[0].mxu0
  %v593 = vadd.f32 %v496, %v592
  %v594 = vpop.f32.mrb[0].mxu0
  %595 = vmatprep.mubr.bf16.mxu0 0
  %596 = vmatmul.mubr.bf16.gmra.mrb[0].mxu0 %v408
  %v597 = vpop.f32.mrb[0].mxu0
  %v598 = vadd.f32 %v501, %v597
  %v599 = vpop.f32.mrb[0].mxu0
  %v600 = vpop.f32.mrb[0].mxu0
  %v601 = vadd.f32 %v504, %v600
  %v602 = vpop.f32.mrb[0].mxu0
  %603 = vdwg.mxu0
  %v636 = vunpack.c.l.b16 %v21
  %v637 = vunpack.c.h.b16 %v21
  %v638 = vunpack.c.l.b16 %v22
  %v639 = vunpack.c.l.b16 %v23
  %v640 = vunpack.c.h.b16 %v23
  %v641 = vunpack.c.l.b16 %v24
  %v642 = vunpack.c.l.b16 %v25
  %v643 = vunpack.c.h.b16 %v25
  %v644 = vunpack.c.l.b16 %v26
  %v645 = vunpack.c.l.b16 %v27
  %v646 = vunpack.c.h.b16 %v27
  %v647 = vunpack.c.l.b16 %v28
  %v648 = vunpack.c.l.b16 %v29
  %v649 = vunpack.c.h.b16 %v29
  %v650 = vunpack.c.l.b16 %v30
  %v651 = vunpack.c.l.b16 %v31
  %v652 = vunpack.c.h.b16 %v31
  %v653 = vunpack.c.l.b16 %v32
  %v654 = vunpack.c.l.b16 %v33
  %v655 = vunpack.c.h.b16 %v33
  %v656 = vunpack.c.l.b16 %v34
  %v657 = vunpack.c.l.b16 %v35
  %v658 = vunpack.c.h.b16 %v35
  %v659 = vunpack.c.l.b16 %v36
  %v660 = vunpack.c.l.b16 %v37
  %v661 = vunpack.c.h.b16 %v37
  %v662 = vunpack.c.l.b16 %v38
  %v663 = vunpack.c.l.b16 %v39
  %v664 = vunpack.c.h.b16 %v39
  %v665 = vunpack.c.l.b16 %v40
  %v666 = vunpack.c.l.b16 %v41
  %v667 = vunpack.c.h.b16 %v41
  %v668 = vunpack.c.l.b16 %v42
  %v669 = vunpack.c.l.b16 %v43
  %v670 = vunpack.c.h.b16 %v43
  %v671 = vunpack.c.l.b16 %v44
  %v672 = vunpack.c.l.b16 %v45
  %v673 = vunpack.c.h.b16 %v45
  %v674 = vunpack.c.l.b16 %v46
  %v675 = vunpack.c.l.b16 %v47
  %v676 = vunpack.c.h.b16 %v47
  %v677 = vunpack.c.l.b16 %v48
  %v678 = vunpack.c.l.b16 %v49
  %v679 = vunpack.c.h.b16 %v49
  %v680 = vunpack.c.l.b16 %v50
  %v681 = vunpack.c.l.b16 %v51
  %v682 = vunpack.c.h.b16 %v51
  %v683 = vunpack.c.l.b16 %v52
  %v684 = vpack.c.b16 %v639, %v636
  %v685 = vpack.c.b16 %v640, %v637
  %v686 = vpack.c.b16 %v641, %v638
  %v687 = vpack.c.b16 %v645, %v642
  %v688 = vpack.c.b16 %v646, %v643
  %v689 = vpack.c.b16 %v647, %v644
  %v690 = vpack.c.b16 %v651, %v648
  %v691 = vpack.c.b16 %v652, %v649
  %v692 = vpack.c.b16 %v653, %v650
  %v693 = vpack.c.b16 %v657, %v654
  %v694 = vpack.c.b16 %v658, %v655
  %v695 = vpack.c.b16 %v659, %v656
  %v696 = vpack.c.b16 %v663, %v660
  %v697 = vpack.c.b16 %v664, %v661
  %v698 = vpack.c.b16 %v665, %v662
  %v699 = vpack.c.b16 %v669, %v666
  %v700 = vpack.c.b16 %v670, %v667
  %v701 = vpack.c.b16 %v671, %v668
  %v702 = vpack.c.b16 %v675, %v672
  %v703 = vpack.c.b16 %v676, %v673
  %v704 = vpack.c.b16 %v677, %v674
  %v705 = vpack.c.b16 %v681, %v678
  %v706 = vpack.c.b16 %v682, %v679
  %v707 = vpack.c.b16 %v683, %v680
  %v760 = vunpack.c.l.b16 %v53
  %v761 = vunpack.c.l.b16 %v54
  %v762 = vunpack.c.l.b16 %v55
  %v763 = vunpack.c.l.b16 %v56
  %v764 = vunpack.c.l.b16 %v57
  %v765 = vunpack.c.l.b16 %v58
  %v766 = vunpack.c.l.b16 %v59
  %v767 = vunpack.c.l.b16 %v60
  %v768 = vunpack.c.l.b16 %v61
  %v769 = vunpack.c.l.b16 %v62
  %v770 = vunpack.c.l.b16 %v63
  %v771 = vunpack.c.l.b16 %v64
  %v772 = vunpack.c.l.b16 %v65
  %v773 = vunpack.c.l.b16 %v66
  %v774 = vunpack.c.l.b16 %v67
  %v775 = vunpack.c.l.b16 %v68
  %v776 = vunpack.c.l.b16 %v69
  %v777 = vunpack.c.l.b16 %v70
  %v778 = vunpack.c.l.b16 %v71
  %v779 = vunpack.c.l.b16 %v72
  %v780 = vunpack.c.l.b16 %v73
  %v781 = vunpack.c.l.b16 %v74
  %v782 = vunpack.c.l.b16 %v75
  %v783 = vunpack.c.l.b16 %v76
  %v784 = vunpack.c.l.b16 %v77
  %v785 = vunpack.c.l.b16 %v78
  %v786 = vunpack.c.l.b16 %v79
  %v787 = vunpack.c.l.b16 %v80
  %v788 = vunpack.c.l.b16 %v81
  %v789 = vunpack.c.l.b16 %v82
  %v790 = vunpack.c.l.b16 %v83
  %v791 = vunpack.c.l.b16 %v84
  %v792 = vunpack.c.l.b16 %v85
  %v793 = vunpack.c.l.b16 %v86
  %v794 = vunpack.c.l.b16 %v87
  %v795 = vunpack.c.l.b16 %v88
  %v796 = vpack.c.b16 %v761, %v760
  %v797 = vpack.c.b16 %v763, %v762
  %v798 = vpack.c.b16 %v765, %v764
  %v799 = vpack.c.b16 %v767, %v766
  %v800 = vpack.c.b16 %v769, %v768
  %v801 = vpack.c.b16 %v771, %v770
  %v802 = vpack.c.b16 %v773, %v772
  %v803 = vpack.c.b16 %v775, %v774
  %v804 = vpack.c.b16 %v777, %v776
  %v805 = vpack.c.b16 %v779, %v778
  %v806 = vpack.c.b16 %v781, %v780
  %v807 = vpack.c.b16 %v783, %v782
  %v808 = vpack.c.b16 %v785, %v784
  %v809 = vpack.c.b16 %v787, %v786
  %v810 = vpack.c.b16 %v789, %v788
  %v811 = vpack.c.b16 %v791, %v790
  %v812 = vpack.c.b16 %v793, %v792
  %v813 = vpack.c.b16 %v795, %v794
  %v833 = vsel %vm385, %v686, 0
  %v836 = vsel %vm385, %v689, 0
  %v839 = vsel %vm385, %v692, 0
  %v842 = vsel %vm385, %v695, 0
  %v845 = vsel %vm385, %v698, 0
  %v848 = vsel %vm385, %v701, 0
  %v851 = vsel %vm385, %v704, 0
  %v854 = vsel %vm385, %v707, 0
  %856 = vmatprep.subr.bf16.mxu0 0
  %857 = vmatpush1.bf16.msra.mxu0 %v796
  %858 = vmatprep.subr.bf16.mxu0 0
  %859 = vmatpush1.bf16.msra.mxu0 %v797
  %860 = vmatprep.subr.bf16.mxu0 0
  %861 = vmatpush1.bf16.msra.mxu0 %v798
  %862 = vmatprep.subr.bf16.mxu0 0
  %863 = vmatpush1.bf16.msra.mxu0 %v799
  %864 = vmatprep.subr.bf16.mxu0 0
  %865 = vmatpush1.bf16.msra.mxu0 %v800
  %866 = vmatprep.subr.bf16.mxu0 0
  %867 = vmatpush1.bf16.msra.mxu0 %v801
  %868 = vmatprep.subr.bf16.mxu0 0
  %869 = vmatpush1.bf16.msra.mxu0 %v802
  %870 = vmatprep.subr.bf16.mxu0 0
  %871 = vmatpush1.bf16.msra.mxu0 %v803
  %872 = vmatprep.subr.bf16.mxu0 0
  %873 = vmatpush1.bf16.msra.mxu0 %v804
  %874 = vmatprep.subr.bf16.mxu0 0
  %875 = vmatpush1.bf16.msra.mxu0 %v805
  %876 = vmatprep.subr.bf16.mxu0 0
  %877 = vmatpush1.bf16.msra.mxu0 %v806
  %878 = vmatprep.subr.bf16.mxu0 0
  %879 = vmatpush1.bf16.msra.mxu0 %v807
  %880 = vmatprep.subr.bf16.mxu0 0
  %881 = vmatpush1.bf16.msra.mxu0 %v808
  %882 = vmatprep.subr.bf16.mxu0 0
  %883 = vmatpush1.bf16.msra.mxu0 %v809
  %884 = vmatprep.subr.bf16.mxu0 0
  %885 = vmatpush1.bf16.msra.mxu0 %v810
  %886 = vmatprep.subr.bf16.mxu0 0
  %887 = vmatpush1.bf16.msra.mxu0 %v811
  %888 = vmatprep.mubr.bf16.mxu0 %v685
  %889 = vmatmul.mubr.bf16.gmra.mrb[0].mxu0 %v684
  %v890 = vpop.f32.mrb[0].mxu0
  %v891 = vadd.f32 %v542, %v890
  %v892 = vpop.f32.mrb[0].mxu0
  %v893 = vpop.f32.mrb[0].mxu0
  %v894 = vadd.f32 %v545, %v893
  %v895 = vpop.f32.mrb[0].mxu0
  %896 = vmatprep.mubr.bf16.mxu0 %v688
  %897 = vmatmul.mubr.bf16.gmra.mrb[0].mxu0 %v687
  %v898 = vpop.f32.mrb[0].mxu0
  %v899 = vadd.f32 %v550, %v898
  %v900 = vpop.f32.mrb[0].mxu0
  %v901 = vpop.f32.mrb[0].mxu0
  %v902 = vadd.f32 %v553, %v901
  %v903 = vpop.f32.mrb[0].mxu0
  %904 = vmatprep.mubr.bf16.mxu0 %v691
  %905 = vmatmul.mubr.bf16.gmra.mrb[0].mxu0 %v690
  %v906 = vpop.f32.mrb[0].mxu0
  %v907 = vadd.f32 %v558, %v906
  %v908 = vpop.f32.mrb[0].mxu0
  %v909 = vpop.f32.mrb[0].mxu0
  %v910 = vadd.f32 %v561, %v909
  %v911 = vpop.f32.mrb[0].mxu0
  %912 = vmatprep.mubr.bf16.mxu0 %v694
  %913 = vmatmul.mubr.bf16.gmra.mrb[0].mxu0 %v693
  %v914 = vpop.f32.mrb[0].mxu0
  %v915 = vadd.f32 %v566, %v914
  %v916 = vpop.f32.mrb[0].mxu0
  %v917 = vpop.f32.mrb[0].mxu0
  %v918 = vadd.f32 %v569, %v917
  %v919 = vpop.f32.mrb[0].mxu0
  %920 = vmatprep.mubr.bf16.mxu0 %v697
  %921 = vmatmul.mubr.bf16.gmra.mrb[0].mxu0 %v696
  %v922 = vpop.f32.mrb[0].mxu0
  %v923 = vadd.f32 %v574, %v922
  %v924 = vpop.f32.mrb[0].mxu0
  %v925 = vpop.f32.mrb[0].mxu0
  %v926 = vadd.f32 %v577, %v925
  %v927 = vpop.f32.mrb[0].mxu0
  %928 = vmatprep.mubr.bf16.mxu0 %v700
  %929 = vmatmul.mubr.bf16.gmra.mrb[0].mxu0 %v699
  %v930 = vpop.f32.mrb[0].mxu0
  %v931 = vadd.f32 %v582, %v930
  %v932 = vpop.f32.mrb[0].mxu0
  %v933 = vpop.f32.mrb[0].mxu0
  %v934 = vadd.f32 %v585, %v933
  %v935 = vpop.f32.mrb[0].mxu0
  %936 = vmatprep.mubr.bf16.mxu0 %v703
  %937 = vmatmul.mubr.bf16.gmra.mrb[0].mxu0 %v702
  %v938 = vpop.f32.mrb[0].mxu0
  %v939 = vadd.f32 %v590, %v938
  %v940 = vpop.f32.mrb[0].mxu0
  %v941 = vpop.f32.mrb[0].mxu0
  %v942 = vadd.f32 %v593, %v941
  %v943 = vpop.f32.mrb[0].mxu0
  %944 = vmatprep.mubr.bf16.mxu0 %v706
  %945 = vmatmul.mubr.bf16.gmra.mrb[0].mxu0 %v705
  %v946 = vpop.f32.mrb[0].mxu0
  %v947 = vadd.f32 %v598, %v946
  %v948 = vpop.f32.mrb[0].mxu0
  %v949 = vpop.f32.mrb[0].mxu0
  %v950 = vadd.f32 %v601, %v949
  %v951 = vpop.f32.mrb[0].mxu0
  %952 = vdwg.mxu0
  %953 = vmatprep.subr.bf16.mxu0 0
  %954 = vmatpush1.bf16.msra.mxu0 %v812
  %955 = vmatprep.subr.bf16.mxu0 0
  %956 = vmatpush1.bf16.msra.mxu0 %v813
  %957 = vmatprep.subr.bf16.mxu0 0
  %958 = vmatpush1.bf16.msra.mxu0 0
  %959 = vmatprep.subr.bf16.mxu0 0
  %960 = vmatpush1.bf16.msra.mxu0 0
  %961 = vmatprep.subr.bf16.mxu0 0
  %962 = vmatpush1.bf16.msra.mxu0 0
  %963 = vmatprep.subr.bf16.mxu0 0
  %964 = vmatpush1.bf16.msra.mxu0 0
  %965 = vmatprep.subr.bf16.mxu0 0
  %966 = vmatpush1.bf16.msra.mxu0 0
  %967 = vmatprep.subr.bf16.mxu0 0
  %968 = vmatpush1.bf16.msra.mxu0 0
  %969 = vmatprep.subr.bf16.mxu0 0
  %970 = vmatpush1.bf16.msra.mxu0 0
  %971 = vmatprep.subr.bf16.mxu0 0
  %972 = vmatpush1.bf16.msra.mxu0 0
  %973 = vmatprep.subr.bf16.mxu0 0
  %974 = vmatpush1.bf16.msra.mxu0 0
  %975 = vmatprep.subr.bf16.mxu0 0
  %976 = vmatpush1.bf16.msra.mxu0 0
  %977 = vmatprep.subr.bf16.mxu0 0
  %978 = vmatpush1.bf16.msra.mxu0 0
  %979 = vmatprep.subr.bf16.mxu0 0
  %980 = vmatpush1.bf16.msra.mxu0 0
  %981 = vmatprep.subr.bf16.mxu0 0
  %982 = vmatpush1.bf16.msra.mxu0 0
  %983 = vmatprep.subr.bf16.mxu0 0
  %984 = vmatpush1.bf16.msra.mxu0 0
  %985 = vmatprep.mubr.bf16.mxu0 0
  %986 = vmatmul.mubr.bf16.gmra.mrb[0].mxu0 %v833
  %v987 = vpop.f32.mrb[0].mxu0
  %v988 = vadd.f32 %v891, %v987
  %v989 = vpop.f32.mrb[0].mxu0
  %v990 = vpop.f32.mrb[0].mxu0
  %v991 = vadd.f32 %v894, %v990
  %v992 = vpop.f32.mrb[0].mxu0
  %993 = vmatprep.mubr.bf16.mxu0 0
  %994 = vmatmul.mubr.bf16.gmra.mrb[0].mxu0 %v836
  %v995 = vpop.f32.mrb[0].mxu0
  %v996 = vadd.f32 %v899, %v995
  %v997 = vpop.f32.mrb[0].mxu0
  %v998 = vpop.f32.mrb[0].mxu0
  %v999 = vadd.f32 %v902, %v998
  %v1000 = vpop.f32.mrb[0].mxu0
  %1001 = vmatprep.mubr.bf16.mxu0 0
  %1002 = vmatmul.mubr.bf16.gmra.mrb[0].mxu0 %v839
  %v1003 = vpop.f32.mrb[0].mxu0
  %v1004 = vadd.f32 %v907, %v1003
  %v1005 = vpop.f32.mrb[0].mxu0
  %v1006 = vpop.f32.mrb[0].mxu0
  %v1007 = vadd.f32 %v910, %v1006
  %v1008 = vpop.f32.mrb[0].mxu0
  %1009 = vmatprep.mubr.bf16.mxu0 0
  %1010 = vmatmul.mubr.bf16.gmra.mrb[0].mxu0 %v842
  %v1011 = vpop.f32.mrb[0].mxu0
  %v1012 = vadd.f32 %v915, %v1011
  %v1013 = vpop.f32.mrb[0].mxu0
  %v1014 = vpop.f32.mrb[0].mxu0
  %v1015 = vadd.f32 %v918, %v1014
  %v1016 = vpop.f32.mrb[0].mxu0
  %1017 = vmatprep.mubr.bf16.mxu0 0
  %1018 = vmatmul.mubr.bf16.gmra.mrb[0].mxu0 %v845
  %v1019 = vpop.f32.mrb[0].mxu0
  %v1020 = vadd.f32 %v923, %v1019
  %v1021 = vpop.f32.mrb[0].mxu0
  %v1022 = vpop.f32.mrb[0].mxu0
  %v1023 = vadd.f32 %v926, %v1022
  %v1024 = vpop.f32.mrb[0].mxu0
  %1025 = vmatprep.mubr.bf16.mxu0 0
  %1026 = vmatmul.mubr.bf16.gmra.mrb[0].mxu0 %v848
  %v1027 = vpop.f32.mrb[0].mxu0
  %v1028 = vadd.f32 %v931, %v1027
  %v1029 = vpop.f32.mrb[0].mxu0
  %v1030 = vpop.f32.mrb[0].mxu0
  %v1031 = vadd.f32 %v934, %v1030
  %v1032 = vpop.f32.mrb[0].mxu0
  %1033 = vmatprep.mubr.bf16.mxu0 0
  %1034 = vmatmul.mubr.bf16.gmra.mrb[0].mxu0 %v851
  %v1035 = vpop.f32.mrb[0].mxu0
  %v1036 = vadd.f32 %v939, %v1035
  %v1037 = vpop.f32.mrb[0].mxu0
  %v1038 = vpop.f32.mrb[0].mxu0
  %v1039 = vadd.f32 %v942, %v1038
  %v1040 = vpop.f32.mrb[0].mxu0
  %1041 = vmatprep.mubr.bf16.mxu0 0
  %1042 = vmatmul.mubr.bf16.gmra.mrb[0].mxu0 %v854
  %v1043 = vpop.f32.mrb[0].mxu0
  %v1044 = vadd.f32 %v947, %v1043
  %v1045 = vpop.f32.mrb[0].mxu0
  %v1046 = vpop.f32.mrb[0].mxu0
  %v1047 = vadd.f32 %v950, %v1046
  %v1048 = vpop.f32.mrb[0].mxu0
  %1049 = vdwg.mxu0
  %v1050 = vld [vmem:[%s4] sm:$0xff]
  %v1051 = vld [vmem:[%s4 + $0x8] sm:$0xff]
  %v1052 = vld [vmem:[%s4 + $0x10] sm:$0xff]
  %v1053 = vld [vmem:[%s4 + $0x18] sm:$0xff]
  %v1054 = vld [vmem:[%s4 + $0x20] sm:$0xff]
  %v1055 = vld [vmem:[%s4 + $0x28] sm:$0xff]
  %v1056 = vld [vmem:[%s4 + $0x30] sm:$0xff]
  %v1057 = vld [vmem:[%s4 + $0x38] sm:$0xff]
  %v1058 = vld [vmem:[%s4 + $0x40] sm:$0xff]
  %v1059 = vld [vmem:[%s4 + $0x48] sm:$0xff]
  %v1060 = vld [vmem:[%s4 + $0x50] sm:$0xff]
  %v1061 = vld [vmem:[%s4 + $0x58] sm:$0xff]
  %v1062 = vld [vmem:[%s4 + $0x60] sm:$0xff]
  %v1063 = vld [vmem:[%s4 + $0x68] sm:$0xff]
  %v1064 = vld [vmem:[%s4 + $0x70] sm:$0xff]
  %v1065 = vld [vmem:[%s4 + $0x78] sm:$0xff]
  %1067 = vset.pattern.permute.xlu0 0
  %1068 = vperm.xlu0 %1067, %v1050
  %v1069 = vpop.permute.xlu0 %1068
  %1072 = vset.pattern.permute.xlu0 0
  %1073 = vperm.xlu0 %1072, %v1051
  %v1074 = vpop.permute.xlu0 %1073
  %1077 = vset.pattern.permute.xlu0 0
  %1078 = vperm.xlu0 %1077, %v1052
  %v1079 = vpop.permute.xlu0 %1078
  %1082 = vset.pattern.permute.xlu0 0
  %1083 = vperm.xlu0 %1082, %v1053
  %v1084 = vpop.permute.xlu0 %1083
  %1087 = vset.pattern.permute.xlu0 0
  %1088 = vperm.xlu0 %1087, %v1054
  %v1089 = vpop.permute.xlu0 %1088
  %1092 = vset.pattern.permute.xlu0 0
  %1093 = vperm.xlu0 %1092, %v1055
  %v1094 = vpop.permute.xlu0 %1093
  %1097 = vset.pattern.permute.xlu0 0
  %1098 = vperm.xlu0 %1097, %v1056
  %v1099 = vpop.permute.xlu0 %1098
  %1102 = vset.pattern.permute.xlu0 0
  %1103 = vperm.xlu0 %1102, %v1057
  %v1104 = vpop.permute.xlu0 %1103
  %1107 = vset.pattern.permute.xlu0 0
  %1108 = vperm.xlu0 %1107, %v1058
  %v1109 = vpop.permute.xlu0 %1108
  %1112 = vset.pattern.permute.xlu0 0
  %1113 = vperm.xlu0 %1112, %v1059
  %v1114 = vpop.permute.xlu0 %1113
  %1117 = vset.pattern.permute.xlu0 0
  %1118 = vperm.xlu0 %1117, %v1060
  %v1119 = vpop.permute.xlu0 %1118
  %1122 = vset.pattern.permute.xlu0 0
  %1123 = vperm.xlu0 %1122, %v1061
  %v1124 = vpop.permute.xlu0 %1123
  %1127 = vset.pattern.permute.xlu0 0
  %1128 = vperm.xlu0 %1127, %v1062
  %v1129 = vpop.permute.xlu0 %1128
  %1132 = vset.pattern.permute.xlu0 0
  %1133 = vperm.xlu0 %1132, %v1063
  %v1134 = vpop.permute.xlu0 %1133
  %1137 = vset.pattern.permute.xlu0 0
  %1138 = vperm.xlu0 %1137, %v1064
  %v1139 = vpop.permute.xlu0 %1138
  %1142 = vset.pattern.permute.xlu0 0
  %1143 = vperm.xlu0 %1142, %v1065
  %v1144 = vpop.permute.xlu0 %1143
  %v1146 = vadd.f32 %v988, %v1069
  %v1147 = vadd.f32 %v991, %v1074
  %v1148 = vadd.f32 %v996, %v1079
  %v1149 = vadd.f32 %v999, %v1084
  %v1150 = vadd.f32 %v1004, %v1089
  %v1151 = vadd.f32 %v1007, %v1094
  %v1152 = vadd.f32 %v1012, %v1099
  %v1153 = vadd.f32 %v1015, %v1104
  %v1154 = vadd.f32 %v1020, %v1109
  %v1155 = vadd.f32 %v1023, %v1114
  %v1156 = vadd.f32 %v1028, %v1119
  %v1157 = vadd.f32 %v1031, %v1124
  %v1158 = vadd.f32 %v1036, %v1129
  %v1159 = vadd.f32 %v1039, %v1134
  %v1160 = vadd.f32 %v1044, %v1139
  %v1161 = vadd.f32 %v1047, %v1144
  %v1162 = vmax.f32 %v1146, 0.0
  %v1163 = vmax.f32 %v1147, 0.0
  %v1164 = vmax.f32 %v1148, 0.0
  %v1165 = vmax.f32 %v1149, 0.0
  %v1166 = vmax.f32 %v1150, 0.0
  %v1167 = vmax.f32 %v1151, 0.0
  %v1168 = vmax.f32 %v1152, 0.0
  %v1169 = vmax.f32 %v1153, 0.0
  %v1170 = vmax.f32 %v1154, 0.0
  %v1171 = vmax.f32 %v1155, 0.0
  %v1172 = vmax.f32 %v1156, 0.0
  %v1173 = vmax.f32 %v1157, 0.0
  %v1174 = vmax.f32 %v1158, 0.0
  %v1175 = vmax.f32 %v1159, 0.0
  %v1176 = vmax.f32 %v1160, 0.0
  %v1177 = vmax.f32 %v1161, 0.0
  %v1178 = vpack.c.bf16 %v1163, %v1162
  %v1179 = vpack.c.bf16 %v1165, %v1164
  %v1180 = vpack.c.bf16 %v1167, %v1166
  %v1181 = vpack.c.bf16 %v1169, %v1168
  %v1182 = vpack.c.bf16 %v1171, %v1170
  %v1183 = vpack.c.bf16 %v1173, %v1172
  %v1184 = vpack.c.bf16 %v1175, %v1174
  %v1185 = vpack.c.bf16 %v1177, %v1176
  %v1194 = vunpack.c.l.b16 %v1178
  %v1195 = vunpack.c.h.b16 %v1178
  %v1196 = vunpack.c.l.b16 %v1179
  %v1197 = vunpack.c.h.b16 %v1179
  %v1198 = vunpack.c.l.b16 %v1180
  %v1199 = vunpack.c.h.b16 %v1180
  %v1200 = vunpack.c.l.b16 %v1181
  %v1201 = vunpack.c.h.b16 %v1181
  %v1202 = vunpack.c.l.b16 %v1182
  %v1203 = vunpack.c.h.b16 %v1182
  %v1204 = vunpack.c.l.b16 %v1183
  %v1205 = vunpack.c.h.b16 %v1183
  %v1206 = vunpack.c.l.b16 %v1184
  %v1207 = vunpack.c.h.b16 %v1184
  %v1208 = vunpack.c.l.b16 %v1185
  %v1209 = vunpack.c.h.b16 %v1185
  %v1210 = vpack.c.b16 %v1194, %v1194
  %v1211 = vpack.c.b16 %v1195, %v1195
  %v1212 = vpack.c.b16 %v1196, %v1196
  %v1213 = vpack.c.b16 %v1197, %v1197
  %v1214 = vpack.c.b16 %v1198, %v1198
  %v1215 = vpack.c.b16 %v1199, %v1199
  %v1216 = vpack.c.b16 %v1200, %v1200
  %v1217 = vpack.c.b16 %v1201, %v1201
  %v1218 = vpack.c.b16 %v1202, %v1202
  %v1219 = vpack.c.b16 %v1203, %v1203
  %v1220 = vpack.c.b16 %v1204, %v1204
  %v1221 = vpack.c.b16 %v1205, %v1205
  %v1222 = vpack.c.b16 %v1206, %v1206
  %v1223 = vpack.c.b16 %v1207, %v1207
  %v1224 = vpack.c.b16 %v1208, %v1208
  %v1225 = vpack.c.b16 %v1209, %v1209
  %1242 = vst [vmem:[%s5] sm:$0xf] %v1210
  %1243 = vst [vmem:[%s5 + $0x4] sm:$0xf] %v1211
  %1244 = vst [vmem:[%s5 + $0x8] sm:$0xf] %v1212
  %1245 = vst [vmem:[%s5 + $0xc] sm:$0xf] %v1213
  %1246 = vst [vmem:[%s5 + $0x10] sm:$0xf] %v1214
  %1247 = vst [vmem:[%s5 + $0x14] sm:$0xf] %v1215
  %1248 = vst [vmem:[%s5 + $0x18] sm:$0xf] %v1216
  %1249 = vst [vmem:[%s5 + $0x1c] sm:$0xf] %v1217
  %1250 = vst [vmem:[%s5 + $0x20] sm:$0xf] %v1218
  %1251 = vst [vmem:[%s5 + $0x24] sm:$0xf] %v1219
  %1252 = vst [vmem:[%s5 + $0x28] sm:$0xf] %v1220
  %1253 = vst [vmem:[%s5 + $0x2c] sm:$0xf] %v1221
  %1254 = vst [vmem:[%s5 + $0x30] sm:$0xf] %v1222
  %1255 = vst [vmem:[%s5 + $0x34] sm:$0xf] %v1223
  %1256 = vst [vmem:[%s5 + $0x38] sm:$0xf] %v1224
  %1257 = vst [vmem:[%s5 + $0x3c] sm:$0xf] %v1225
  // Predicated region
  $region22: #{forward.24} parent=0 // pred_check
    _
  $region23: #{forward.24} parent=0 // pred_check_branch
    %1259 = sbr.rel (0) target = $region25
  $region24: #{forward.24} parent=0 // pred_region
    _
  $region25: #{forward.24} parent=0 // pred_fallthru
    _
  // Predicated region
  $region26: #{forward.24} parent=0 // pred_check
    _
  $region27: #{forward.24} parent=0 // pred_check_branch
    %1261 = sbr.rel (0) target = $region29
  $region28: #{forward.24} parent=0 // pred_region
    _
  $region29: #{forward.24} parent=0 // pred_fallthru
    _

// kernel: forward.27
$region0: #{forward.27}
  #allocation0 [shape = 'u32[]', space=smem, size = 0x4, offset = 0x4, fixed_abs, tag = 'smem constant byte address 0x4 - core index']
  #allocation1 [shape = 'u32[144,128]{1,0:T(1,128)}', space=vmem, size = 0x12000, scoped, tag = 'internal scratch']
  %s0 = inlined_call_operand.vmem [shape: bf16[64,288], index: 0, kind: input, shape index: {}]
  %s1 = inlined_call_operand.vmem [shape: bf16[288,256], index: 1, kind: input, shape index: {}]
  %s2 = inlined_call_operand.vmem [shape: bf16[64,288], index: 2, kind: input, shape index: {}]
  %s3 = inlined_call_operand.vmem [shape: bf16[288,256], index: 3, kind: input, shape index: {}]
  %s4 = inlined_call_operand.vmem [shape: f32[64,1], index: 4, kind: input, shape index: {}]
  %s5 = inlined_call_operand.vmem [shape: bf16[64,256], index: 5, kind: output, shape index: {}]
  %s6 = sld [smem:[#allocation0]]
  $region30: #{forward.27} parent=0
    _
  %s8 = ssub.s32 1, %s6
  %s9 = scalar_select 0, %s8, %s6
  // Predicated region
  $region2: #{forward.27} parent=0 // pred_check
    _
  $region3: #{forward.27} parent=0 // pred_check_branch
    %11 = sbr.rel (0) target = $region5
  $region4: #{forward.27} parent=0 // pred_region
    _
  $region5: #{forward.27} parent=0 // pred_fallthru
    _
  // Predicated region
  $region6: #{forward.27} parent=0 // pred_check
    _
  $region7: #{forward.27} parent=0 // pred_check_branch
    %13 = sbr.rel (0) target = $region9
  $region8: #{forward.27} parent=0 // pred_region
    _
  $region9: #{forward.27} parent=0 // pred_fallthru
    _
  // Predicated region
  $region10: #{forward.27} parent=0 // pred_check
    _
  $region11: #{forward.27} parent=0 // pred_check_branch
    %15 = sbr.rel (0) target = $region13
  $region12: #{forward.27} parent=0 // pred_region
    _
  $region13: #{forward.27} parent=0 // pred_fallthru
    _
  // Predicated region
  $region14: #{forward.27} parent=0 // pred_check
    _
  $region15: #{forward.27} parent=0 // pred_check_branch
    %17 = sbr.rel (0) target = $region17
  $region16: #{forward.27} parent=0 // pred_region
    _
  $region17: #{forward.27} parent=0 // pred_fallthru
    _
  // Predicated region
  $region18: #{forward.27} parent=0 // pred_check
    _
  $region19: #{forward.27} parent=0 // pred_check_branch
    %19 = sbr.rel (0) target = $region21
  $region20: #{forward.27} parent=0 // pred_region
    _
  $region21: #{forward.27} parent=0 // pred_fallthru
    _
  %v21 = vld [vmem:[%s0] sm:$0xff]
  %v22 = vld [vmem:[%s0 + $0x8] sm:$0xf]
  %v23 = vld [vmem:[%s0 + $0xc] sm:$0xff]
  %v24 = vld [vmem:[%s0 + $0x14] sm:$0xf]
  %v25 = vld [vmem:[%s0 + $0x18] sm:$0xff]
  %v26 = vld [vmem:[%s0 + $0x20] sm:$0xf]
  %v27 = vld [vmem:[%s0 + $0x24] sm:$0xff]
  %v28 = vld [vmem:[%s0 + $0x2c] sm:$0xf]
  %v29 = vld [vmem:[%s0 + $0x30] sm:$0xff]
  %v30 = vld [vmem:[%s0 + $0x38] sm:$0xf]
  %v31 = vld [vmem:[%s0 + $0x3c] sm:$0xff]
  %v32 = vld [vmem:[%s0 + $0x44] sm:$0xf]
  %v33 = vld [vmem:[%s0 + $0x48] sm:$0xff]
  %v34 = vld [vmem:[%s0 + $0x50] sm:$0xf]
  %v35 = vld [vmem:[%s0 + $0x54] sm:$0xff]
  %v36 = vld [vmem:[%s0 + $0x5c] sm:$0xf]
  %v37 = vld [vmem:[%s1] sm:$0xff]
  %v38 = vld [vmem:[%s1 + $0x8] sm:$0xff]
  %v39 = vld [vmem:[%s1 + $0x10] sm:$0xff]
  %v40 = vld [vmem:[%s1 + $0x18] sm:$0xff]
  %v41 = vld [vmem:[%s1 + $0x20] sm:$0xff]
  %v42 = vld [vmem:[%s1 + $0x28] sm:$0xff]
  %v43 = vld [vmem:[%s1 + $0x30] sm:$0xff]
  %v44 = vld [vmem:[%s1 + $0x38] sm:$0xff]
  %v45 = vld [vmem:[%s1 + $0x40] sm:$0xff]
  %v46 = vld [vmem:[%s1 + $0x48] sm:$0xff]
  %v47 = vld [vmem:[%s1 + $0x50] sm:$0xff]
  %v48 = vld [vmem:[%s1 + $0x58] sm:$0xff]
  %v49 = vld [vmem:[%s1 + $0x60] sm:$0xff]
  %v50 = vld [vmem:[%s1 + $0x68] sm:$0xff]
  %v51 = vld [vmem:[%s1 + $0x70] sm:$0xff]
  %v52 = vld [vmem:[%s1 + $0x78] sm:$0xff]
  %v53 = vld [vmem:[%s1 + $0x80] sm:$0xff]
  %v54 = vld [vmem:[%s1 + $0x88] sm:$0xff]
  %v55 = vld [vmem:[%s1 + $0x90] sm:$0xff]
  %v56 = vld [vmem:[%s1 + $0x98] sm:$0xff]
  %v57 = vld [vmem:[%s1 + $0xa0] sm:$0xff]
  %v58 = vld [vmem:[%s1 + $0xa8] sm:$0xff]
  %v59 = vld [vmem:[%s1 + $0xb0] sm:$0xff]
  %v60 = vld [vmem:[%s1 + $0xb8] sm:$0xff]
  %v61 = vld [vmem:[%s1 + $0xc0] sm:$0xff]
  %v62 = vld [vmem:[%s1 + $0xc8] sm:$0xff]
  %v63 = vld [vmem:[%s1 + $0xd0] sm:$0xff]
  %v64 = vld [vmem:[%s1 + $0xd8] sm:$0xff]
  %v65 = vld [vmem:[%s1 + $0xe0] sm:$0xff]
  %v66 = vld [vmem:[%s1 + $0xe8] sm:$0xff]
  %v67 = vld [vmem:[%s1 + $0xf0] sm:$0xff]
  %v68 = vld [vmem:[%s1 + $0xf8] sm:$0xff]
  %v69 = vld [vmem:[%s1 + $0x100] sm:$0xff]
  %v70 = vld [vmem:[%s1 + $0x108] sm:$0xff]
  %v71 = vld [vmem:[%s1 + $0x110] sm:$0xff]
  %v72 = vld [vmem:[%s1 + $0x118] sm:$0xff]
  %v73 = vld [vmem:[%s2] sm:$0xff]
  %v74 = vld [vmem:[%s2 + $0x8] sm:$0xf]
  %v75 = vld [vmem:[%s2 + $0xc] sm:$0xff]
  %v76 = vld [vmem:[%s2 + $0x14] sm:$0xf]
  %v77 = vld [vmem:[%s2 + $0x18] sm:$0xff]
  %v78 = vld [vmem:[%s2 + $0x20] sm:$0xf]
  %v79 = vld [vmem:[%s2 + $0x24] sm:$0xff]
  %v80 = vld [vmem:[%s2 + $0x2c] sm:$0xf]
  %v81 = vld [vmem:[%s2 + $0x30] sm:$0xff]
  %v82 = vld [vmem:[%s2 + $0x38] sm:$0xf]
  %v83 = vld [vmem:[%s2 + $0x3c] sm:$0xff]
  %v84 = vld [vmem:[%s2 + $0x44] sm:$0xf]
  %v85 = vld [vmem:[%s2 + $0x48] sm:$0xff]
  %v86 = vld [vmem:[%s2 + $0x50] sm:$0xf]
  %v87 = vld [vmem:[%s2 + $0x54] sm:$0xff]
  %v88 = vld [vmem:[%s2 + $0x5c] sm:$0xf]
  %v89 = vld [vmem:[%s3] sm:$0xff]
  %v90 = vld [vmem:[%s3 + $0x8] sm:$0xff]
  %v91 = vld [vmem:[%s3 + $0x10] sm:$0xff]
  %v92 = vld [vmem:[%s3 + $0x18] sm:$0xff]
  %v93 = vld [vmem:[%s3 + $0x20] sm:$0xff]
  %v94 = vld [vmem:[%s3 + $0x28] sm:$0xff]
  %v95 = vld [vmem:[%s3 + $0x30] sm:$0xff]
  %v96 = vld [vmem:[%s3 + $0x38] sm:$0xff]
  %v97 = vld [vmem:[%s3 + $0x40] sm:$0xff]
  %v98 = vld [vmem:[%s3 + $0x48] sm:$0xff]
  %v99 = vld [vmem:[%s3 + $0x50] sm:$0xff]
  %v100 = vld [vmem:[%s3 + $0x58] sm:$0xff]
  %v101 = vld [vmem:[%s3 + $0x60] sm:$0xff]
  %v102 = vld [vmem:[%s3 + $0x68] sm:$0xff]
  %v103 = vld [vmem:[%s3 + $0x70] sm:$0xff]
  %v104 = vld [vmem:[%s3 + $0x78] sm:$0xff]
  %v105 = vld [vmem:[%s3 + $0x80] sm:$0xff]
  %v106 = vld [vmem:[%s3 + $0x88] sm:$0xff]
  %v107 = vld [vmem:[%s3 + $0x90] sm:$0xff]
  %v108 = vld [vmem:[%s3 + $0x98] sm:$0xff]
  %v109 = vld [vmem:[%s3 + $0xa0] sm:$0xff]
  %v110 = vld [vmem:[%s3 + $0xa8] sm:$0xff]
  %v111 = vld [vmem:[%s3 + $0xb0] sm:$0xff]
  %v112 = vld [vmem:[%s3 + $0xb8] sm:$0xff]
  %v113 = vld [vmem:[%s3 + $0xc0] sm:$0xff]
  %v114 = vld [vmem:[%s3 + $0xc8] sm:$0xff]
  %v115 = vld [vmem:[%s3 + $0xd0] sm:$0xff]
  %v116 = vld [vmem:[%s3 + $0xd8] sm:$0xff]
  %v117 = vld [vmem:[%s3 + $0xe0] sm:$0xff]
  %v118 = vld [vmem:[%s3 + $0xe8] sm:$0xff]
  %v119 = vld [vmem:[%s3 + $0xf0] sm:$0xff]
  %v120 = vld [vmem:[%s3 + $0xf8] sm:$0xff]
  %v121 = vld [vmem:[%s3 + $0x100] sm:$0xff]
  %v122 = vld [vmem:[%s3 + $0x108] sm:$0xff]
  %v123 = vld [vmem:[%s3 + $0x110] sm:$0xff]
  %v124 = vld [vmem:[%s3 + $0x118] sm:$0xff]
  %v141 = vunpack.c.l.b16 %v73
  %v142 = vunpack.c.h.b16 %v73
  %v143 = vunpack.c.l.b16 %v74
  %v144 = vunpack.c.l.b16 %v75
  %v145 = vunpack.c.h.b16 %v75
  %v146 = vunpack.c.l.b16 %v76
  %v147 = vunpack.c.l.b16 %v77
  %v148 = vunpack.c.h.b16 %v77
  %v149 = vunpack.c.l.b16 %v78
  %v150 = vunpack.c.l.b16 %v79
  %v151 = vunpack.c.h.b16 %v79
  %v152 = vunpack.c.l.b16 %v80
  %v153 = vunpack.c.l.b16 %v81
  %v154 = vunpack.c.h.b16 %v81
  %v155 = vunpack.c.l.b16 %v82
  %v156 = vunpack.c.l.b16 %v83
  %v157 = vunpack.c.h.b16 %v83
  %v158 = vunpack.c.l.b16 %v84
  %v159 = vunpack.c.l.b16 %v85
  %v160 = vunpack.c.h.b16 %v85
  %v161 = vunpack.c.l.b16 %v86
  %v162 = vunpack.c.l.b16 %v87
  %v163 = vunpack.c.h.b16 %v87
  %v164 = vunpack.c.l.b16 %v88
  %v165 = vpack.c.b16 %v144, %v141
  %v166 = vpack.c.b16 %v145, %v142
  %v167 = vpack.c.b16 %v146, %v143
  %v168 = vpack.c.b16 %v150, %v147
  %v169 = vpack.c.b16 %v151, %v148
  %v170 = vpack.c.b16 %v152, %v149
  %v171 = vpack.c.b16 %v156, %v153
  %v172 = vpack.c.b16 %v157, %v154
  %v173 = vpack.c.b16 %v158, %v155
  %v174 = vpack.c.b16 %v162, %v159
  %v175 = vpack.c.b16 %v163, %v160
  %v176 = vpack.c.b16 %v164, %v161
  %v221 = vunpack.c.l.b16 %v89
  %v222 = vunpack.c.h.b16 %v89
  %v223 = vunpack.c.l.b16 %v90
  %v224 = vunpack.c.h.b16 %v90
  %v225 = vunpack.c.l.b16 %v91
  %v226 = vunpack.c.h.b16 %v91
  %v227 = vunpack.c.l.b16 %v92
  %v228 = vunpack.c.h.b16 %v92
  %v229 = vunpack.c.l.b16 %v93
  %v230 = vunpack.c.h.b16 %v93
  %v231 = vunpack.c.l.b16 %v94
  %v232 = vunpack.c.h.b16 %v94
  %v233 = vunpack.c.l.b16 %v95
  %v234 = vunpack.c.h.b16 %v95
  %v235 = vunpack.c.l.b16 %v96
  %v236 = vunpack.c.h.b16 %v96
  %v237 = vunpack.c.l.b16 %v97
  %v238 = vunpack.c.h.b16 %v97
  %v239 = vunpack.c.l.b16 %v98
  %v240 = vunpack.c.h.b16 %v98
  %v241 = vunpack.c.l.b16 %v99
  %v242 = vunpack.c.h.b16 %v99
  %v243 = vunpack.c.l.b16 %v100
  %v244 = vunpack.c.h.b16 %v100
  %v245 = vunpack.c.l.b16 %v101
  %v246 = vunpack.c.h.b16 %v101
  %v247 = vunpack.c.l.b16 %v102
  %v248 = vunpack.c.h.b16 %v102
  %v249 = vunpack.c.l.b16 %v103
  %v250 = vunpack.c.h.b16 %v103
  %v251 = vunpack.c.l.b16 %v104
  %v252 = vunpack.c.h.b16 %v104
  %v253 = vunpack.c.l.b16 %v105
  %v254 = vunpack.c.h.b16 %v105
  %v255 = vunpack.c.l.b16 %v106
  %v256 = vunpack.c.h.b16 %v106
  %v257 = vunpack.c.l.b16 %v107
  %v258 = vunpack.c.h.b16 %v107
  %v259 = vunpack.c.l.b16 %v108
  %v260 = vunpack.c.h.b16 %v108
  %v261 = vunpack.c.l.b16 %v109
  %v262 = vunpack.c.h.b16 %v109
  %v263 = vunpack.c.l.b16 %v110
  %v264 = vunpack.c.h.b16 %v110
  %v265 = vunpack.c.l.b16 %v111
  %v266 = vunpack.c.h.b16 %v111
  %v267 = vunpack.c.l.b16 %v112
  %v268 = vunpack.c.h.b16 %v112
  %v269 = vunpack.c.l.b16 %v113
  %v270 = vunpack.c.h.b16 %v113
  %v271 = vunpack.c.l.b16 %v114
  %v272 = vunpack.c.h.b16 %v114
  %v273 = vunpack.c.l.b16 %v115
  %v274 = vunpack.c.h.b16 %v115
  %v275 = vunpack.c.l.b16 %v116
  %v276 = vunpack.c.h.b16 %v116
  %v277 = vunpack.c.l.b16 %v117
  %v278 = vunpack.c.h.b16 %v117
  %v279 = vunpack.c.l.b16 %v118
  %v280 = vunpack.c.h.b16 %v118
  %v281 = vunpack.c.l.b16 %v119
  %v282 = vunpack.c.h.b16 %v119
  %v283 = vunpack.c.l.b16 %v120
  %v284 = vunpack.c.h.b16 %v120
  %v285 = vunpack.c.l.b16 %v121
  %v286 = vunpack.c.h.b16 %v121
  %v287 = vunpack.c.l.b16 %v122
  %v288 = vunpack.c.h.b16 %v122
  %v289 = vunpack.c.l.b16 %v123
  %v290 = vunpack.c.h.b16 %v123
  %v291 = vunpack.c.l.b16 %v124
  %v292 = vunpack.c.h.b16 %v124
  %v293 = vpack.c.b16 %v223, %v221
  %v294 = vpack.c.b16 %v224, %v222
  %v295 = vpack.c.b16 %v227, %v225
  %v296 = vpack.c.b16 %v228, %v226
  %v297 = vpack.c.b16 %v231, %v229
  %v298 = vpack.c.b16 %v232, %v230
  %v299 = vpack.c.b16 %v235, %v233
  %v300 = vpack.c.b16 %v236, %v234
  %v301 = vpack.c.b16 %v239, %v237
  %v302 = vpack.c.b16 %v240, %v238
  %v303 = vpack.c.b16 %v243, %v241
  %v304 = vpack.c.b16 %v244, %v242
  %v305 = vpack.c.b16 %v247, %v245
  %v306 = vpack.c.b16 %v248, %v246
  %v307 = vpack.c.b16 %v251, %v249
  %v308 = vpack.c.b16 %v252, %v250
  %v309 = vpack.c.b16 %v255, %v253
  %v310 = vpack.c.b16 %v256, %v254
  %v311 = vpack.c.b16 %v259, %v257
  %v312 = vpack.c.b16 %v260, %v258
  %v313 = vpack.c.b16 %v263, %v261
  %v314 = vpack.c.b16 %v264, %v262
  %v315 = vpack.c.b16 %v267, %v265
  %v316 = vpack.c.b16 %v268, %v266
  %v317 = vpack.c.b16 %v271, %v269
  %v318 = vpack.c.b16 %v272, %v270
  %v319 = vpack.c.b16 %v275, %v273
  %v320 = vpack.c.b16 %v276, %v274
  %v321 = vpack.c.b16 %v279, %v277
  %v322 = vpack.c.b16 %v280, %v278
  %v323 = vpack.c.b16 %v283, %v281
  %v324 = vpack.c.b16 %v284, %v282
  %v325 = vpack.c.b16 %v287, %v285
  %v326 = vpack.c.b16 %v288, %v286
  %v327 = vpack.c.b16 %v291, %v289
  %v328 = vpack.c.b16 %v292, %v290
  %vm365 = vcmask 261120
  %v367 = vsel %vm365, %v167, 0
  %v370 = vsel %vm365, %v170, 0
  %v373 = vsel %vm365, %v173, 0
  %v376 = vsel %vm365, %v176, 0
  %378 = vmatprep.subr.bf16.mxu0 %v294
  %379 = vmatpush1.bf16.msra.mxu0 %v293
  %380 = vmatprep.subr.bf16.mxu0 %v296
  %381 = vmatpush1.bf16.msra.mxu0 %v295
  %382 = vmatprep.subr.bf16.mxu0 %v298
  %383 = vmatpush1.bf16.msra.mxu0 %v297
  %384 = vmatprep.subr.bf16.mxu0 %v300
  %385 = vmatpush1.bf16.msra.mxu0 %v299
  %386 = vmatprep.subr.bf16.mxu0 %v302
  %387 = vmatpush1.bf16.msra.mxu0 %v301
  %388 = vmatprep.subr.bf16.mxu0 %v304
  %389 = vmatpush1.bf16.msra.mxu0 %v303
  %390 = vmatprep.subr.bf16.mxu0 %v306
  %391 = vmatpush1.bf16.msra.mxu0 %v305
  %392 = vmatprep.subr.bf16.mxu0 %v308
  %393 = vmatpush1.bf16.msra.mxu0 %v307
  %394 = vmatprep.subr.bf16.mxu0 %v310
  %395 = vmatpush1.bf16.msra.mxu0 %v309
  %396 = vmatprep.subr.bf16.mxu0 %v312
  %397 = vmatpush1.bf16.msra.mxu0 %v311
  %398 = vmatprep.subr.bf16.mxu0 %v314
  %399 = vmatpush1.bf16.msra.mxu0 %v313
  %400 = vmatprep.subr.bf16.mxu0 %v316
  %401 = vmatpush1.bf16.msra.mxu0 %v315
  %402 = vmatprep.subr.bf16.mxu0 %v318
  %403 = vmatpush1.bf16.msra.mxu0 %v317
  %404 = vmatprep.subr.bf16.mxu0 %v320
  %405 = vmatpush1.bf16.msra.mxu0 %v319
  %406 = vmatprep.subr.bf16.mxu0 %v322
  %407 = vmatpush1.bf16.msra.mxu0 %v321
  %408 = vmatprep.subr.bf16.mxu0 %v324
  %409 = vmatpush1.bf16.msra.mxu0 %v323
  %410 = vmatprep.mubr.bf16.mxu0 %v166
  %411 = vmatmul.mubr.bf16.gmra.mrb[0].mxu0 %v165
  %v412 = vpop.f32.mrb[0].mxu0
  %v413 = vadd.f32 0.0, %v412
  %v414 = vpop.f32.mrb[0].mxu0
  %v415 = vadd.f32 0.0, %v414
  %v416 = vpop.f32.mrb[0].mxu0
  %v417 = vadd.f32 0.0, %v416
  %v418 = vpop.f32.mrb[0].mxu0
  %v419 = vadd.f32 0.0, %v418
  %420 = vmatprep.mubr.bf16.mxu0 %v169
  %421 = vmatmul.mubr.bf16.gmra.mrb[0].mxu0 %v168
  %v422 = vpop.f32.mrb[0].mxu0
  %v423 = vadd.f32 0.0, %v422
  %v424 = vpop.f32.mrb[0].mxu0
  %v425 = vadd.f32 0.0, %v424
  %v426 = vpop.f32.mrb[0].mxu0
  %v427 = vadd.f32 0.0, %v426
  %v428 = vpop.f32.mrb[0].mxu0
  %v429 = vadd.f32 0.0, %v428
  %430 = vmatprep.mubr.bf16.mxu0 %v172
  %431 = vmatmul.mubr.bf16.gmra.mrb[0].mxu0 %v171
  %v432 = vpop.f32.mrb[0].mxu0
  %v433 = vadd.f32 0.0, %v432
  %v434 = vpop.f32.mrb[0].mxu0
  %v435 = vadd.f32 0.0, %v434
  %v436 = vpop.f32.mrb[0].mxu0
  %v437 = vadd.f32 0.0, %v436
  %v438 = vpop.f32.mrb[0].mxu0
  %v439 = vadd.f32 0.0, %v438
  %440 = vmatprep.mubr.bf16.mxu0 %v175
  %441 = vmatmul.mubr.bf16.gmra.mrb[0].mxu0 %v174
  %v442 = vpop.f32.mrb[0].mxu0
  %v443 = vadd.f32 0.0, %v442
  %v444 = vpop.f32.mrb[0].mxu0
  %v445 = vadd.f32 0.0, %v444
  %v446 = vpop.f32.mrb[0].mxu0
  %v447 = vadd.f32 0.0, %v446
  %v448 = vpop.f32.mrb[0].mxu0
  %v449 = vadd.f32 0.0, %v448
  %450 = vdwg.mxu0
  %451 = vmatprep.subr.bf16.mxu0 %v326
  %452 = vmatpush1.bf16.msra.mxu0 %v325
  %453 = vmatprep.subr.bf16.mxu0 %v328
  %454 = vmatpush1.bf16.msra.mxu0 %v327
  %455 = vmatprep.subr.bf16.mxu0 0
  %456 = vmatpush1.bf16.msra.mxu0 0
  %457 = vmatprep.subr.bf16.mxu0 0
  %458 = vmatpush1.bf16.msra.mxu0 0
  %459 = vmatprep.subr.bf16.mxu0 0
  %460 = vmatpush1.bf16.msra.mxu0 0
  %461 = vmatprep.subr.bf16.mxu0 0
  %462 = vmatpush1.bf16.msra.mxu0 0
  %463 = vmatprep.subr.bf16.mxu0 0
  %464 = vmatpush1.bf16.msra.mxu0 0
  %465 = vmatprep.subr.bf16.mxu0 0
  %466 = vmatpush1.bf16.msra.mxu0 0
  %467 = vmatprep.subr.bf16.mxu0 0
  %468 = vmatpush1.bf16.msra.mxu0 0
  %469 = vmatprep.subr.bf16.mxu0 0
  %470 = vmatpush1.bf16.msra.mxu0 0
  %471 = vmatprep.subr.bf16.mxu0 0
  %472 = vmatpush1.bf16.msra.mxu0 0
  %473 = vmatprep.subr.bf16.mxu0 0
  %474 = vmatpush1.bf16.msra.mxu0 0
  %475 = vmatprep.subr.bf16.mxu0 0
  %476 = vmatpush1.bf16.msra.mxu0 0
  %477 = vmatprep.subr.bf16.mxu0 0
  %478 = vmatpush1.bf16.msra.mxu0 0
  %479 = vmatprep.subr.bf16.mxu0 0
  %480 = vmatpush1.bf16.msra.mxu0 0
  %481 = vmatprep.subr.bf16.mxu0 0
  %482 = vmatpush1.bf16.msra.mxu0 0
  %483 = vmatprep.mubr.bf16.mxu0 0
  %484 = vmatmul.mubr.bf16.gmra.mrb[0].mxu0 %v367
  %v485 = vpop.f32.mrb[0].mxu0
  %v486 = vadd.f32 %v413, %v485
  %v487 = vpop.f32.mrb[0].mxu0
  %v488 = vadd.f32 %v415, %v487
  %v489 = vpop.f32.mrb[0].mxu0
  %v490 = vadd.f32 %v417, %v489
  %v491 = vpop.f32.mrb[0].mxu0
  %v492 = vadd.f32 %v419, %v491
  %493 = vmatprep.mubr.bf16.mxu0 0
  %494 = vmatmul.mubr.bf16.gmra.mrb[0].mxu0 %v370
  %v495 = vpop.f32.mrb[0].mxu0
  %v496 = vadd.f32 %v423, %v495
  %v497 = vpop.f32.mrb[0].mxu0
  %v498 = vadd.f32 %v425, %v497
  %v499 = vpop.f32.mrb[0].mxu0
  %v500 = vadd.f32 %v427, %v499
  %v501 = vpop.f32.mrb[0].mxu0
  %v502 = vadd.f32 %v429, %v501
  %503 = vmatprep.mubr.bf16.mxu0 0
  %504 = vmatmul.mubr.bf16.gmra.mrb[0].mxu0 %v373
  %v505 = vpop.f32.mrb[0].mxu0
  %v506 = vadd.f32 %v433, %v505
  %v507 = vpop.f32.mrb[0].mxu0
  %v508 = vadd.f32 %v435, %v507
  %v509 = vpop.f32.mrb[0].mxu0
  %v510 = vadd.f32 %v437, %v509
  %v511 = vpop.f32.mrb[0].mxu0
  %v512 = vadd.f32 %v439, %v511
  %513 = vmatprep.mubr.bf16.mxu0 0
  %514 = vmatmul.mubr.bf16.gmra.mrb[0].mxu0 %v376
  %v515 = vpop.f32.mrb[0].mxu0
  %v516 = vadd.f32 %v443, %v515
  %v517 = vpop.f32.mrb[0].mxu0
  %v518 = vadd.f32 %v445, %v517
  %v519 = vpop.f32.mrb[0].mxu0
  %v520 = vadd.f32 %v447, %v519
  %v521 = vpop.f32.mrb[0].mxu0
  %v522 = vadd.f32 %v449, %v521
  %523 = vdwg.mxu0
  %v540 = vunpack.c.l.b16 %v21
  %v541 = vunpack.c.h.b16 %v21
  %v542 = vunpack.c.l.b16 %v22
  %v543 = vunpack.c.l.b16 %v23
  %v544 = vunpack.c.h.b16 %v23
  %v545 = vunpack.c.l.b16 %v24
  %v546 = vunpack.c.l.b16 %v25
  %v547 = vunpack.c.h.b16 %v25
  %v548 = vunpack.c.l.b16 %v26
  %v549 = vunpack.c.l.b16 %v27
  %v550 = vunpack.c.h.b16 %v27
  %v551 = vunpack.c.l.b16 %v28
  %v552 = vunpack.c.l.b16 %v29
  %v553 = vunpack.c.h.b16 %v29
  %v554 = vunpack.c.l.b16 %v30
  %v555 = vunpack.c.l.b16 %v31
  %v556 = vunpack.c.h.b16 %v31
  %v557 = vunpack.c.l.b16 %v32
  %v558 = vunpack.c.l.b16 %v33
  %v559 = vunpack.c.h.b16 %v33
  %v560 = vunpack.c.l.b16 %v34
  %v561 = vunpack.c.l.b16 %v35
  %v562 = vunpack.c.h.b16 %v35
  %v563 = vunpack.c.l.b16 %v36
  %v564 = vpack.c.b16 %v543, %v540
  %v565 = vpack.c.b16 %v544, %v541
  %v566 = vpack.c.b16 %v545, %v542
  %v567 = vpack.c.b16 %v549, %v546
  %v568 = vpack.c.b16 %v550, %v547
  %v569 = vpack.c.b16 %v551, %v548
  %v570 = vpack.c.b16 %v555, %v552
  %v571 = vpack.c.b16 %v556, %v553
  %v572 = vpack.c.b16 %v557, %v554
  %v573 = vpack.c.b16 %v561, %v558
  %v574 = vpack.c.b16 %v562, %v559
  %v575 = vpack.c.b16 %v563, %v560
  %v620 = vunpack.c.l.b16 %v37
  %v621 = vunpack.c.h.b16 %v37
  %v622 = vunpack.c.l.b16 %v38
  %v623 = vunpack.c.h.b16 %v38
  %v624 = vunpack.c.l.b16 %v39
  %v625 = vunpack.c.h.b16 %v39
  %v626 = vunpack.c.l.b16 %v40
  %v627 = vunpack.c.h.b16 %v40
  %v628 = vunpack.c.l.b16 %v41
  %v629 = vunpack.c.h.b16 %v41
  %v630 = vunpack.c.l.b16 %v42
  %v631 = vunpack.c.h.b16 %v42
  %v632 = vunpack.c.l.b16 %v43
  %v633 = vunpack.c.h.b16 %v43
  %v634 = vunpack.c.l.b16 %v44
  %v635 = vunpack.c.h.b16 %v44
  %v636 = vunpack.c.l.b16 %v45
  %v637 = vunpack.c.h.b16 %v45
  %v638 = vunpack.c.l.b16 %v46
  %v639 = vunpack.c.h.b16 %v46
  %v640 = vunpack.c.l.b16 %v47
  %v641 = vunpack.c.h.b16 %v47
  %v642 = vunpack.c.l.b16 %v48
  %v643 = vunpack.c.h.b16 %v48
  %v644 = vunpack.c.l.b16 %v49
  %v645 = vunpack.c.h.b16 %v49
  %v646 = vunpack.c.l.b16 %v50
  %v647 = vunpack.c.h.b16 %v50
  %v648 = vunpack.c.l.b16 %v51
  %v649 = vunpack.c.h.b16 %v51
  %v650 = vunpack.c.l.b16 %v52
  %v651 = vunpack.c.h.b16 %v52
  %v652 = vunpack.c.l.b16 %v53
  %v653 = vunpack.c.h.b16 %v53
  %v654 = vunpack.c.l.b16 %v54
  %v655 = vunpack.c.h.b16 %v54
  %v656 = vunpack.c.l.b16 %v55
  %v657 = vunpack.c.h.b16 %v55
  %v658 = vunpack.c.l.b16 %v56
  %v659 = vunpack.c.h.b16 %v56
  %v660 = vunpack.c.l.b16 %v57
  %v661 = vunpack.c.h.b16 %v57
  %v662 = vunpack.c.l.b16 %v58
  %v663 = vunpack.c.h.b16 %v58
  %v664 = vunpack.c.l.b16 %v59
  %v665 = vunpack.c.h.b16 %v59
  %v666 = vunpack.c.l.b16 %v60
  %v667 = vunpack.c.h.b16 %v60
  %v668 = vunpack.c.l.b16 %v61
  %v669 = vunpack.c.h.b16 %v61
  %v670 = vunpack.c.l.b16 %v62
  %v671 = vunpack.c.h.b16 %v62
  %v672 = vunpack.c.l.b16 %v63
  %v673 = vunpack.c.h.b16 %v63
  %v674 = vunpack.c.l.b16 %v64
  %v675 = vunpack.c.h.b16 %v64
  %v676 = vunpack.c.l.b16 %v65
  %v677 = vunpack.c.h.b16 %v65
  %v678 = vunpack.c.l.b16 %v66
  %v679 = vunpack.c.h.b16 %v66
  %v680 = vunpack.c.l.b16 %v67
  %v681 = vunpack.c.h.b16 %v67
  %v682 = vunpack.c.l.b16 %v68
  %v683 = vunpack.c.h.b16 %v68
  %v684 = vunpack.c.l.b16 %v69
  %v685 = vunpack.c.h.b16 %v69
  %v686 = vunpack.c.l.b16 %v70
  %v687 = vunpack.c.h.b16 %v70
  %v688 = vunpack.c.l.b16 %v71
  %v689 = vunpack.c.h.b16 %v71
  %v690 = vunpack.c.l.b16 %v72
  %v691 = vunpack.c.h.b16 %v72
  %v692 = vpack.c.b16 %v622, %v620
  %v693 = vpack.c.b16 %v623, %v621
  %v694 = vpack.c.b16 %v626, %v624
  %v695 = vpack.c.b16 %v627, %v625
  %v696 = vpack.c.b16 %v630, %v628
  %v697 = vpack.c.b16 %v631, %v629
  %v698 = vpack.c.b16 %v634, %v632
  %v699 = vpack.c.b16 %v635, %v633
  %v700 = vpack.c.b16 %v638, %v636
  %v701 = vpack.c.b16 %v639, %v637
  %v702 = vpack.c.b16 %v642, %v640
  %v703 = vpack.c.b16 %v643, %v641
  %v704 = vpack.c.b16 %v646, %v644
  %v705 = vpack.c.b16 %v647, %v645
  %v706 = vpack.c.b16 %v650, %v648
  %v707 = vpack.c.b16 %v651, %v649
  %v708 = vpack.c.b16 %v654, %v652
  %v709 = vpack.c.b16 %v655, %v653
  %v710 = vpack.c.b16 %v658, %v656
  %v711 = vpack.c.b16 %v659, %v657
  %v712 = vpack.c.b16 %v662, %v660
  %v713 = vpack.c.b16 %v663, %v661
  %v714 = vpack.c.b16 %v666, %v664
  %v715 = vpack.c.b16 %v667, %v665
  %v716 = vpack.c.b16 %v670, %v668
  %v717 = vpack.c.b16 %v671, %v669
  %v718 = vpack.c.b16 %v674, %v672
  %v719 = vpack.c.b16 %v675, %v673
  %v720 = vpack.c.b16 %v678, %v676
  %v721 = vpack.c.b16 %v679, %v677
  %v722 = vpack.c.b16 %v682, %v680
  %v723 = vpack.c.b16 %v683, %v681
  %v724 = vpack.c.b16 %v686, %v684
  %v725 = vpack.c.b16 %v687, %v685
  %v726 = vpack.c.b16 %v690, %v688
  %v727 = vpack.c.b16 %v691, %v689
  %v765 = vsel %vm365, %v566, 0
  %v768 = vsel %vm365, %v569, 0
  %v771 = vsel %vm365, %v572, 0
  %v774 = vsel %vm365, %v575, 0
  %776 = vmatprep.subr.bf16.mxu0 %v693
  %777 = vmatpush1.bf16.msra.mxu0 %v692
  %778 = vmatprep.subr.bf16.mxu0 %v695
  %779 = vmatpush1.bf16.msra.mxu0 %v694
  %780 = vmatprep.subr.bf16.mxu0 %v697
  %781 = vmatpush1.bf16.msra.mxu0 %v696
  %782 = vmatprep.subr.bf16.mxu0 %v699
  %783 = vmatpush1.bf16.msra.mxu0 %v698
  %784 = vmatprep.subr.bf16.mxu0 %v701
  %785 = vmatpush1.bf16.msra.mxu0 %v700
  %786 = vmatprep.subr.bf16.mxu0 %v703
  %787 = vmatpush1.bf16.msra.mxu0 %v702
  %788 = vmatprep.subr.bf16.mxu0 %v705
  %789 = vmatpush1.bf16.msra.mxu0 %v704
  %790 = vmatprep.subr.bf16.mxu0 %v707
  %791 = vmatpush1.bf16.msra.mxu0 %v706
  %792 = vmatprep.subr.bf16.mxu0 %v709
  %793 = vmatpush1.bf16.msra.mxu0 %v708
  %794 = vmatprep.subr.bf16.mxu0 %v711
  %795 = vmatpush1.bf16.msra.mxu0 %v710
  %796 = vmatprep.subr.bf16.mxu0 %v713
  %797 = vmatpush1.bf16.msra.mxu0 %v712
  %798 = vmatprep.subr.bf16.mxu0 %v715
  %799 = vmatpush1.bf16.msra.mxu0 %v714
  %800 = vmatprep.subr.bf16.mxu0 %v717
  %801 = vmatpush1.bf16.msra.mxu0 %v716
  %802 = vmatprep.subr.bf16.mxu0 %v719
  %803 = vmatpush1.bf16.msra.mxu0 %v718
  %804 = vmatprep.subr.bf16.mxu0 %v721
  %805 = vmatpush1.bf16.msra.mxu0 %v720
  %806 = vmatprep.subr.bf16.mxu0 %v723
  %807 = vmatpush1.bf16.msra.mxu0 %v722
  %808 = vmatprep.mubr.bf16.mxu0 %v565
  %809 = vmatmul.mubr.bf16.gmra.mrb[0].mxu0 %v564
  %v810 = vpop.f32.mrb[0].mxu0
  %v811 = vadd.f32 %v486, %v810
  %v812 = vpop.f32.mrb[0].mxu0
  %v813 = vadd.f32 %v488, %v812
  %v814 = vpop.f32.mrb[0].mxu0
  %v815 = vadd.f32 %v490, %v814
  %v816 = vpop.f32.mrb[0].mxu0
  %v817 = vadd.f32 %v492, %v816
  %818 = vmatprep.mubr.bf16.mxu0 %v568
  %819 = vmatmul.mubr.bf16.gmra.mrb[0].mxu0 %v567
  %v820 = vpop.f32.mrb[0].mxu0
  %v821 = vadd.f32 %v496, %v820
  %v822 = vpop.f32.mrb[0].mxu0
  %v823 = vadd.f32 %v498, %v822
  %v824 = vpop.f32.mrb[0].mxu0
  %v825 = vadd.f32 %v500, %v824
  %v826 = vpop.f32.mrb[0].mxu0
  %v827 = vadd.f32 %v502, %v826
  %828 = vmatprep.mubr.bf16.mxu0 %v571
  %829 = vmatmul.mubr.bf16.gmra.mrb[0].mxu0 %v570
  %v830 = vpop.f32.mrb[0].mxu0
  %v831 = vadd.f32 %v506, %v830
  %v832 = vpop.f32.mrb[0].mxu0
  %v833 = vadd.f32 %v508, %v832
  %v834 = vpop.f32.mrb[0].mxu0
  %v835 = vadd.f32 %v510, %v834
  %v836 = vpop.f32.mrb[0].mxu0
  %v837 = vadd.f32 %v512, %v836
  %838 = vmatprep.mubr.bf16.mxu0 %v574
  %839 = vmatmul.mubr.bf16.gmra.mrb[0].mxu0 %v573
  %v840 = vpop.f32.mrb[0].mxu0
  %v841 = vadd.f32 %v516, %v840
  %v842 = vpop.f32.mrb[0].mxu0
  %v843 = vadd.f32 %v518, %v842
  %v844 = vpop.f32.mrb[0].mxu0
  %v845 = vadd.f32 %v520, %v844
  %v846 = vpop.f32.mrb[0].mxu0
  %v847 = vadd.f32 %v522, %v846
  %848 = vdwg.mxu0
  %849 = vmatprep.subr.bf16.mxu0 %v725
  %850 = vmatpush1.bf16.msra.mxu0 %v724
  %851 = vmatprep.subr.bf16.mxu0 %v727
  %852 = vmatpush1.bf16.msra.mxu0 %v726
  %853 = vmatprep.subr.bf16.mxu0 0
  %854 = vmatpush1.bf16.msra.mxu0 0
  %855 = vmatprep.subr.bf16.mxu0 0
  %856 = vmatpush1.bf16.msra.mxu0 0
  %857 = vmatprep.subr.bf16.mxu0 0
  %858 = vmatpush1.bf16.msra.mxu0 0
  %859 = vmatprep.subr.bf16.mxu0 0
  %860 = vmatpush1.bf16.msra.mxu0 0
  %861 = vmatprep.subr.bf16.mxu0 0
  %862 = vmatpush1.bf16.msra.mxu0 0
  %863 = vmatprep.subr.bf16.mxu0 0
  %864 = vmatpush1.bf16.msra.mxu0 0
  %865 = vmatprep.subr.bf16.mxu0 0
  %866 = vmatpush1.bf16.msra.mxu0 0
  %867 = vmatprep.subr.bf16.mxu0 0
  %868 = vmatpush1.bf16.msra.mxu0 0
  %869 = vmatprep.subr.bf16.mxu0 0
  %870 = vmatpush1.bf16.msra.mxu0 0
  %871 = vmatprep.subr.bf16.mxu0 0
  %872 = vmatpush1.bf16.msra.mxu0 0
  %873 = vmatprep.subr.bf16.mxu0 0
  %874 = vmatpush1.bf16.msra.mxu0 0
  %875 = vmatprep.subr.bf16.mxu0 0
  %876 = vmatpush1.bf16.msra.mxu0 0
  %877 = vmatprep.subr.bf16.mxu0 0
  %878 = vmatpush1.bf16.msra.mxu0 0
  %879 = vmatprep.subr.bf16.mxu0 0
  %880 = vmatpush1.bf16.msra.mxu0 0
  %881 = vmatprep.mubr.bf16.mxu0 0
  %882 = vmatmul.mubr.bf16.gmra.mrb[0].mxu0 %v765
  %v883 = vpop.f32.mrb[0].mxu0
  %v884 = vadd.f32 %v811, %v883
  %v885 = vpop.f32.mrb[0].mxu0
  %v886 = vadd.f32 %v813, %v885
  %v887 = vpop.f32.mrb[0].mxu0
  %v888 = vadd.f32 %v815, %v887
  %v889 = vpop.f32.mrb[0].mxu0
  %v890 = vadd.f32 %v817, %v889
  %891 = vmatprep.mubr.bf16.mxu0 0
  %892 = vmatmul.mubr.bf16.gmra.mrb[0].mxu0 %v768
  %v893 = vpop.f32.mrb[0].mxu0
  %v894 = vadd.f32 %v821, %v893
  %v895 = vpop.f32.mrb[0].mxu0
  %v896 = vadd.f32 %v823, %v895
  %v897 = vpop.f32.mrb[0].mxu0
  %v898 = vadd.f32 %v825, %v897
  %v899 = vpop.f32.mrb[0].mxu0
  %v900 = vadd.f32 %v827, %v899
  %901 = vmatprep.mubr.bf16.mxu0 0
  %902 = vmatmul.mubr.bf16.gmra.mrb[0].mxu0 %v771
  %v903 = vpop.f32.mrb[0].mxu0
  %v904 = vadd.f32 %v831, %v903
  %v905 = vpop.f32.mrb[0].mxu0
  %v906 = vadd.f32 %v833, %v905
  %v907 = vpop.f32.mrb[0].mxu0
  %v908 = vadd.f32 %v835, %v907
  %v909 = vpop.f32.mrb[0].mxu0
  %v910 = vadd.f32 %v837, %v909
  %911 = vmatprep.mubr.bf16.mxu0 0
  %912 = vmatmul.mubr.bf16.gmra.mrb[0].mxu0 %v774
  %v913 = vpop.f32.mrb[0].mxu0
  %v914 = vadd.f32 %v841, %v913
  %v915 = vpop.f32.mrb[0].mxu0
  %v916 = vadd.f32 %v843, %v915
  %v917 = vpop.f32.mrb[0].mxu0
  %v918 = vadd.f32 %v845, %v917
  %v919 = vpop.f32.mrb[0].mxu0
  %v920 = vadd.f32 %v847, %v919
  %921 = vdwg.mxu0
  %v922 = vld [vmem:[%s4] sm:$0xff]
  %v923 = vld [vmem:[%s4 + $0x8] sm:$0xff]
  %v924 = vld [vmem:[%s4 + $0x10] sm:$0xff]
  %v925 = vld [vmem:[%s4 + $0x18] sm:$0xff]
  %v926 = vld [vmem:[%s4 + $0x20] sm:$0xff]
  %v927 = vld [vmem:[%s4 + $0x28] sm:$0xff]
  %v928 = vld [vmem:[%s4 + $0x30] sm:$0xff]
  %v929 = vld [vmem:[%s4 + $0x38] sm:$0xff]
  %931 = vset.pattern.permute.xlu0 0
  %932 = vperm.xlu0 %931, %v922
  %v933 = vpop.permute.xlu0 %932
  %936 = vset.pattern.permute.xlu0 0
  %937 = vperm.xlu0 %936, %v923
  %v938 = vpop.permute.xlu0 %937
  %941 = vset.pattern.permute.xlu0 0
  %942 = vperm.xlu0 %941, %v924
  %v943 = vpop.permute.xlu0 %942
  %946 = vset.pattern.permute.xlu0 0
  %947 = vperm.xlu0 %946, %v925
  %v948 = vpop.permute.xlu0 %947
  %951 = vset.pattern.permute.xlu0 0
  %952 = vperm.xlu0 %951, %v926
  %v953 = vpop.permute.xlu0 %952
  %956 = vset.pattern.permute.xlu0 0
  %957 = vperm.xlu0 %956, %v927
  %v958 = vpop.permute.xlu0 %957
  %961 = vset.pattern.permute.xlu0 0
  %962 = vperm.xlu0 %961, %v928
  %v963 = vpop.permute.xlu0 %962
  %966 = vset.pattern.permute.xlu0 0
  %967 = vperm.xlu0 %966, %v929
  %v968 = vpop.permute.xlu0 %967
  %v970 = vadd.f32 %v884, %v933
  %v971 = vadd.f32 %v886, %v933
  %v972 = vadd.f32 %v888, %v938
  %v973 = vadd.f32 %v890, %v938
  %v974 = vadd.f32 %v894, %v943
  %v975 = vadd.f32 %v896, %v943
  %v976 = vadd.f32 %v898, %v948
  %v977 = vadd.f32 %v900, %v948
  %v978 = vadd.f32 %v904, %v953
  %v979 = vadd.f32 %v906, %v953
  %v980 = vadd.f32 %v908, %v958
  %v981 = vadd.f32 %v910, %v958
  %v982 = vadd.f32 %v914, %v963
  %v983 = vadd.f32 %v916, %v963
  %v984 = vadd.f32 %v918, %v968
  %v985 = vadd.f32 %v920, %v968
  %v986 = vmax.f32 %v970, 0.0
  %v987 = vmax.f32 %v971, 0.0
  %v988 = vmax.f32 %v972, 0.0
  %v989 = vmax.f32 %v973, 0.0
  %v990 = vmax.f32 %v974, 0.0
  %v991 = vmax.f32 %v975, 0.0
  %v992 = vmax.f32 %v976, 0.0
  %v993 = vmax.f32 %v977, 0.0
  %v994 = vmax.f32 %v978, 0.0
  %v995 = vmax.f32 %v979, 0.0
  %v996 = vmax.f32 %v980, 0.0
  %v997 = vmax.f32 %v981, 0.0
  %v998 = vmax.f32 %v982, 0.0
  %v999 = vmax.f32 %v983, 0.0
  %v1000 = vmax.f32 %v984, 0.0
  %v1001 = vmax.f32 %v985, 0.0
  %v1002 = vpack.c.bf16 %v988, %v986
  %v1003 = vpack.c.bf16 %v989, %v987
  %v1004 = vpack.c.bf16 %v992, %v990
  %v1005 = vpack.c.bf16 %v993, %v991
  %v1006 = vpack.c.bf16 %v996, %v994
  %v1007 = vpack.c.bf16 %v997, %v995
  %v1008 = vpack.c.bf16 %v1000, %v998
  %v1009 = vpack.c.bf16 %v1001, %v999
  %v1018 = vunpack.c.l.b16 %v1002
  %v1019 = vunpack.c.l.b16 %v1003
  %v1020 = vunpack.c.h.b16 %v1002
  %v1021 = vunpack.c.h.b16 %v1003
  %v1022 = vunpack.c.l.b16 %v1004
  %v1023 = vunpack.c.l.b16 %v1005
  %v1024 = vunpack.c.h.b16 %v1004
  %v1025 = vunpack.c.h.b16 %v1005
  %v1026 = vunpack.c.l.b16 %v1006
  %v1027 = vunpack.c.l.b16 %v1007
  %v1028 = vunpack.c.h.b16 %v1006
  %v1029 = vunpack.c.h.b16 %v1007
  %v1030 = vunpack.c.l.b16 %v1008
  %v1031 = vunpack.c.l.b16 %v1009
  %v1032 = vunpack.c.h.b16 %v1008
  %v1033 = vunpack.c.h.b16 %v1009
  %v1034 = vpack.c.b16 %v1019, %v1018
  %v1035 = vpack.c.b16 %v1021, %v1020
  %v1036 = vpack.c.b16 %v1023, %v1022
  %v1037 = vpack.c.b16 %v1025, %v1024
  %v1038 = vpack.c.b16 %v1027, %v1026
  %v1039 = vpack.c.b16 %v1029, %v1028
  %v1040 = vpack.c.b16 %v1031, %v1030
  %v1041 = vpack.c.b16 %v1033, %v1032
  %1050 = vst [vmem:[%s5] sm:$0xff] %v1034
  %1051 = vst [vmem:[%s5 + $0x8] sm:$0xff] %v1035
  %1052 = vst [vmem:[%s5 + $0x10] sm:$0xff] %v1036
  %1053 = vst [vmem:[%s5 + $0x18] sm:$0xff] %v1037
  %1054 = vst [vmem:[%s5 + $0x20] sm:$0xff] %v1038
  %1055 = vst [vmem:[%s5 + $0x28] sm:$0xff] %v1039
  %1056 = vst [vmem:[%s5 + $0x30] sm:$0xff] %v1040
  %1057 = vst [vmem:[%s5 + $0x38] sm:$0xff] %v1041
  // Predicated region
  $region22: #{forward.27} parent=0 // pred_check
    _
  $region23: #{forward.27} parent=0 // pred_check_branch
    %1059 = sbr.rel (0) target = $region25
  $region24: #{forward.27} parent=0 // pred_region
    _
  $region25: #{forward.27} parent=0 // pred_fallthru
    _
  // Predicated region
  $region26: #{forward.27} parent=0 // pred_check
    _
  $region27: #{forward.27} parent=0 // pred_check_branch
    %1061 = sbr.rel (0) target = $region29
  $region28: #{forward.27} parent=0 // pred_region
    _
  $region29: #{forward.27} parent=0 // pred_fallthru
    _

// kernel: forward.28
$region0: #{forward.28}
  #allocation0 [shape = 'u32[]', space=smem, size = 0x4, offset = 0x4, fixed_abs, tag = 'smem constant byte address 0x4 - core index']
  #allocation1 [shape = 'u32[144,128]{1,0:T(1,128)}', space=vmem, size = 0x12000, scoped, tag = 'internal scratch']
  %s0 = inlined_call_operand.vmem [shape: bf16[32,144], index: 0, kind: input, shape index: {}]
  %s1 = inlined_call_operand.vmem [shape: bf16[144,1024], index: 1, kind: input, shape index: {}]
  %s2 = inlined_call_operand.vmem [shape: bf16[32,144], index: 2, kind: input, shape index: {}]
  %s3 = inlined_call_operand.vmem [shape: bf16[144,1024], index: 3, kind: input, shape index: {}]
  %s4 = inlined_call_operand.vmem [shape: f32[32,1], index: 4, kind: input, shape index: {}]
  %s5 = inlined_call_operand.vmem [shape: bf16[32,1024], index: 5, kind: output, shape index: {}]
  %s6 = sld [smem:[#allocation0]]
  $region163: #{forward.28} parent=0
    _
  %s8 = ssub.s32 1, %s6
  %s9 = scalar_select 0, %s8, %s6
  $region1: #{forward.28} parent=0
    #allocation2 [shape = 'u8[147456]{0}', space=vmem, size = 0x24000, scoped, tag = 'input window, operand 1']
    #allocation3 [shape = 'u8[147456]{0}', space=vmem, size = 0x24000, scoped, tag = 'input window, operand 3']
    #allocation4 [shape = 'u8[32768]{0}', space=vmem, size = 0x8000, scoped, tag = 'output window, operand 0']
    loop: start=0, step=1, limit=6
    $region2: #{forward.28} parent=1 // loop_pre_header
      _
    $region3: #{forward.28} parent=1 // loop_header
      %s11 = sphi 0, %s15
      %p12 = scmp.ge.s32.totalorder %s11, 6
      %s19 = sphi 0, %s19
      %s21 = sphi 0, %s19
      %s22 = sphi 0, %s21
      %s36 = sphi 0, %s22
      %s42 = sphi 0, %s44
      %s45 = sphi 0, %s42
      %s46 = sphi 0, %s45
      %s62 = sphi 0, %s46
      %s66 = sphi 0, %s66
      %s68 = sphi 0, %s66
      %s69 = sphi 0, %s68
      %s83 = sphi 0, %s69
      %s89 = sphi 0, %s91
      %s92 = sphi 0, %s89
      %s93 = sphi 0, %s92
      %s109 = sphi 0, %s93
      %s113 = sphi 0, %s113
      %s115 = sphi 0, %s113
      %s116 = sphi 0, %s115
      %s130 = sphi 0, %s116
      %s136 = sphi 0, %s138
      %s139 = sphi 0, %s136
      %s140 = sphi 0, %s139
      %s156 = sphi 0, %s140
    $region4: #{forward.28} parent=1 // loop_header_branch
      %14 = sbr.rel (%p12) target = $region8
    $region5: #{forward.28} parent=1 // loop_body
      %s16 = ssub.s32 %s11, 1
      %s17 = ssub.s32 %s11, 2
      %s18 = sadd.s32 %s11, 1
      %s20 = sadd.s32 %s19, 1
      %p23 = scmp.eq.s32.totalorder %s11, 3
      %p24 = scmp.ne.s32.totalorder %s19, %s21
      %p25 = scmp.eq.s32.totalorder %s11, 0
      %p26 = por %p24, %p25
      %p27 = scmp.ne.s32.totalorder %s19, %s21
      %p28 = scmp.eq.s32.totalorder %s16, 3
      %p29 = por %p27, %p28
      %p30 = scmp.ne.s32.totalorder %s21, %s22
      %p31 = scmp.eq.s32.totalorder %s16, 0
      %p32 = por %p30, %p31
      %p33 = scmp.ne.s32.totalorder %s21, %s22
      %p34 = scmp.eq.s32.totalorder %s17, 3
      %p35 = por %p33, %p34
      %p37 = scmp.ne.s32.totalorder %s22, %s36
      %p38 = scmp.eq.s32.totalorder %s17, 0
      %p39 = por %p37, %p38
      %s40 = ssub.s32 %s11, %s18
      %p41 = scmp.eq.s32.totalorder %s40, 0
      %s43 = sadd.s32 %s42, 1
      %s44 = scalar_select %p41, %s42, %s43
      %p47 = pneg %p41
      %p48 = scmp.eq.s32.totalorder %s11, 3
      %p49 = por %p47, %p48
      %p50 = scmp.ne.s32.totalorder %s42, %s45
      %p51 = scmp.eq.s32.totalorder %s11, 0
      %p52 = por %p50, %p51
      %p53 = scmp.ne.s32.totalorder %s42, %s45
      %p54 = scmp.eq.s32.totalorder %s16, 3
      %p55 = por %p53, %p54
      %p56 = scmp.ne.s32.totalorder %s45, %s46
      %p57 = scmp.eq.s32.totalorder %s16, 0
      %p58 = por %p56, %p57
      %p59 = scmp.ne.s32.totalorder %s45, %s46
      %p60 = scmp.eq.s32.totalorder %s17, 3
      %p61 = por %p59, %p60
      %p63 = scmp.ne.s32.totalorder %s46, %s62
      %p64 = scmp.eq.s32.totalorder %s17, 0
      %p65 = por %p63, %p64
      %s67 = sadd.s32 %s66, 1
      %p70 = scmp.eq.s32.totalorder %s11, 3
      %p71 = scmp.ne.s32.totalorder %s66, %s68
      %p72 = scmp.eq.s32.totalorder %s11, 0
      %p73 = por %p71, %p72
      %p74 = scmp.ne.s32.totalorder %s66, %s68
      %p75 = scmp.eq.s32.totalorder %s16, 3
      %p76 = por %p74, %p75
      %p77 = scmp.ne.s32.totalorder %s68, %s69
      %p78 = scmp.eq.s32.totalorder %s16, 0
      %p79 = por %p77, %p78
      %p80 = scmp.ne.s32.totalorder %s68, %s69
      %p81 = scmp.eq.s32.totalorder %s17, 3
      %p82 = por %p80, %p81
      %p84 = scmp.ne.s32.totalorder %s69, %s83
      %p85 = scmp.eq.s32.totalorder %s17, 0
      %p86 = por %p84, %p85
      %s87 = ssub.s32 %s11, %s18
      %p88 = scmp.eq.s32.totalorder %s87, 0
      %s90 = sadd.s32 %s89, 1
      %s91 = scalar_select %p88, %s89, %s90
      %p94 = pneg %p88
      %p95 = scmp.eq.s32.totalorder %s11, 3
      %p96 = por %p94, %p95
      %p97 = scmp.ne.s32.totalorder %s89, %s92
      %p98 = scmp.eq.s32.totalorder %s11, 0
      %p99 = por %p97, %p98
      %p100 = scmp.ne.s32.totalorder %s89, %s92
      %p101 = scmp.eq.s32.totalorder %s16, 3
      %p102 = por %p100, %p101
      %p103 = scmp.ne.s32.totalorder %s92, %s93
      %p104 = scmp.eq.s32.totalorder %s16, 0
      %p105 = por %p103, %p104
      %p106 = scmp.ne.s32.totalorder %s92, %s93
      %p107 = scmp.eq.s32.totalorder %s17, 3
      %p108 = por %p106, %p107
      %p110 = scmp.ne.s32.totalorder %s93, %s109
      %p111 = scmp.eq.s32.totalorder %s17, 0
      %p112 = por %p110, %p111
      %s114 = sadd.s32 %s113, 1
      %p117 = scmp.eq.s32.totalorder %s11, 3
      %p118 = scmp.ne.s32.totalorder %s113, %s115
      %p119 = scmp.eq.s32.totalorder %s11, 0
      %p120 = por %p118, %p119
      %p121 = scmp.ne.s32.totalorder %s113, %s115
      %p122 = scmp.eq.s32.totalorder %s16, 3
      %p123 = por %p121, %p122
      %p124 = scmp.ne.s32.totalorder %s115, %s116
      %p125 = scmp.eq.s32.totalorder %s16, 0
      %p126 = por %p124, %p125
      %p127 = scmp.ne.s32.totalorder %s115, %s116
      %p128 = scmp.eq.s32.totalorder %s17, 3
      %p129 = por %p127, %p128
      %p131 = scmp.ne.s32.totalorder %s116, %s130
      %p132 = scmp.eq.s32.totalorder %s17, 0
      %p133 = por %p131, %p132
      %s134 = ssub.s32 %s11, %s18
      %p135 = scmp.eq.s32.totalorder %s134, 0
      %s137 = sadd.s32 %s136, 1
      %s138 = scalar_select %p135, %s136, %s137
      %p141 = pneg %p135
      %p142 = scmp.eq.s32.totalorder %s11, 3
      %p143 = por %p141, %p142
      %p144 = scmp.ne.s32.totalorder %s136, %s139
      %p145 = scmp.eq.s32.totalorder %s11, 0
      %p146 = por %p144, %p145
      %p147 = scmp.ne.s32.totalorder %s136, %s139
      %p148 = scmp.eq.s32.totalorder %s16, 3
      %p149 = por %p147, %p148
      %p150 = scmp.ne.s32.totalorder %s139, %s140
      %p151 = scmp.eq.s32.totalorder %s16, 0
      %p152 = por %p150, %p151
      %p153 = scmp.ne.s32.totalorder %s139, %s140
      %p154 = scmp.eq.s32.totalorder %s17, 3
      %p155 = por %p153, %p154
      %p157 = scmp.ne.s32.totalorder %s140, %s156
      %p158 = scmp.eq.s32.totalorder %s17, 0
      %p159 = por %p157, %p158
      %p160 = scmp.le.s32.totalorder 1, %s11
      %p161 = scmp.lt.s32.totalorder %s11, 5
      %p162 = pnand %p160, %p161
      %p163 = pneg %p162
      // Predicated region
      $region9: #{forward.28} parent=5 // pred_check
        _
      $region10: #{forward.28} parent=5 // pred_check_branch
        %165 = sbr.rel (%p162) target = $region12
      $region11: #{forward.28} parent=5 // pred_region
        %s166 = ssub.s32 %s11, 1
        // Predicated region
        $region13: #{forward.28} parent=11 // pred_check
          %p167 = pneg %p32
        $region14: #{forward.28} parent=11 // pred_check_branch
          %169 = sbr.rel (%p167) target = $region16
        $region15: #{forward.28} parent=11 // pred_region
          _
        $region16: #{forward.28} parent=11 // pred_fallthru
          _
        // Predicated region
        $region17: #{forward.28} parent=11 // pred_check
          %p170 = pneg %p79
        $region18: #{forward.28} parent=11 // pred_check_branch
          %172 = sbr.rel (%p170) target = $region20
        $region19: #{forward.28} parent=11 // pred_region
          _
        $region20: #{forward.28} parent=11 // pred_fallthru
          _
        // Predicated region
        $region21: #{forward.28} parent=11 // pred_check
          %p173 = pneg %p126
        $region22: #{forward.28} parent=11 // pred_check_branch
          %175 = sbr.rel (%p173) target = $region24
        $region23: #{forward.28} parent=11 // pred_region
          _
        $region24: #{forward.28} parent=11 // pred_fallthru
          _
      $region12: #{forward.28} parent=5 // pred_fallthru
        _
      %p176 = scmp.lt.s32.totalorder %s11, 4
      // Predicated region
      $region25: #{forward.28} parent=5 // pred_check
        %p177 = pneg %p176
      $region26: #{forward.28} parent=5 // pred_check_branch
        %179 = sbr.rel (%p177) target = $region28
      $region27: #{forward.28} parent=5 // pred_region
        // Predicated region
        $region29: #{forward.28} parent=27 // pred_check
          %p180 = pneg %p52
        $region30: #{forward.28} parent=27 // pred_check_branch
          %182 = sbr.rel (%p180) target = $region32
        $region31: #{forward.28} parent=27 // pred_region
          %s183 = sand.u32 %s42, 1
          %s184 = sand.u32 %s42, 1
          %s185 = smul.addr %s184, 144
          %s186 = scalar_lea.vmem [#allocation2], %s185
          %s187 = smul.u32 2, %s11
          %s188 = smul.addr %s187, 4
          %s189 = scalar_lea.vmem %s1, %s188
          // Predicated region
          $region33: #{forward.28} parent=31 // pred_check
            _
          $region34: #{forward.28} parent=31 // pred_check_branch
            %191 = sbr.rel (0) target = $region36
          $region35: #{forward.28} parent=31 // pred_region
            // Predicated region
            $region37: #{forward.28} parent=35 // pred_check
              _
            $region38: #{forward.28} parent=35 // pred_check_branch
              %193 = sbr.rel (0) target = $region40
            $region39: #{forward.28} parent=35 // pred_region
              // Predicated region
              $region52: #{forward.28} parent=39 // pred_check
                _
              $region53: #{forward.28} parent=39 // pred_check_branch
                %242 = sbr.rel (0) target = $region55
              $region54: #{forward.28} parent=39 // pred_region
                loop: start=0, step=1, limit=1
                $region56: #{forward.28} parent=54 // loop_pre_header
                  _
                $region57: #{forward.28} parent=54 // loop_header
                  %s244 = sphi 0, %s248
                  %p245 = scmp.ge.s32.totalorder %s244, 1
                  %s249 = sphi %s189, %s189
                  %s250 = sphi %s186, %s186
                $region58: #{forward.28} parent=54 // loop_header_branch
                  %247 = sbr.rel (%p245) target = $region62
                $region59: #{forward.28} parent=54 // loop_body
                  %v251 = vld [vmem:[%s249] sm:$0xff]
                  %252 = vst [vmem:[%s250] sm:$0xff] %v251
                  %v253 = vld [vmem:[%s249 + $0x20] sm:$0xff]
                  %254 = vst [vmem:[%s250 + $0x8] sm:$0xff] %v253
                  %v255 = vld [vmem:[%s249 + $0x40] sm:$0xff]
                  %256 = vst [vmem:[%s250 + $0x10] sm:$0xff] %v255
                  %v257 = vld [vmem:[%s249 + $0x60] sm:$0xff]
                  %258 = vst [vmem:[%s250 + $0x18] sm:$0xff] %v257
                  %v259 = vld [vmem:[%s249 + $0x80] sm:$0xff]
                  %260 = vst [vmem:[%s250 + $0x20] sm:$0xff] %v259
                  %v261 = vld [vmem:[%s249 + $0xa0] sm:$0xff]
                  %262 = vst [vmem:[%s250 + $0x28] sm:$0xff] %v261
                  %v263 = vld [vmem:[%s249 + $0xc0] sm:$0xff]
                  %264 = vst [vmem:[%s250 + $0x30] sm:$0xff] %v263
                  %v265 = vld [vmem:[%s249 + $0xe0] sm:$0xff]
                  %266 = vst [vmem:[%s250 + $0x38] sm:$0xff] %v265
                  %v267 = vld [vmem:[%s249 + $0x100] sm:$0xff]
                  %268 = vst [vmem:[%s250 + $0x40] sm:$0xff] %v267
                  %v269 = vld [vmem:[%s249 + $0x120] sm:$0xff]
                  %270 = vst [vmem:[%s250 + $0x48] sm:$0xff] %v269
                  %v271 = vld [vmem:[%s249 + $0x140] sm:$0xff]
                  %272 = vst [vmem:[%s250 + $0x50] sm:$0xff] %v271
                  %v273 = vld [vmem:[%s249 + $0x160] sm:$0xff]
                  %274 = vst [vmem:[%s250 + $0x58] sm:$0xff] %v273
                  %v275 = vld [vmem:[%s249 + $0x180] sm:$0xff]
                  %276 = vst [vmem:[%s250 + $0x60] sm:$0xff] %v275
                  %v277 = vld [vmem:[%s249 + $0x1a0] sm:$0xff]
                  %278 = vst [vmem:[%s250 + $0x68] sm:$0xff] %v277
                  %v279 = vld [vmem:[%s249 + $0x1c0] sm:$0xff]
                  %280 = vst [vmem:[%s250 + $0x70] sm:$0xff] %v279
                  %v281 = vld [vmem:[%s249 + $0x1e0] sm:$0xff]
                  %282 = vst [vmem:[%s250 + $0x78] sm:$0xff] %v281
                  %v283 = vld [vmem:[%s249 + $0x200] sm:$0xff]
                  %284 = vst [vmem:[%s250 + $0x80] sm:$0xff] %v283
                  %v285 = vld [vmem:[%s249 + $0x220] sm:$0xff]
                  %286 = vst [vmem:[%s250 + $0x88] sm:$0xff] %v285
                $region60: #{forward.28} parent=54 // loop_footer
                  %s248 = sadd.s32 1, %s244
                $region61: #{forward.28} parent=54 // loop_footer_branch
                  %243 = sbr.rel target = $region57
                $region62: #{forward.28} parent=54 // loop_exit
                  _
              $region55: #{forward.28} parent=39 // pred_fallthru
                _
              // Predicated region
              $region63: #{forward.28} parent=39 // pred_check
                _
              $region64: #{forward.28} parent=39 // pred_check_branch
                %288 = sbr.rel target = $region66
              $region65: #{forward.28} parent=39 // pred_region
                _
              $region66: #{forward.28} parent=39 // pred_fallthru
                _
            $region40: #{forward.28} parent=35 // pred_fallthru
              _
            // Predicated region
            $region41: #{forward.28} parent=35 // pred_check
              _
            $region42: #{forward.28} parent=35 // pred_check_branch
              %195 = sbr.rel target = $region44
            $region43: #{forward.28} parent=35 // pred_region
              loop: start=0, step=1, limit=1
              $region45: #{forward.28} parent=43 // loop_pre_header
                _
              $region46: #{forward.28} parent=43 // loop_header
                %s198 = sphi 0, %s202
                %p199 = scmp.ge.s32.totalorder %s198, 1
                %s203 = sphi %s189, %s189
                %s204 = sphi %s186, %s186
              $region47: #{forward.28} parent=43 // loop_header_branch
                %201 = sbr.rel (%p199) target = $region51
              $region48: #{forward.28} parent=43 // loop_body
                %v205 = vld [vmem:[%s203] sm:$0xff]
                %206 = vst [vmem:[%s204] sm:$0xff] %v205
                %v207 = vld [vmem:[%s203 + $0x20] sm:$0xff]
                %208 = vst [vmem:[%s204 + $0x8] sm:$0xff] %v207
                %v209 = vld [vmem:[%s203 + $0x40] sm:$0xff]
                %210 = vst [vmem:[%s204 + $0x10] sm:$0xff] %v209
                %v211 = vld [vmem:[%s203 + $0x60] sm:$0xff]
                %212 = vst [vmem:[%s204 + $0x18] sm:$0xff] %v211
                %v213 = vld [vmem:[%s203 + $0x80] sm:$0xff]
                %214 = vst [vmem:[%s204 + $0x20] sm:$0xff] %v213
                %v215 = vld [vmem:[%s203 + $0xa0] sm:$0xff]
                %216 = vst [vmem:[%s204 + $0x28] sm:$0xff] %v215
                %v217 = vld [vmem:[%s203 + $0xc0] sm:$0xff]
                %218 = vst [vmem:[%s204 + $0x30] sm:$0xff] %v217
                %v219 = vld [vmem:[%s203 + $0xe0] sm:$0xff]
                %220 = vst [vmem:[%s204 + $0x38] sm:$0xff] %v219
                %v221 = vld [vmem:[%s203 + $0x100] sm:$0xff]
                %222 = vst [vmem:[%s204 + $0x40] sm:$0xff] %v221
                %v223 = vld [vmem:[%s203 + $0x120] sm:$0xff]
                %224 = vst [vmem:[%s204 + $0x48] sm:$0xff] %v223
                %v225 = vld [vmem:[%s203 + $0x140] sm:$0xff]
                %226 = vst [vmem:[%s204 + $0x50] sm:$0xff] %v225
                %v227 = vld [vmem:[%s203 + $0x160] sm:$0xff]
                %228 = vst [vmem:[%s204 + $0x58] sm:$0xff] %v227
                %v229 = vld [vmem:[%s203 + $0x180] sm:$0xff]
                %230 = vst [vmem:[%s204 + $0x60] sm:$0xff] %v229
                %v231 = vld [vmem:[%s203 + $0x1a0] sm:$0xff]
                %232 = vst [vmem:[%s204 + $0x68] sm:$0xff] %v231
                %v233 = vld [vmem:[%s203 + $0x1c0] sm:$0xff]
                %234 = vst [vmem:[%s204 + $0x70] sm:$0xff] %v233
                %v235 = vld [vmem:[%s203 + $0x1e0] sm:$0xff]
                %236 = vst [vmem:[%s204 + $0x78] sm:$0xff] %v235
                %v237 = vld [vmem:[%s203 + $0x200] sm:$0xff]
                %238 = vst [vmem:[%s204 + $0x80] sm:$0xff] %v237
                %v239 = vld [vmem:[%s203 + $0x220] sm:$0xff]
                %240 = vst [vmem:[%s204 + $0x88] sm:$0xff] %v239
              $region49: #{forward.28} parent=43 // loop_footer
                %s202 = sadd.s32 1, %s198
              $region50: #{forward.28} parent=43 // loop_footer_branch
                %197 = sbr.rel target = $region46
              $region51: #{forward.28} parent=43 // loop_exit
                _
            $region44: #{forward.28} parent=35 // pred_fallthru
              _
          $region36: #{forward.28} parent=31 // pred_fallthru
            _
          %289 = vnop
        $region32: #{forward.28} parent=27 // pred_fallthru
          _
        // Predicated region
        $region67: #{forward.28} parent=27 // pred_check
          %p290 = pneg %p99
        $region68: #{forward.28} parent=27 // pred_check_branch
          %292 = sbr.rel (%p290) target = $region70
        $region69: #{forward.28} parent=27 // pred_region
          %s293 = sand.u32 %s89, 1
          %s294 = sand.u32 %s89, 1
          %s295 = smul.addr %s294, 144
          %s296 = scalar_lea.vmem [#allocation3], %s295
          %s297 = smul.u32 2, %s11
          %s298 = smul.addr %s297, 4
          %s299 = scalar_lea.vmem %s3, %s298
          // Predicated region
          $region71: #{forward.28} parent=69 // pred_check
            _
          $region72: #{forward.28} parent=69 // pred_check_branch
            %301 = sbr.rel (0) target = $region74
          $region73: #{forward.28} parent=69 // pred_region
            // Predicated region
            $region75: #{forward.28} parent=73 // pred_check
              _
            $region76: #{forward.28} parent=73 // pred_check_branch
              %303 = sbr.rel (0) target = $region78
            $region77: #{forward.28} parent=73 // pred_region
              // Predicated region
              $region90: #{forward.28} parent=77 // pred_check
                _
              $region91: #{forward.28} parent=77 // pred_check_branch
                %352 = sbr.rel (0) target = $region93
              $region92: #{forward.28} parent=77 // pred_region
                loop: start=0, step=1, limit=1
                $region94: #{forward.28} parent=92 // loop_pre_header
                  _
                $region95: #{forward.28} parent=92 // loop_header
                  %s354 = sphi 0, %s358
                  %p355 = scmp.ge.s32.totalorder %s354, 1
                  %s359 = sphi %s299, %s299
                  %s360 = sphi %s296, %s296
                $region96: #{forward.28} parent=92 // loop_header_branch
                  %357 = sbr.rel (%p355) target = $region100
                $region97: #{forward.28} parent=92 // loop_body
                  %v361 = vld [vmem:[%s359] sm:$0xff]
                  %362 = vst [vmem:[%s360] sm:$0xff] %v361
                  %v363 = vld [vmem:[%s359 + $0x20] sm:$0xff]
                  %364 = vst [vmem:[%s360 + $0x8] sm:$0xff] %v363
                  %v365 = vld [vmem:[%s359 + $0x40] sm:$0xff]
                  %366 = vst [vmem:[%s360 + $0x10] sm:$0xff] %v365
                  %v367 = vld [vmem:[%s359 + $0x60] sm:$0xff]
                  %368 = vst [vmem:[%s360 + $0x18] sm:$0xff] %v367
                  %v369 = vld [vmem:[%s359 + $0x80] sm:$0xff]
                  %370 = vst [vmem:[%s360 + $0x20] sm:$0xff] %v369
                  %v371 = vld [vmem:[%s359 + $0xa0] sm:$0xff]
                  %372 = vst [vmem:[%s360 + $0x28] sm:$0xff] %v371
                  %v373 = vld [vmem:[%s359 + $0xc0] sm:$0xff]
                  %374 = vst [vmem:[%s360 + $0x30] sm:$0xff] %v373
                  %v375 = vld [vmem:[%s359 + $0xe0] sm:$0xff]
                  %376 = vst [vmem:[%s360 + $0x38] sm:$0xff] %v375
                  %v377 = vld [vmem:[%s359 + $0x100] sm:$0xff]
                  %378 = vst [vmem:[%s360 + $0x40] sm:$0xff] %v377
                  %v379 = vld [vmem:[%s359 + $0x120] sm:$0xff]
                  %380 = vst [vmem:[%s360 + $0x48] sm:$0xff] %v379
                  %v381 = vld [vmem:[%s359 + $0x140] sm:$0xff]
                  %382 = vst [vmem:[%s360 + $0x50] sm:$0xff] %v381
                  %v383 = vld [vmem:[%s359 + $0x160] sm:$0xff]
                  %384 = vst [vmem:[%s360 + $0x58] sm:$0xff] %v383
                  %v385 = vld [vmem:[%s359 + $0x180] sm:$0xff]
                  %386 = vst [vmem:[%s360 + $0x60] sm:$0xff] %v385
                  %v387 = vld [vmem:[%s359 + $0x1a0] sm:$0xff]
                  %388 = vst [vmem:[%s360 + $0x68] sm:$0xff] %v387
                  %v389 = vld [vmem:[%s359 + $0x1c0] sm:$0xff]
                  %390 = vst [vmem:[%s360 + $0x70] sm:$0xff] %v389
                  %v391 = vld [vmem:[%s359 + $0x1e0] sm:$0xff]
                  %392 = vst [vmem:[%s360 + $0x78] sm:$0xff] %v391
                  %v393 = vld [vmem:[%s359 + $0x200] sm:$0xff]
                  %394 = vst [vmem:[%s360 + $0x80] sm:$0xff] %v393
                  %v395 = vld [vmem:[%s359 + $0x220] sm:$0xff]
                  %396 = vst [vmem:[%s360 + $0x88] sm:$0xff] %v395
                $region98: #{forward.28} parent=92 // loop_footer
                  %s358 = sadd.s32 1, %s354
                $region99: #{forward.28} parent=92 // loop_footer_branch
                  %353 = sbr.rel target = $region95
                $region100: #{forward.28} parent=92 // loop_exit
                  _
              $region93: #{forward.28} parent=77 // pred_fallthru
                _
              // Predicated region
              $region101: #{forward.28} parent=77 // pred_check
                _
              $region102: #{forward.28} parent=77 // pred_check_branch
                %398 = sbr.rel target = $region104
              $region103: #{forward.28} parent=77 // pred_region
                _
              $region104: #{forward.28} parent=77 // pred_fallthru
                _
            $region78: #{forward.28} parent=73 // pred_fallthru
              _
            // Predicated region
            $region79: #{forward.28} parent=73 // pred_check
              _
            $region80: #{forward.28} parent=73 // pred_check_branch
              %305 = sbr.rel target = $region82
            $region81: #{forward.28} parent=73 // pred_region
              loop: start=0, step=1, limit=1
              $region83: #{forward.28} parent=81 // loop_pre_header
                _
              $region84: #{forward.28} parent=81 // loop_header
                %s308 = sphi 0, %s312
                %p309 = scmp.ge.s32.totalorder %s308, 1
                %s313 = sphi %s299, %s299
                %s314 = sphi %s296, %s296
              $region85: #{forward.28} parent=81 // loop_header_branch
                %311 = sbr.rel (%p309) target = $region89
              $region86: #{forward.28} parent=81 // loop_body
                %v315 = vld [vmem:[%s313] sm:$0xff]
                %316 = vst [vmem:[%s314] sm:$0xff] %v315
                %v317 = vld [vmem:[%s313 + $0x20] sm:$0xff]
                %318 = vst [vmem:[%s314 + $0x8] sm:$0xff] %v317
                %v319 = vld [vmem:[%s313 + $0x40] sm:$0xff]
                %320 = vst [vmem:[%s314 + $0x10] sm:$0xff] %v319
                %v321 = vld [vmem:[%s313 + $0x60] sm:$0xff]
                %322 = vst [vmem:[%s314 + $0x18] sm:$0xff] %v321
                %v323 = vld [vmem:[%s313 + $0x80] sm:$0xff]
                %324 = vst [vmem:[%s314 + $0x20] sm:$0xff] %v323
                %v325 = vld [vmem:[%s313 + $0xa0] sm:$0xff]
                %326 = vst [vmem:[%s314 + $0x28] sm:$0xff] %v325
                %v327 = vld [vmem:[%s313 + $0xc0] sm:$0xff]
                %328 = vst [vmem:[%s314 + $0x30] sm:$0xff] %v327
                %v329 = vld [vmem:[%s313 + $0xe0] sm:$0xff]
                %330 = vst [vmem:[%s314 + $0x38] sm:$0xff] %v329
                %v331 = vld [vmem:[%s313 + $0x100] sm:$0xff]
                %332 = vst [vmem:[%s314 + $0x40] sm:$0xff] %v331
                %v333 = vld [vmem:[%s313 + $0x120] sm:$0xff]
                %334 = vst [vmem:[%s314 + $0x48] sm:$0xff] %v333
                %v335 = vld [vmem:[%s313 + $0x140] sm:$0xff]
                %336 = vst [vmem:[%s314 + $0x50] sm:$0xff] %v335
                %v337 = vld [vmem:[%s313 + $0x160] sm:$0xff]
                %338 = vst [vmem:[%s314 + $0x58] sm:$0xff] %v337
                %v339 = vld [vmem:[%s313 + $0x180] sm:$0xff]
                %340 = vst [vmem:[%s314 + $0x60] sm:$0xff] %v339
                %v341 = vld [vmem:[%s313 + $0x1a0] sm:$0xff]
                %342 = vst [vmem:[%s314 + $0x68] sm:$0xff] %v341
                %v343 = vld [vmem:[%s313 + $0x1c0] sm:$0xff]
                %344 = vst [vmem:[%s314 + $0x70] sm:$0xff] %v343
                %v345 = vld [vmem:[%s313 + $0x1e0] sm:$0xff]
                %346 = vst [vmem:[%s314 + $0x78] sm:$0xff] %v345
                %v347 = vld [vmem:[%s313 + $0x200] sm:$0xff]
                %348 = vst [vmem:[%s314 + $0x80] sm:$0xff] %v347
                %v349 = vld [vmem:[%s313 + $0x220] sm:$0xff]
                %350 = vst [vmem:[%s314 + $0x88] sm:$0xff] %v349
              $region87: #{forward.28} parent=81 // loop_footer
                %s312 = sadd.s32 1, %s308
              $region88: #{forward.28} parent=81 // loop_footer_branch
                %307 = sbr.rel target = $region84
              $region89: #{forward.28} parent=81 // loop_exit
                _
            $region82: #{forward.28} parent=73 // pred_fallthru
              _
          $region74: #{forward.28} parent=69 // pred_fallthru
            _
          %399 = vnop
        $region70: #{forward.28} parent=27 // pred_fallthru
          _
      $region28: #{forward.28} parent=5 // pred_fallthru
        _
      %p400 = scmp.le.s32.totalorder 1, %s11
      %p401 = scmp.lt.s32.totalorder %s11, 5
      %p402 = pnand %p400, %p401
      %p403 = pneg %p402
      // Predicated region
      $region105: #{forward.28} parent=5 // pred_check
        _
      $region106: #{forward.28} parent=5 // pred_check_branch
        %405 = sbr.rel (%p402) target = $region108
      $region107: #{forward.28} parent=5 // pred_region
        %s406 = ssub.s32 %s11, 1
        %s407 = sand.u32 %s45, 1
        %s408 = sand.u32 %s45, 1
        %s409 = smul.addr %s408, 144
        %s410 = scalar_lea.vmem [#allocation2], %s409
        // Predicated region
        $region109: #{forward.28} parent=107 // pred_check
          %p411 = pneg %p58
        $region110: #{forward.28} parent=107 // pred_check_branch
          %413 = sbr.rel (%p411) target = $region112
        $region111: #{forward.28} parent=107 // pred_region
          _
        $region112: #{forward.28} parent=107 // pred_fallthru
          _
        %s414 = sand.u32 %s92, 1
        %s415 = sand.u32 %s92, 1
        %s416 = smul.addr %s415, 144
        %s417 = scalar_lea.vmem [#allocation3], %s416
        // Predicated region
        $region113: #{forward.28} parent=107 // pred_check
          %p418 = pneg %p105
        $region114: #{forward.28} parent=107 // pred_check_branch
          %420 = sbr.rel (%p418) target = $region116
        $region115: #{forward.28} parent=107 // pred_region
          _
        $region116: #{forward.28} parent=107 // pred_fallthru
          _
        %p421 = pneg %p32
        %p422 = pneg %p29
        %s423 = sand.u32 %s45, 1
        %s424 = sand.u32 %s45, 1
        %s425 = smul.addr %s424, 144
        %s426 = scalar_lea.vmem [#allocation2], %s425
        %p427 = pneg %p58
        %p428 = pneg %p55
        %p429 = pneg %p79
        %p430 = pneg %p76
        %s431 = sand.u32 %s92, 1
        %s432 = sand.u32 %s92, 1
        %s433 = smul.addr %s432, 144
        %s434 = scalar_lea.vmem [#allocation3], %s433
        %p435 = pneg %p105
        %p436 = pneg %p102
        %p437 = pneg %p126
        %p438 = pneg %p123
        %p439 = pneg %p152
        %p440 = pneg %p149
        %s441 = sand.u32 %s139, 1
        %s442 = sand.u32 %s139, 1
        %s443 = smul.addr %s442, 32
        %s444 = scalar_lea.vmem [#allocation4], %s443
        %s445 = smul.u32 2, %s16
        %s446 = smul.u32 2, %s16
        %s447 = smul.u32 2, %s16
        %v449 = vld [vmem:[%s0] sm:$0xff]
        %v450 = vld [vmem:[%s0 + $0x8] sm:$0xff]
        %v451 = vld [vmem:[%s0 + $0x10] sm:$0xff]
        %v452 = vld [vmem:[%s0 + $0x18] sm:$0xff]
        %v453 = vld [vmem:[%s410] sm:$0xff]
        %v454 = vld [vmem:[%s410 + $0x8] sm:$0xff]
        %v455 = vld [vmem:[%s410 + $0x10] sm:$0xff]
        %v456 = vld [vmem:[%s410 + $0x18] sm:$0xff]
        %v457 = vld [vmem:[%s410 + $0x20] sm:$0xff]
        %v458 = vld [vmem:[%s410 + $0x28] sm:$0xff]
        %v459 = vld [vmem:[%s410 + $0x30] sm:$0xff]
        %v460 = vld [vmem:[%s410 + $0x38] sm:$0xff]
        %v461 = vld [vmem:[%s410 + $0x40] sm:$0xff]
        %v462 = vld [vmem:[%s410 + $0x48] sm:$0xff]
        %v463 = vld [vmem:[%s410 + $0x50] sm:$0xff]
        %v464 = vld [vmem:[%s410 + $0x58] sm:$0xff]
        %v465 = vld [vmem:[%s410 + $0x60] sm:$0xff]
        %v466 = vld [vmem:[%s410 + $0x68] sm:$0xff]
        %v467 = vld [vmem:[%s410 + $0x70] sm:$0xff]
        %v468 = vld [vmem:[%s410 + $0x78] sm:$0xff]
        %v469 = vld [vmem:[%s410 + $0x80] sm:$0xff]
        %v470 = vld [vmem:[%s410 + $0x88] sm:$0xff]
        %v471 = vld [vmem:[%s2] sm:$0xff]
        %v472 = vld [vmem:[%s2 + $0x8] sm:$0xff]
        %v473 = vld [vmem:[%s2 + $0x10] sm:$0xff]
        %v474 = vld [vmem:[%s2 + $0x18] sm:$0xff]
        %v475 = vld [vmem:[%s417] sm:$0xff]
        %v476 = vld [vmem:[%s417 + $0x8] sm:$0xff]
        %v477 = vld [vmem:[%s417 + $0x10] sm:$0xff]
        %v478 = vld [vmem:[%s417 + $0x18] sm:$0xff]
        %v479 = vld [vmem:[%s417 + $0x20] sm:$0xff]
        %v480 = vld [vmem:[%s417 + $0x28] sm:$0xff]
        %v481 = vld [vmem:[%s417 + $0x30] sm:$0xff]
        %v482 = vld [vmem:[%s417 + $0x38] sm:$0xff]
        %v483 = vld [vmem:[%s417 + $0x40] sm:$0xff]
        %v484 = vld [vmem:[%s417 + $0x48] sm:$0xff]
        %v485 = vld [vmem:[%s417 + $0x50] sm:$0xff]
        %v486 = vld [vmem:[%s417 + $0x58] sm:$0xff]
        %v487 = vld [vmem:[%s417 + $0x60] sm:$0xff]
        %v488 = vld [vmem:[%s417 + $0x68] sm:$0xff]
        %v489 = vld [vmem:[%s417 + $0x70] sm:$0xff]
        %v490 = vld [vmem:[%s417 + $0x78] sm:$0xff]
        %v491 = vld [vmem:[%s417 + $0x80] sm:$0xff]
        %v492 = vld [vmem:[%s417 + $0x88] sm:$0xff]
        %v497 = vunpack.c.l.b16 %v471
        %v498 = vunpack.c.h.b16 %v471
        %v499 = vunpack.c.l.b16 %v472
        %v500 = vunpack.c.h.b16 %v472
        %v501 = vunpack.c.l.b16 %v473
        %v502 = vunpack.c.h.b16 %v473
        %v503 = vunpack.c.l.b16 %v474
        %v504 = vunpack.c.h.b16 %v474
        %v505 = vpack.c.b16 %v499, %v497
        %v506 = vpack.c.b16 %v500, %v498
        %v507 = vpack.c.b16 %v503, %v501
        %v508 = vpack.c.b16 %v504, %v502
        %v529 = vunpack.c.l.b16 %v475
        %v530 = vunpack.c.h.b16 %v475
        %v531 = vunpack.c.l.b16 %v476
        %v532 = vunpack.c.h.b16 %v476
        %v533 = vunpack.c.l.b16 %v477
        %v534 = vunpack.c.h.b16 %v477
        %v535 = vunpack.c.l.b16 %v478
        %v536 = vunpack.c.h.b16 %v478
        %v537 = vunpack.c.l.b16 %v479
        %v538 = vunpack.c.h.b16 %v479
        %v539 = vunpack.c.l.b16 %v480
        %v540 = vunpack.c.h.b16 %v480
        %v541 = vunpack.c.l.b16 %v481
        %v542 = vunpack.c.h.b16 %v481
        %v543 = vunpack.c.l.b16 %v482
        %v544 = vunpack.c.h.b16 %v482
        %v545 = vunpack.c.l.b16 %v483
        %v546 = vunpack.c.h.b16 %v483
        %v547 = vunpack.c.l.b16 %v484
        %v548 = vunpack.c.h.b16 %v484
        %v549 = vunpack.c.l.b16 %v485
        %v550 = vunpack.c.h.b16 %v485
        %v551 = vunpack.c.l.b16 %v486
        %v552 = vunpack.c.h.b16 %v486
        %v553 = vunpack.c.l.b16 %v487
        %v554 = vunpack.c.h.b16 %v487
        %v555 = vunpack.c.l.b16 %v488
        %v556 = vunpack.c.h.b16 %v488
        %v557 = vunpack.c.l.b16 %v489
        %v558 = vunpack.c.h.b16 %v489
        %v559 = vunpack.c.l.b16 %v490
        %v560 = vunpack.c.h.b16 %v490
        %v561 = vunpack.c.l.b16 %v491
        %v562 = vunpack.c.h.b16 %v491
        %v563 = vunpack.c.l.b16 %v492
        %v564 = vunpack.c.h.b16 %v492
        %v565 = vpack.c.b16 %v531, %v529
        %v566 = vpack.c.b16 %v532, %v530
        %v567 = vpack.c.b16 %v535, %v533
        %v568 = vpack.c.b16 %v536, %v534
        %v569 = vpack.c.b16 %v539, %v537
        %v570 = vpack.c.b16 %v540, %v538
        %v571 = vpack.c.b16 %v543, %v541
        %v572 = vpack.c.b16 %v544, %v542
        %v573 = vpack.c.b16 %v547, %v545
        %v574 = vpack.c.b16 %v548, %v546
        %v575 = vpack.c.b16 %v551, %v549
        %v576 = vpack.c.b16 %v552, %v550
        %v577 = vpack.c.b16 %v555, %v553
        %v578 = vpack.c.b16 %v556, %v554
        %v579 = vpack.c.b16 %v559, %v557
        %v580 = vpack.c.b16 %v560, %v558
        %v581 = vpack.c.b16 %v563, %v561
        %v582 = vpack.c.b16 %v564, %v562
        %vm601 = vcmask 130048
        %v603 = vsel %vm601, %v506, 0
        %v606 = vsel %vm601, %v508, 0
        %608 = vmatprep.subr.bf16.mxu0 %v566
        %609 = vmatpush1.bf16.msra.mxu0 %v565
        %610 = vmatprep.subr.bf16.mxu0 %v568
        %611 = vmatpush1.bf16.msra.mxu0 %v567
        %612 = vmatprep.subr.bf16.mxu0 %v570
        %613 = vmatpush1.bf16.msra.mxu0 %v569
        %614 = vmatprep.subr.bf16.mxu0 %v572
        %615 = vmatpush1.bf16.msra.mxu0 %v571
        %616 = vmatprep.subr.bf16.mxu0 %v574
        %617 = vmatpush1.bf16.msra.mxu0 %v573
        %618 = vmatprep.subr.bf16.mxu0 %v576
        %619 = vmatpush1.bf16.msra.mxu0 %v575
        %620 = vmatprep.subr.bf16.mxu0 %v578
        %621 = vmatpush1.bf16.msra.mxu0 %v577
        %622 = vmatprep.subr.bf16.mxu0 %v580
        %623 = vmatpush1.bf16.msra.mxu0 %v579
        %624 = vmatprep.subr.bf16.mxu0 %v582
        %625 = vmatpush1.bf16.msra.mxu0 %v581
        %626 = vmatprep.subr.bf16.mxu0 0
        %627 = vmatpush1.bf16.msra.mxu0 0
        %628 = vmatprep.subr.bf16.mxu0 0
        %629 = vmatpush1.bf16.msra.mxu0 0
        %630 = vmatprep.subr.bf16.mxu0 0
        %631 = vmatpush1.bf16.msra.mxu0 0
        %632 = vmatprep.subr.bf16.mxu0 0
        %633 = vmatpush1.bf16.msra.mxu0 0
        %634 = vmatprep.subr.bf16.mxu0 0
        %635 = vmatpush1.bf16.msra.mxu0 0
        %636 = vmatprep.subr.bf16.mxu0 0
        %637 = vmatpush1.bf16.msra.mxu0 0
        %638 = vmatprep.subr.bf16.mxu0 0
        %639 = vmatpush1.bf16.msra.mxu0 0
        %640 = vmatprep.mubr.bf16.mxu0 %v603
        %641 = vmatmul.mubr.bf16.gmra.mrb[0].mxu0 %v505
        %v642 = vpop.f32.mrb[0].mxu0
        %v643 = vadd.f32 0.0, %v642
        %v644 = vpop.f32.mrb[0].mxu0
        %v645 = vadd.f32 0.0, %v644
        %v646 = vpop.f32.mrb[0].mxu0
        %v647 = vadd.f32 0.0, %v646
        %v648 = vpop.f32.mrb[0].mxu0
        %v649 = vadd.f32 0.0, %v648
        %650 = vmatprep.mubr.bf16.mxu0 %v606
        %651 = vmatmul.mubr.bf16.gmra.mrb[0].mxu0 %v507
        %v652 = vpop.f32.mrb[0].mxu0
        %v653 = vadd.f32 0.0, %v652
        %v654 = vpop.f32.mrb[0].mxu0
        %v655 = vadd.f32 0.0, %v654
        %v656 = vpop.f32.mrb[0].mxu0
        %v657 = vadd.f32 0.0, %v656
        %v658 = vpop.f32.mrb[0].mxu0
        %v659 = vadd.f32 0.0, %v658
        %660 = vdwg.mxu0
        %v665 = vunpack.c.l.b16 %v449
        %v666 = vunpack.c.h.b16 %v449
        %v667 = vunpack.c.l.b16 %v450
        %v668 = vunpack.c.h.b16 %v450
        %v669 = vunpack.c.l.b16 %v451
        %v670 = vunpack.c.h.b16 %v451
        %v671 = vunpack.c.l.b16 %v452
        %v672 = vunpack.c.h.b16 %v452
        %v673 = vpack.c.b16 %v667, %v665
        %v674 = vpack.c.b16 %v668, %v666
        %v675 = vpack.c.b16 %v671, %v669
        %v676 = vpack.c.b16 %v672, %v670
        %v697 = vunpack.c.l.b16 %v453
        %v698 = vunpack.c.h.b16 %v453
        %v699 = vunpack.c.l.b16 %v454
        %v700 = vunpack.c.h.b16 %v454
        %v701 = vunpack.c.l.b16 %v455
        %v702 = vunpack.c.h.b16 %v455
        %v703 = vunpack.c.l.b16 %v456
        %v704 = vunpack.c.h.b16 %v456
        %v705 = vunpack.c.l.b16 %v457
        %v706 = vunpack.c.h.b16 %v457
        %v707 = vunpack.c.l.b16 %v458
        %v708 = vunpack.c.h.b16 %v458
        %v709 = vunpack.c.l.b16 %v459
        %v710 = vunpack.c.h.b16 %v459
        %v711 = vunpack.c.l.b16 %v460
        %v712 = vunpack.c.h.b16 %v460
        %v713 = vunpack.c.l.b16 %v461
        %v714 = vunpack.c.h.b16 %v461
        %v715 = vunpack.c.l.b16 %v462
        %v716 = vunpack.c.h.b16 %v462
        %v717 = vunpack.c.l.b16 %v463
        %v718 = vunpack.c.h.b16 %v463
        %v719 = vunpack.c.l.b16 %v464
        %v720 = vunpack.c.h.b16 %v464
        %v721 = vunpack.c.l.b16 %v465
        %v722 = vunpack.c.h.b16 %v465
        %v723 = vunpack.c.l.b16 %v466
        %v724 = vunpack.c.h.b16 %v466
        %v725 = vunpack.c.l.b16 %v467
        %v726 = vunpack.c.h.b16 %v467
        %v727 = vunpack.c.l.b16 %v468
        %v728 = vunpack.c.h.b16 %v468
        %v729 = vunpack.c.l.b16 %v469
        %v730 = vunpack.c.h.b16 %v469
        %v731 = vunpack.c.l.b16 %v470
        %v732 = vunpack.c.h.b16 %v470
        %v733 = vpack.c.b16 %v699, %v697
        %v734 = vpack.c.b16 %v700, %v698
        %v735 = vpack.c.b16 %v703, %v701
        %v736 = vpack.c.b16 %v704, %v702
        %v737 = vpack.c.b16 %v707, %v705
        %v738 = vpack.c.b16 %v708, %v706
        %v739 = vpack.c.b16 %v711, %v709
        %v740 = vpack.c.b16 %v712, %v710
        %v741 = vpack.c.b16 %v715, %v713
        %v742 = vpack.c.b16 %v716, %v714
        %v743 = vpack.c.b16 %v719, %v717
        %v744 = vpack.c.b16 %v720, %v718
        %v745 = vpack.c.b16 %v723, %v721
        %v746 = vpack.c.b16 %v724, %v722
        %v747 = vpack.c.b16 %v727, %v725
        %v748 = vpack.c.b16 %v728, %v726
        %v749 = vpack.c.b16 %v731, %v729
        %v750 = vpack.c.b16 %v732, %v730
        %v770 = vsel %vm601, %v674, 0
        %v773 = vsel %vm601, %v676, 0
        %775 = vmatprep.subr.bf16.mxu0 %v734
        %776 = vmatpush1.bf16.msra.mxu0 %v733
        %777 = vmatprep.subr.bf16.mxu0 %v736
        %778 = vmatpush1.bf16.msra.mxu0 %v735
        %779 = vmatprep.subr.bf16.mxu0 %v738
        %780 = vmatpush1.bf16.msra.mxu0 %v737
        %781 = vmatprep.subr.bf16.mxu0 %v740
        %782 = vmatpush1.bf16.msra.mxu0 %v739
        %783 = vmatprep.subr.bf16.mxu0 %v742
        %784 = vmatpush1.bf16.msra.mxu0 %v741
        %785 = vmatprep.subr.bf16.mxu0 %v744
        %786 = vmatpush1.bf16.msra.mxu0 %v743
        %787 = vmatprep.subr.bf16.mxu0 %v746
        %788 = vmatpush1.bf16.msra.mxu0 %v745
        %789 = vmatprep.subr.bf16.mxu0 %v748
        %790 = vmatpush1.bf16.msra.mxu0 %v747
        %791 = vmatprep.subr.bf16.mxu0 %v750
        %792 = vmatpush1.bf16.msra.mxu0 %v749
        %793 = vmatprep.subr.bf16.mxu0 0
        %794 = vmatpush1.bf16.msra.mxu0 0
        %795 = vmatprep.subr.bf16.mxu0 0
        %796 = vmatpush1.bf16.msra.mxu0 0
        %797 = vmatprep.subr.bf16.mxu0 0
        %798 = vmatpush1.bf16.msra.mxu0 0
        %799 = vmatprep.subr.bf16.mxu0 0
        %800 = vmatpush1.bf16.msra.mxu0 0
        %801 = vmatprep.subr.bf16.mxu0 0
        %802 = vmatpush1.bf16.msra.mxu0 0
        %803 = vmatprep.subr.bf16.mxu0 0
        %804 = vmatpush1.bf16.msra.mxu0 0
        %805 = vmatprep.subr.bf16.mxu0 0
        %806 = vmatpush1.bf16.msra.mxu0 0
        %807 = vmatprep.mubr.bf16.mxu0 %v770
        %808 = vmatmul.mubr.bf16.gmra.mrb[0].mxu0 %v673
        %v809 = vpop.f32.mrb[0].mxu0
        %v810 = vadd.f32 %v643, %v809
        %v811 = vpop.f32.mrb[0].mxu0
        %v812 = vadd.f32 %v645, %v811
        %v813 = vpop.f32.mrb[0].mxu0
        %v814 = vadd.f32 %v647, %v813
        %v815 = vpop.f32.mrb[0].mxu0
        %v816 = vadd.f32 %v649, %v815
        %817 = vmatprep.mubr.bf16.mxu0 %v773
        %818 = vmatmul.mubr.bf16.gmra.mrb[0].mxu0 %v675
        %v819 = vpop.f32.mrb[0].mxu0
        %v820 = vadd.f32 %v653, %v819
        %v821 = vpop.f32.mrb[0].mxu0
        %v822 = vadd.f32 %v655, %v821
        %v823 = vpop.f32.mrb[0].mxu0
        %v824 = vadd.f32 %v657, %v823
        %v825 = vpop.f32.mrb[0].mxu0
        %v826 = vadd.f32 %v659, %v825
        %827 = vdwg.mxu0
        %v828 = vld [vmem:[%s4] sm:$0xff]
        %v829 = vld [vmem:[%s4 + $0x8] sm:$0xff]
        %v830 = vld [vmem:[%s4 + $0x10] sm:$0xff]
        %v831 = vld [vmem:[%s4 + $0x18] sm:$0xff]
        %833 = vset.pattern.permute.xlu0 0
        %834 = vperm.xlu0 %833, %v828
        %v835 = vpop.permute.xlu0 %834
        %838 = vset.pattern.permute.xlu0 0
        %839 = vperm.xlu0 %838, %v829
        %v840 = vpop.permute.xlu0 %839
        %843 = vset.pattern.permute.xlu0 0
        %844 = vperm.xlu0 %843, %v830
        %v845 = vpop.permute.xlu0 %844
        %848 = vset.pattern.permute.xlu0 0
        %849 = vperm.xlu0 %848, %v831
        %v850 = vpop.permute.xlu0 %849
        %v852 = vadd.f32 %v810, %v835
        %v853 = vadd.f32 %v812, %v835
        %v854 = vadd.f32 %v814, %v840
        %v855 = vadd.f32 %v816, %v840
        %v856 = vadd.f32 %v820, %v845
        %v857 = vadd.f32 %v822, %v845
        %v858 = vadd.f32 %v824, %v850
        %v859 = vadd.f32 %v826, %v850
        %v860 = vmax.f32 %v852, 0.0
        %v861 = vmax.f32 %v853, 0.0
        %v862 = vmax.f32 %v854, 0.0
        %v863 = vmax.f32 %v855, 0.0
        %v864 = vmax.f32 %v856, 0.0
        %v865 = vmax.f32 %v857, 0.0
        %v866 = vmax.f32 %v858, 0.0
        %v867 = vmax.f32 %v859, 0.0
        %v868 = vpack.c.bf16 %v862, %v860
        %v869 = vpack.c.bf16 %v863, %v861
        %v870 = vpack.c.bf16 %v866, %v864
        %v871 = vpack.c.bf16 %v867, %v865
        %v876 = vunpack.c.l.b16 %v868
        %v877 = vunpack.c.l.b16 %v869
        %v878 = vunpack.c.h.b16 %v868
        %v879 = vunpack.c.h.b16 %v869
        %v880 = vunpack.c.l.b16 %v870
        %v881 = vunpack.c.l.b16 %v871
        %v882 = vunpack.c.h.b16 %v870
        %v883 = vunpack.c.h.b16 %v871
        %v884 = vpack.c.b16 %v877, %v876
        %v885 = vpack.c.b16 %v879, %v878
        %v886 = vpack.c.b16 %v881, %v880
        %v887 = vpack.c.b16 %v883, %v882
        %892 = vst [vmem:[%s444] sm:$0xff] %v884
        %893 = vst [vmem:[%s444 + $0x8] sm:$0xff] %v885
        %894 = vst [vmem:[%s444 + $0x10] sm:$0xff] %v886
        %895 = vst [vmem:[%s444 + $0x18] sm:$0xff] %v887
        %s896 = sand.u32 %s139, 1
        %s897 = sand.u32 %s139, 1
        %s898 = smul.addr %s897, 32
        %s899 = scalar_lea.vmem [#allocation4], %s898
        // Predicated region
        $region117: #{forward.28} parent=107 // pred_check
          %p900 = pneg %p149
        $region118: #{forward.28} parent=107 // pred_check_branch
          %902 = sbr.rel (%p900) target = $region120
        $region119: #{forward.28} parent=107 // pred_region
          %s903 = smul.u32 2, %s16
          %s904 = smul.addr %s903, 4
          %s905 = scalar_lea.vmem %s5, %s904
          // Predicated region
          $region121: #{forward.28} parent=119 // pred_check
            _
          $region122: #{forward.28} parent=119 // pred_check_branch
            %907 = sbr.rel (0) target = $region124
          $region123: #{forward.28} parent=119 // pred_region
            // Predicated region
            $region125: #{forward.28} parent=123 // pred_check
              _
            $region126: #{forward.28} parent=123 // pred_check_branch
              %909 = sbr.rel (0) target = $region128
            $region127: #{forward.28} parent=123 // pred_region
              // Predicated region
              $region140: #{forward.28} parent=127 // pred_check
                _
              $region141: #{forward.28} parent=127 // pred_check_branch
                %930 = sbr.rel (0) target = $region143
              $region142: #{forward.28} parent=127 // pred_region
                loop: start=0, step=1, limit=1
                $region144: #{forward.28} parent=142 // loop_pre_header
                  _
                $region145: #{forward.28} parent=142 // loop_header
                  %s932 = sphi 0, %s936
                  %p933 = scmp.ge.s32.totalorder %s932, 1
                  %s937 = sphi %s899, %s899
                  %s938 = sphi %s905, %s905
                $region146: #{forward.28} parent=142 // loop_header_branch
                  %935 = sbr.rel (%p933) target = $region150
                $region147: #{forward.28} parent=142 // loop_body
                  %v939 = vld [vmem:[%s937] sm:$0xff]
                  %940 = vst [vmem:[%s938] sm:$0xff] %v939
                  %v941 = vld [vmem:[%s937 + $0x8] sm:$0xff]
                  %942 = vst [vmem:[%s938 + $0x20] sm:$0xff] %v941
                  %v943 = vld [vmem:[%s937 + $0x10] sm:$0xff]
                  %944 = vst [vmem:[%s938 + $0x40] sm:$0xff] %v943
                  %v945 = vld [vmem:[%s937 + $0x18] sm:$0xff]
                  %946 = vst [vmem:[%s938 + $0x60] sm:$0xff] %v945
                $region148: #{forward.28} parent=142 // loop_footer
                  %s936 = sadd.s32 1, %s932
                $region149: #{forward.28} parent=142 // loop_footer_branch
                  %931 = sbr.rel target = $region145
                $region150: #{forward.28} parent=142 // loop_exit
                  _
              $region143: #{forward.28} parent=127 // pred_fallthru
                _
              // Predicated region
              $region151: #{forward.28} parent=127 // pred_check
                _
              $region152: #{forward.28} parent=127 // pred_check_branch
                %948 = sbr.rel target = $region154
              $region153: #{forward.28} parent=127 // pred_region
                _
              $region154: #{forward.28} parent=127 // pred_fallthru
                _
            $region128: #{forward.28} parent=123 // pred_fallthru
              _
            // Predicated region
            $region129: #{forward.28} parent=123 // pred_check
              _
            $region130: #{forward.28} parent=123 // pred_check_branch
              %911 = sbr.rel target = $region132
            $region131: #{forward.28} parent=123 // pred_region
              loop: start=0, step=1, limit=1
              $region133: #{forward.28} parent=131 // loop_pre_header
                _
              $region134: #{forward.28} parent=131 // loop_header
                %s914 = sphi 0, %s918
                %p915 = scmp.ge.s32.totalorder %s914, 1
                %s919 = sphi %s899, %s899
                %s920 = sphi %s905, %s905
              $region135: #{forward.28} parent=131 // loop_header_branch
                %917 = sbr.rel (%p915) target = $region139
              $region136: #{forward.28} parent=131 // loop_body
                %v921 = vld [vmem:[%s919] sm:$0xff]
                %922 = vst [vmem:[%s920] sm:$0xff] %v921
                %v923 = vld [vmem:[%s919 + $0x8] sm:$0xff]
                %924 = vst [vmem:[%s920 + $0x20] sm:$0xff] %v923
                %v925 = vld [vmem:[%s919 + $0x10] sm:$0xff]
                %926 = vst [vmem:[%s920 + $0x40] sm:$0xff] %v925
                %v927 = vld [vmem:[%s919 + $0x18] sm:$0xff]
                %928 = vst [vmem:[%s920 + $0x60] sm:$0xff] %v927
              $region137: #{forward.28} parent=131 // loop_footer
                %s918 = sadd.s32 1, %s914
              $region138: #{forward.28} parent=131 // loop_footer_branch
                %913 = sbr.rel target = $region134
              $region139: #{forward.28} parent=131 // loop_exit
                _
            $region132: #{forward.28} parent=123 // pred_fallthru
              _
          $region124: #{forward.28} parent=119 // pred_fallthru
            _
          %949 = vnop
        $region120: #{forward.28} parent=107 // pred_fallthru
          _
      $region108: #{forward.28} parent=5 // pred_fallthru
        _
      %p950 = scmp.le.s32.totalorder 2, %s11
      // Predicated region
      $region155: #{forward.28} parent=5 // pred_check
        %p951 = pneg %p950
      $region156: #{forward.28} parent=5 // pred_check_branch
        %953 = sbr.rel (%p951) target = $region158
      $region157: #{forward.28} parent=5 // pred_region
        %s954 = ssub.s32 %s11, 2
        // Predicated region
        $region159: #{forward.28} parent=157 // pred_check
          %p955 = pneg %p155
        $region160: #{forward.28} parent=157 // pred_check_branch
          %957 = sbr.rel (%p955) target = $region162
        $region161: #{forward.28} parent=157 // pred_region
          %s958 = sand.u32 %s140, 1
          %s959 = sand.u32 %s140, 1
          %s960 = smul.addr %s959, 32
          %s961 = scalar_lea.vmem [#allocation4], %s960
        $region162: #{forward.28} parent=157 // pred_fallthru
          _
      $region158: #{forward.28} parent=5 // pred_fallthru
        _
    $region6: #{forward.28} parent=1 // loop_footer
      %s15 = sadd.s32 1, %s11
    $region7: #{forward.28} parent=1 // loop_footer_branch
      %10 = sbr.rel target = $region3
    $region8: #{forward.28} parent=1 // loop_exit
      _

// kernel: forward.29
$region0: #{forward.29}
  #allocation0 [shape = 'u32[]', space=smem, size = 0x4, offset = 0x4, fixed_abs, tag = 'smem constant byte address 0x4 - core index']
  #allocation1 [shape = 'u32[144,128]{1,0:T(1,128)}', space=vmem, size = 0x12000, scoped, tag = 'internal scratch']
  %s0 = inlined_call_operand.vmem [shape: bf16[16,72], index: 0, kind: input, shape index: {}]
  %s1 = inlined_call_operand.vmem [shape: bf16[72,4096], index: 1, kind: input, shape index: {}]
  %s2 = inlined_call_operand.vmem [shape: bf16[16,72], index: 2, kind: input, shape index: {}]
  %s3 = inlined_call_operand.vmem [shape: bf16[72,4096], index: 3, kind: input, shape index: {}]
  %s4 = inlined_call_operand.vmem [shape: f32[16,1], index: 4, kind: input, shape index: {}]
  %s5 = inlined_call_operand.vmem [shape: bf16[16,4096], index: 5, kind: output, shape index: {}]
  %s6 = sld [smem:[#allocation0]]
  $region118: #{forward.29} parent=0
    _
  %s8 = ssub.s32 1, %s6
  %s9 = scalar_select 0, %s8, %s6
  $region1: #{forward.29} parent=0
    #allocation2 [shape = 'u8[147456]{0}', space=vmem, size = 0x24000, scoped, tag = 'input window, operand 1']
    #allocation3 [shape = 'u8[147456]{0}', space=vmem, size = 0x24000, scoped, tag = 'input window, operand 3']
    #allocation4 [shape = 'u8[32768]{0}', space=vmem, size = 0x8000, scoped, tag = 'output window, operand 0']
    loop: start=0, step=1, limit=10
    $region2: #{forward.29} parent=1 // loop_pre_header
      _
    $region3: #{forward.29} parent=1 // loop_header
      %s11 = sphi 0, %s15
      %p12 = scmp.ge.s32.totalorder %s11, 10
      %s19 = sphi 0, %s19
      %s21 = sphi 0, %s19
      %s22 = sphi 0, %s21
      %s36 = sphi 0, %s22
      %s42 = sphi 0, %s44
      %s45 = sphi 0, %s42
      %s46 = sphi 0, %s45
      %s62 = sphi 0, %s46
      %s66 = sphi 0, %s66
      %s68 = sphi 0, %s66
      %s69 = sphi 0, %s68
      %s83 = sphi 0, %s69
      %s89 = sphi 0, %s91
      %s92 = sphi 0, %s89
      %s93 = sphi 0, %s92
      %s109 = sphi 0, %s93
      %s113 = sphi 0, %s113
      %s115 = sphi 0, %s113
      %s116 = sphi 0, %s115
      %s130 = sphi 0, %s116
      %s136 = sphi 0, %s138
      %s139 = sphi 0, %s136
      %s140 = sphi 0, %s139
      %s156 = sphi 0, %s140
    $region4: #{forward.29} parent=1 // loop_header_branch
      %14 = sbr.rel (%p12) target = $region8
    $region5: #{forward.29} parent=1 // loop_body
      %s16 = ssub.s32 %s11, 1
      %s17 = ssub.s32 %s11, 2
      %s18 = sadd.s32 %s11, 1
      %s20 = sadd.s32 %s19, 1
      %p23 = scmp.eq.s32.totalorder %s11, 7
      %p24 = scmp.ne.s32.totalorder %s19, %s21
      %p25 = scmp.eq.s32.totalorder %s11, 0
      %p26 = por %p24, %p25
      %p27 = scmp.ne.s32.totalorder %s19, %s21
      %p28 = scmp.eq.s32.totalorder %s16, 7
      %p29 = por %p27, %p28
      %p30 = scmp.ne.s32.totalorder %s21, %s22
      %p31 = scmp.eq.s32.totalorder %s16, 0
      %p32 = por %p30, %p31
      %p33 = scmp.ne.s32.totalorder %s21, %s22
      %p34 = scmp.eq.s32.totalorder %s17, 7
      %p35 = por %p33, %p34
      %p37 = scmp.ne.s32.totalorder %s22, %s36
      %p38 = scmp.eq.s32.totalorder %s17, 0
      %p39 = por %p37, %p38
      %s40 = ssub.s32 %s11, %s18
      %p41 = scmp.eq.s32.totalorder %s40, 0
      %s43 = sadd.s32 %s42, 1
      %s44 = scalar_select %p41, %s42, %s43
      %p47 = pneg %p41
      %p48 = scmp.eq.s32.totalorder %s11, 7
      %p49 = por %p47, %p48
      %p50 = scmp.ne.s32.totalorder %s42, %s45
      %p51 = scmp.eq.s32.totalorder %s11, 0
      %p52 = por %p50, %p51
      %p53 = scmp.ne.s32.totalorder %s42, %s45
      %p54 = scmp.eq.s32.totalorder %s16, 7
      %p55 = por %p53, %p54
      %p56 = scmp.ne.s32.totalorder %s45, %s46
      %p57 = scmp.eq.s32.totalorder %s16, 0
      %p58 = por %p56, %p57
      %p59 = scmp.ne.s32.totalorder %s45, %s46
      %p60 = scmp.eq.s32.totalorder %s17, 7
      %p61 = por %p59, %p60
      %p63 = scmp.ne.s32.totalorder %s46, %s62
      %p64 = scmp.eq.s32.totalorder %s17, 0
      %p65 = por %p63, %p64
      %s67 = sadd.s32 %s66, 1
      %p70 = scmp.eq.s32.totalorder %s11, 7
      %p71 = scmp.ne.s32.totalorder %s66, %s68
      %p72 = scmp.eq.s32.totalorder %s11, 0
      %p73 = por %p71, %p72
      %p74 = scmp.ne.s32.totalorder %s66, %s68
      %p75 = scmp.eq.s32.totalorder %s16, 7
      %p76 = por %p74, %p75
      %p77 = scmp.ne.s32.totalorder %s68, %s69
      %p78 = scmp.eq.s32.totalorder %s16, 0
      %p79 = por %p77, %p78
      %p80 = scmp.ne.s32.totalorder %s68, %s69
      %p81 = scmp.eq.s32.totalorder %s17, 7
      %p82 = por %p80, %p81
      %p84 = scmp.ne.s32.totalorder %s69, %s83
      %p85 = scmp.eq.s32.totalorder %s17, 0
      %p86 = por %p84, %p85
      %s87 = ssub.s32 %s11, %s18
      %p88 = scmp.eq.s32.totalorder %s87, 0
      %s90 = sadd.s32 %s89, 1
      %s91 = scalar_select %p88, %s89, %s90
      %p94 = pneg %p88
      %p95 = scmp.eq.s32.totalorder %s11, 7
      %p96 = por %p94, %p95
      %p97 = scmp.ne.s32.totalorder %s89, %s92
      %p98 = scmp.eq.s32.totalorder %s11, 0
      %p99 = por %p97, %p98
      %p100 = scmp.ne.s32.totalorder %s89, %s92
      %p101 = scmp.eq.s32.totalorder %s16, 7
      %p102 = por %p100, %p101
      %p103 = scmp.ne.s32.totalorder %s92, %s93
      %p104 = scmp.eq.s32.totalorder %s16, 0
      %p105 = por %p103, %p104
      %p106 = scmp.ne.s32.totalorder %s92, %s93
      %p107 = scmp.eq.s32.totalorder %s17, 7
      %p108 = por %p106, %p107
      %p110 = scmp.ne.s32.totalorder %s93, %s109
      %p111 = scmp.eq.s32.totalorder %s17, 0
      %p112 = por %p110, %p111
      %s114 = sadd.s32 %s113, 1
      %p117 = scmp.eq.s32.totalorder %s11, 7
      %p118 = scmp.ne.s32.totalorder %s113, %s115
      %p119 = scmp.eq.s32.totalorder %s11, 0
      %p120 = por %p118, %p119
      %p121 = scmp.ne.s32.totalorder %s113, %s115
      %p122 = scmp.eq.s32.totalorder %s16, 7
      %p123 = por %p121, %p122
      %p124 = scmp.ne.s32.totalorder %s115, %s116
      %p125 = scmp.eq.s32.totalorder %s16, 0
      %p126 = por %p124, %p125
      %p127 = scmp.ne.s32.totalorder %s115, %s116
      %p128 = scmp.eq.s32.totalorder %s17, 7
      %p129 = por %p127, %p128
      %p131 = scmp.ne.s32.totalorder %s116, %s130
      %p132 = scmp.eq.s32.totalorder %s17, 0
      %p133 = por %p131, %p132
      %s134 = ssub.s32 %s11, %s18
      %p135 = scmp.eq.s32.totalorder %s134, 0
      %s137 = sadd.s32 %s136, 1
      %s138 = scalar_select %p135, %s136, %s137
      %p141 = pneg %p135
      %p142 = scmp.eq.s32.totalorder %s11, 7
      %p143 = por %p141, %p142
      %p144 = scmp.ne.s32.totalorder %s136, %s139
      %p145 = scmp.eq.s32.totalorder %s11, 0
      %p146 = por %p144, %p145
      %p147 = scmp.ne.s32.totalorder %s136, %s139
      %p148 = scmp.eq.s32.totalorder %s16, 7
      %p149 = por %p147, %p148
      %p150 = scmp.ne.s32.totalorder %s139, %s140
      %p151 = scmp.eq.s32.totalorder %s16, 0
      %p152 = por %p150, %p151
      %p153 = scmp.ne.s32.totalorder %s139, %s140
      %p154 = scmp.eq.s32.totalorder %s17, 7
      %p155 = por %p153, %p154
      %p157 = scmp.ne.s32.totalorder %s140, %s156
      %p158 = scmp.eq.s32.totalorder %s17, 0
      %p159 = por %p157, %p158
      %p160 = scmp.le.s32.totalorder 1, %s11
      %p161 = scmp.lt.s32.totalorder %s11, 9
      %p162 = pnand %p160, %p161
      %p163 = pneg %p162
      // Predicated region
      $region9: #{forward.29} parent=5 // pred_check
        _
      $region10: #{forward.29} parent=5 // pred_check_branch
        %165 = sbr.rel (%p162) target = $region12
      $region11: #{forward.29} parent=5 // pred_region
        %s166 = ssub.s32 %s11, 1
        // Predicated region
        $region13: #{forward.29} parent=11 // pred_check
          %p167 = pneg %p32
        $region14: #{forward.29} parent=11 // pred_check_branch
          %169 = sbr.rel (%p167) target = $region16
        $region15: #{forward.29} parent=11 // pred_region
          _
        $region16: #{forward.29} parent=11 // pred_fallthru
          _
        // Predicated region
        $region17: #{forward.29} parent=11 // pred_check
          %p170 = pneg %p79
        $region18: #{forward.29} parent=11 // pred_check_branch
          %172 = sbr.rel (%p170) target = $region20
        $region19: #{forward.29} parent=11 // pred_region
          _
        $region20: #{forward.29} parent=11 // pred_fallthru
          _
        // Predicated region
        $region21: #{forward.29} parent=11 // pred_check
          %p173 = pneg %p126
        $region22: #{forward.29} parent=11 // pred_check_branch
          %175 = sbr.rel (%p173) target = $region24
        $region23: #{forward.29} parent=11 // pred_region
          _
        $region24: #{forward.29} parent=11 // pred_fallthru
          _
      $region12: #{forward.29} parent=5 // pred_fallthru
        _
      %p176 = scmp.lt.s32.totalorder %s11, 8
      // Predicated region
      $region25: #{forward.29} parent=5 // pred_check
        %p177 = pneg %p176
      $region26: #{forward.29} parent=5 // pred_check_branch
        %179 = sbr.rel (%p177) target = $region28
      $region27: #{forward.29} parent=5 // pred_region
        // Predicated region
        $region29: #{forward.29} parent=27 // pred_check
          %p180 = pneg %p52
        $region30: #{forward.29} parent=27 // pred_check_branch
          %182 = sbr.rel (%p180) target = $region32
        $region31: #{forward.29} parent=27 // pred_region
          %s183 = sand.u32 %s42, 1
          %s184 = sand.u32 %s42, 1
          %s185 = smul.addr %s184, 144
          %s186 = scalar_lea.vmem [#allocation2], %s185
          %s187 = smul.u32 4, %s11
          %s188 = smul.addr %s187, 4
          %s189 = scalar_lea.vmem %s1, %s188
          // Predicated region
          $region33: #{forward.29} parent=31 // pred_check
            _
          $region34: #{forward.29} parent=31 // pred_check_branch
            %191 = sbr.rel (0) target = $region36
          $region35: #{forward.29} parent=31 // pred_region
            // Predicated region
            $region37: #{forward.29} parent=35 // pred_check
              _
            $region38: #{forward.29} parent=35 // pred_check_branch
              %193 = sbr.rel (0) target = $region40
            $region39: #{forward.29} parent=35 // pred_region
              loop: start=0, step=1, limit=1
              $region41: #{forward.29} parent=39 // loop_pre_header
                _
              $region42: #{forward.29} parent=39 // loop_header
                %s195 = sphi 0, %s199
                %p196 = scmp.ge.s32.totalorder %s195, 1
                %s200 = sphi %s189, %s189
                %s201 = sphi %s186, %s186
              $region43: #{forward.29} parent=39 // loop_header_branch
                %198 = sbr.rel (%p196) target = $region47
              $region44: #{forward.29} parent=39 // loop_body
                %v202 = vld [vmem:[%s200] sm:$0xff]
                %203 = vst [vmem:[%s201] sm:$0xff] %v202
                %v204 = vld [vmem:[%s200 + $0x8] sm:$0xff]
                %205 = vst [vmem:[%s201 + $0x8] sm:$0xff] %v204
                %v206 = vld [vmem:[%s200 + $0x80] sm:$0xff]
                %207 = vst [vmem:[%s201 + $0x10] sm:$0xff] %v206
                %v208 = vld [vmem:[%s200 + $0x88] sm:$0xff]
                %209 = vst [vmem:[%s201 + $0x18] sm:$0xff] %v208
                %v210 = vld [vmem:[%s200 + $0x100] sm:$0xff]
                %211 = vst [vmem:[%s201 + $0x20] sm:$0xff] %v210
                %v212 = vld [vmem:[%s200 + $0x108] sm:$0xff]
                %213 = vst [vmem:[%s201 + $0x28] sm:$0xff] %v212
                %v214 = vld [vmem:[%s200 + $0x180] sm:$0xff]
                %215 = vst [vmem:[%s201 + $0x30] sm:$0xff] %v214
                %v216 = vld [vmem:[%s200 + $0x188] sm:$0xff]
                %217 = vst [vmem:[%s201 + $0x38] sm:$0xff] %v216
                %v218 = vld [vmem:[%s200 + $0x200] sm:$0xff]
                %219 = vst [vmem:[%s201 + $0x40] sm:$0xff] %v218
                %v220 = vld [vmem:[%s200 + $0x208] sm:$0xff]
                %221 = vst [vmem:[%s201 + $0x48] sm:$0xff] %v220
                %v222 = vld [vmem:[%s200 + $0x280] sm:$0xff]
                %223 = vst [vmem:[%s201 + $0x50] sm:$0xff] %v222
                %v224 = vld [vmem:[%s200 + $0x288] sm:$0xff]
                %225 = vst [vmem:[%s201 + $0x58] sm:$0xff] %v224
                %v226 = vld [vmem:[%s200 + $0x300] sm:$0xff]
                %227 = vst [vmem:[%s201 + $0x60] sm:$0xff] %v226
                %v228 = vld [vmem:[%s200 + $0x308] sm:$0xff]
                %229 = vst [vmem:[%s201 + $0x68] sm:$0xff] %v228
                %v230 = vld [vmem:[%s200 + $0x380] sm:$0xff]
                %231 = vst [vmem:[%s201 + $0x70] sm:$0xff] %v230
                %v232 = vld [vmem:[%s200 + $0x388] sm:$0xff]
                %233 = vst [vmem:[%s201 + $0x78] sm:$0xff] %v232
                %v234 = vld [vmem:[%s200 + $0x400] sm:$0xff]
                %235 = vst [vmem:[%s201 + $0x80] sm:$0xff] %v234
                %v236 = vld [vmem:[%s200 + $0x408] sm:$0xff]
                %237 = vst [vmem:[%s201 + $0x88] sm:$0xff] %v236
              $region45: #{forward.29} parent=39 // loop_footer
                %s199 = sadd.s32 1, %s195
              $region46: #{forward.29} parent=39 // loop_footer_branch
                %194 = sbr.rel target = $region42
              $region47: #{forward.29} parent=39 // loop_exit
                _
            $region40: #{forward.29} parent=35 // pred_fallthru
              _
            // Predicated region
            $region48: #{forward.29} parent=35 // pred_check
              _
            $region49: #{forward.29} parent=35 // pred_check_branch
              %239 = sbr.rel target = $region51
            $region50: #{forward.29} parent=35 // pred_region
              _
            $region51: #{forward.29} parent=35 // pred_fallthru
              _
          $region36: #{forward.29} parent=31 // pred_fallthru
            _
          %240 = vnop
        $region32: #{forward.29} parent=27 // pred_fallthru
          _
        // Predicated region
        $region52: #{forward.29} parent=27 // pred_check
          %p241 = pneg %p99
        $region53: #{forward.29} parent=27 // pred_check_branch
          %243 = sbr.rel (%p241) target = $region55
        $region54: #{forward.29} parent=27 // pred_region
          %s244 = sand.u32 %s89, 1
          %s245 = sand.u32 %s89, 1
          %s246 = smul.addr %s245, 144
          %s247 = scalar_lea.vmem [#allocation3], %s246
          %s248 = smul.u32 4, %s11
          %s249 = smul.addr %s248, 4
          %s250 = scalar_lea.vmem %s3, %s249
          // Predicated region
          $region56: #{forward.29} parent=54 // pred_check
            _
          $region57: #{forward.29} parent=54 // pred_check_branch
            %252 = sbr.rel (0) target = $region59
          $region58: #{forward.29} parent=54 // pred_region
            // Predicated region
            $region60: #{forward.29} parent=58 // pred_check
              _
            $region61: #{forward.29} parent=58 // pred_check_branch
              %254 = sbr.rel (0) target = $region63
            $region62: #{forward.29} parent=58 // pred_region
              loop: start=0, step=1, limit=1
              $region64: #{forward.29} parent=62 // loop_pre_header
                _
              $region65: #{forward.29} parent=62 // loop_header
                %s256 = sphi 0, %s260
                %p257 = scmp.ge.s32.totalorder %s256, 1
                %s261 = sphi %s250, %s250
                %s262 = sphi %s247, %s247
              $region66: #{forward.29} parent=62 // loop_header_branch
                %259 = sbr.rel (%p257) target = $region70
              $region67: #{forward.29} parent=62 // loop_body
                %v263 = vld [vmem:[%s261] sm:$0xff]
                %264 = vst [vmem:[%s262] sm:$0xff] %v263
                %v265 = vld [vmem:[%s261 + $0x8] sm:$0xff]
                %266 = vst [vmem:[%s262 + $0x8] sm:$0xff] %v265
                %v267 = vld [vmem:[%s261 + $0x80] sm:$0xff]
                %268 = vst [vmem:[%s262 + $0x10] sm:$0xff] %v267
                %v269 = vld [vmem:[%s261 + $0x88] sm:$0xff]
                %270 = vst [vmem:[%s262 + $0x18] sm:$0xff] %v269
                %v271 = vld [vmem:[%s261 + $0x100] sm:$0xff]
                %272 = vst [vmem:[%s262 + $0x20] sm:$0xff] %v271
                %v273 = vld [vmem:[%s261 + $0x108] sm:$0xff]
                %274 = vst [vmem:[%s262 + $0x28] sm:$0xff] %v273
                %v275 = vld [vmem:[%s261 + $0x180] sm:$0xff]
                %276 = vst [vmem:[%s262 + $0x30] sm:$0xff] %v275
                %v277 = vld [vmem:[%s261 + $0x188] sm:$0xff]
                %278 = vst [vmem:[%s262 + $0x38] sm:$0xff] %v277
                %v279 = vld [vmem:[%s261 + $0x200] sm:$0xff]
                %280 = vst [vmem:[%s262 + $0x40] sm:$0xff] %v279
                %v281 = vld [vmem:[%s261 + $0x208] sm:$0xff]
                %282 = vst [vmem:[%s262 + $0x48] sm:$0xff] %v281
                %v283 = vld [vmem:[%s261 + $0x280] sm:$0xff]
                %284 = vst [vmem:[%s262 + $0x50] sm:$0xff] %v283
                %v285 = vld [vmem:[%s261 + $0x288] sm:$0xff]
                %286 = vst [vmem:[%s262 + $0x58] sm:$0xff] %v285
                %v287 = vld [vmem:[%s261 + $0x300] sm:$0xff]
                %288 = vst [vmem:[%s262 + $0x60] sm:$0xff] %v287
                %v289 = vld [vmem:[%s261 + $0x308] sm:$0xff]
                %290 = vst [vmem:[%s262 + $0x68] sm:$0xff] %v289
                %v291 = vld [vmem:[%s261 + $0x380] sm:$0xff]
                %292 = vst [vmem:[%s262 + $0x70] sm:$0xff] %v291
                %v293 = vld [vmem:[%s261 + $0x388] sm:$0xff]
                %294 = vst [vmem:[%s262 + $0x78] sm:$0xff] %v293
                %v295 = vld [vmem:[%s261 + $0x400] sm:$0xff]
                %296 = vst [vmem:[%s262 + $0x80] sm:$0xff] %v295
                %v297 = vld [vmem:[%s261 + $0x408] sm:$0xff]
                %298 = vst [vmem:[%s262 + $0x88] sm:$0xff] %v297
              $region68: #{forward.29} parent=62 // loop_footer
                %s260 = sadd.s32 1, %s256
              $region69: #{forward.29} parent=62 // loop_footer_branch
                %255 = sbr.rel target = $region65
              $region70: #{forward.29} parent=62 // loop_exit
                _
            $region63: #{forward.29} parent=58 // pred_fallthru
              _
            // Predicated region
            $region71: #{forward.29} parent=58 // pred_check
              _
            $region72: #{forward.29} parent=58 // pred_check_branch
              %300 = sbr.rel target = $region74
            $region73: #{forward.29} parent=58 // pred_region
              _
            $region74: #{forward.29} parent=58 // pred_fallthru
              _
          $region59: #{forward.29} parent=54 // pred_fallthru
            _
          %301 = vnop
        $region55: #{forward.29} parent=27 // pred_fallthru
          _
      $region28: #{forward.29} parent=5 // pred_fallthru
        _
      %p302 = scmp.le.s32.totalorder 1, %s11
      %p303 = scmp.lt.s32.totalorder %s11, 9
      %p304 = pnand %p302, %p303
      %p305 = pneg %p304
      // Predicated region
      $region75: #{forward.29} parent=5 // pred_check
        _
      $region76: #{forward.29} parent=5 // pred_check_branch
        %307 = sbr.rel (%p304) target = $region78
      $region77: #{forward.29} parent=5 // pred_region
        %s308 = ssub.s32 %s11, 1
        %s309 = sand.u32 %s45, 1
        %s310 = sand.u32 %s45, 1
        %s311 = smul.addr %s310, 144
        %s312 = scalar_lea.vmem [#allocation2], %s311
        // Predicated region
        $region79: #{forward.29} parent=77 // pred_check
          %p313 = pneg %p58
        $region80: #{forward.29} parent=77 // pred_check_branch
          %315 = sbr.rel (%p313) target = $region82
        $region81: #{forward.29} parent=77 // pred_region
          _
        $region82: #{forward.29} parent=77 // pred_fallthru
          _
        %s316 = sand.u32 %s92, 1
        %s317 = sand.u32 %s92, 1
        %s318 = smul.addr %s317, 144
        %s319 = scalar_lea.vmem [#allocation3], %s318
        // Predicated region
        $region83: #{forward.29} parent=77 // pred_check
          %p320 = pneg %p105
        $region84: #{forward.29} parent=77 // pred_check_branch
          %322 = sbr.rel (%p320) target = $region86
        $region85: #{forward.29} parent=77 // pred_region
          _
        $region86: #{forward.29} parent=77 // pred_fallthru
          _
        %p323 = pneg %p32
        %p324 = pneg %p29
        %s325 = sand.u32 %s45, 1
        %s326 = sand.u32 %s45, 1
        %s327 = smul.addr %s326, 144
        %s328 = scalar_lea.vmem [#allocation2], %s327
        %p329 = pneg %p58
        %p330 = pneg %p55
        %p331 = pneg %p79
        %p332 = pneg %p76
        %s333 = sand.u32 %s92, 1
        %s334 = sand.u32 %s92, 1
        %s335 = smul.addr %s334, 144
        %s336 = scalar_lea.vmem [#allocation3], %s335
        %p337 = pneg %p105
        %p338 = pneg %p102
        %p339 = pneg %p126
        %p340 = pneg %p123
        %p341 = pneg %p152
        %p342 = pneg %p149
        %s343 = sand.u32 %s139, 1
        %s344 = sand.u32 %s139, 1
        %s345 = smul.addr %s344, 32
        %s346 = scalar_lea.vmem [#allocation4], %s345
        %s347 = smul.u32 4, %s16
        %s348 = smul.u32 4, %s16
        %s349 = smul.u32 4, %s16
        %v351 = vld [vmem:[%s0] sm:$0xf]
        %v352 = vld [vmem:[%s0 + $0x4] sm:$0xf]
        %v353 = vld [vmem:[%s312] sm:$0xff]
        %v354 = vld [vmem:[%s312 + $0x8] sm:$0xff]
        %v355 = vld [vmem:[%s312 + $0x10] sm:$0xff]
        %v356 = vld [vmem:[%s312 + $0x18] sm:$0xff]
        %v357 = vld [vmem:[%s312 + $0x20] sm:$0xff]
        %v358 = vld [vmem:[%s312 + $0x28] sm:$0xff]
        %v359 = vld [vmem:[%s312 + $0x30] sm:$0xff]
        %v360 = vld [vmem:[%s312 + $0x38] sm:$0xff]
        %v361 = vld [vmem:[%s312 + $0x40] sm:$0xff]
        %v362 = vld [vmem:[%s312 + $0x48] sm:$0xff]
        %v363 = vld [vmem:[%s312 + $0x50] sm:$0xff]
        %v364 = vld [vmem:[%s312 + $0x58] sm:$0xff]
        %v365 = vld [vmem:[%s312 + $0x60] sm:$0xff]
        %v366 = vld [vmem:[%s312 + $0x68] sm:$0xff]
        %v367 = vld [vmem:[%s312 + $0x70] sm:$0xff]
        %v368 = vld [vmem:[%s312 + $0x78] sm:$0xff]
        %v369 = vld [vmem:[%s312 + $0x80] sm:$0xff]
        %v370 = vld [vmem:[%s312 + $0x88] sm:$0xff]
        %v371 = vld [vmem:[%s2] sm:$0xf]
        %v372 = vld [vmem:[%s2 + $0x4] sm:$0xf]
        %v373 = vld [vmem:[%s319] sm:$0xff]
        %v374 = vld [vmem:[%s319 + $0x8] sm:$0xff]
        %v375 = vld [vmem:[%s319 + $0x10] sm:$0xff]
        %v376 = vld [vmem:[%s319 + $0x18] sm:$0xff]
        %v377 = vld [vmem:[%s319 + $0x20] sm:$0xff]
        %v378 = vld [vmem:[%s319 + $0x28] sm:$0xff]
        %v379 = vld [vmem:[%s319 + $0x30] sm:$0xff]
        %v380 = vld [vmem:[%s319 + $0x38] sm:$0xff]
        %v381 = vld [vmem:[%s319 + $0x40] sm:$0xff]
        %v382 = vld [vmem:[%s319 + $0x48] sm:$0xff]
        %v383 = vld [vmem:[%s319 + $0x50] sm:$0xff]
        %v384 = vld [vmem:[%s319 + $0x58] sm:$0xff]
        %v385 = vld [vmem:[%s319 + $0x60] sm:$0xff]
        %v386 = vld [vmem:[%s319 + $0x68] sm:$0xff]
        %v387 = vld [vmem:[%s319 + $0x70] sm:$0xff]
        %v388 = vld [vmem:[%s319 + $0x78] sm:$0xff]
        %v389 = vld [vmem:[%s319 + $0x80] sm:$0xff]
        %v390 = vld [vmem:[%s319 + $0x88] sm:$0xff]
        %v393 = vunpack.c.l.b16 %v371
        %v394 = vunpack.c.l.b16 %v372
        %v395 = vpack.c.b16 %v394, %v393
        %v414 = vunpack.c.l.b16 %v373
        %v415 = vunpack.c.h.b16 %v373
        %v416 = vunpack.c.l.b16 %v374
        %v417 = vunpack.c.h.b16 %v374
        %v418 = vunpack.c.l.b16 %v375
        %v419 = vunpack.c.h.b16 %v375
        %v420 = vunpack.c.l.b16 %v376
        %v421 = vunpack.c.h.b16 %v376
        %v422 = vunpack.c.l.b16 %v377
        %v423 = vunpack.c.h.b16 %v377
        %v424 = vunpack.c.l.b16 %v378
        %v425 = vunpack.c.h.b16 %v378
        %v426 = vunpack.c.l.b16 %v379
        %v427 = vunpack.c.h.b16 %v379
        %v428 = vunpack.c.l.b16 %v380
        %v429 = vunpack.c.h.b16 %v380
        %v430 = vunpack.c.l.b16 %v381
        %v431 = vunpack.c.h.b16 %v381
        %v432 = vunpack.c.l.b16 %v382
        %v433 = vunpack.c.h.b16 %v382
        %v434 = vunpack.c.l.b16 %v383
        %v435 = vunpack.c.h.b16 %v383
        %v436 = vunpack.c.l.b16 %v384
        %v437 = vunpack.c.h.b16 %v384
        %v438 = vunpack.c.l.b16 %v385
        %v439 = vunpack.c.h.b16 %v385
        %v440 = vunpack.c.l.b16 %v386
        %v441 = vunpack.c.h.b16 %v386
        %v442 = vunpack.c.l.b16 %v387
        %v443 = vunpack.c.h.b16 %v387
        %v444 = vunpack.c.l.b16 %v388
        %v445 = vunpack.c.h.b16 %v388
        %v446 = vunpack.c.l.b16 %v389
        %v447 = vunpack.c.h.b16 %v389
        %v448 = vunpack.c.l.b16 %v390
        %v449 = vunpack.c.h.b16 %v390
        %v450 = vpack.c.b16 %v418, %v414
        %v451 = vpack.c.b16 %v419, %v415
        %v452 = vpack.c.b16 %v420, %v416
        %v453 = vpack.c.b16 %v421, %v417
        %v454 = vpack.c.b16 %v426, %v422
        %v455 = vpack.c.b16 %v427, %v423
        %v456 = vpack.c.b16 %v428, %v424
        %v457 = vpack.c.b16 %v429, %v425
        %v458 = vpack.c.b16 %v434, %v430
        %v459 = vpack.c.b16 %v435, %v431
        %v460 = vpack.c.b16 %v436, %v432
        %v461 = vpack.c.b16 %v437, %v433
        %v462 = vpack.c.b16 %v442, %v438
        %v463 = vpack.c.b16 %v443, %v439
        %v464 = vpack.c.b16 %v444, %v440
        %v465 = vpack.c.b16 %v445, %v441
        %v466 = vpack.c.b16 %v446, %v446
        %v467 = vpack.c.b16 %v447, %v447
        %v468 = vpack.c.b16 %v448, %v448
        %v469 = vpack.c.b16 %v449, %v449
        %vm486 = vcmask 588800
        %v488 = vsel %vm486, %v395, 0
        %vm490 = vcmask 1043456
        %v492 = vsel %vm490, %v466, 0
        %v495 = vsel %vm490, %v467, 0
        %v498 = vsel %vm490, %v468, 0
        %v501 = vsel %vm490, %v469, 0
        %503 = vmatprep.subr.bf16.mxu0 %v451
        %504 = vmatpush1.bf16.msra.mxu0 %v450
        %505 = vmatprep.subr.bf16.mxu0 %v455
        %506 = vmatpush1.bf16.msra.mxu0 %v454
        %507 = vmatprep.subr.bf16.mxu0 %v459
        %508 = vmatpush1.bf16.msra.mxu0 %v458
        %509 = vmatprep.subr.bf16.mxu0 %v463
        %510 = vmatpush1.bf16.msra.mxu0 %v462
        %511 = vmatprep.subr.bf16.mxu0 %v495
        %512 = vmatpush1.bf16.msra.mxu0 %v492
        %513 = vmatprep.subr.bf16.mxu0 0
        %514 = vmatpush1.bf16.msra.mxu0 0
        %515 = vmatprep.subr.bf16.mxu0 0
        %516 = vmatpush1.bf16.msra.mxu0 0
        %517 = vmatprep.subr.bf16.mxu0 0
        %518 = vmatpush1.bf16.msra.mxu0 0
        %519 = vmatprep.subr.bf16.mxu0 0
        %520 = vmatpush1.bf16.msra.mxu0 0
        %521 = vmatprep.subr.bf16.mxu0 0
        %522 = vmatpush1.bf16.msra.mxu0 0
        %523 = vmatprep.subr.bf16.mxu0 0
        %524 = vmatpush1.bf16.msra.mxu0 0
        %525 = vmatprep.subr.bf16.mxu0 0
        %526 = vmatpush1.bf16.msra.mxu0 0
        %527 = vmatprep.subr.bf16.mxu0 0
        %528 = vmatpush1.bf16.msra.mxu0 0
        %529 = vmatprep.subr.bf16.mxu0 0
        %530 = vmatpush1.bf16.msra.mxu0 0
        %531 = vmatprep.subr.bf16.mxu0 0
        %532 = vmatpush1.bf16.msra.mxu0 0
        %533 = vmatprep.subr.bf16.mxu0 0
        %534 = vmatpush1.bf16.msra.mxu0 0
        %535 = vmatprep.mubr.bf16.mxu0 0
        %536 = vmatmul.mubr.bf16.gmra.mrb[0].mxu0 %v488
        %v537 = vpop.f32.mrb[0].mxu0
        %v538 = vadd.f32 0.0, %v537
        %v539 = vpop.f32.mrb[0].mxu0
        %v540 = vadd.f32 0.0, %v539
        %v541 = vpop.f32.mrb[0].mxu0
        %v542 = vadd.f32 0.0, %v541
        %v543 = vpop.f32.mrb[0].mxu0
        %v544 = vadd.f32 0.0, %v543
        %545 = vdwg.mxu0
        %546 = vmatprep.subr.bf16.mxu0 %v453
        %547 = vmatpush1.bf16.msra.mxu0 %v452
        %548 = vmatprep.subr.bf16.mxu0 %v457
        %549 = vmatpush1.bf16.msra.mxu0 %v456
        %550 = vmatprep.subr.bf16.mxu0 %v461
        %551 = vmatpush1.bf16.msra.mxu0 %v460
        %552 = vmatprep.subr.bf16.mxu0 %v465
        %553 = vmatpush1.bf16.msra.mxu0 %v464
        %554 = vmatprep.subr.bf16.mxu0 %v501
        %555 = vmatpush1.bf16.msra.mxu0 %v498
        %556 = vmatprep.subr.bf16.mxu0 0
        %557 = vmatpush1.bf16.msra.mxu0 0
        %558 = vmatprep.subr.bf16.mxu0 0
        %559 = vmatpush1.bf16.msra.mxu0 0
        %560 = vmatprep.subr.bf16.mxu0 0
        %561 = vmatpush1.bf16.msra.mxu0 0
        %562 = vmatprep.subr.bf16.mxu0 0
        %563 = vmatpush1.bf16.msra.mxu0 0
        %564 = vmatprep.subr.bf16.mxu0 0
        %565 = vmatpush1.bf16.msra.mxu0 0
        %566 = vmatprep.subr.bf16.mxu0 0
        %567 = vmatpush1.bf16.msra.mxu0 0
        %568 = vmatprep.subr.bf16.mxu0 0
        %569 = vmatpush1.bf16.msra.mxu0 0
        %570 = vmatprep.subr.bf16.mxu0 0
        %571 = vmatpush1.bf16.msra.mxu0 0
        %572 = vmatprep.subr.bf16.mxu0 0
        %573 = vmatpush1.bf16.msra.mxu0 0
        %574 = vmatprep.subr.bf16.mxu0 0
        %575 = vmatpush1.bf16.msra.mxu0 0
        %576 = vmatprep.subr.bf16.mxu0 0
        %577 = vmatpush1.bf16.msra.mxu0 0
        %578 = vmatprep.mubr.bf16.mxu0 0
        %579 = vmatmul.mubr.bf16.gmra.mrb[0].mxu0 %v488
        %v580 = vpop.f32.mrb[0].mxu0
        %v581 = vadd.f32 0.0, %v580
        %v582 = vpop.f32.mrb[0].mxu0
        %v583 = vadd.f32 0.0, %v582
        %v584 = vpop.f32.mrb[0].mxu0
        %v585 = vadd.f32 0.0, %v584
        %v586 = vpop.f32.mrb[0].mxu0
        %v587 = vadd.f32 0.0, %v586
        %588 = vdwg.mxu0
        %v591 = vunpack.c.l.b16 %v351
        %v592 = vunpack.c.l.b16 %v352
        %v593 = vpack.c.b16 %v592, %v591
        %v612 = vunpack.c.l.b16 %v353
        %v613 = vunpack.c.h.b16 %v353
        %v614 = vunpack.c.l.b16 %v354
        %v615 = vunpack.c.h.b16 %v354
        %v616 = vunpack.c.l.b16 %v355
        %v617 = vunpack.c.h.b16 %v355
        %v618 = vunpack.c.l.b16 %v356
        %v619 = vunpack.c.h.b16 %v356
        %v620 = vunpack.c.l.b16 %v357
        %v621 = vunpack.c.h.b16 %v357
        %v622 = vunpack.c.l.b16 %v358
        %v623 = vunpack.c.h.b16 %v358
        %v624 = vunpack.c.l.b16 %v359
        %v625 = vunpack.c.h.b16 %v359
        %v626 = vunpack.c.l.b16 %v360
        %v627 = vunpack.c.h.b16 %v360
        %v628 = vunpack.c.l.b16 %v361
        %v629 = vunpack.c.h.b16 %v361
        %v630 = vunpack.c.l.b16 %v362
        %v631 = vunpack.c.h.b16 %v362
        %v632 = vunpack.c.l.b16 %v363
        %v633 = vunpack.c.h.b16 %v363
        %v634 = vunpack.c.l.b16 %v364
        %v635 = vunpack.c.h.b16 %v364
        %v636 = vunpack.c.l.b16 %v365
        %v637 = vunpack.c.h.b16 %v365
        %v638 = vunpack.c.l.b16 %v366
        %v639 = vunpack.c.h.b16 %v366
        %v640 = vunpack.c.l.b16 %v367
        %v641 = vunpack.c.h.b16 %v367
        %v642 = vunpack.c.l.b16 %v368
        %v643 = vunpack.c.h.b16 %v368
        %v644 = vunpack.c.l.b16 %v369
        %v645 = vunpack.c.h.b16 %v369
        %v646 = vunpack.c.l.b16 %v370
        %v647 = vunpack.c.h.b16 %v370
        %v648 = vpack.c.b16 %v616, %v612
        %v649 = vpack.c.b16 %v617, %v613
        %v650 = vpack.c.b16 %v618, %v614
        %v651 = vpack.c.b16 %v619, %v615
        %v652 = vpack.c.b16 %v624, %v620
        %v653 = vpack.c.b16 %v625, %v621
        %v654 = vpack.c.b16 %v626, %v622
        %v655 = vpack.c.b16 %v627, %v623
        %v656 = vpack.c.b16 %v632, %v628
        %v657 = vpack.c.b16 %v633, %v629
        %v658 = vpack.c.b16 %v634, %v630
        %v659 = vpack.c.b16 %v635, %v631
        %v660 = vpack.c.b16 %v640, %v636
        %v661 = vpack.c.b16 %v641, %v637
        %v662 = vpack.c.b16 %v642, %v638
        %v663 = vpack.c.b16 %v643, %v639
        %v664 = vpack.c.b16 %v644, %v644
        %v665 = vpack.c.b16 %v645, %v645
        %v666 = vpack.c.b16 %v646, %v646
        %v667 = vpack.c.b16 %v647, %v647
        %v685 = vsel %vm486, %v593, 0
        %v688 = vsel %vm490, %v664, 0
        %v691 = vsel %vm490, %v665, 0
        %v694 = vsel %vm490, %v666, 0
        %v697 = vsel %vm490, %v667, 0
        %699 = vmatprep.subr.bf16.mxu0 %v649
        %700 = vmatpush1.bf16.msra.mxu0 %v648
        %701 = vmatprep.subr.bf16.mxu0 %v653
        %702 = vmatpush1.bf16.msra.mxu0 %v652
        %703 = vmatprep.subr.bf16.mxu0 %v657
        %704 = vmatpush1.bf16.msra.mxu0 %v656
        %705 = vmatprep.subr.bf16.mxu0 %v661
        %706 = vmatpush1.bf16.msra.mxu0 %v660
        %707 = vmatprep.subr.bf16.mxu0 %v691
        %708 = vmatpush1.bf16.msra.mxu0 %v688
        %709 = vmatprep.subr.bf16.mxu0 0
        %710 = vmatpush1.bf16.msra.mxu0 0
        %711 = vmatprep.subr.bf16.mxu0 0
        %712 = vmatpush1.bf16.msra.mxu0 0
        %713 = vmatprep.subr.bf16.mxu0 0
        %714 = vmatpush1.bf16.msra.mxu0 0
        %715 = vmatprep.subr.bf16.mxu0 0
        %716 = vmatpush1.bf16.msra.mxu0 0
        %717 = vmatprep.subr.bf16.mxu0 0
        %718 = vmatpush1.bf16.msra.mxu0 0
        %719 = vmatprep.subr.bf16.mxu0 0
        %720 = vmatpush1.bf16.msra.mxu0 0
        %721 = vmatprep.subr.bf16.mxu0 0
        %722 = vmatpush1.bf16.msra.mxu0 0
        %723 = vmatprep.subr.bf16.mxu0 0
        %724 = vmatpush1.bf16.msra.mxu0 0
        %725 = vmatprep.subr.bf16.mxu0 0
        %726 = vmatpush1.bf16.msra.mxu0 0
        %727 = vmatprep.subr.bf16.mxu0 0
        %728 = vmatpush1.bf16.msra.mxu0 0
        %729 = vmatprep.subr.bf16.mxu0 0
        %730 = vmatpush1.bf16.msra.mxu0 0
        %731 = vmatprep.mubr.bf16.mxu0 0
        %732 = vmatmul.mubr.bf16.gmra.mrb[0].mxu0 %v685
        %v733 = vpop.f32.mrb[0].mxu0
        %v734 = vadd.f32 %v538, %v733
        %v735 = vpop.f32.mrb[0].mxu0
        %v736 = vadd.f32 %v540, %v735
        %v737 = vpop.f32.mrb[0].mxu0
        %v738 = vadd.f32 %v542, %v737
        %v739 = vpop.f32.mrb[0].mxu0
        %v740 = vadd.f32 %v544, %v739
        %741 = vdwg.mxu0
        %742 = vmatprep.subr.bf16.mxu0 %v651
        %743 = vmatpush1.bf16.msra.mxu0 %v650
        %744 = vmatprep.subr.bf16.mxu0 %v655
        %745 = vmatpush1.bf16.msra.mxu0 %v654
        %746 = vmatprep.subr.bf16.mxu0 %v659
        %747 = vmatpush1.bf16.msra.mxu0 %v658
        %748 = vmatprep.subr.bf16.mxu0 %v663
        %749 = vmatpush1.bf16.msra.mxu0 %v662
        %750 = vmatprep.subr.bf16.mxu0 %v697
        %751 = vmatpush1.bf16.msra.mxu0 %v694
        %752 = vmatprep.subr.bf16.mxu0 0
        %753 = vmatpush1.bf16.msra.mxu0 0
        %754 = vmatprep.subr.bf16.mxu0 0
        %755 = vmatpush1.bf16.msra.mxu0 0
        %756 = vmatprep.subr.bf16.mxu0 0
        %757 = vmatpush1.bf16.msra.mxu0 0
        %758 = vmatprep.subr.bf16.mxu0 0
        %759 = vmatpush1.bf16.msra.mxu0 0
        %760 = vmatprep.subr.bf16.mxu0 0
        %761 = vmatpush1.bf16.msra.mxu0 0
        %762 = vmatprep.subr.bf16.mxu0 0
        %763 = vmatpush1.bf16.msra.mxu0 0
        %764 = vmatprep.subr.bf16.mxu0 0
        %765 = vmatpush1.bf16.msra.mxu0 0
        %766 = vmatprep.subr.bf16.mxu0 0
        %767 = vmatpush1.bf16.msra.mxu0 0
        %768 = vmatprep.subr.bf16.mxu0 0
        %769 = vmatpush1.bf16.msra.mxu0 0
        %770 = vmatprep.subr.bf16.mxu0 0
        %771 = vmatpush1.bf16.msra.mxu0 0
        %772 = vmatprep.subr.bf16.mxu0 0
        %773 = vmatpush1.bf16.msra.mxu0 0
        %774 = vmatprep.mubr.bf16.mxu0 0
        %775 = vmatmul.mubr.bf16.gmra.mrb[0].mxu0 %v685
        %v776 = vpop.f32.mrb[0].mxu0
        %v777 = vadd.f32 %v581, %v776
        %v778 = vpop.f32.mrb[0].mxu0
        %v779 = vadd.f32 %v583, %v778
        %v780 = vpop.f32.mrb[0].mxu0
        %v781 = vadd.f32 %v585, %v780
        %v782 = vpop.f32.mrb[0].mxu0
        %v783 = vadd.f32 %v587, %v782
        %784 = vdwg.mxu0
        %v785 = vld [vmem:[%s4] sm:$0xff]
        %v786 = vld [vmem:[%s4 + $0x8] sm:$0xff]
        %788 = vset.pattern.permute.xlu0 0
        %789 = vperm.xlu0 %788, %v785
        %v790 = vpop.permute.xlu0 %789
        %793 = vset.pattern.permute.xlu0 0
        %794 = vperm.xlu0 %793, %v786
        %v795 = vpop.permute.xlu0 %794
        %v797 = vadd.f32 %v734, %v790
        %v798 = vadd.f32 %v736, %v790
        %v799 = vadd.f32 %v777, %v790
        %v800 = vadd.f32 %v779, %v790
        %v801 = vadd.f32 %v738, %v795
        %v802 = vadd.f32 %v740, %v795
        %v803 = vadd.f32 %v781, %v795
        %v804 = vadd.f32 %v783, %v795
        %v805 = vmax.f32 %v797, 0.0
        %v806 = vmax.f32 %v798, 0.0
        %v807 = vmax.f32 %v799, 0.0
        %v808 = vmax.f32 %v800, 0.0
        %v809 = vmax.f32 %v801, 0.0
        %v810 = vmax.f32 %v802, 0.0
        %v811 = vmax.f32 %v803, 0.0
        %v812 = vmax.f32 %v804, 0.0
        %v813 = vpack.c.bf16 %v809, %v805
        %v814 = vpack.c.bf16 %v810, %v806
        %v815 = vpack.c.bf16 %v811, %v807
        %v816 = vpack.c.bf16 %v812, %v808
        %v821 = vunpack.c.l.b16 %v813
        %v822 = vunpack.c.l.b16 %v814
        %v823 = vunpack.c.l.b16 %v815
        %v824 = vunpack.c.l.b16 %v816
        %v825 = vunpack.c.h.b16 %v813
        %v826 = vunpack.c.h.b16 %v814
        %v827 = vunpack.c.h.b16 %v815
        %v828 = vunpack.c.h.b16 %v816
        %v829 = vpack.c.b16 %v822, %v821
        %v830 = vpack.c.b16 %v824, %v823
        %v831 = vpack.c.b16 %v826, %v825
        %v832 = vpack.c.b16 %v828, %v827
        %837 = vst [vmem:[%s346] sm:$0xff] %v829
        %838 = vst [vmem:[%s346 + $0x8] sm:$0xff] %v830
        %839 = vst [vmem:[%s346 + $0x10] sm:$0xff] %v831
        %840 = vst [vmem:[%s346 + $0x18] sm:$0xff] %v832
        %s841 = sand.u32 %s139, 1
        %s842 = sand.u32 %s139, 1
        %s843 = smul.addr %s842, 32
        %s844 = scalar_lea.vmem [#allocation4], %s843
        // Predicated region
        $region87: #{forward.29} parent=77 // pred_check
          %p845 = pneg %p149
        $region88: #{forward.29} parent=77 // pred_check_branch
          %847 = sbr.rel (%p845) target = $region90
        $region89: #{forward.29} parent=77 // pred_region
          %s848 = smul.u32 4, %s16
          %s849 = smul.addr %s848, 4
          %s850 = scalar_lea.vmem %s5, %s849
          // Predicated region
          $region91: #{forward.29} parent=89 // pred_check
            _
          $region92: #{forward.29} parent=89 // pred_check_branch
            %852 = sbr.rel (0) target = $region94
          $region93: #{forward.29} parent=89 // pred_region
            // Predicated region
            $region95: #{forward.29} parent=93 // pred_check
              _
            $region96: #{forward.29} parent=93 // pred_check_branch
              %854 = sbr.rel (0) target = $region98
            $region97: #{forward.29} parent=93 // pred_region
              loop: start=0, step=1, limit=1
              $region99: #{forward.29} parent=97 // loop_pre_header
                _
              $region100: #{forward.29} parent=97 // loop_header
                %s856 = sphi 0, %s860
                %p857 = scmp.ge.s32.totalorder %s856, 1
                %s861 = sphi %s844, %s844
                %s862 = sphi %s850, %s850
              $region101: #{forward.29} parent=97 // loop_header_branch
                %859 = sbr.rel (%p857) target = $region105
              $region102: #{forward.29} parent=97 // loop_body
                %v863 = vld [vmem:[%s861] sm:$0xff]
                %864 = vst [vmem:[%s862] sm:$0xff] %v863
                %v865 = vld [vmem:[%s861 + $0x8] sm:$0xff]
                %866 = vst [vmem:[%s862 + $0x8] sm:$0xff] %v865
                %v867 = vld [vmem:[%s861 + $0x10] sm:$0xff]
                %868 = vst [vmem:[%s862 + $0x80] sm:$0xff] %v867
                %v869 = vld [vmem:[%s861 + $0x18] sm:$0xff]
                %870 = vst [vmem:[%s862 + $0x88] sm:$0xff] %v869
              $region103: #{forward.29} parent=97 // loop_footer
                %s860 = sadd.s32 1, %s856
              $region104: #{forward.29} parent=97 // loop_footer_branch
                %855 = sbr.rel target = $region100
              $region105: #{forward.29} parent=97 // loop_exit
                _
            $region98: #{forward.29} parent=93 // pred_fallthru
              _
            // Predicated region
            $region106: #{forward.29} parent=93 // pred_check
              _
            $region107: #{forward.29} parent=93 // pred_check_branch
              %872 = sbr.rel target = $region109
            $region108: #{forward.29} parent=93 // pred_region
              _
            $region109: #{forward.29} parent=93 // pred_fallthru
              _
          $region94: #{forward.29} parent=89 // pred_fallthru
            _
          %873 = vnop
        $region90: #{forward.29} parent=77 // pred_fallthru
          _
      $region78: #{forward.29} parent=5 // pred_fallthru
        _
      %p874 = scmp.le.s32.totalorder 2, %s11
      // Predicated region
      $region110: #{forward.29} parent=5 // pred_check
        %p875 = pneg %p874
      $region111: #{forward.29} parent=5 // pred_check_branch
        %877 = sbr.rel (%p875) target = $region113
      $region112: #{forward.29} parent=5 // pred_region
        %s878 = ssub.s32 %s11, 2
        // Predicated region
        $region114: #{forward.29} parent=112 // pred_check
          %p879 = pneg %p155
        $region115: #{forward.29} parent=112 // pred_check_branch
          %881 = sbr.rel (%p879) target = $region117
        $region116: #{forward.29} parent=112 // pred_region
          %s882 = sand.u32 %s140, 1
          %s883 = sand.u32 %s140, 1
          %s884 = smul.addr %s883, 32
          %s885 = scalar_lea.vmem [#allocation4], %s884
        $region117: #{forward.29} parent=112 // pred_fallthru
          _
      $region113: #{forward.29} parent=5 // pred_fallthru
        _
    $region6: #{forward.29} parent=1 // loop_footer
      %s15 = sadd.s32 1, %s11
    $region7: #{forward.29} parent=1 // loop_footer_branch
      %10 = sbr.rel target = $region3
    $region8: #{forward.29} parent=1 // loop_exit
      _

</llo_original>
